<compile_context>
chip_gen: v7x
topology: tpu7x:2x2x1
jax: 0.10.0
libtpu: 0.0.40
codegen_flags: <defaults>
</compile_context>

<pallas_src>
import math
from functools import partial

import numpy as np
import jax
import jax.numpy as jnp
from jax.experimental import pallas as pl
from jax.experimental.pallas import tpu as pltpu

# ----------------------------- configuration -----------------------------
B = 2               # batch
FRAMES = 32         # num spectrogram frames
NUM_MEL = 16        # ref_num_mel
STYLE_DIM = 32      # ref_style_emb_dim (= FFT style_dim = denoiser "sequence" length)
STEP_DIM = 16       # den_step_dim
NUM_HEADS = 1       # den_num_heads (embed_dim = 1 -> must be 1)
HIDDEN_FFN = 64     # den_hidden_channels
NUM_BLOCKS = 1      # den_num_blocks
NUM_TIMESTEPS = 4   # diff_num_timesteps
LN_EPS = 1e-5
BN_EPS = 1e-5

CONV_FILTERS = [1, 32, 32, 64, 64, 128, 128]
NUM_CONV = len(CONV_FILTERS) - 1

VMEM = pltpu.MemorySpace.VMEM
SMEM = pltpu.MemorySpace.SMEM


def _post_conv_size(h, n=NUM_CONV, k=3, s=2, p=1):
    for _ in range(n):
        h = (h - k + 2 * p) // s + 1
    return h


PCH = _post_conv_size(NUM_MEL)      # mel axis after the conv stack
T_SEQ = _post_conv_size(FRAMES)     # frame axis after the conv stack (= GRU seq length)
GRU_IN = 128 * PCH                  # GRU input size
GATES_PAD = 128                     # 3*STYLE_DIM = 96 gate lanes padded to a full vreg width


# ----------------------------- diffusion schedule -----------------------------
def make_schedule(num_timesteps):
    betas = np.linspace(1e-4, 0.01, num_timesteps).astype(np.float64)   # 'linear' schedule
    alphas = 1.0 - betas
    ac = np.cumprod(alphas)
    ac_prev = np.append(1.0, ac[:-1])
    post_var = betas * (1.0 - ac_prev) / (1.0 - ac)
    return {
        "sqrt_ac": np.sqrt(ac),
        "sqrt_1mac": np.sqrt(1.0 - ac),
        "sqrt_recip_ac": np.sqrt(1.0 / ac),
        "sqrt_recipm1_ac": np.sqrt(1.0 / ac - 1.0),
        "pm_coef1": betas * np.sqrt(ac_prev) / (1.0 - ac),
        "pm_coef2": (1.0 - ac_prev) * np.sqrt(alphas) / (1.0 - ac),
        "post_logvar": np.log(np.maximum(post_var, 1e-20)),
    }


SCHED = make_schedule(NUM_TIMESTEPS)


# ----------------------------- Kernel 1: fused ReferenceEncoder -----------------------------
def _make_encoder_kernel(num_conv, t_seq):
    """Fused conv stack (BN folded, eval) + GRU recurrence.  grid=() / full VMEM blocks."""

    def kernel(*refs):
        x_ref = refs[0]
        conv_refs = refs[1:1 + 3 * num_conv]
        wih_ref, bi_ref, whh_ref, bh_ref = refs[1 + 3 * num_conv:5 + 3 * num_conv]
        z_ref = refs[5 + 3 * num_conv]

        # ---- conv + BN + ReLU stack; activations never leave VMEM ----
        x = x_ref[...]                                      # [B*H, W*C]
        for l in range(num_conv):
            p_ref = conv_refs[3 * l]                        # [3, B*Ho, B*H]
            m_ref = conv_refs[3 * l + 1]                    # [3, W*C, Wo*Co]
            b_row = conv_refs[3 * l + 2][...]               # [1, Wo*Co]
            acc = None
            for di in range(3):
                term = jnp.dot(p_ref[di], x, preferred_element_type=jnp.float32)
                term = jnp.dot(term, m_ref[di], preferred_element_type=jnp.float32)
                acc = term if acc is None else acc + term
            x = jnp.maximum(acc + b_row, 0.0)

        # ---- GRU: non-recurrent input matmul hoisted (all timesteps at once) ----
        # x: [T_SEQ*B, PCH*128] (time-major rows from the last conv layer)
        gi_all = jnp.dot(x, wih_ref[...], preferred_element_type=jnp.float32) + bi_ref[...]
        whh = whh_ref[...]
        bh = bh_ref[...]
        hdim = STYLE_DIM
        h = jnp.zeros((B, hdim), jnp.float32)
        # t_seq is tiny (1 at these shapes) -> static unroll keeps the LLO scheduler happy.
        for step in range(t_seq):
            gi = gi_all[step * B:(step + 1) * B, :]         # [B, 128]  gates r|z|n|pad
            gh = jnp.dot(h, whh, preferred_element_type=jnp.float32) + bh
            r = jax.nn.sigmoid(gi[:, 0:hdim] + gh[:, 0:hdim])
            zg = jax.nn.sigmoid(gi[:, hdim:2 * hdim] + gh[:, hdim:2 * hdim])
            n = jnp.tanh(gi[:, 2 * hdim:3 * hdim] + r * gh[:, 2 * hdim:3 * hdim])
            h = (1.0 - zg) * n + zg * h
        z_ref[...] = h

    return kernel


def encoder_forward(mel, params):
    """ReferenceEncoder forward: mel [B, FRAMES, NUM_MEL] -> style [B, STYLE_DIM]."""
    x0 = mel.reshape(B * FRAMES, NUM_MEL)                   # [b*H + h, w*C + c] layout, C=1
    args = [x0]
    for (p_mat, m_mat, b_row) in params["conv_mats"]:
        args += [p_mat, m_mat, b_row]
    gru = params["gru"]
    args += [gru["wih"], gru["bi"], gru["whh"], gru["bh"]]
    return pl.pallas_call(
        _make_encoder_kernel(NUM_CONV, T_SEQ),
        out_shape=jax.ShapeDtypeStruct((B, STYLE_DIM), jnp.float32),
        in_specs=[pl.BlockSpec(memory_space=VMEM)] * len(args),
        out_specs=pl.BlockSpec(memory_space=VMEM),
    )(*args)


# -------------------- Kernel 2: fused q_sample + denoiser + p_sample chain --------------------
def _make_diffusion_kernel(t, sched, num_blocks):
    chain_steps = list(range(t - 1, -1, -1))                # p_sample steps (may be empty)

    def layer_norm(x, g, b):
        mu = jnp.mean(x, axis=-1, keepdims=True)
        var = jnp.mean((x - mu) ** 2, axis=-1, keepdims=True)
        return (x - mu) * jax.lax.rsqrt(var + LN_EPS) * g + b

    def kernel(*refs):
        (z_ref, nt_ref, cn_ref, temb_ref,
         mw1_ref, mb1_ref, mw2_ref, mb2_ref,
         pwz_ref, pwt_ref, pb_ref, s_ref) = refs[:12]
        layer_refs = refs[12:12 + 7 * num_blocks]
        np_ref = refs[12 + 7 * num_blocks]
        style_ref = refs[13 + 7 * num_blocks]

        D = STYLE_DIM

        def fft_layer(x, l):
            n1g = layer_refs[7 * l + 0][...]
            n1b = layer_refs[7 * l + 1][...]
            c1w = layer_refs[7 * l + 2][...]                # [3, H] taps (i-1, i, i+1)
            c1b = layer_refs[7 * l + 3][...]                # [1, H]
            c2w = layer_refs[7 * l + 4][...]                # [3, H]
            n2g = layer_refs[7 * l + 5][...]
            n2b = layer_refs[7 * l + 6][...]
            wq, wk, wv = s_ref[l, 0], s_ref[l, 1], s_ref[l, 2]
            bq, bk, bv = s_ref[l, 3], s_ref[l, 4], s_ref[l, 5]
            wo, bo, c2bias = s_ref[l, 6], s_ref[l, 7], s_ref[l, 8]

            # --- self-attention (embed_dim=1, num_heads=1, seq = style dim) ---
            q = wq * x + bq
            k = wk * x + bk
            v = wv * x + bv
            scores = q[:, :, None] * k[:, None, :]          # [B, D, D]; scale = 1/sqrt(1)
            scores = scores - jnp.max(scores, axis=-1, keepdims=True)
            p = jnp.exp(scores)
            p = p / jnp.sum(p, axis=-1, keepdims=True)
            attn = jnp.sum(p * v[:, None, :], axis=-1)      # [B, D]
            src2 = wo * attn + bo
            # reference code: `src = src + dropout1(src2)` then `src = src + src2` (eval mode)
            x = x + 2.0 * src2
            x = layer_norm(x, n1g, n1b)

            # --- Conv1d(k=3, pad=1) FFN over the style axis ---
            lane = jax.lax.broadcasted_iota(jnp.int32, (B, D), 1)
            xm1 = jnp.where(lane == 0, 0.0, pltpu.roll(x, shift=1, axis=1))
            xp1 = jnp.where(lane == D - 1, 0.0, pltpu.roll(x, shift=D - 1, axis=1))
            t0 = c1w[0:1, :][:, :, None]                    # [1, H, 1]
            t1 = c1w[1:2, :][:, :, None]
            t2 = c1w[2:3, :][:, :, None]
            y = xm1[:, None, :] * t0 + x[:, None, :] * t1 + xp1[:, None, :] * t2
            y = jnp.maximum(y + c1b[:, :, None], 0.0)       # [B, H, D]

            lane3 = jax.lax.broadcasted_iota(jnp.int32, y.shape, 2)
            ym1 = jnp.where(lane3 == 0, 0.0, pltpu.roll(y, shift=1, axis=2))
            yp1 = jnp.where(lane3 == D - 1, 0.0, pltpu.roll(y, shift=D - 1, axis=2))
            s0 = c2w[0:1, :][:, :, None]
            s1 = c2w[1:2, :][:, :, None]
            s2 = c2w[2:3, :][:, :, None]
            ffn = (jnp.sum(ym1 * s0, axis=1) + jnp.sum(y * s1, axis=1)
                   + jnp.sum(yp1 * s2, axis=1) + c2bias)
            x = x + ffn
            return layer_norm(x, n2g, n2b)

        def denoise(zb, call_idx):
            # sinusoidal-embedding rows are identical across batch -> MLP runs on [1, .]
            temb = temb_ref[call_idx:call_idx + 1, :]       # [1, STEP_DIM]
            h1 = jnp.dot(temb, mw1_ref[...], preferred_element_type=jnp.float32) + mb1_ref[...]
            sp = jnp.where(h1 > 20.0, h1, jnp.log1p(jnp.exp(jnp.minimum(h1, 20.0))))
            h1 = h1 * jnp.tanh(sp)                          # Mish
            tfeat = jnp.dot(h1, mw2_ref[...], preferred_element_type=jnp.float32) + mb2_ref[...]
            # project_input(cat([z, t])) split into two matmuls (avoids in-kernel concat)
            xin = (jnp.dot(zb, pwz_ref[...], preferred_element_type=jnp.float32)
                   + jnp.dot(tfeat, pwt_ref[...], preferred_element_type=jnp.float32)
                   + pb_ref[...])
            for l in range(num_blocks):
                xin = fft_layer(xin, l)
            return xin

        z = z_ref[...]
        noise_tgt = nt_ref[...]

        # q_sample(z, t)
        x = float(sched["sqrt_ac"][t]) * z + float(sched["sqrt_1mac"][t]) * noise_tgt
        # p_pred: predicted noise on the noised style (ret["noises"]["noise_pred"])
        np_ref[...] = denoise(x, 0)

        # reverse p_sample chain (clip_denoised=False, as in the reference forward)
        for call_idx, i in enumerate(chain_steps, start=1):
            eps = denoise(x, call_idx)
            x0 = (float(sched["sqrt_recip_ac"][i]) * x
                  - float(sched["sqrt_recipm1_ac"][i]) * eps)
            mean = float(sched["pm_coef1"][i]) * x0 + float(sched["pm_coef2"][i]) * x
            if i > 0:
                sigma = float(np.exp(0.5 * sched["post_logvar"][i]))
                x = mean + sigma * cn_ref[i]
            else:
                x = mean                                    # nonzero_mask = 0 at i == 0
        style_ref[...] = x

    return kernel


def diffusion_forward(z, noise_target, chain_noise, params, t):
    steps = [t] + list(range(t - 1, -1, -1))                # denoiser call schedule
    half = STEP_DIM // 2
    freqs = np.exp(np.arange(half) * -(math.log(10000.0) / (half - 1)))
    temb_np = np.zeros((len(steps), STEP_DIM), np.float32)
    for row, s in enumerate(steps):
        e = s * freqs
        temb_np[row, :half] = np.sin(e)
        temb_np[row, half:] = np.cos(e)

    args = [z, noise_target, chain_noise, jnp.asarray(temb_np),
            params["mlp_w1"], params["mlp_b1"], params["mlp_w2"], params["mlp_b2"],
            params["proj_wz"], params["proj_wt"], params["proj_b"],
            params["fft_scalars"]]
    for lyr in params["fft_layers"]:
        args += [lyr["norm1_g"], lyr["norm1_b"], lyr["conv1_w"], lyr["conv1_b"],
                 lyr["conv2_w"], lyr["norm2_g"], lyr["norm2_b"]]
    in_specs = [pl.BlockSpec(memory_space=VMEM)] * len(args)
    in_specs[11] = pl.BlockSpec(memory_space=SMEM)          # attention / bias scalars

    return pl.pallas_call(
        _make_diffusion_kernel(t, SCHED, NUM_BLOCKS),
        out_shape=(jax.ShapeDtypeStruct((B, STYLE_DIM), jnp.float32),
                   jax.ShapeDtypeStruct((B, STYLE_DIM), jnp.float32)),
        in_specs=in_specs,
        out_specs=(pl.BlockSpec(memory_space=VMEM), pl.BlockSpec(memory_space=VMEM)),
    )(*args)


# ----------------------------- parameter construction (host) -----------------------------
def _build_conv_mats(wc, bc, gamma, beta, batch, h, w_sp, c_in, c_out, time_major):
    """Fold Conv2d(3x3,s=2,p=1) + BatchNorm(eval) into row-select (P) and weight (M) mats."""
    ho, wo = (h - 1) // 2 + 1, (w_sp - 1) // 2 + 1
    scale = gamma / np.sqrt(1.0 + BN_EPS)                   # running stats: mean=0, var=1
    wf = wc * scale[:, None, None, None]                    # [Co, Ci, 3, 3]
    bf = bc * scale + beta
    p_mat = np.zeros((3, batch * ho, batch * h), np.float32)
    for di in range(3):
        for bb in range(batch):
            for i in range(ho):
                hh = 2 * i + di - 1
                if 0 <= hh < h:
                    r = (i * batch + bb) if time_major else (bb * ho + i)
                    p_mat[di, r, bb * h + hh] = 1.0
    m_mat = np.zeros((3, w_sp * c_in, wo * c_out), np.float32)
    for di in range(3):
        for j in range(wo):
            for dj in range(3):
                ww = 2 * j + dj - 1
                if 0 <= ww < w_sp:
                    m_mat[di, ww * c_in:(ww + 1) * c_in, j * c_out:(j + 1) * c_out] += \
                        wf[:, :, di, dj].T
    b_row = np.tile(bf, wo)[None, :].astype(np.float32)
    return p_mat, m_mat, b_row, ho, wo


def init_params(key):
    keys = iter(jax.random.split(key, 64))

    def nrm(shape, fan_in):
        arr = np.asarray(jax.random.normal(next(keys), shape, jnp.float32))
        return (arr / float(np.sqrt(fan_in))).astype(np.float32)

    params = {}

    # --- ReferenceEncoder conv stack (BN folded, eval mode) ---
    conv_mats = []
    h, w_sp = FRAMES, NUM_MEL
    for l in range(NUM_CONV):
        cin, cout = CONV_FILTERS[l], CONV_FILTERS[l + 1]
        wc = nrm((cout, cin, 3, 3), cin * 9)
        bc = nrm((cout,), cin * 9)
        gamma = 1.0 + 0.1 * np.asarray(jax.random.normal(next(keys), (cout,), jnp.float32))
        beta = 0.1 * np.asarray(jax.random.normal(next(keys), (cout,), jnp.float32))
        p_mat, m_mat, b_row, h, w_sp = _build_conv_mats(
            wc, bc, gamma, beta, B, h, w_sp, cin, cout,
            time_major=(l == NUM_CONV - 1))                 # last layer -> time-major rows
        conv_mats.append((jnp.asarray(p_mat), jnp.asarray(m_mat), jnp.asarray(b_row)))
    params["conv_mats"] = conv_mats

    # --- GRU (GRU_IN -> STYLE_DIM), PyTorch gate order r|z|n, gates padded 96 -> 128 lanes ---
    hs = STYLE_DIM
    w_ih = nrm((3 * hs, GRU_IN), GRU_IN)
    w_hh = nrm((3 * hs, hs), hs)
    b_ih = nrm((3 * hs,), GRU_IN)
    b_hh = nrm((3 * hs,), hs)
    # permute GRU input features from PyTorch order (c*PCH + w) to conv-kernel order (w*128 + c)
    perm = np.asarray([c * PCH + w for w in range(PCH) for c in range(128)], np.int64)
    wih = np.zeros((GRU_IN, GATES_PAD), np.float32)
    wih[:, :3 * hs] = w_ih.T[perm, :]
    whh = np.zeros((hs, GATES_PAD), np.float32)
    whh[:, :3 * hs] = w_hh.T
    bi = np.zeros((1, GATES_PAD), np.float32)
    bi[0, :3 * hs] = b_ih
    bh = np.zeros((1, GATES_PAD), np.float32)
    bh[0, :3 * hs] = b_hh
    params["gru"] = {"wih": jnp.asarray(wih), "bi": jnp.asarray(bi),
                     "whh": jnp.asarray(whh), "bh": jnp.asarray(bh)}

    # --- DiffNet: sinusoidal-step MLP + input projection (split so no in-kernel concat) ---
    params["mlp_w1"] = jnp.asarray(nrm((STEP_DIM, 4 * STEP_DIM), STEP_DIM))
    params["mlp_b1"] = jnp.asarray(nrm((1, 4 * STEP_DIM), STEP_DIM))
    params["mlp_w2"] = jnp.asarray(nrm((4 * STEP_DIM, STEP_DIM), 4 * STEP_DIM))
    params["mlp_b2"] = jnp.asarray(nrm((1, STEP_DIM), 4 * STEP_DIM))
    proj_w = nrm((STYLE_DIM + STEP_DIM, STYLE_DIM), STYLE_DIM + STEP_DIM)
    params["proj_wz"] = jnp.asarray(proj_w[:STYLE_DIM, :])
    params["proj_wt"] = jnp.asarray(proj_w[STYLE_DIM:, :])
    params["proj_b"] = jnp.asarray(nrm((1, STYLE_DIM), STYLE_DIM + STEP_DIM))

    # --- FFTransformer layers (embed_dim = 1) ---
    scalars = np.zeros((NUM_BLOCKS, 9), np.float32)
    fft_layers = []
    for l in range(NUM_BLOCKS):
        inproj_w = nrm((3,), 1.0)            # [wq, wk, wv]
        inproj_b = nrm((3,), 1.0)            # [bq, bk, bv]
        out_w = nrm((1,), 1.0)
        out_b = nrm((1,), 1.0)
        conv1_w = nrm((HIDDEN_FFN, 1, 3), 3)
        conv1_b = nrm((HIDDEN_FFN,), 3)
        conv2_w = nrm((1, HIDDEN_FFN, 3), 3 * HIDDEN_FFN)
        conv2_b = nrm((1,), 3 * HIDDEN_FFN)
        scalars[l, 0:3] = inproj_w
        scalars[l, 3:6] = inproj_b
        scalars[l, 6] = out_w[0]
        scalars[l, 7] = out_b[0]
        scalars[l, 8] = conv2_b[0]

        def _ln_pair():
            g = 1.0 + 0.1 * np.asarray(jax.random.normal(next(keys), (STYLE_DIM,), jnp.float32))
            b = 0.1 * np.asarray(jax.random.normal(next(keys), (STYLE_DIM,), jnp.float32))
            return jnp.asarray(g[None, :].astype(np.float32)), \
                jnp.asarray(b[None, :].astype(np.float32))

        n1g, n1b = _ln_pair()
        n2g, n2b = _ln_pair()
        fft_layers.append({
            "norm1_g": n1g, "norm1_b": n1b,
            "norm2_g": n2g, "norm2_b": n2b,
            "conv1_w": jnp.asarray(conv1_w[:, 0, :].T),     # [3, H] taps (i-1, i, i+1)
            "conv1_b": jnp.asarray(conv1_b[None, :]),       # [1, H]
            "conv2_w": jnp.asarray(conv2_w[0].T),           # [3, H]
        })
    params["fft_scalars"] = jnp.asarray(scalars)
    params["fft_layers"] = fft_layers
    return params


# ----------------------------- top-level forward -----------------------------
@partial(jax.jit, static_argnames=("t",))
def diff_style_forward(mel, params, key, t):
    # Kernel 1: fused ReferenceEncoder
    z = encoder_forward(mel, params)                        # [B, STYLE_DIM]
    key_n, key_c = jax.random.split(key)
    noise_target = jax.random.normal(key_n, (B, STYLE_DIM), jnp.float32)
    chain_noise = jax.random.normal(key_c, (max(t, 1), B, STYLE_DIM), jnp.float32)
    # Kernel 2: fused q_sample + denoiser + unrolled reverse p_sample chain
    noise_pred, style = diffusion_forward(z, noise_target, chain_noise, params, t)
    return {
        "ref_enc_style": z[:, None, :],
        "noises": {"noise_pred": noise_pred[:, None, :],
                   "noise_target": noise_target[:, None, :]},
        "style": style[:, None, :],
    }


if __name__ == "__main__":
    key = jax.random.PRNGKey(0)
    kp, kx, kf = jax.random.split(key, 3)
    params = init_params(kp)
    mel = jax.random.normal(kx, (B, FRAMES, NUM_MEL), jnp.float32)

    # Random diffusion step: host-side static int (mirrors PyTorch `.item()`); sampled before
    # any device work so there is no mid-forward host sync, and the whole chain is unrolled
    # inside one kernel for this t.
    t = int(np.random.default_rng(0).integers(0, NUM_TIMESTEPS))

    ret = diff_style_forward(mel, params, kf, t=t)

    jax.block_until_ready(ret["ref_enc_style"])
    jax.block_until_ready(ret["noises"]["noise_pred"])
    jax.block_until_ready(ret["style"])
    assert ret["ref_enc_style"].shape == (B, 1, STYLE_DIM)
    assert ret["noises"]["noise_pred"].shape == (B, 1, STYLE_DIM)
    assert ret["noises"]["noise_target"].shape == (B, 1, STYLE_DIM)
    assert ret["style"].shape == (B, 1, STYLE_DIM)
    print("KERNEL_OK")
</pallas_src>

<mosaic_0001>
module attributes {stable_mosaic.version = 11 : i64} {
  func.func @kernel(%arg0: memref<64x16xf32, #tpu.memory_space<vmem>>, %arg1: memref<3x32x64xf32, #tpu.memory_space<vmem>>, %arg2: memref<3x16x256xf32, #tpu.memory_space<vmem>>, %arg3: memref<1x256xf32, #tpu.memory_space<vmem>>, %arg4: memref<3x16x32xf32, #tpu.memory_space<vmem>>, %arg5: memref<3x256x128xf32, #tpu.memory_space<vmem>>, %arg6: memref<1x128xf32, #tpu.memory_space<vmem>>, %arg7: memref<3x8x16xf32, #tpu.memory_space<vmem>>, %arg8: memref<3x128x128xf32, #tpu.memory_space<vmem>>, %arg9: memref<1x128xf32, #tpu.memory_space<vmem>>, %arg10: memref<3x4x8xf32, #tpu.memory_space<vmem>>, %arg11: memref<3x128x64xf32, #tpu.memory_space<vmem>>, %arg12: memref<1x64xf32, #tpu.memory_space<vmem>>, %arg13: memref<3x2x4xf32, #tpu.memory_space<vmem>>, %arg14: memref<3x64x128xf32, #tpu.memory_space<vmem>>, %arg15: memref<1x128xf32, #tpu.memory_space<vmem>>, %arg16: memref<3x2x2xf32, #tpu.memory_space<vmem>>, %arg17: memref<3x128x128xf32, #tpu.memory_space<vmem>>, %arg18: memref<1x128xf32, #tpu.memory_space<vmem>>, %arg19: memref<128x128xf32, #tpu.memory_space<vmem>>, %arg20: memref<1x128xf32, #tpu.memory_space<vmem>>, %arg21: memref<32x128xf32, #tpu.memory_space<vmem>>, %arg22: memref<1x128xf32, #tpu.memory_space<vmem>>, %arg23: memref<2x32xf32, #tpu.memory_space<vmem>>) attributes {dimension_semantics = [], scalar_prefetch = 0 : i64, scratch_operands = 0 : i64, tpu.core_type = #tpu.core_type<tc>} {
    %c0 = arith.constant 0 : index
    %c0_0 = arith.constant 0 : index
    %0 = vector.load %arg0[%c0, %c0_0] : memref<64x16xf32, #tpu.memory_space<vmem>>, vector<64x16xf32>
    %c0_1 = arith.constant 0 : index
    %c0_2 = arith.constant 0 : index
    %1 = vector.load %arg3[%c0_1, %c0_2] : memref<1x256xf32, #tpu.memory_space<vmem>>, vector<1x256xf32>
    %c0_3 = arith.constant 0 : index
    %c0_4 = arith.constant 0 : index
    %c0_5 = arith.constant 0 : index
    %2 = vector.load %arg1[%c0_3, %c0_4, %c0_5] : memref<3x32x64xf32, #tpu.memory_space<vmem>>, vector<1x32x64xf32>
    %3 = vector.shape_cast %2 : vector<1x32x64xf32> to vector<32x64xf32>
    %cst = arith.constant dense<0.000000e+00> : vector<32x16xf32>
    %4 = tpu.matmul %3, %0, %cst {dimension_numbers = #tpu.dot_dimension_numbers<[1], [0], [0], [1], [0, 0, 1, 1], [], []>} : vector<32x64xf32>, vector<64x16xf32>, vector<32x16xf32> -> vector<32x16xf32>
    %c0_6 = arith.constant 0 : index
    %c0_7 = arith.constant 0 : index
    %c0_8 = arith.constant 0 : index
    %5 = vector.load %arg2[%c0_6, %c0_7, %c0_8] : memref<3x16x256xf32, #tpu.memory_space<vmem>>, vector<1x16x256xf32>
    %6 = vector.shape_cast %5 : vector<1x16x256xf32> to vector<16x256xf32>
    %cst_9 = arith.constant dense<0.000000e+00> : vector<32x256xf32>
    %7 = tpu.matmul %4, %6, %cst_9 {dimension_numbers = #tpu.dot_dimension_numbers<[1], [0], [0], [1], [0, 0, 1, 1], [], []>} : vector<32x16xf32>, vector<16x256xf32>, vector<32x256xf32> -> vector<32x256xf32>
    %c1 = arith.constant 1 : index
    %c0_10 = arith.constant 0 : index
    %c0_11 = arith.constant 0 : index
    %8 = vector.load %arg1[%c1, %c0_10, %c0_11] : memref<3x32x64xf32, #tpu.memory_space<vmem>>, vector<1x32x64xf32>
    %9 = vector.shape_cast %8 : vector<1x32x64xf32> to vector<32x64xf32>
    %cst_12 = arith.constant dense<0.000000e+00> : vector<32x16xf32>
    %10 = tpu.matmul %9, %0, %cst_12 {dimension_numbers = #tpu.dot_dimension_numbers<[1], [0], [0], [1], [0, 0, 1, 1], [], []>} : vector<32x64xf32>, vector<64x16xf32>, vector<32x16xf32> -> vector<32x16xf32>
    %c1_13 = arith.constant 1 : index
    %c0_14 = arith.constant 0 : index
    %c0_15 = arith.constant 0 : index
    %11 = vector.load %arg2[%c1_13, %c0_14, %c0_15] : memref<3x16x256xf32, #tpu.memory_space<vmem>>, vector<1x16x256xf32>
    %12 = vector.shape_cast %11 : vector<1x16x256xf32> to vector<16x256xf32>
    %cst_16 = arith.constant dense<0.000000e+00> : vector<32x256xf32>
    %13 = tpu.matmul %10, %12, %cst_16 {dimension_numbers = #tpu.dot_dimension_numbers<[1], [0], [0], [1], [0, 0, 1, 1], [], []>} : vector<32x16xf32>, vector<16x256xf32>, vector<32x256xf32> -> vector<32x256xf32>
    %14 = arith.addf %7, %13 : vector<32x256xf32>
    %c2 = arith.constant 2 : index
    %c0_17 = arith.constant 0 : index
    %c0_18 = arith.constant 0 : index
    %15 = vector.load %arg1[%c2, %c0_17, %c0_18] : memref<3x32x64xf32, #tpu.memory_space<vmem>>, vector<1x32x64xf32>
    %16 = vector.shape_cast %15 : vector<1x32x64xf32> to vector<32x64xf32>
    %cst_19 = arith.constant dense<0.000000e+00> : vector<32x16xf32>
    %17 = tpu.matmul %16, %0, %cst_19 {dimension_numbers = #tpu.dot_dimension_numbers<[1], [0], [0], [1], [0, 0, 1, 1], [], []>} : vector<32x64xf32>, vector<64x16xf32>, vector<32x16xf32> -> vector<32x16xf32>
    %c2_20 = arith.constant 2 : index
    %c0_21 = arith.constant 0 : index
    %c0_22 = arith.constant 0 : index
    %18 = vector.load %arg2[%c2_20, %c0_21, %c0_22] : memref<3x16x256xf32, #tpu.memory_space<vmem>>, vector<1x16x256xf32>
    %19 = vector.shape_cast %18 : vector<1x16x256xf32> to vector<16x256xf32>
    %cst_23 = arith.constant dense<0.000000e+00> : vector<32x256xf32>
    %20 = tpu.matmul %17, %19, %cst_23 {dimension_numbers = #tpu.dot_dimension_numbers<[1], [0], [0], [1], [0, 0, 1, 1], [], []>} : vector<32x16xf32>, vector<16x256xf32>, vector<32x256xf32> -> vector<32x256xf32>
    %21 = arith.addf %14, %20 : vector<32x256xf32>
    %22 = vector.broadcast %1 : vector<1x256xf32> to vector<32x256xf32>
    %23 = arith.addf %21, %22 : vector<32x256xf32>
    %cst_24 = arith.constant 0.000000e+00 : f32
    %24 = vector.broadcast %cst_24 : f32 to vector<32x256xf32>
    %25 = arith.maximumf %23, %24 : vector<32x256xf32>
    %c0_25 = arith.constant 0 : index
    %c0_26 = arith.constant 0 : index
    %26 = vector.load %arg6[%c0_25, %c0_26] : memref<1x128xf32, #tpu.memory_space<vmem>>, vector<1x128xf32>
    %c0_27 = arith.constant 0 : index
    %c0_28 = arith.constant 0 : index
    %c0_29 = arith.constant 0 : index
    %27 = vector.load %arg4[%c0_27, %c0_28, %c0_29] : memref<3x16x32xf32, #tpu.memory_space<vmem>>, vector<1x16x32xf32>
    %28 = vector.shape_cast %27 : vector<1x16x32xf32> to vector<16x32xf32>
    %cst_30 = arith.constant dense<0.000000e+00> : vector<16x256xf32>
    %29 = tpu.matmul %28, %25, %cst_30 {dimension_numbers = #tpu.dot_dimension_numbers<[1], [0], [0], [1], [0, 0, 1, 1], [], []>} : vector<16x32xf32>, vector<32x256xf32>, vector<16x256xf32> -> vector<16x256xf32>
    %c0_31 = arith.constant 0 : index
    %c0_32 = arith.constant 0 : index
    %c0_33 = arith.constant 0 : index
    %30 = vector.load %arg5[%c0_31, %c0_32, %c0_33] : memref<3x256x128xf32, #tpu.memory_space<vmem>>, vector<1x256x128xf32>
    %31 = vector.shape_cast %30 : vector<1x256x128xf32> to vector<256x128xf32>
    %cst_34 = arith.constant dense<0.000000e+00> : vector<16x128xf32>
    %32 = tpu.matmul %29, %31, %cst_34 {dimension_numbers = #tpu.dot_dimension_numbers<[1], [0], [0], [1], [0, 0, 1, 1], [], []>} : vector<16x256xf32>, vector<256x128xf32>, vector<16x128xf32> -> vector<16x128xf32>
    %c1_35 = arith.constant 1 : index
    %c0_36 = arith.constant 0 : index
    %c0_37 = arith.constant 0 : index
    %33 = vector.load %arg4[%c1_35, %c0_36, %c0_37] : memref<3x16x32xf32, #tpu.memory_space<vmem>>, vector<1x16x32xf32>
    %34 = vector.shape_cast %33 : vector<1x16x32xf32> to vector<16x32xf32>
    %cst_38 = arith.constant dense<0.000000e+00> : vector<16x256xf32>
    %35 = tpu.matmul %34, %25, %cst_38 {dimension_numbers = #tpu.dot_dimension_numbers<[1], [0], [0], [1], [0, 0, 1, 1], [], []>} : vector<16x32xf32>, vector<32x256xf32>, vector<16x256xf32> -> vector<16x256xf32>
    %c1_39 = arith.constant 1 : index
    %c0_40 = arith.constant 0 : index
    %c0_41 = arith.constant 0 : index
    %36 = vector.load %arg5[%c1_39, %c0_40, %c0_41] : memref<3x256x128xf32, #tpu.memory_space<vmem>>, vector<1x256x128xf32>
    %37 = vector.shape_cast %36 : vector<1x256x128xf32> to vector<256x128xf32>
    %cst_42 = arith.constant dense<0.000000e+00> : vector<16x128xf32>
    %38 = tpu.matmul %35, %37, %cst_42 {dimension_numbers = #tpu.dot_dimension_numbers<[1], [0], [0], [1], [0, 0, 1, 1], [], []>} : vector<16x256xf32>, vector<256x128xf32>, vector<16x128xf32> -> vector<16x128xf32>
    %39 = arith.addf %32, %38 : vector<16x128xf32>
    %c2_43 = arith.constant 2 : index
    %c0_44 = arith.constant 0 : index
    %c0_45 = arith.constant 0 : index
    %40 = vector.load %arg4[%c2_43, %c0_44, %c0_45] : memref<3x16x32xf32, #tpu.memory_space<vmem>>, vector<1x16x32xf32>
    %41 = vector.shape_cast %40 : vector<1x16x32xf32> to vector<16x32xf32>
    %cst_46 = arith.constant dense<0.000000e+00> : vector<16x256xf32>
    %42 = tpu.matmul %41, %25, %cst_46 {dimension_numbers = #tpu.dot_dimension_numbers<[1], [0], [0], [1], [0, 0, 1, 1], [], []>} : vector<16x32xf32>, vector<32x256xf32>, vector<16x256xf32> -> vector<16x256xf32>
    %c2_47 = arith.constant 2 : index
    %c0_48 = arith.constant 0 : index
    %c0_49 = arith.constant 0 : index
    %43 = vector.load %arg5[%c2_47, %c0_48, %c0_49] : memref<3x256x128xf32, #tpu.memory_space<vmem>>, vector<1x256x128xf32>
    %44 = vector.shape_cast %43 : vector<1x256x128xf32> to vector<256x128xf32>
    %cst_50 = arith.constant dense<0.000000e+00> : vector<16x128xf32>
    %45 = tpu.matmul %42, %44, %cst_50 {dimension_numbers = #tpu.dot_dimension_numbers<[1], [0], [0], [1], [0, 0, 1, 1], [], []>} : vector<16x256xf32>, vector<256x128xf32>, vector<16x128xf32> -> vector<16x128xf32>
    %46 = arith.addf %39, %45 : vector<16x128xf32>
    %47 = vector.broadcast %26 : vector<1x128xf32> to vector<16x128xf32>
    %48 = arith.addf %46, %47 : vector<16x128xf32>
    %cst_51 = arith.constant 0.000000e+00 : f32
    %49 = vector.broadcast %cst_51 : f32 to vector<16x128xf32>
    %50 = arith.maximumf %48, %49 : vector<16x128xf32>
    %c0_52 = arith.constant 0 : index
    %c0_53 = arith.constant 0 : index
    %51 = vector.load %arg9[%c0_52, %c0_53] : memref<1x128xf32, #tpu.memory_space<vmem>>, vector<1x128xf32>
    %c0_54 = arith.constant 0 : index
    %c0_55 = arith.constant 0 : index
    %c0_56 = arith.constant 0 : index
    %52 = vector.load %arg7[%c0_54, %c0_55, %c0_56] : memref<3x8x16xf32, #tpu.memory_space<vmem>>, vector<1x8x16xf32>
    %53 = vector.shape_cast %52 : vector<1x8x16xf32> to vector<8x16xf32>
    %cst_57 = arith.constant dense<0.000000e+00> : vector<8x128xf32>
    %54 = tpu.matmul %53, %50, %cst_57 {dimension_numbers = #tpu.dot_dimension_numbers<[1], [0], [0], [1], [0, 0, 1, 1], [], []>} : vector<8x16xf32>, vector<16x128xf32>, vector<8x128xf32> -> vector<8x128xf32>
    %c0_58 = arith.constant 0 : index
    %c0_59 = arith.constant 0 : index
    %c0_60 = arith.constant 0 : index
    %55 = vector.load %arg8[%c0_58, %c0_59, %c0_60] : memref<3x128x128xf32, #tpu.memory_space<vmem>>, vector<1x128x128xf32>
    %56 = vector.shape_cast %55 : vector<1x128x128xf32> to vector<128x128xf32>
    %cst_61 = arith.constant dense<0.000000e+00> : vector<8x128xf32>
    %57 = tpu.matmul %54, %56, %cst_61 {dimension_numbers = #tpu.dot_dimension_numbers<[1], [0], [0], [1], [0, 0, 1, 1], [], []>} : vector<8x128xf32>, vector<128x128xf32>, vector<8x128xf32> -> vector<8x128xf32>
    %c1_62 = arith.constant 1 : index
    %c0_63 = arith.constant 0 : index
    %c0_64 = arith.constant 0 : index
    %58 = vector.load %arg7[%c1_62, %c0_63, %c0_64] : memref<3x8x16xf32, #tpu.memory_space<vmem>>, vector<1x8x16xf32>
    %59 = vector.shape_cast %58 : vector<1x8x16xf32> to vector<8x16xf32>
    %cst_65 = arith.constant dense<0.000000e+00> : vector<8x128xf32>
    %60 = tpu.matmul %59, %50, %cst_65 {dimension_numbers = #tpu.dot_dimension_numbers<[1], [0], [0], [1], [0, 0, 1, 1], [], []>} : vector<8x16xf32>, vector<16x128xf32>, vector<8x128xf32> -> vector<8x128xf32>
    %c1_66 = arith.constant 1 : index
    %c0_67 = arith.constant 0 : index
    %c0_68 = arith.constant 0 : index
    %61 = vector.load %arg8[%c1_66, %c0_67, %c0_68] : memref<3x128x128xf32, #tpu.memory_space<vmem>>, vector<1x128x128xf32>
    %62 = vector.shape_cast %61 : vector<1x128x128xf32> to vector<128x128xf32>
    %cst_69 = arith.constant dense<0.000000e+00> : vector<8x128xf32>
    %63 = tpu.matmul %60, %62, %cst_69 {dimension_numbers = #tpu.dot_dimension_numbers<[1], [0], [0], [1], [0, 0, 1, 1], [], []>} : vector<8x128xf32>, vector<128x128xf32>, vector<8x128xf32> -> vector<8x128xf32>
    %64 = arith.addf %57, %63 : vector<8x128xf32>
    %c2_70 = arith.constant 2 : index
    %c0_71 = arith.constant 0 : index
    %c0_72 = arith.constant 0 : index
    %65 = vector.load %arg7[%c2_70, %c0_71, %c0_72] : memref<3x8x16xf32, #tpu.memory_space<vmem>>, vector<1x8x16xf32>
    %66 = vector.shape_cast %65 : vector<1x8x16xf32> to vector<8x16xf32>
    %cst_73 = arith.constant dense<0.000000e+00> : vector<8x128xf32>
    %67 = tpu.matmul %66, %50, %cst_73 {dimension_numbers = #tpu.dot_dimension_numbers<[1], [0], [0], [1], [0, 0, 1, 1], [], []>} : vector<8x16xf32>, vector<16x128xf32>, vector<8x128xf32> -> vector<8x128xf32>
    %c2_74 = arith.constant 2 : index
    %c0_75 = arith.constant 0 : index
    %c0_76 = arith.constant 0 : index
    %68 = vector.load %arg8[%c2_74, %c0_75, %c0_76] : memref<3x128x128xf32, #tpu.memory_space<vmem>>, vector<1x128x128xf32>
    %69 = vector.shape_cast %68 : vector<1x128x128xf32> to vector<128x128xf32>
    %cst_77 = arith.constant dense<0.000000e+00> : vector<8x128xf32>
    %70 = tpu.matmul %67, %69, %cst_77 {dimension_numbers = #tpu.dot_dimension_numbers<[1], [0], [0], [1], [0, 0, 1, 1], [], []>} : vector<8x128xf32>, vector<128x128xf32>, vector<8x128xf32> -> vector<8x128xf32>
    %71 = arith.addf %64, %70 : vector<8x128xf32>
    %72 = vector.broadcast %51 : vector<1x128xf32> to vector<8x128xf32>
    %73 = arith.addf %71, %72 : vector<8x128xf32>
    %cst_78 = arith.constant 0.000000e+00 : f32
    %74 = vector.broadcast %cst_78 : f32 to vector<8x128xf32>
    %75 = arith.maximumf %73, %74 : vector<8x128xf32>
    %c0_79 = arith.constant 0 : index
    %c0_80 = arith.constant 0 : index
    %76 = vector.load %arg12[%c0_79, %c0_80] : memref<1x64xf32, #tpu.memory_space<vmem>>, vector<1x64xf32>
    %c0_81 = arith.constant 0 : index
    %c0_82 = arith.constant 0 : index
    %c0_83 = arith.constant 0 : index
    %77 = vector.load %arg10[%c0_81, %c0_82, %c0_83] : memref<3x4x8xf32, #tpu.memory_space<vmem>>, vector<1x4x8xf32>
    %78 = vector.shape_cast %77 : vector<1x4x8xf32> to vector<4x8xf32>
    %cst_84 = arith.constant dense<0.000000e+00> : vector<4x128xf32>
    %79 = tpu.matmul %78, %75, %cst_84 {dimension_numbers = #tpu.dot_dimension_numbers<[1], [0], [0], [1], [0, 0, 1, 1], [], []>} : vector<4x8xf32>, vector<8x128xf32>, vector<4x128xf32> -> vector<4x128xf32>
    %c0_85 = arith.constant 0 : index
    %c0_86 = arith.constant 0 : index
    %c0_87 = arith.constant 0 : index
    %80 = vector.load %arg11[%c0_85, %c0_86, %c0_87] : memref<3x128x64xf32, #tpu.memory_space<vmem>>, vector<1x128x64xf32>
    %81 = vector.shape_cast %80 : vector<1x128x64xf32> to vector<128x64xf32>
    %cst_88 = arith.constant dense<0.000000e+00> : vector<4x64xf32>
    %82 = tpu.matmul %79, %81, %cst_88 {dimension_numbers = #tpu.dot_dimension_numbers<[1], [0], [0], [1], [0, 0, 1, 1], [], []>} : vector<4x128xf32>, vector<128x64xf32>, vector<4x64xf32> -> vector<4x64xf32>
    %c1_89 = arith.constant 1 : index
    %c0_90 = arith.constant 0 : index
    %c0_91 = arith.constant 0 : index
    %83 = vector.load %arg10[%c1_89, %c0_90, %c0_91] : memref<3x4x8xf32, #tpu.memory_space<vmem>>, vector<1x4x8xf32>
    %84 = vector.shape_cast %83 : vector<1x4x8xf32> to vector<4x8xf32>
    %cst_92 = arith.constant dense<0.000000e+00> : vector<4x128xf32>
    %85 = tpu.matmul %84, %75, %cst_92 {dimension_numbers = #tpu.dot_dimension_numbers<[1], [0], [0], [1], [0, 0, 1, 1], [], []>} : vector<4x8xf32>, vector<8x128xf32>, vector<4x128xf32> -> vector<4x128xf32>
    %c1_93 = arith.constant 1 : index
    %c0_94 = arith.constant 0 : index
    %c0_95 = arith.constant 0 : index
    %86 = vector.load %arg11[%c1_93, %c0_94, %c0_95] : memref<3x128x64xf32, #tpu.memory_space<vmem>>, vector<1x128x64xf32>
    %87 = vector.shape_cast %86 : vector<1x128x64xf32> to vector<128x64xf32>
    %cst_96 = arith.constant dense<0.000000e+00> : vector<4x64xf32>
    %88 = tpu.matmul %85, %87, %cst_96 {dimension_numbers = #tpu.dot_dimension_numbers<[1], [0], [0], [1], [0, 0, 1, 1], [], []>} : vector<4x128xf32>, vector<128x64xf32>, vector<4x64xf32> -> vector<4x64xf32>
    %89 = arith.addf %82, %88 : vector<4x64xf32>
    %c2_97 = arith.constant 2 : index
    %c0_98 = arith.constant 0 : index
    %c0_99 = arith.constant 0 : index
    %90 = vector.load %arg10[%c2_97, %c0_98, %c0_99] : memref<3x4x8xf32, #tpu.memory_space<vmem>>, vector<1x4x8xf32>
    %91 = vector.shape_cast %90 : vector<1x4x8xf32> to vector<4x8xf32>
    %cst_100 = arith.constant dense<0.000000e+00> : vector<4x128xf32>
    %92 = tpu.matmul %91, %75, %cst_100 {dimension_numbers = #tpu.dot_dimension_numbers<[1], [0], [0], [1], [0, 0, 1, 1], [], []>} : vector<4x8xf32>, vector<8x128xf32>, vector<4x128xf32> -> vector<4x128xf32>
    %c2_101 = arith.constant 2 : index
    %c0_102 = arith.constant 0 : index
    %c0_103 = arith.constant 0 : index
    %93 = vector.load %arg11[%c2_101, %c0_102, %c0_103] : memref<3x128x64xf32, #tpu.memory_space<vmem>>, vector<1x128x64xf32>
    %94 = vector.shape_cast %93 : vector<1x128x64xf32> to vector<128x64xf32>
    %cst_104 = arith.constant dense<0.000000e+00> : vector<4x64xf32>
    %95 = tpu.matmul %92, %94, %cst_104 {dimension_numbers = #tpu.dot_dimension_numbers<[1], [0], [0], [1], [0, 0, 1, 1], [], []>} : vector<4x128xf32>, vector<128x64xf32>, vector<4x64xf32> -> vector<4x64xf32>
    %96 = arith.addf %89, %95 : vector<4x64xf32>
    %97 = vector.broadcast %76 : vector<1x64xf32> to vector<4x64xf32>
    %98 = arith.addf %96, %97 : vector<4x64xf32>
    %cst_105 = arith.constant 0.000000e+00 : f32
    %99 = vector.broadcast %cst_105 : f32 to vector<4x64xf32>
    %100 = arith.maximumf %98, %99 : vector<4x64xf32>
    %c0_106 = arith.constant 0 : index
    %c0_107 = arith.constant 0 : index
    %101 = vector.load %arg15[%c0_106, %c0_107] : memref<1x128xf32, #tpu.memory_space<vmem>>, vector<1x128xf32>
    %c0_108 = arith.constant 0 : index
    %c0_109 = arith.constant 0 : index
    %c0_110 = arith.constant 0 : index
    %102 = vector.load %arg13[%c0_108, %c0_109, %c0_110] : memref<3x2x4xf32, #tpu.memory_space<vmem>>, vector<1x2x4xf32>
    %103 = vector.shape_cast %102 : vector<1x2x4xf32> to vector<2x4xf32>
    %cst_111 = arith.constant dense<0.000000e+00> : vector<2x64xf32>
    %104 = tpu.matmul %103, %100, %cst_111 {dimension_numbers = #tpu.dot_dimension_numbers<[1], [0], [0], [1], [0, 0, 1, 1], [], []>} : vector<2x4xf32>, vector<4x64xf32>, vector<2x64xf32> -> vector<2x64xf32>
    %c0_112 = arith.constant 0 : index
    %c0_113 = arith.constant 0 : index
    %c0_114 = arith.constant 0 : index
    %105 = vector.load %arg14[%c0_112, %c0_113, %c0_114] : memref<3x64x128xf32, #tpu.memory_space<vmem>>, vector<1x64x128xf32>
    %106 = vector.shape_cast %105 : vector<1x64x128xf32> to vector<64x128xf32>
    %cst_115 = arith.constant dense<0.000000e+00> : vector<2x128xf32>
    %107 = tpu.matmul %104, %106, %cst_115 {dimension_numbers = #tpu.dot_dimension_numbers<[1], [0], [0], [1], [0, 0, 1, 1], [], []>} : vector<2x64xf32>, vector<64x128xf32>, vector<2x128xf32> -> vector<2x128xf32>
    %c1_116 = arith.constant 1 : index
    %c0_117 = arith.constant 0 : index
    %c0_118 = arith.constant 0 : index
    %108 = vector.load %arg13[%c1_116, %c0_117, %c0_118] : memref<3x2x4xf32, #tpu.memory_space<vmem>>, vector<1x2x4xf32>
    %109 = vector.shape_cast %108 : vector<1x2x4xf32> to vector<2x4xf32>
    %cst_119 = arith.constant dense<0.000000e+00> : vector<2x64xf32>
    %110 = tpu.matmul %109, %100, %cst_119 {dimension_numbers = #tpu.dot_dimension_numbers<[1], [0], [0], [1], [0, 0, 1, 1], [], []>} : vector<2x4xf32>, vector<4x64xf32>, vector<2x64xf32> -> vector<2x64xf32>
    %c1_120 = arith.constant 1 : index
    %c0_121 = arith.constant 0 : index
    %c0_122 = arith.constant 0 : index
    %111 = vector.load %arg14[%c1_120, %c0_121, %c0_122] : memref<3x64x128xf32, #tpu.memory_space<vmem>>, vector<1x64x128xf32>
    %112 = vector.shape_cast %111 : vector<1x64x128xf32> to vector<64x128xf32>
    %cst_123 = arith.constant dense<0.000000e+00> : vector<2x128xf32>
    %113 = tpu.matmul %110, %112, %cst_123 {dimension_numbers = #tpu.dot_dimension_numbers<[1], [0], [0], [1], [0, 0, 1, 1], [], []>} : vector<2x64xf32>, vector<64x128xf32>, vector<2x128xf32> -> vector<2x128xf32>
    %114 = arith.addf %107, %113 : vector<2x128xf32>
    %c2_124 = arith.constant 2 : index
    %c0_125 = arith.constant 0 : index
    %c0_126 = arith.constant 0 : index
    %115 = vector.load %arg13[%c2_124, %c0_125, %c0_126] : memref<3x2x4xf32, #tpu.memory_space<vmem>>, vector<1x2x4xf32>
    %116 = vector.shape_cast %115 : vector<1x2x4xf32> to vector<2x4xf32>
    %cst_127 = arith.constant dense<0.000000e+00> : vector<2x64xf32>
    %117 = tpu.matmul %116, %100, %cst_127 {dimension_numbers = #tpu.dot_dimension_numbers<[1], [0], [0], [1], [0, 0, 1, 1], [], []>} : vector<2x4xf32>, vector<4x64xf32>, vector<2x64xf32> -> vector<2x64xf32>
    %c2_128 = arith.constant 2 : index
    %c0_129 = arith.constant 0 : index
    %c0_130 = arith.constant 0 : index
    %118 = vector.load %arg14[%c2_128, %c0_129, %c0_130] : memref<3x64x128xf32, #tpu.memory_space<vmem>>, vector<1x64x128xf32>
    %119 = vector.shape_cast %118 : vector<1x64x128xf32> to vector<64x128xf32>
    %cst_131 = arith.constant dense<0.000000e+00> : vector<2x128xf32>
    %120 = tpu.matmul %117, %119, %cst_131 {dimension_numbers = #tpu.dot_dimension_numbers<[1], [0], [0], [1], [0, 0, 1, 1], [], []>} : vector<2x64xf32>, vector<64x128xf32>, vector<2x128xf32> -> vector<2x128xf32>
    %121 = arith.addf %114, %120 : vector<2x128xf32>
    %122 = vector.broadcast %101 : vector<1x128xf32> to vector<2x128xf32>
    %123 = arith.addf %121, %122 : vector<2x128xf32>
    %cst_132 = arith.constant 0.000000e+00 : f32
    %124 = vector.broadcast %cst_132 : f32 to vector<2x128xf32>
    %125 = arith.maximumf %123, %124 : vector<2x128xf32>
    %c0_133 = arith.constant 0 : index
    %c0_134 = arith.constant 0 : index
    %126 = vector.load %arg18[%c0_133, %c0_134] : memref<1x128xf32, #tpu.memory_space<vmem>>, vector<1x128xf32>
    %c0_135 = arith.constant 0 : index
    %c0_136 = arith.constant 0 : index
    %c0_137 = arith.constant 0 : index
    %127 = vector.load %arg16[%c0_135, %c0_136, %c0_137] : memref<3x2x2xf32, #tpu.memory_space<vmem>>, vector<1x2x2xf32>
    %128 = vector.shape_cast %127 : vector<1x2x2xf32> to vector<2x2xf32>
    %cst_138 = arith.constant dense<0.000000e+00> : vector<2x128xf32>
    %129 = tpu.matmul %128, %125, %cst_138 {dimension_numbers = #tpu.dot_dimension_numbers<[1], [0], [0], [1], [0, 0, 1, 1], [], []>} : vector<2x2xf32>, vector<2x128xf32>, vector<2x128xf32> -> vector<2x128xf32>
    %c0_139 = arith.constant 0 : index
    %c0_140 = arith.constant 0 : index
    %c0_141 = arith.constant 0 : index
    %130 = vector.load %arg17[%c0_139, %c0_140, %c0_141] : memref<3x128x128xf32, #tpu.memory_space<vmem>>, vector<1x128x128xf32>
    %131 = vector.shape_cast %130 : vector<1x128x128xf32> to vector<128x128xf32>
    %cst_142 = arith.constant dense<0.000000e+00> : vector<2x128xf32>
    %132 = tpu.matmul %129, %131, %cst_142 {dimension_numbers = #tpu.dot_dimension_numbers<[1], [0], [0], [1], [0, 0, 1, 1], [], []>} : vector<2x128xf32>, vector<128x128xf32>, vector<2x128xf32> -> vector<2x128xf32>
    %c1_143 = arith.constant 1 : index
    %c0_144 = arith.constant 0 : index
    %c0_145 = arith.constant 0 : index
    %133 = vector.load %arg16[%c1_143, %c0_144, %c0_145] : memref<3x2x2xf32, #tpu.memory_space<vmem>>, vector<1x2x2xf32>
    %134 = vector.shape_cast %133 : vector<1x2x2xf32> to vector<2x2xf32>
    %cst_146 = arith.constant dense<0.000000e+00> : vector<2x128xf32>
    %135 = tpu.matmul %134, %125, %cst_146 {dimension_numbers = #tpu.dot_dimension_numbers<[1], [0], [0], [1], [0, 0, 1, 1], [], []>} : vector<2x2xf32>, vector<2x128xf32>, vector<2x128xf32> -> vector<2x128xf32>
    %c1_147 = arith.constant 1 : index
    %c0_148 = arith.constant 0 : index
    %c0_149 = arith.constant 0 : index
    %136 = vector.load %arg17[%c1_147, %c0_148, %c0_149] : memref<3x128x128xf32, #tpu.memory_space<vmem>>, vector<1x128x128xf32>
    %137 = vector.shape_cast %136 : vector<1x128x128xf32> to vector<128x128xf32>
    %cst_150 = arith.constant dense<0.000000e+00> : vector<2x128xf32>
    %138 = tpu.matmul %135, %137, %cst_150 {dimension_numbers = #tpu.dot_dimension_numbers<[1], [0], [0], [1], [0, 0, 1, 1], [], []>} : vector<2x128xf32>, vector<128x128xf32>, vector<2x128xf32> -> vector<2x128xf32>
    %139 = arith.addf %132, %138 : vector<2x128xf32>
    %c2_151 = arith.constant 2 : index
    %c0_152 = arith.constant 0 : index
    %c0_153 = arith.constant 0 : index
    %140 = vector.load %arg16[%c2_151, %c0_152, %c0_153] : memref<3x2x2xf32, #tpu.memory_space<vmem>>, vector<1x2x2xf32>
    %141 = vector.shape_cast %140 : vector<1x2x2xf32> to vector<2x2xf32>
    %cst_154 = arith.constant dense<0.000000e+00> : vector<2x128xf32>
    %142 = tpu.matmul %141, %125, %cst_154 {dimension_numbers = #tpu.dot_dimension_numbers<[1], [0], [0], [1], [0, 0, 1, 1], [], []>} : vector<2x2xf32>, vector<2x128xf32>, vector<2x128xf32> -> vector<2x128xf32>
    %c2_155 = arith.constant 2 : index
    %c0_156 = arith.constant 0 : index
    %c0_157 = arith.constant 0 : index
    %143 = vector.load %arg17[%c2_155, %c0_156, %c0_157] : memref<3x128x128xf32, #tpu.memory_space<vmem>>, vector<1x128x128xf32>
    %144 = vector.shape_cast %143 : vector<1x128x128xf32> to vector<128x128xf32>
    %cst_158 = arith.constant dense<0.000000e+00> : vector<2x128xf32>
    %145 = tpu.matmul %142, %144, %cst_158 {dimension_numbers = #tpu.dot_dimension_numbers<[1], [0], [0], [1], [0, 0, 1, 1], [], []>} : vector<2x128xf32>, vector<128x128xf32>, vector<2x128xf32> -> vector<2x128xf32>
    %146 = arith.addf %139, %145 : vector<2x128xf32>
    %147 = vector.broadcast %126 : vector<1x128xf32> to vector<2x128xf32>
    %148 = arith.addf %146, %147 : vector<2x128xf32>
    %cst_159 = arith.constant 0.000000e+00 : f32
    %149 = vector.broadcast %cst_159 : f32 to vector<2x128xf32>
    %150 = arith.maximumf %148, %149 : vector<2x128xf32>
    %c0_160 = arith.constant 0 : index
    %c0_161 = arith.constant 0 : index
    %151 = vector.load %arg19[%c0_160, %c0_161] : memref<128x128xf32, #tpu.memory_space<vmem>>, vector<128x128xf32>
    %cst_162 = arith.constant dense<0.000000e+00> : vector<2x128xf32>
    %152 = tpu.matmul %150, %151, %cst_162 {dimension_numbers = #tpu.dot_dimension_numbers<[1], [0], [0], [1], [0, 0, 1, 1], [], []>} : vector<2x128xf32>, vector<128x128xf32>, vector<2x128xf32> -> vector<2x128xf32>
    %c0_163 = arith.constant 0 : index
    %c0_164 = arith.constant 0 : index
    %153 = vector.load %arg20[%c0_163, %c0_164] : memref<1x128xf32, #tpu.memory_space<vmem>>, vector<1x128xf32>
    %154 = vector.broadcast %153 : vector<1x128xf32> to vector<2x128xf32>
    %155 = arith.addf %152, %154 : vector<2x128xf32>
    %c0_165 = arith.constant 0 : index
    %c0_166 = arith.constant 0 : index
    %156 = vector.load %arg21[%c0_165, %c0_166] : memref<32x128xf32, #tpu.memory_space<vmem>>, vector<32x128xf32>
    %c0_167 = arith.constant 0 : index
    %c0_168 = arith.constant 0 : index
    %157 = vector.load %arg22[%c0_167, %c0_168] : memref<1x128xf32, #tpu.memory_space<vmem>>, vector<1x128xf32>
    %cst_169 = arith.constant 0.000000e+00 : f32
    %158 = vector.broadcast %cst_169 : f32 to vector<2x32xf32>
    %cst_170 = arith.constant dense<0.000000e+00> : vector<2x128xf32>
    %159 = tpu.matmul %158, %156, %cst_170 {dimension_numbers = #tpu.dot_dimension_numbers<[1], [0], [0], [1], [0, 0, 1, 1], [], []>} : vector<2x32xf32>, vector<32x128xf32>, vector<2x128xf32> -> vector<2x128xf32>
    %160 = vector.broadcast %157 : vector<1x128xf32> to vector<2x128xf32>
    %161 = arith.addf %159, %160 : vector<2x128xf32>
    %162 = vector.extract_strided_slice %155 {offsets = [0, 0], sizes = [2, 32], strides = [1, 1]} : vector<2x128xf32> to vector<2x32xf32>
    %163 = vector.extract_strided_slice %161 {offsets = [0, 0], sizes = [2, 32], strides = [1, 1]} : vector<2x128xf32> to vector<2x32xf32>
    %164 = arith.addf %162, %163 : vector<2x32xf32>
    %165 = arith.negf %164 : vector<2x32xf32>
    %166 = math.exp %165 : vector<2x32xf32>
    %cst_171 = arith.constant 1.000000e+00 : f32
    %167 = vector.broadcast %cst_171 : f32 to vector<2x32xf32>
    %168 = arith.addf %167, %166 : vector<2x32xf32>
    %169 = arith.divf %167, %168 : vector<2x32xf32>
    %170 = vector.extract_strided_slice %155 {offsets = [0, 32], sizes = [2, 32], strides = [1, 1]} : vector<2x128xf32> to vector<2x32xf32>
    %171 = vector.extract_strided_slice %161 {offsets = [0, 32], sizes = [2, 32], strides = [1, 1]} : vector<2x128xf32> to vector<2x32xf32>
    %172 = arith.addf %170, %171 : vector<2x32xf32>
    %173 = arith.negf %172 : vector<2x32xf32>
    %174 = math.exp %173 : vector<2x32xf32>
    %cst_172 = arith.constant 1.000000e+00 : f32
    %175 = vector.broadcast %cst_172 : f32 to vector<2x32xf32>
    %176 = arith.addf %175, %174 : vector<2x32xf32>
    %177 = arith.divf %175, %176 : vector<2x32xf32>
    %178 = vector.extract_strided_slice %155 {offsets = [0, 64], sizes = [2, 32], strides = [1, 1]} : vector<2x128xf32> to vector<2x32xf32>
    %179 = vector.extract_strided_slice %161 {offsets = [0, 64], sizes = [2, 32], strides = [1, 1]} : vector<2x128xf32> to vector<2x32xf32>
    %180 = arith.mulf %169, %179 : vector<2x32xf32>
    %181 = arith.addf %178, %180 : vector<2x32xf32>
    %182 = math.tanh %181 : vector<2x32xf32>
    %cst_173 = arith.constant 1.000000e+00 : f32
    %183 = vector.broadcast %cst_173 : f32 to vector<2x32xf32>
    %184 = arith.subf %183, %177 : vector<2x32xf32>
    %185 = arith.mulf %184, %182 : vector<2x32xf32>
    %186 = arith.mulf %177, %158 : vector<2x32xf32>
    %187 = arith.addf %185, %186 : vector<2x32xf32>
    %c0_174 = arith.constant 0 : index
    %c0_175 = arith.constant 0 : index
    %188 = vector.load %arg23[%c0_174, %c0_175] : memref<2x32xf32, #tpu.memory_space<vmem>>, vector<2x32xf32>
    tpu.vector_store %arg23[%c0_174, %c0_175], %187 {strides = array<i32>} : memref<2x32xf32, #tpu.memory_space<vmem>>, vector<2x32xf32>,
    return
  }
}

module attributes {stable_mosaic.version = 11 : i64} {
  func.func @kernel(%arg0: memref<2x32xf32, #tpu.memory_space<vmem>>, %arg1: memref<2x32xf32, #tpu.memory_space<vmem>>, %arg2: memref<3x2x32xf32, #tpu.memory_space<vmem>>, %arg3: memref<4x16xf32, #tpu.memory_space<vmem>>, %arg4: memref<16x64xf32, #tpu.memory_space<vmem>>, %arg5: memref<1x64xf32, #tpu.memory_space<vmem>>, %arg6: memref<64x16xf32, #tpu.memory_space<vmem>>, %arg7: memref<1x16xf32, #tpu.memory_space<vmem>>, %arg8: memref<32x32xf32, #tpu.memory_space<vmem>>, %arg9: memref<16x32xf32, #tpu.memory_space<vmem>>, %arg10: memref<1x32xf32, #tpu.memory_space<vmem>>, %arg11: memref<1x9xf32, #tpu.memory_space<smem>>, %arg12: memref<1x32xf32, #tpu.memory_space<vmem>>, %arg13: memref<1x32xf32, #tpu.memory_space<vmem>>, %arg14: memref<3x64xf32, #tpu.memory_space<vmem>>, %arg15: memref<1x64xf32, #tpu.memory_space<vmem>>, %arg16: memref<3x64xf32, #tpu.memory_space<vmem>>, %arg17: memref<1x32xf32, #tpu.memory_space<vmem>>, %arg18: memref<1x32xf32, #tpu.memory_space<vmem>>, %arg19: memref<2x32xf32, #tpu.memory_space<vmem>>, %arg20: memref<2x32xf32, #tpu.memory_space<vmem>>) attributes {dimension_semantics = [], scalar_prefetch = 0 : i64, scratch_operands = 0 : i64, tpu.core_type = #tpu.core_type<tc>} {
    %c0 = arith.constant 0 : index
    %c0_0 = arith.constant 0 : index
    %0 = vector.load %arg0[%c0, %c0_0] : memref<2x32xf32, #tpu.memory_space<vmem>>, vector<2x32xf32>
    %c0_1 = arith.constant 0 : index
    %c0_2 = arith.constant 0 : index
    %1 = vector.load %arg1[%c0_1, %c0_2] : memref<2x32xf32, #tpu.memory_space<vmem>>, vector<2x32xf32>
    %cst = arith.constant 0.989911913 : f32
    %2 = vector.broadcast %cst : f32 to vector<2x32xf32>
    %3 = arith.mulf %2, %0 : vector<2x32xf32>
    %cst_3 = arith.constant 0.141684338 : f32
    %4 = vector.broadcast %cst_3 : f32 to vector<2x32xf32>
    %5 = arith.mulf %4, %1 : vector<2x32xf32>
    %6 = arith.addf %3, %5 : vector<2x32xf32>
    %c0_4 = arith.constant 0 : index
    %c0_5 = arith.constant 0 : index
    %7 = vector.load %arg3[%c0_4, %c0_5] : memref<4x16xf32, #tpu.memory_space<vmem>>, vector<1x16xf32>
    %c0_6 = arith.constant 0 : index
    %c0_7 = arith.constant 0 : index
    %8 = vector.load %arg4[%c0_6, %c0_7] : memref<16x64xf32, #tpu.memory_space<vmem>>, vector<16x64xf32>
    %cst_8 = arith.constant dense<0.000000e+00> : vector<1x64xf32>
    %9 = tpu.matmul %7, %8, %cst_8 {dimension_numbers = #tpu.dot_dimension_numbers<[1], [0], [0], [1], [0, 0, 1, 1], [], []>} : vector<1x16xf32>, vector<16x64xf32>, vector<1x64xf32> -> vector<1x64xf32>
    %c0_9 = arith.constant 0 : index
    %c0_10 = arith.constant 0 : index
    %10 = vector.load %arg5[%c0_9, %c0_10] : memref<1x64xf32, #tpu.memory_space<vmem>>, vector<1x64xf32>
    %11 = arith.addf %9, %10 : vector<1x64xf32>
    %cst_11 = arith.constant 2.000000e+01 : f32
    %12 = vector.broadcast %cst_11 : f32 to vector<1x64xf32>
    %13 = arith.cmpf ogt, %11, %12 : vector<1x64xf32>
    %cst_12 = arith.constant 2.000000e+01 : f32
    %14 = vector.broadcast %cst_12 : f32 to vector<1x64xf32>
    %15 = arith.minimumf %11, %14 : vector<1x64xf32>
    %16 = math.exp %15 : vector<1x64xf32>
    %17 = math.log1p %16 : vector<1x64xf32>
    %18 = arith.select %13, %11, %17 : vector<1x64xi1>, vector<1x64xf32>
    %19 = math.tanh %18 : vector<1x64xf32>
    %20 = arith.mulf %11, %19 : vector<1x64xf32>
    %c0_13 = arith.constant 0 : index
    %c0_14 = arith.constant 0 : index
    %21 = vector.load %arg6[%c0_13, %c0_14] : memref<64x16xf32, #tpu.memory_space<vmem>>, vector<64x16xf32>
    %cst_15 = arith.constant dense<0.000000e+00> : vector<1x16xf32>
    %22 = tpu.matmul %20, %21, %cst_15 {dimension_numbers = #tpu.dot_dimension_numbers<[1], [0], [0], [1], [0, 0, 1, 1], [], []>} : vector<1x64xf32>, vector<64x16xf32>, vector<1x16xf32> -> vector<1x16xf32>
    %c0_16 = arith.constant 0 : index
    %c0_17 = arith.constant 0 : index
    %23 = vector.load %arg7[%c0_16, %c0_17] : memref<1x16xf32, #tpu.memory_space<vmem>>, vector<1x16xf32>
    %24 = arith.addf %22, %23 : vector<1x16xf32>
    %c0_18 = arith.constant 0 : index
    %c0_19 = arith.constant 0 : index
    %25 = vector.load %arg8[%c0_18, %c0_19] : memref<32x32xf32, #tpu.memory_space<vmem>>, vector<32x32xf32>
    %cst_20 = arith.constant dense<0.000000e+00> : vector<2x32xf32>
    %26 = tpu.matmul %6, %25, %cst_20 {dimension_numbers = #tpu.dot_dimension_numbers<[1], [0], [0], [1], [0, 0, 1, 1], [], []>} : vector<2x32xf32>, vector<32x32xf32>, vector<2x32xf32> -> vector<2x32xf32>
    %c0_21 = arith.constant 0 : index
    %c0_22 = arith.constant 0 : index
    %27 = vector.load %arg9[%c0_21, %c0_22] : memref<16x32xf32, #tpu.memory_space<vmem>>, vector<16x32xf32>
    %cst_23 = arith.constant dense<0.000000e+00> : vector<1x32xf32>
    %28 = tpu.matmul %24, %27, %cst_23 {dimension_numbers = #tpu.dot_dimension_numbers<[1], [0], [0], [1], [0, 0, 1, 1], [], []>} : vector<1x16xf32>, vector<16x32xf32>, vector<1x32xf32> -> vector<1x32xf32>
    %29 = vector.broadcast %28 : vector<1x32xf32> to vector<2x32xf32>
    %30 = arith.addf %26, %29 : vector<2x32xf32>
    %c0_24 = arith.constant 0 : index
    %c0_25 = arith.constant 0 : index
    %31 = vector.load %arg10[%c0_24, %c0_25] : memref<1x32xf32, #tpu.memory_space<vmem>>, vector<1x32xf32>
    %32 = vector.broadcast %31 : vector<1x32xf32> to vector<2x32xf32>
    %33 = arith.addf %30, %32 : vector<2x32xf32>
    %c0_26 = arith.constant 0 : index
    %c0_27 = arith.constant 0 : index
    %34 = vector.load %arg12[%c0_26, %c0_27] : memref<1x32xf32, #tpu.memory_space<vmem>>, vector<1x32xf32>
    %c0_28 = arith.constant 0 : index
    %c0_29 = arith.constant 0 : index
    %35 = vector.load %arg13[%c0_28, %c0_29] : memref<1x32xf32, #tpu.memory_space<vmem>>, vector<1x32xf32>
    %c0_30 = arith.constant 0 : index
    %c0_31 = arith.constant 0 : index
    %36 = vector.load %arg14[%c0_30, %c0_31] : memref<3x64xf32, #tpu.memory_space<vmem>>, vector<3x64xf32>
    %c0_32 = arith.constant 0 : index
    %c0_33 = arith.constant 0 : index
    %37 = vector.load %arg15[%c0_32, %c0_33] : memref<1x64xf32, #tpu.memory_space<vmem>>, vector<1x64xf32>
    %c0_34 = arith.constant 0 : index
    %c0_35 = arith.constant 0 : index
    %38 = vector.load %arg16[%c0_34, %c0_35] : memref<3x64xf32, #tpu.memory_space<vmem>>, vector<3x64xf32>
    %c0_36 = arith.constant 0 : index
    %c0_37 = arith.constant 0 : index
    %39 = vector.load %arg17[%c0_36, %c0_37] : memref<1x32xf32, #tpu.memory_space<vmem>>, vector<1x32xf32>
    %c0_38 = arith.constant 0 : index
    %c0_39 = arith.constant 0 : index
    %40 = vector.load %arg18[%c0_38, %c0_39] : memref<1x32xf32, #tpu.memory_space<vmem>>, vector<1x32xf32>
    %c0_40 = arith.constant 0 : index
    %c0_41 = arith.constant 0 : index
    %41 = memref.load %arg11[%c0_40, %c0_41] : memref<1x9xf32, #tpu.memory_space<smem>>
    %c0_42 = arith.constant 0 : index
    %c1 = arith.constant 1 : index
    %42 = memref.load %arg11[%c0_42, %c1] : memref<1x9xf32, #tpu.memory_space<smem>>
    %c0_43 = arith.constant 0 : index
    %c2 = arith.constant 2 : index
    %43 = memref.load %arg11[%c0_43, %c2] : memref<1x9xf32, #tpu.memory_space<smem>>
    %c0_44 = arith.constant 0 : index
    %c3 = arith.constant 3 : index
    %44 = memref.load %arg11[%c0_44, %c3] : memref<1x9xf32, #tpu.memory_space<smem>>
    %c0_45 = arith.constant 0 : index
    %c4 = arith.constant 4 : index
    %45 = memref.load %arg11[%c0_45, %c4] : memref<1x9xf32, #tpu.memory_space<smem>>
    %c0_46 = arith.constant 0 : index
    %c5 = arith.constant 5 : index
    %46 = memref.load %arg11[%c0_46, %c5] : memref<1x9xf32, #tpu.memory_space<smem>>
    %c0_47 = arith.constant 0 : index
    %c6 = arith.constant 6 : index
    %47 = memref.load %arg11[%c0_47, %c6] : memref<1x9xf32, #tpu.memory_space<smem>>
    %c0_48 = arith.constant 0 : index
    %c7 = arith.constant 7 : index
    %48 = memref.load %arg11[%c0_48, %c7] : memref<1x9xf32, #tpu.memory_space<smem>>
    %c0_49 = arith.constant 0 : index
    %c8 = arith.constant 8 : index
    %49 = memref.load %arg11[%c0_49, %c8] : memref<1x9xf32, #tpu.memory_space<smem>>
    %50 = vector.broadcast %41 : f32 to vector<2x32xf32>
    %51 = arith.mulf %50, %33 : vector<2x32xf32>
    %52 = vector.broadcast %44 : f32 to vector<2x32xf32>
    %53 = arith.addf %51, %52 : vector<2x32xf32>
    %54 = vector.broadcast %42 : f32 to vector<2x32xf32>
    %55 = arith.mulf %54, %33 : vector<2x32xf32>
    %56 = vector.broadcast %45 : f32 to vector<2x32xf32>
    %57 = arith.addf %55, %56 : vector<2x32xf32>
    %58 = vector.broadcast %43 : f32 to vector<2x32xf32>
    %59 = arith.mulf %58, %33 : vector<2x32xf32>
    %60 = vector.broadcast %46 : f32 to vector<2x32xf32>
    %61 = arith.addf %59, %60 : vector<2x32xf32>
    %62 = vector.shape_cast %53 : vector<2x32xf32> to vector<2x32x1xf32>
    %63 = vector.shape_cast %57 : vector<2x32xf32> to vector<2x1x32xf32>
    %64 = vector.broadcast %62 : vector<2x32x1xf32> to vector<2x32x32xf32>
    %65 = vector.broadcast %63 : vector<2x1x32xf32> to vector<2x32x32xf32>
    %66 = arith.mulf %64, %65 : vector<2x32x32xf32>
    %cst_50 = arith.constant dense<0xFF800000> : vector<2x32xf32>
    %67 = vector.multi_reduction <maximumf>, %66, %cst_50 [2] : vector<2x32x32xf32> to vector<2x32xf32>
    %68 = vector.shape_cast %67 : vector<2x32xf32> to vector<2x32x1xf32>
    %69 = vector.broadcast %68 : vector<2x32x1xf32> to vector<2x32x32xf32>
    %70 = arith.subf %66, %69 : vector<2x32x32xf32>
    %71 = math.exp %70 : vector<2x32x32xf32>
    %cst_51 = arith.constant dense<0.000000e+00> : vector<2x32xf32>
    %72 = vector.multi_reduction <add>, %71, %cst_51 [2] : vector<2x32x32xf32> to vector<2x32xf32>
    %73 = vector.shape_cast %72 : vector<2x32xf32> to vector<2x32x1xf32>
    %74 = vector.broadcast %73 : vector<2x32x1xf32> to vector<2x32x32xf32>
    %75 = arith.divf %71, %74 : vector<2x32x32xf32>
    %76 = vector.shape_cast %61 : vector<2x32xf32> to vector<2x1x32xf32>
    %77 = vector.broadcast %76 : vector<2x1x32xf32> to vector<2x32x32xf32>
    %78 = arith.mulf %75, %77 : vector<2x32x32xf32>
    %cst_52 = arith.constant dense<0.000000e+00> : vector<2x32xf32>
    %79 = vector.multi_reduction <add>, %78, %cst_52 [2] : vector<2x32x32xf32> to vector<2x32xf32>
    %80 = vector.broadcast %47 : f32 to vector<2x32xf32>
    %81 = arith.mulf %80, %79 : vector<2x32xf32>
    %82 = vector.broadcast %48 : f32 to vector<2x32xf32>
    %83 = arith.addf %81, %82 : vector<2x32xf32>
    %cst_53 = arith.constant 2.000000e+00 : f32
    %84 = vector.broadcast %cst_53 : f32 to vector<2x32xf32>
    %85 = arith.mulf %84, %83 : vector<2x32xf32>
    %86 = arith.addf %33, %85 : vector<2x32xf32>
    %cst_54 = arith.constant dense<0.000000e+00> : vector<2xf32>
    %87 = vector.multi_reduction <add>, %86, %cst_54 [1] : vector<2x32xf32> to vector<2xf32>
    %88 = vector.shape_cast %87 : vector<2xf32> to vector<2x1xf32>
    %cst_55 = arith.constant 3.200000e+01 : f32
    %89 = vector.broadcast %cst_55 : f32 to vector<2x1xf32>
    %90 = arith.divf %88, %89 : vector<2x1xf32>
    %91 = vector.broadcast %90 : vector<2x1xf32> to vector<2x32xf32>
    %92 = arith.subf %86, %91 : vector<2x32xf32>
    %93 = arith.mulf %92, %92 : vector<2x32xf32>
    %cst_56 = arith.constant dense<0.000000e+00> : vector<2xf32>
    %94 = vector.multi_reduction <add>, %93, %cst_56 [1] : vector<2x32xf32> to vector<2xf32>
    %95 = vector.shape_cast %94 : vector<2xf32> to vector<2x1xf32>
    %cst_57 = arith.constant 3.200000e+01 : f32
    %96 = vector.broadcast %cst_57 : f32 to vector<2x1xf32>
    %97 = arith.divf %95, %96 : vector<2x1xf32>
    %98 = vector.broadcast %90 : vector<2x1xf32> to vector<2x32xf32>
    %99 = arith.subf %86, %98 : vector<2x32xf32>
    %cst_58 = arith.constant 9.99999974E-6 : f32
    %100 = vector.broadcast %cst_58 : f32 to vector<2x1xf32>
    %101 = arith.addf %97, %100 : vector<2x1xf32>
    %102 = math.rsqrt %101 : vector<2x1xf32>
    %103 = vector.broadcast %102 : vector<2x1xf32> to vector<2x32xf32>
    %104 = arith.mulf %99, %103 : vector<2x32xf32>
    %105 = vector.broadcast %34 : vector<1x32xf32> to vector<2x32xf32>
    %106 = arith.mulf %104, %105 : vector<2x32xf32>
    %107 = vector.broadcast %35 : vector<1x32xf32> to vector<2x32xf32>
    %108 = arith.addf %106, %107 : vector<2x32xf32>
    %109 = tpu.iota {dimensions = array<i32: 1>} : vector<2x32xi32>
    %c0_i32 = arith.constant 0 : i32
    %110 = vector.broadcast %c0_i32 : i32 to vector<2x32xi32>
    %111 = arith.cmpi eq, %109, %110 : vector<2x32xi32>
    %c1_i32 = arith.constant 1 : i32
    %112 = tpu.dynamic_rotate %108 by %c1_i32 dim 1 : vector<2x32xf32>, i32 -> vector<2x32xf32>
    %cst_59 = arith.constant 0.000000e+00 : f32
    %113 = vector.broadcast %cst_59 : f32 to vector<2x32xf32>
    %114 = arith.select %111, %113, %112 : vector<2x32xi1>, vector<2x32xf32>
    %c31_i32 = arith.constant 31 : i32
    %115 = vector.broadcast %c31_i32 : i32 to vector<2x32xi32>
    %116 = arith.cmpi eq, %109, %115 : vector<2x32xi32>
    %c31_i32_60 = arith.constant 31 : i32
    %117 = tpu.dynamic_rotate %108 by %c31_i32_60 dim 1 : vector<2x32xf32>, i32 -> vector<2x32xf32>
    %cst_61 = arith.constant 0.000000e+00 : f32
    %118 = vector.broadcast %cst_61 : f32 to vector<2x32xf32>
    %119 = arith.select %116, %118, %117 : vector<2x32xi1>, vector<2x32xf32>
    %120 = vector.extract_strided_slice %36 {offsets = [0, 0], sizes = [1, 64], strides = [1, 1]} : vector<3x64xf32> to vector<1x64xf32>
    %121 = vector.shape_cast %120 : vector<1x64xf32> to vector<1x64x1xf32>
    %122 = vector.extract_strided_slice %36 {offsets = [1, 0], sizes = [1, 64], strides = [1, 1]} : vector<3x64xf32> to vector<1x64xf32>
    %123 = vector.shape_cast %122 : vector<1x64xf32> to vector<1x64x1xf32>
    %124 = vector.extract_strided_slice %36 {offsets = [2, 0], sizes = [1, 64], strides = [1, 1]} : vector<3x64xf32> to vector<1x64xf32>
    %125 = vector.shape_cast %124 : vector<1x64xf32> to vector<1x64x1xf32>
    %126 = vector.shape_cast %114 : vector<2x32xf32> to vector<2x1x32xf32>
    %127 = vector.broadcast %126 : vector<2x1x32xf32> to vector<2x64x32xf32>
    %128 = vector.broadcast %121 : vector<1x64x1xf32> to vector<2x64x32xf32>
    %129 = arith.mulf %127, %128 : vector<2x64x32xf32>
    %130 = vector.shape_cast %108 : vector<2x32xf32> to vector<2x1x32xf32>
    %131 = vector.broadcast %130 : vector<2x1x32xf32> to vector<2x64x32xf32>
    %132 = vector.broadcast %123 : vector<1x64x1xf32> to vector<2x64x32xf32>
    %133 = arith.mulf %131, %132 : vector<2x64x32xf32>
    %134 = arith.addf %129, %133 : vector<2x64x32xf32>
    %135 = vector.shape_cast %119 : vector<2x32xf32> to vector<2x1x32xf32>
    %136 = vector.broadcast %135 : vector<2x1x32xf32> to vector<2x64x32xf32>
    %137 = vector.broadcast %125 : vector<1x64x1xf32> to vector<2x64x32xf32>
    %138 = arith.mulf %136, %137 : vector<2x64x32xf32>
    %139 = arith.addf %134, %138 : vector<2x64x32xf32>
    %140 = vector.shape_cast %37 : vector<1x64xf32> to vector<1x64x1xf32>
    %141 = vector.broadcast %140 : vector<1x64x1xf32> to vector<2x64x32xf32>
    %142 = arith.addf %139, %141 : vector<2x64x32xf32>
    %cst_62 = arith.constant 0.000000e+00 : f32
    %143 = vector.broadcast %cst_62 : f32 to vector<2x64x32xf32>
    %144 = arith.maximumf %142, %143 : vector<2x64x32xf32>
    %145 = tpu.iota {dimensions = array<i32: 2>} : vector<2x64x32xi32>
    %c0_i32_63 = arith.constant 0 : i32
    %146 = vector.broadcast %c0_i32_63 : i32 to vector<2x64x32xi32>
    %147 = arith.cmpi eq, %145, %146 : vector<2x64x32xi32>
    %c1_i32_64 = arith.constant 1 : i32
    %148 = tpu.dynamic_rotate %144 by %c1_i32_64 dim 2 : vector<2x64x32xf32>, i32 -> vector<2x64x32xf32>
    %cst_65 = arith.constant 0.000000e+00 : f32
    %149 = vector.broadcast %cst_65 : f32 to vector<2x64x32xf32>
    %150 = arith.select %147, %149, %148 : vector<2x64x32xi1>, vector<2x64x32xf32>
    %c31_i32_66 = arith.constant 31 : i32
    %151 = vector.broadcast %c31_i32_66 : i32 to vector<2x64x32xi32>
    %152 = arith.cmpi eq, %145, %151 : vector<2x64x32xi32>
    %c31_i32_67 = arith.constant 31 : i32
    %153 = tpu.dynamic_rotate %144 by %c31_i32_67 dim 2 : vector<2x64x32xf32>, i32 -> vector<2x64x32xf32>
    %cst_68 = arith.constant 0.000000e+00 : f32
    %154 = vector.broadcast %cst_68 : f32 to vector<2x64x32xf32>
    %155 = arith.select %152, %154, %153 : vector<2x64x32xi1>, vector<2x64x32xf32>
    %156 = vector.extract_strided_slice %38 {offsets = [0, 0], sizes = [1, 64], strides = [1, 1]} : vector<3x64xf32> to vector<1x64xf32>
    %157 = vector.shape_cast %156 : vector<1x64xf32> to vector<1x64x1xf32>
    %158 = vector.extract_strided_slice %38 {offsets = [1, 0], sizes = [1, 64], strides = [1, 1]} : vector<3x64xf32> to vector<1x64xf32>
    %159 = vector.shape_cast %158 : vector<1x64xf32> to vector<1x64x1xf32>
    %160 = vector.extract_strided_slice %38 {offsets = [2, 0], sizes = [1, 64], strides = [1, 1]} : vector<3x64xf32> to vector<1x64xf32>
    %161 = vector.shape_cast %160 : vector<1x64xf32> to vector<1x64x1xf32>
    %162 = vector.broadcast %157 : vector<1x64x1xf32> to vector<2x64x32xf32>
    %163 = arith.mulf %150, %162 : vector<2x64x32xf32>
    %cst_69 = arith.constant dense<0.000000e+00> : vector<2x32xf32>
    %164 = vector.multi_reduction <add>, %163, %cst_69 [1] : vector<2x64x32xf32> to vector<2x32xf32>
    %165 = vector.broadcast %159 : vector<1x64x1xf32> to vector<2x64x32xf32>
    %166 = arith.mulf %144, %165 : vector<2x64x32xf32>
    %cst_70 = arith.constant dense<0.000000e+00> : vector<2x32xf32>
    %167 = vector.multi_reduction <add>, %166, %cst_70 [1] : vector<2x64x32xf32> to vector<2x32xf32>
    %168 = arith.addf %164, %167 : vector<2x32xf32>
    %169 = vector.broadcast %161 : vector<1x64x1xf32> to vector<2x64x32xf32>
    %170 = arith.mulf %155, %169 : vector<2x64x32xf32>
    %cst_71 = arith.constant dense<0.000000e+00> : vector<2x32xf32>
    %171 = vector.multi_reduction <add>, %170, %cst_71 [1] : vector<2x64x32xf32> to vector<2x32xf32>
    %172 = arith.addf %168, %171 : vector<2x32xf32>
    %173 = vector.broadcast %49 : f32 to vector<2x32xf32>
    %174 = arith.addf %172, %173 : vector<2x32xf32>
    %175 = arith.addf %108, %174 : vector<2x32xf32>
    %cst_72 = arith.constant dense<0.000000e+00> : vector<2xf32>
    %176 = vector.multi_reduction <add>, %175, %cst_72 [1] : vector<2x32xf32> to vector<2xf32>
    %177 = vector.shape_cast %176 : vector<2xf32> to vector<2x1xf32>
    %cst_73 = arith.constant 3.200000e+01 : f32
    %178 = vector.broadcast %cst_73 : f32 to vector<2x1xf32>
    %179 = arith.divf %177, %178 : vector<2x1xf32>
    %180 = vector.broadcast %179 : vector<2x1xf32> to vector<2x32xf32>
    %181 = arith.subf %175, %180 : vector<2x32xf32>
    %182 = arith.mulf %181, %181 : vector<2x32xf32>
    %cst_74 = arith.constant dense<0.000000e+00> : vector<2xf32>
    %183 = vector.multi_reduction <add>, %182, %cst_74 [1] : vector<2x32xf32> to vector<2xf32>
    %184 = vector.shape_cast %183 : vector<2xf32> to vector<2x1xf32>
    %cst_75 = arith.constant 3.200000e+01 : f32
    %185 = vector.broadcast %cst_75 : f32 to vector<2x1xf32>
    %186 = arith.divf %184, %185 : vector<2x1xf32>
    %187 = vector.broadcast %179 : vector<2x1xf32> to vector<2x32xf32>
    %188 = arith.subf %175, %187 : vector<2x32xf32>
    %cst_76 = arith.constant 9.99999974E-6 : f32
    %189 = vector.broadcast %cst_76 : f32 to vector<2x1xf32>
    %190 = arith.addf %186, %189 : vector<2x1xf32>
    %191 = math.rsqrt %190 : vector<2x1xf32>
    %192 = vector.broadcast %191 : vector<2x1xf32> to vector<2x32xf32>
    %193 = arith.mulf %188, %192 : vector<2x32xf32>
    %194 = vector.broadcast %39 : vector<1x32xf32> to vector<2x32xf32>
    %195 = arith.mulf %193, %194 : vector<2x32xf32>
    %196 = vector.broadcast %40 : vector<1x32xf32> to vector<2x32xf32>
    %197 = arith.addf %195, %196 : vector<2x32xf32>
    %c0_77 = arith.constant 0 : index
    %c0_78 = arith.constant 0 : index
    %198 = vector.load %arg19[%c0_77, %c0_78] : memref<2x32xf32, #tpu.memory_space<vmem>>, vector<2x32xf32>
    tpu.vector_store %arg19[%c0_77, %c0_78], %197 {strides = array<i32>} : memref<2x32xf32, #tpu.memory_space<vmem>>, vector<2x32xf32>,
    %c1_79 = arith.constant 1 : index
    %c0_80 = arith.constant 0 : index
    %199 = vector.load %arg3[%c1_79, %c0_80] : memref<4x16xf32, #tpu.memory_space<vmem>>, vector<1x16xf32>
    %c0_81 = arith.constant 0 : index
    %c0_82 = arith.constant 0 : index
    %200 = vector.load %arg4[%c0_81, %c0_82] : memref<16x64xf32, #tpu.memory_space<vmem>>, vector<16x64xf32>
    %cst_83 = arith.constant dense<0.000000e+00> : vector<1x64xf32>
    %201 = tpu.matmul %199, %200, %cst_83 {dimension_numbers = #tpu.dot_dimension_numbers<[1], [0], [0], [1], [0, 0, 1, 1], [], []>} : vector<1x16xf32>, vector<16x64xf32>, vector<1x64xf32> -> vector<1x64xf32>
    %c0_84 = arith.constant 0 : index
    %c0_85 = arith.constant 0 : index
    %202 = vector.load %arg5[%c0_84, %c0_85] : memref<1x64xf32, #tpu.memory_space<vmem>>, vector<1x64xf32>
    %203 = arith.addf %201, %202 : vector<1x64xf32>
    %cst_86 = arith.constant 2.000000e+01 : f32
    %204 = vector.broadcast %cst_86 : f32 to vector<1x64xf32>
    %205 = arith.cmpf ogt, %203, %204 : vector<1x64xf32>
    %cst_87 = arith.constant 2.000000e+01 : f32
    %206 = vector.broadcast %cst_87 : f32 to vector<1x64xf32>
    %207 = arith.minimumf %203, %206 : vector<1x64xf32>
    %208 = math.exp %207 : vector<1x64xf32>
    %209 = math.log1p %208 : vector<1x64xf32>
    %210 = arith.select %205, %203, %209 : vector<1x64xi1>, vector<1x64xf32>
    %211 = math.tanh %210 : vector<1x64xf32>
    %212 = arith.mulf %203, %211 : vector<1x64xf32>
    %c0_88 = arith.constant 0 : index
    %c0_89 = arith.constant 0 : index
    %213 = vector.load %arg6[%c0_88, %c0_89] : memref<64x16xf32, #tpu.memory_space<vmem>>, vector<64x16xf32>
    %cst_90 = arith.constant dense<0.000000e+00> : vector<1x16xf32>
    %214 = tpu.matmul %212, %213, %cst_90 {dimension_numbers = #tpu.dot_dimension_numbers<[1], [0], [0], [1], [0, 0, 1, 1], [], []>} : vector<1x64xf32>, vector<64x16xf32>, vector<1x16xf32> -> vector<1x16xf32>
    %c0_91 = arith.constant 0 : index
    %c0_92 = arith.constant 0 : index
    %215 = vector.load %arg7[%c0_91, %c0_92] : memref<1x16xf32, #tpu.memory_space<vmem>>, vector<1x16xf32>
    %216 = arith.addf %214, %215 : vector<1x16xf32>
    %c0_93 = arith.constant 0 : index
    %c0_94 = arith.constant 0 : index
    %217 = vector.load %arg8[%c0_93, %c0_94] : memref<32x32xf32, #tpu.memory_space<vmem>>, vector<32x32xf32>
    %cst_95 = arith.constant dense<0.000000e+00> : vector<2x32xf32>
    %218 = tpu.matmul %6, %217, %cst_95 {dimension_numbers = #tpu.dot_dimension_numbers<[1], [0], [0], [1], [0, 0, 1, 1], [], []>} : vector<2x32xf32>, vector<32x32xf32>, vector<2x32xf32> -> vector<2x32xf32>
    %c0_96 = arith.constant 0 : index
    %c0_97 = arith.constant 0 : index
    %219 = vector.load %arg9[%c0_96, %c0_97] : memref<16x32xf32, #tpu.memory_space<vmem>>, vector<16x32xf32>
    %cst_98 = arith.constant dense<0.000000e+00> : vector<1x32xf32>
    %220 = tpu.matmul %216, %219, %cst_98 {dimension_numbers = #tpu.dot_dimension_numbers<[1], [0], [0], [1], [0, 0, 1, 1], [], []>} : vector<1x16xf32>, vector<16x32xf32>, vector<1x32xf32> -> vector<1x32xf32>
    %221 = vector.broadcast %220 : vector<1x32xf32> to vector<2x32xf32>
    %222 = arith.addf %218, %221 : vector<2x32xf32>
    %c0_99 = arith.constant 0 : index
    %c0_100 = arith.constant 0 : index
    %223 = vector.load %arg10[%c0_99, %c0_100] : memref<1x32xf32, #tpu.memory_space<vmem>>, vector<1x32xf32>
    %224 = vector.broadcast %223 : vector<1x32xf32> to vector<2x32xf32>
    %225 = arith.addf %222, %224 : vector<2x32xf32>
    %c0_101 = arith.constant 0 : index
    %c0_102 = arith.constant 0 : index
    %226 = vector.load %arg12[%c0_101, %c0_102] : memref<1x32xf32, #tpu.memory_space<vmem>>, vector<1x32xf32>
    %c0_103 = arith.constant 0 : index
    %c0_104 = arith.constant 0 : index
    %227 = vector.load %arg13[%c0_103, %c0_104] : memref<1x32xf32, #tpu.memory_space<vmem>>, vector<1x32xf32>
    %c0_105 = arith.constant 0 : index
    %c0_106 = arith.constant 0 : index
    %228 = vector.load %arg14[%c0_105, %c0_106] : memref<3x64xf32, #tpu.memory_space<vmem>>, vector<3x64xf32>
    %c0_107 = arith.constant 0 : index
    %c0_108 = arith.constant 0 : index
    %229 = vector.load %arg15[%c0_107, %c0_108] : memref<1x64xf32, #tpu.memory_space<vmem>>, vector<1x64xf32>
    %c0_109 = arith.constant 0 : index
    %c0_110 = arith.constant 0 : index
    %230 = vector.load %arg16[%c0_109, %c0_110] : memref<3x64xf32, #tpu.memory_space<vmem>>, vector<3x64xf32>
    %c0_111 = arith.constant 0 : index
    %c0_112 = arith.constant 0 : index
    %231 = vector.load %arg17[%c0_111, %c0_112] : memref<1x32xf32, #tpu.memory_space<vmem>>, vector<1x32xf32>
    %c0_113 = arith.constant 0 : index
    %c0_114 = arith.constant 0 : index
    %232 = vector.load %arg18[%c0_113, %c0_114] : memref<1x32xf32, #tpu.memory_space<vmem>>, vector<1x32xf32>
    %c0_115 = arith.constant 0 : index
    %c0_116 = arith.constant 0 : index
    %233 = memref.load %arg11[%c0_115, %c0_116] : memref<1x9xf32, #tpu.memory_space<smem>>
    %c0_117 = arith.constant 0 : index
    %c1_118 = arith.constant 1 : index
    %234 = memref.load %arg11[%c0_117, %c1_118] : memref<1x9xf32, #tpu.memory_space<smem>>
    %c0_119 = arith.constant 0 : index
    %c2_120 = arith.constant 2 : index
    %235 = memref.load %arg11[%c0_119, %c2_120] : memref<1x9xf32, #tpu.memory_space<smem>>
    %c0_121 = arith.constant 0 : index
    %c3_122 = arith.constant 3 : index
    %236 = memref.load %arg11[%c0_121, %c3_122] : memref<1x9xf32, #tpu.memory_space<smem>>
    %c0_123 = arith.constant 0 : index
    %c4_124 = arith.constant 4 : index
    %237 = memref.load %arg11[%c0_123, %c4_124] : memref<1x9xf32, #tpu.memory_space<smem>>
    %c0_125 = arith.constant 0 : index
    %c5_126 = arith.constant 5 : index
    %238 = memref.load %arg11[%c0_125, %c5_126] : memref<1x9xf32, #tpu.memory_space<smem>>
    %c0_127 = arith.constant 0 : index
    %c6_128 = arith.constant 6 : index
    %239 = memref.load %arg11[%c0_127, %c6_128] : memref<1x9xf32, #tpu.memory_space<smem>>
    %c0_129 = arith.constant 0 : index
    %c7_130 = arith.constant 7 : index
    %240 = memref.load %arg11[%c0_129, %c7_130] : memref<1x9xf32, #tpu.memory_space<smem>>
    %c0_131 = arith.constant 0 : index
    %c8_132 = arith.constant 8 : index
    %241 = memref.load %arg11[%c0_131, %c8_132] : memref<1x9xf32, #tpu.memory_space<smem>>
    %242 = vector.broadcast %233 : f32 to vector<2x32xf32>
    %243 = arith.mulf %242, %225 : vector<2x32xf32>
    %244 = vector.broadcast %236 : f32 to vector<2x32xf32>
    %245 = arith.addf %243, %244 : vector<2x32xf32>
    %246 = vector.broadcast %234 : f32 to vector<2x32xf32>
    %247 = arith.mulf %246, %225 : vector<2x32xf32>
    %248 = vector.broadcast %237 : f32 to vector<2x32xf32>
    %249 = arith.addf %247, %248 : vector<2x32xf32>
    %250 = vector.broadcast %235 : f32 to vector<2x32xf32>
    %251 = arith.mulf %250, %225 : vector<2x32xf32>
    %252 = vector.broadcast %238 : f32 to vector<2x32xf32>
    %253 = arith.addf %251, %252 : vector<2x32xf32>
    %254 = vector.shape_cast %245 : vector<2x32xf32> to vector<2x32x1xf32>
    %255 = vector.shape_cast %249 : vector<2x32xf32> to vector<2x1x32xf32>
    %256 = vector.broadcast %254 : vector<2x32x1xf32> to vector<2x32x32xf32>
    %257 = vector.broadcast %255 : vector<2x1x32xf32> to vector<2x32x32xf32>
    %258 = arith.mulf %256, %257 : vector<2x32x32xf32>
    %cst_133 = arith.constant dense<0xFF800000> : vector<2x32xf32>
    %259 = vector.multi_reduction <maximumf>, %258, %cst_133 [2] : vector<2x32x32xf32> to vector<2x32xf32>
    %260 = vector.shape_cast %259 : vector<2x32xf32> to vector<2x32x1xf32>
    %261 = vector.broadcast %260 : vector<2x32x1xf32> to vector<2x32x32xf32>
    %262 = arith.subf %258, %261 : vector<2x32x32xf32>
    %263 = math.exp %262 : vector<2x32x32xf32>
    %cst_134 = arith.constant dense<0.000000e+00> : vector<2x32xf32>
    %264 = vector.multi_reduction <add>, %263, %cst_134 [2] : vector<2x32x32xf32> to vector<2x32xf32>
    %265 = vector.shape_cast %264 : vector<2x32xf32> to vector<2x32x1xf32>
    %266 = vector.broadcast %265 : vector<2x32x1xf32> to vector<2x32x32xf32>
    %267 = arith.divf %263, %266 : vector<2x32x32xf32>
    %268 = vector.shape_cast %253 : vector<2x32xf32> to vector<2x1x32xf32>
    %269 = vector.broadcast %268 : vector<2x1x32xf32> to vector<2x32x32xf32>
    %270 = arith.mulf %267, %269 : vector<2x32x32xf32>
    %cst_135 = arith.constant dense<0.000000e+00> : vector<2x32xf32>
    %271 = vector.multi_reduction <add>, %270, %cst_135 [2] : vector<2x32x32xf32> to vector<2x32xf32>
    %272 = vector.broadcast %239 : f32 to vector<2x32xf32>
    %273 = arith.mulf %272, %271 : vector<2x32xf32>
    %274 = vector.broadcast %240 : f32 to vector<2x32xf32>
    %275 = arith.addf %273, %274 : vector<2x32xf32>
    %cst_136 = arith.constant 2.000000e+00 : f32
    %276 = vector.broadcast %cst_136 : f32 to vector<2x32xf32>
    %277 = arith.mulf %276, %275 : vector<2x32xf32>
    %278 = arith.addf %225, %277 : vector<2x32xf32>
    %cst_137 = arith.constant dense<0.000000e+00> : vector<2xf32>
    %279 = vector.multi_reduction <add>, %278, %cst_137 [1] : vector<2x32xf32> to vector<2xf32>
    %280 = vector.shape_cast %279 : vector<2xf32> to vector<2x1xf32>
    %cst_138 = arith.constant 3.200000e+01 : f32
    %281 = vector.broadcast %cst_138 : f32 to vector<2x1xf32>
    %282 = arith.divf %280, %281 : vector<2x1xf32>
    %283 = vector.broadcast %282 : vector<2x1xf32> to vector<2x32xf32>
    %284 = arith.subf %278, %283 : vector<2x32xf32>
    %285 = arith.mulf %284, %284 : vector<2x32xf32>
    %cst_139 = arith.constant dense<0.000000e+00> : vector<2xf32>
    %286 = vector.multi_reduction <add>, %285, %cst_139 [1] : vector<2x32xf32> to vector<2xf32>
    %287 = vector.shape_cast %286 : vector<2xf32> to vector<2x1xf32>
    %cst_140 = arith.constant 3.200000e+01 : f32
    %288 = vector.broadcast %cst_140 : f32 to vector<2x1xf32>
    %289 = arith.divf %287, %288 : vector<2x1xf32>
    %290 = vector.broadcast %282 : vector<2x1xf32> to vector<2x32xf32>
    %291 = arith.subf %278, %290 : vector<2x32xf32>
    %cst_141 = arith.constant 9.99999974E-6 : f32
    %292 = vector.broadcast %cst_141 : f32 to vector<2x1xf32>
    %293 = arith.addf %289, %292 : vector<2x1xf32>
    %294 = math.rsqrt %293 : vector<2x1xf32>
    %295 = vector.broadcast %294 : vector<2x1xf32> to vector<2x32xf32>
    %296 = arith.mulf %291, %295 : vector<2x32xf32>
    %297 = vector.broadcast %226 : vector<1x32xf32> to vector<2x32xf32>
    %298 = arith.mulf %296, %297 : vector<2x32xf32>
    %299 = vector.broadcast %227 : vector<1x32xf32> to vector<2x32xf32>
    %300 = arith.addf %298, %299 : vector<2x32xf32>
    %301 = tpu.iota {dimensions = array<i32: 1>} : vector<2x32xi32>
    %c0_i32_142 = arith.constant 0 : i32
    %302 = vector.broadcast %c0_i32_142 : i32 to vector<2x32xi32>
    %303 = arith.cmpi eq, %301, %302 : vector<2x32xi32>
    %c1_i32_143 = arith.constant 1 : i32
    %304 = tpu.dynamic_rotate %300 by %c1_i32_143 dim 1 : vector<2x32xf32>, i32 -> vector<2x32xf32>
    %cst_144 = arith.constant 0.000000e+00 : f32
    %305 = vector.broadcast %cst_144 : f32 to vector<2x32xf32>
    %306 = arith.select %303, %305, %304 : vector<2x32xi1>, vector<2x32xf32>
    %c31_i32_145 = arith.constant 31 : i32
    %307 = vector.broadcast %c31_i32_145 : i32 to vector<2x32xi32>
    %308 = arith.cmpi eq, %301, %307 : vector<2x32xi32>
    %c31_i32_146 = arith.constant 31 : i32
    %309 = tpu.dynamic_rotate %300 by %c31_i32_146 dim 1 : vector<2x32xf32>, i32 -> vector<2x32xf32>
    %cst_147 = arith.constant 0.000000e+00 : f32
    %310 = vector.broadcast %cst_147 : f32 to vector<2x32xf32>
    %311 = arith.select %308, %310, %309 : vector<2x32xi1>, vector<2x32xf32>
    %312 = vector.extract_strided_slice %228 {offsets = [0, 0], sizes = [1, 64], strides = [1, 1]} : vector<3x64xf32> to vector<1x64xf32>
    %313 = vector.shape_cast %312 : vector<1x64xf32> to vector<1x64x1xf32>
    %314 = vector.extract_strided_slice %228 {offsets = [1, 0], sizes = [1, 64], strides = [1, 1]} : vector<3x64xf32> to vector<1x64xf32>
    %315 = vector.shape_cast %314 : vector<1x64xf32> to vector<1x64x1xf32>
    %316 = vector.extract_strided_slice %228 {offsets = [2, 0], sizes = [1, 64], strides = [1, 1]} : vector<3x64xf32> to vector<1x64xf32>
    %317 = vector.shape_cast %316 : vector<1x64xf32> to vector<1x64x1xf32>
    %318 = vector.shape_cast %306 : vector<2x32xf32> to vector<2x1x32xf32>
    %319 = vector.broadcast %318 : vector<2x1x32xf32> to vector<2x64x32xf32>
    %320 = vector.broadcast %313 : vector<1x64x1xf32> to vector<2x64x32xf32>
    %321 = arith.mulf %319, %320 : vector<2x64x32xf32>
    %322 = vector.shape_cast %300 : vector<2x32xf32> to vector<2x1x32xf32>
    %323 = vector.broadcast %322 : vector<2x1x32xf32> to vector<2x64x32xf32>
    %324 = vector.broadcast %315 : vector<1x64x1xf32> to vector<2x64x32xf32>
    %325 = arith.mulf %323, %324 : vector<2x64x32xf32>
    %326 = arith.addf %321, %325 : vector<2x64x32xf32>
    %327 = vector.shape_cast %311 : vector<2x32xf32> to vector<2x1x32xf32>
    %328 = vector.broadcast %327 : vector<2x1x32xf32> to vector<2x64x32xf32>
    %329 = vector.broadcast %317 : vector<1x64x1xf32> to vector<2x64x32xf32>
    %330 = arith.mulf %328, %329 : vector<2x64x32xf32>
    %331 = arith.addf %326, %330 : vector<2x64x32xf32>
    %332 = vector.shape_cast %229 : vector<1x64xf32> to vector<1x64x1xf32>
    %333 = vector.broadcast %332 : vector<1x64x1xf32> to vector<2x64x32xf32>
    %334 = arith.addf %331, %333 : vector<2x64x32xf32>
    %cst_148 = arith.constant 0.000000e+00 : f32
    %335 = vector.broadcast %cst_148 : f32 to vector<2x64x32xf32>
    %336 = arith.maximumf %334, %335 : vector<2x64x32xf32>
    %337 = tpu.iota {dimensions = array<i32: 2>} : vector<2x64x32xi32>
    %c0_i32_149 = arith.constant 0 : i32
    %338 = vector.broadcast %c0_i32_149 : i32 to vector<2x64x32xi32>
    %339 = arith.cmpi eq, %337, %338 : vector<2x64x32xi32>
    %c1_i32_150 = arith.constant 1 : i32
    %340 = tpu.dynamic_rotate %336 by %c1_i32_150 dim 2 : vector<2x64x32xf32>, i32 -> vector<2x64x32xf32>
    %cst_151 = arith.constant 0.000000e+00 : f32
    %341 = vector.broadcast %cst_151 : f32 to vector<2x64x32xf32>
    %342 = arith.select %339, %341, %340 : vector<2x64x32xi1>, vector<2x64x32xf32>
    %c31_i32_152 = arith.constant 31 : i32
    %343 = vector.broadcast %c31_i32_152 : i32 to vector<2x64x32xi32>
    %344 = arith.cmpi eq, %337, %343 : vector<2x64x32xi32>
    %c31_i32_153 = arith.constant 31 : i32
    %345 = tpu.dynamic_rotate %336 by %c31_i32_153 dim 2 : vector<2x64x32xf32>, i32 -> vector<2x64x32xf32>
    %cst_154 = arith.constant 0.000000e+00 : f32
    %346 = vector.broadcast %cst_154 : f32 to vector<2x64x32xf32>
    %347 = arith.select %344, %346, %345 : vector<2x64x32xi1>, vector<2x64x32xf32>
    %348 = vector.extract_strided_slice %230 {offsets = [0, 0], sizes = [1, 64], strides = [1, 1]} : vector<3x64xf32> to vector<1x64xf32>
    %349 = vector.shape_cast %348 : vector<1x64xf32> to vector<1x64x1xf32>
    %350 = vector.extract_strided_slice %230 {offsets = [1, 0], sizes = [1, 64], strides = [1, 1]} : vector<3x64xf32> to vector<1x64xf32>
    %351 = vector.shape_cast %350 : vector<1x64xf32> to vector<1x64x1xf32>
    %352 = vector.extract_strided_slice %230 {offsets = [2, 0], sizes = [1, 64], strides = [1, 1]} : vector<3x64xf32> to vector<1x64xf32>
    %353 = vector.shape_cast %352 : vector<1x64xf32> to vector<1x64x1xf32>
    %354 = vector.broadcast %349 : vector<1x64x1xf32> to vector<2x64x32xf32>
    %355 = arith.mulf %342, %354 : vector<2x64x32xf32>
    %cst_155 = arith.constant dense<0.000000e+00> : vector<2x32xf32>
    %356 = vector.multi_reduction <add>, %355, %cst_155 [1] : vector<2x64x32xf32> to vector<2x32xf32>
    %357 = vector.broadcast %351 : vector<1x64x1xf32> to vector<2x64x32xf32>
    %358 = arith.mulf %336, %357 : vector<2x64x32xf32>
    %cst_156 = arith.constant dense<0.000000e+00> : vector<2x32xf32>
    %359 = vector.multi_reduction <add>, %358, %cst_156 [1] : vector<2x64x32xf32> to vector<2x32xf32>
    %360 = arith.addf %356, %359 : vector<2x32xf32>
    %361 = vector.broadcast %353 : vector<1x64x1xf32> to vector<2x64x32xf32>
    %362 = arith.mulf %347, %361 : vector<2x64x32xf32>
    %cst_157 = arith.constant dense<0.000000e+00> : vector<2x32xf32>
    %363 = vector.multi_reduction <add>, %362, %cst_157 [1] : vector<2x64x32xf32> to vector<2x32xf32>
    %364 = arith.addf %360, %363 : vector<2x32xf32>
    %365 = vector.broadcast %241 : f32 to vector<2x32xf32>
    %366 = arith.addf %364, %365 : vector<2x32xf32>
    %367 = arith.addf %300, %366 : vector<2x32xf32>
    %cst_158 = arith.constant dense<0.000000e+00> : vector<2xf32>
    %368 = vector.multi_reduction <add>, %367, %cst_158 [1] : vector<2x32xf32> to vector<2xf32>
    %369 = vector.shape_cast %368 : vector<2xf32> to vector<2x1xf32>
    %cst_159 = arith.constant 3.200000e+01 : f32
    %370 = vector.broadcast %cst_159 : f32 to vector<2x1xf32>
    %371 = arith.divf %369, %370 : vector<2x1xf32>
    %372 = vector.broadcast %371 : vector<2x1xf32> to vector<2x32xf32>
    %373 = arith.subf %367, %372 : vector<2x32xf32>
    %374 = arith.mulf %373, %373 : vector<2x32xf32>
    %cst_160 = arith.constant dense<0.000000e+00> : vector<2xf32>
    %375 = vector.multi_reduction <add>, %374, %cst_160 [1] : vector<2x32xf32> to vector<2xf32>
    %376 = vector.shape_cast %375 : vector<2xf32> to vector<2x1xf32>
    %cst_161 = arith.constant 3.200000e+01 : f32
    %377 = vector.broadcast %cst_161 : f32 to vector<2x1xf32>
    %378 = arith.divf %376, %377 : vector<2x1xf32>
    %379 = vector.broadcast %371 : vector<2x1xf32> to vector<2x32xf32>
    %380 = arith.subf %367, %379 : vector<2x32xf32>
    %cst_162 = arith.constant 9.99999974E-6 : f32
    %381 = vector.broadcast %cst_162 : f32 to vector<2x1xf32>
    %382 = arith.addf %378, %381 : vector<2x1xf32>
    %383 = math.rsqrt %382 : vector<2x1xf32>
    %384 = vector.broadcast %383 : vector<2x1xf32> to vector<2x32xf32>
    %385 = arith.mulf %380, %384 : vector<2x32xf32>
    %386 = vector.broadcast %231 : vector<1x32xf32> to vector<2x32xf32>
    %387 = arith.mulf %385, %386 : vector<2x32xf32>
    %388 = vector.broadcast %232 : vector<1x32xf32> to vector<2x32xf32>
    %389 = arith.addf %387, %388 : vector<2x32xf32>
    %cst_163 = arith.constant 1.00512731 : f32
    %390 = vector.broadcast %cst_163 : f32 to vector<2x32xf32>
    %391 = arith.mulf %390, %6 : vector<2x32xf32>
    %cst_164 = arith.constant 0.101394437 : f32
    %392 = vector.broadcast %cst_164 : f32 to vector<2x32xf32>
    %393 = arith.mulf %392, %389 : vector<2x32xf32>
    %394 = arith.subf %391, %393 : vector<2x32xf32>
    %cst_165 = arith.constant 0.657245099 : f32
    %395 = vector.broadcast %cst_165 : f32 to vector<2x32xf32>
    %396 = arith.mulf %395, %394 : vector<2x32xf32>
    %cst_166 = arith.constant 0.34275192 : f32
    %397 = vector.broadcast %cst_166 : f32 to vector<2x32xf32>
    %398 = arith.mulf %397, %6 : vector<2x32xf32>
    %399 = arith.addf %396, %398 : vector<2x32xf32>
    %c2_167 = arith.constant 2 : index
    %c0_168 = arith.constant 0 : index
    %c0_169 = arith.constant 0 : index
    %400 = vector.load %arg2[%c2_167, %c0_168, %c0_169] : memref<3x2x32xf32, #tpu.memory_space<vmem>>, vector<1x2x32xf32>
    %401 = vector.shape_cast %400 : vector<1x2x32xf32> to vector<2x32xf32>
    %cst_170 = arith.constant 0.0480017699 : f32
    %402 = vector.broadcast %cst_170 : f32 to vector<2x32xf32>
    %403 = arith.mulf %402, %401 : vector<2x32xf32>
    %404 = arith.addf %399, %403 : vector<2x32xf32>
    %c2_171 = arith.constant 2 : index
    %c0_172 = arith.constant 0 : index
    %405 = vector.load %arg3[%c2_171, %c0_172] : memref<4x16xf32, #tpu.memory_space<vmem>>, vector<1x16xf32>
    %c0_173 = arith.constant 0 : index
    %c0_174 = arith.constant 0 : index
    %406 = vector.load %arg4[%c0_173, %c0_174] : memref<16x64xf32, #tpu.memory_space<vmem>>, vector<16x64xf32>
    %cst_175 = arith.constant dense<0.000000e+00> : vector<1x64xf32>
    %407 = tpu.matmul %405, %406, %cst_175 {dimension_numbers = #tpu.dot_dimension_numbers<[1], [0], [0], [1], [0, 0, 1, 1], [], []>} : vector<1x16xf32>, vector<16x64xf32>, vector<1x64xf32> -> vector<1x64xf32>
    %c0_176 = arith.constant 0 : index
    %c0_177 = arith.constant 0 : index
    %408 = vector.load %arg5[%c0_176, %c0_177] : memref<1x64xf32, #tpu.memory_space<vmem>>, vector<1x64xf32>
    %409 = arith.addf %407, %408 : vector<1x64xf32>
    %cst_178 = arith.constant 2.000000e+01 : f32
    %410 = vector.broadcast %cst_178 : f32 to vector<1x64xf32>
    %411 = arith.cmpf ogt, %409, %410 : vector<1x64xf32>
    %cst_179 = arith.constant 2.000000e+01 : f32
    %412 = vector.broadcast %cst_179 : f32 to vector<1x64xf32>
    %413 = arith.minimumf %409, %412 : vector<1x64xf32>
    %414 = math.exp %413 : vector<1x64xf32>
    %415 = math.log1p %414 : vector<1x64xf32>
    %416 = arith.select %411, %409, %415 : vector<1x64xi1>, vector<1x64xf32>
    %417 = math.tanh %416 : vector<1x64xf32>
    %418 = arith.mulf %409, %417 : vector<1x64xf32>
    %c0_180 = arith.constant 0 : index
    %c0_181 = arith.constant 0 : index
    %419 = vector.load %arg6[%c0_180, %c0_181] : memref<64x16xf32, #tpu.memory_space<vmem>>, vector<64x16xf32>
    %cst_182 = arith.constant dense<0.000000e+00> : vector<1x16xf32>
    %420 = tpu.matmul %418, %419, %cst_182 {dimension_numbers = #tpu.dot_dimension_numbers<[1], [0], [0], [1], [0, 0, 1, 1], [], []>} : vector<1x64xf32>, vector<64x16xf32>, vector<1x16xf32> -> vector<1x16xf32>
    %c0_183 = arith.constant 0 : index
    %c0_184 = arith.constant 0 : index
    %421 = vector.load %arg7[%c0_183, %c0_184] : memref<1x16xf32, #tpu.memory_space<vmem>>, vector<1x16xf32>
    %422 = arith.addf %420, %421 : vector<1x16xf32>
    %c0_185 = arith.constant 0 : index
    %c0_186 = arith.constant 0 : index
    %423 = vector.load %arg8[%c0_185, %c0_186] : memref<32x32xf32, #tpu.memory_space<vmem>>, vector<32x32xf32>
    %cst_187 = arith.constant dense<0.000000e+00> : vector<2x32xf32>
    %424 = tpu.matmul %404, %423, %cst_187 {dimension_numbers = #tpu.dot_dimension_numbers<[1], [0], [0], [1], [0, 0, 1, 1], [], []>} : vector<2x32xf32>, vector<32x32xf32>, vector<2x32xf32> -> vector<2x32xf32>
    %c0_188 = arith.constant 0 : index
    %c0_189 = arith.constant 0 : index
    %425 = vector.load %arg9[%c0_188, %c0_189] : memref<16x32xf32, #tpu.memory_space<vmem>>, vector<16x32xf32>
    %cst_190 = arith.constant dense<0.000000e+00> : vector<1x32xf32>
    %426 = tpu.matmul %422, %425, %cst_190 {dimension_numbers = #tpu.dot_dimension_numbers<[1], [0], [0], [1], [0, 0, 1, 1], [], []>} : vector<1x16xf32>, vector<16x32xf32>, vector<1x32xf32> -> vector<1x32xf32>
    %427 = vector.broadcast %426 : vector<1x32xf32> to vector<2x32xf32>
    %428 = arith.addf %424, %427 : vector<2x32xf32>
    %c0_191 = arith.constant 0 : index
    %c0_192 = arith.constant 0 : index
    %429 = vector.load %arg10[%c0_191, %c0_192] : memref<1x32xf32, #tpu.memory_space<vmem>>, vector<1x32xf32>
    %430 = vector.broadcast %429 : vector<1x32xf32> to vector<2x32xf32>
    %431 = arith.addf %428, %430 : vector<2x32xf32>
    %c0_193 = arith.constant 0 : index
    %c0_194 = arith.constant 0 : index
    %432 = vector.load %arg12[%c0_193, %c0_194] : memref<1x32xf32, #tpu.memory_space<vmem>>, vector<1x32xf32>
    %c0_195 = arith.constant 0 : index
    %c0_196 = arith.constant 0 : index
    %433 = vector.load %arg13[%c0_195, %c0_196] : memref<1x32xf32, #tpu.memory_space<vmem>>, vector<1x32xf32>
    %c0_197 = arith.constant 0 : index
    %c0_198 = arith.constant 0 : index
    %434 = vector.load %arg14[%c0_197, %c0_198] : memref<3x64xf32, #tpu.memory_space<vmem>>, vector<3x64xf32>
    %c0_199 = arith.constant 0 : index
    %c0_200 = arith.constant 0 : index
    %435 = vector.load %arg15[%c0_199, %c0_200] : memref<1x64xf32, #tpu.memory_space<vmem>>, vector<1x64xf32>
    %c0_201 = arith.constant 0 : index
    %c0_202 = arith.constant 0 : index
    %436 = vector.load %arg16[%c0_201, %c0_202] : memref<3x64xf32, #tpu.memory_space<vmem>>, vector<3x64xf32>
    %c0_203 = arith.constant 0 : index
    %c0_204 = arith.constant 0 : index
    %437 = vector.load %arg17[%c0_203, %c0_204] : memref<1x32xf32, #tpu.memory_space<vmem>>, vector<1x32xf32>
    %c0_205 = arith.constant 0 : index
    %c0_206 = arith.constant 0 : index
    %438 = vector.load %arg18[%c0_205, %c0_206] : memref<1x32xf32, #tpu.memory_space<vmem>>, vector<1x32xf32>
    %c0_207 = arith.constant 0 : index
    %c0_208 = arith.constant 0 : index
    %439 = memref.load %arg11[%c0_207, %c0_208] : memref<1x9xf32, #tpu.memory_space<smem>>
    %c0_209 = arith.constant 0 : index
    %c1_210 = arith.constant 1 : index
    %440 = memref.load %arg11[%c0_209, %c1_210] : memref<1x9xf32, #tpu.memory_space<smem>>
    %c0_211 = arith.constant 0 : index
    %c2_212 = arith.constant 2 : index
    %441 = memref.load %arg11[%c0_211, %c2_212] : memref<1x9xf32, #tpu.memory_space<smem>>
    %c0_213 = arith.constant 0 : index
    %c3_214 = arith.constant 3 : index
    %442 = memref.load %arg11[%c0_213, %c3_214] : memref<1x9xf32, #tpu.memory_space<smem>>
    %c0_215 = arith.constant 0 : index
    %c4_216 = arith.constant 4 : index
    %443 = memref.load %arg11[%c0_215, %c4_216] : memref<1x9xf32, #tpu.memory_space<smem>>
    %c0_217 = arith.constant 0 : index
    %c5_218 = arith.constant 5 : index
    %444 = memref.load %arg11[%c0_217, %c5_218] : memref<1x9xf32, #tpu.memory_space<smem>>
    %c0_219 = arith.constant 0 : index
    %c6_220 = arith.constant 6 : index
    %445 = memref.load %arg11[%c0_219, %c6_220] : memref<1x9xf32, #tpu.memory_space<smem>>
    %c0_221 = arith.constant 0 : index
    %c7_222 = arith.constant 7 : index
    %446 = memref.load %arg11[%c0_221, %c7_222] : memref<1x9xf32, #tpu.memory_space<smem>>
    %c0_223 = arith.constant 0 : index
    %c8_224 = arith.constant 8 : index
    %447 = memref.load %arg11[%c0_223, %c8_224] : memref<1x9xf32, #tpu.memory_space<smem>>
    %448 = vector.broadcast %439 : f32 to vector<2x32xf32>
    %449 = arith.mulf %448, %431 : vector<2x32xf32>
    %450 = vector.broadcast %442 : f32 to vector<2x32xf32>
    %451 = arith.addf %449, %450 : vector<2x32xf32>
    %452 = vector.broadcast %440 : f32 to vector<2x32xf32>
    %453 = arith.mulf %452, %431 : vector<2x32xf32>
    %454 = vector.broadcast %443 : f32 to vector<2x32xf32>
    %455 = arith.addf %453, %454 : vector<2x32xf32>
    %456 = vector.broadcast %441 : f32 to vector<2x32xf32>
    %457 = arith.mulf %456, %431 : vector<2x32xf32>
    %458 = vector.broadcast %444 : f32 to vector<2x32xf32>
    %459 = arith.addf %457, %458 : vector<2x32xf32>
    %460 = vector.shape_cast %451 : vector<2x32xf32> to vector<2x32x1xf32>
    %461 = vector.shape_cast %455 : vector<2x32xf32> to vector<2x1x32xf32>
    %462 = vector.broadcast %460 : vector<2x32x1xf32> to vector<2x32x32xf32>
    %463 = vector.broadcast %461 : vector<2x1x32xf32> to vector<2x32x32xf32>
    %464 = arith.mulf %462, %463 : vector<2x32x32xf32>
    %cst_225 = arith.constant dense<0xFF800000> : vector<2x32xf32>
    %465 = vector.multi_reduction <maximumf>, %464, %cst_225 [2] : vector<2x32x32xf32> to vector<2x32xf32>
    %466 = vector.shape_cast %465 : vector<2x32xf32> to vector<2x32x1xf32>
    %467 = vector.broadcast %466 : vector<2x32x1xf32> to vector<2x32x32xf32>
    %468 = arith.subf %464, %467 : vector<2x32x32xf32>
    %469 = math.exp %468 : vector<2x32x32xf32>
    %cst_226 = arith.constant dense<0.000000e+00> : vector<2x32xf32>
    %470 = vector.multi_reduction <add>, %469, %cst_226 [2] : vector<2x32x32xf32> to vector<2x32xf32>
    %471 = vector.shape_cast %470 : vector<2x32xf32> to vector<2x32x1xf32>
    %472 = vector.broadcast %471 : vector<2x32x1xf32> to vector<2x32x32xf32>
    %473 = arith.divf %469, %472 : vector<2x32x32xf32>
    %474 = vector.shape_cast %459 : vector<2x32xf32> to vector<2x1x32xf32>
    %475 = vector.broadcast %474 : vector<2x1x32xf32> to vector<2x32x32xf32>
    %476 = arith.mulf %473, %475 : vector<2x32x32xf32>
    %cst_227 = arith.constant dense<0.000000e+00> : vector<2x32xf32>
    %477 = vector.multi_reduction <add>, %476, %cst_227 [2] : vector<2x32x32xf32> to vector<2x32xf32>
    %478 = vector.broadcast %445 : f32 to vector<2x32xf32>
    %479 = arith.mulf %478, %477 : vector<2x32xf32>
    %480 = vector.broadcast %446 : f32 to vector<2x32xf32>
    %481 = arith.addf %479, %480 : vector<2x32xf32>
    %cst_228 = arith.constant 2.000000e+00 : f32
    %482 = vector.broadcast %cst_228 : f32 to vector<2x32xf32>
    %483 = arith.mulf %482, %481 : vector<2x32xf32>
    %484 = arith.addf %431, %483 : vector<2x32xf32>
    %cst_229 = arith.constant dense<0.000000e+00> : vector<2xf32>
    %485 = vector.multi_reduction <add>, %484, %cst_229 [1] : vector<2x32xf32> to vector<2xf32>
    %486 = vector.shape_cast %485 : vector<2xf32> to vector<2x1xf32>
    %cst_230 = arith.constant 3.200000e+01 : f32
    %487 = vector.broadcast %cst_230 : f32 to vector<2x1xf32>
    %488 = arith.divf %486, %487 : vector<2x1xf32>
    %489 = vector.broadcast %488 : vector<2x1xf32> to vector<2x32xf32>
    %490 = arith.subf %484, %489 : vector<2x32xf32>
    %491 = arith.mulf %490, %490 : vector<2x32xf32>
    %cst_231 = arith.constant dense<0.000000e+00> : vector<2xf32>
    %492 = vector.multi_reduction <add>, %491, %cst_231 [1] : vector<2x32xf32> to vector<2xf32>
    %493 = vector.shape_cast %492 : vector<2xf32> to vector<2x1xf32>
    %cst_232 = arith.constant 3.200000e+01 : f32
    %494 = vector.broadcast %cst_232 : f32 to vector<2x1xf32>
    %495 = arith.divf %493, %494 : vector<2x1xf32>
    %496 = vector.broadcast %488 : vector<2x1xf32> to vector<2x32xf32>
    %497 = arith.subf %484, %496 : vector<2x32xf32>
    %cst_233 = arith.constant 9.99999974E-6 : f32
    %498 = vector.broadcast %cst_233 : f32 to vector<2x1xf32>
    %499 = arith.addf %495, %498 : vector<2x1xf32>
    %500 = math.rsqrt %499 : vector<2x1xf32>
    %501 = vector.broadcast %500 : vector<2x1xf32> to vector<2x32xf32>
    %502 = arith.mulf %497, %501 : vector<2x32xf32>
    %503 = vector.broadcast %432 : vector<1x32xf32> to vector<2x32xf32>
    %504 = arith.mulf %502, %503 : vector<2x32xf32>
    %505 = vector.broadcast %433 : vector<1x32xf32> to vector<2x32xf32>
    %506 = arith.addf %504, %505 : vector<2x32xf32>
    %507 = tpu.iota {dimensions = array<i32: 1>} : vector<2x32xi32>
    %c0_i32_234 = arith.constant 0 : i32
    %508 = vector.broadcast %c0_i32_234 : i32 to vector<2x32xi32>
    %509 = arith.cmpi eq, %507, %508 : vector<2x32xi32>
    %c1_i32_235 = arith.constant 1 : i32
    %510 = tpu.dynamic_rotate %506 by %c1_i32_235 dim 1 : vector<2x32xf32>, i32 -> vector<2x32xf32>
    %cst_236 = arith.constant 0.000000e+00 : f32
    %511 = vector.broadcast %cst_236 : f32 to vector<2x32xf32>
    %512 = arith.select %509, %511, %510 : vector<2x32xi1>, vector<2x32xf32>
    %c31_i32_237 = arith.constant 31 : i32
    %513 = vector.broadcast %c31_i32_237 : i32 to vector<2x32xi32>
    %514 = arith.cmpi eq, %507, %513 : vector<2x32xi32>
    %c31_i32_238 = arith.constant 31 : i32
    %515 = tpu.dynamic_rotate %506 by %c31_i32_238 dim 1 : vector<2x32xf32>, i32 -> vector<2x32xf32>
    %cst_239 = arith.constant 0.000000e+00 : f32
    %516 = vector.broadcast %cst_239 : f32 to vector<2x32xf32>
    %517 = arith.select %514, %516, %515 : vector<2x32xi1>, vector<2x32xf32>
    %518 = vector.extract_strided_slice %434 {offsets = [0, 0], sizes = [1, 64], strides = [1, 1]} : vector<3x64xf32> to vector<1x64xf32>
    %519 = vector.shape_cast %518 : vector<1x64xf32> to vector<1x64x1xf32>
    %520 = vector.extract_strided_slice %434 {offsets = [1, 0], sizes = [1, 64], strides = [1, 1]} : vector<3x64xf32> to vector<1x64xf32>
    %521 = vector.shape_cast %520 : vector<1x64xf32> to vector<1x64x1xf32>
    %522 = vector.extract_strided_slice %434 {offsets = [2, 0], sizes = [1, 64], strides = [1, 1]} : vector<3x64xf32> to vector<1x64xf32>
    %523 = vector.shape_cast %522 : vector<1x64xf32> to vector<1x64x1xf32>
    %524 = vector.shape_cast %512 : vector<2x32xf32> to vector<2x1x32xf32>
    %525 = vector.broadcast %524 : vector<2x1x32xf32> to vector<2x64x32xf32>
    %526 = vector.broadcast %519 : vector<1x64x1xf32> to vector<2x64x32xf32>
    %527 = arith.mulf %525, %526 : vector<2x64x32xf32>
    %528 = vector.shape_cast %506 : vector<2x32xf32> to vector<2x1x32xf32>
    %529 = vector.broadcast %528 : vector<2x1x32xf32> to vector<2x64x32xf32>
    %530 = vector.broadcast %521 : vector<1x64x1xf32> to vector<2x64x32xf32>
    %531 = arith.mulf %529, %530 : vector<2x64x32xf32>
    %532 = arith.addf %527, %531 : vector<2x64x32xf32>
    %533 = vector.shape_cast %517 : vector<2x32xf32> to vector<2x1x32xf32>
    %534 = vector.broadcast %533 : vector<2x1x32xf32> to vector<2x64x32xf32>
    %535 = vector.broadcast %523 : vector<1x64x1xf32> to vector<2x64x32xf32>
    %536 = arith.mulf %534, %535 : vector<2x64x32xf32>
    %537 = arith.addf %532, %536 : vector<2x64x32xf32>
    %538 = vector.shape_cast %435 : vector<1x64xf32> to vector<1x64x1xf32>
    %539 = vector.broadcast %538 : vector<1x64x1xf32> to vector<2x64x32xf32>
    %540 = arith.addf %537, %539 : vector<2x64x32xf32>
    %cst_240 = arith.constant 0.000000e+00 : f32
    %541 = vector.broadcast %cst_240 : f32 to vector<2x64x32xf32>
    %542 = arith.maximumf %540, %541 : vector<2x64x32xf32>
    %543 = tpu.iota {dimensions = array<i32: 2>} : vector<2x64x32xi32>
    %c0_i32_241 = arith.constant 0 : i32
    %544 = vector.broadcast %c0_i32_241 : i32 to vector<2x64x32xi32>
    %545 = arith.cmpi eq, %543, %544 : vector<2x64x32xi32>
    %c1_i32_242 = arith.constant 1 : i32
    %546 = tpu.dynamic_rotate %542 by %c1_i32_242 dim 2 : vector<2x64x32xf32>, i32 -> vector<2x64x32xf32>
    %cst_243 = arith.constant 0.000000e+00 : f32
    %547 = vector.broadcast %cst_243 : f32 to vector<2x64x32xf32>
    %548 = arith.select %545, %547, %546 : vector<2x64x32xi1>, vector<2x64x32xf32>
    %c31_i32_244 = arith.constant 31 : i32
    %549 = vector.broadcast %c31_i32_244 : i32 to vector<2x64x32xi32>
    %550 = arith.cmpi eq, %543, %549 : vector<2x64x32xi32>
    %c31_i32_245 = arith.constant 31 : i32
    %551 = tpu.dynamic_rotate %542 by %c31_i32_245 dim 2 : vector<2x64x32xf32>, i32 -> vector<2x64x32xf32>
    %cst_246 = arith.constant 0.000000e+00 : f32
    %552 = vector.broadcast %cst_246 : f32 to vector<2x64x32xf32>
    %553 = arith.select %550, %552, %551 : vector<2x64x32xi1>, vector<2x64x32xf32>
    %554 = vector.extract_strided_slice %436 {offsets = [0, 0], sizes = [1, 64], strides = [1, 1]} : vector<3x64xf32> to vector<1x64xf32>
    %555 = vector.shape_cast %554 : vector<1x64xf32> to vector<1x64x1xf32>
    %556 = vector.extract_strided_slice %436 {offsets = [1, 0], sizes = [1, 64], strides = [1, 1]} : vector<3x64xf32> to vector<1x64xf32>
    %557 = vector.shape_cast %556 : vector<1x64xf32> to vector<1x64x1xf32>
    %558 = vector.extract_strided_slice %436 {offsets = [2, 0], sizes = [1, 64], strides = [1, 1]} : vector<3x64xf32> to vector<1x64xf32>
    %559 = vector.shape_cast %558 : vector<1x64xf32> to vector<1x64x1xf32>
    %560 = vector.broadcast %555 : vector<1x64x1xf32> to vector<2x64x32xf32>
    %561 = arith.mulf %548, %560 : vector<2x64x32xf32>
    %cst_247 = arith.constant dense<0.000000e+00> : vector<2x32xf32>
    %562 = vector.multi_reduction <add>, %561, %cst_247 [1] : vector<2x64x32xf32> to vector<2x32xf32>
    %563 = vector.broadcast %557 : vector<1x64x1xf32> to vector<2x64x32xf32>
    %564 = arith.mulf %542, %563 : vector<2x64x32xf32>
    %cst_248 = arith.constant dense<0.000000e+00> : vector<2x32xf32>
    %565 = vector.multi_reduction <add>, %564, %cst_248 [1] : vector<2x64x32xf32> to vector<2x32xf32>
    %566 = arith.addf %562, %565 : vector<2x32xf32>
    %567 = vector.broadcast %559 : vector<1x64x1xf32> to vector<2x64x32xf32>
    %568 = arith.mulf %553, %567 : vector<2x64x32xf32>
    %cst_249 = arith.constant dense<0.000000e+00> : vector<2x32xf32>
    %569 = vector.multi_reduction <add>, %568, %cst_249 [1] : vector<2x64x32xf32> to vector<2x32xf32>
    %570 = arith.addf %566, %569 : vector<2x32xf32>
    %571 = vector.broadcast %447 : f32 to vector<2x32xf32>
    %572 = arith.addf %570, %571 : vector<2x32xf32>
    %573 = arith.addf %506, %572 : vector<2x32xf32>
    %cst_250 = arith.constant dense<0.000000e+00> : vector<2xf32>
    %574 = vector.multi_reduction <add>, %573, %cst_250 [1] : vector<2x32xf32> to vector<2xf32>
    %575 = vector.shape_cast %574 : vector<2xf32> to vector<2x1xf32>
    %cst_251 = arith.constant 3.200000e+01 : f32
    %576 = vector.broadcast %cst_251 : f32 to vector<2x1xf32>
    %577 = arith.divf %575, %576 : vector<2x1xf32>
    %578 = vector.broadcast %577 : vector<2x1xf32> to vector<2x32xf32>
    %579 = arith.subf %573, %578 : vector<2x32xf32>
    %580 = arith.mulf %579, %579 : vector<2x32xf32>
    %cst_252 = arith.constant dense<0.000000e+00> : vector<2xf32>
    %581 = vector.multi_reduction <add>, %580, %cst_252 [1] : vector<2x32xf32> to vector<2xf32>
    %582 = vector.shape_cast %581 : vector<2xf32> to vector<2x1xf32>
    %cst_253 = arith.constant 3.200000e+01 : f32
    %583 = vector.broadcast %cst_253 : f32 to vector<2x1xf32>
    %584 = arith.divf %582, %583 : vector<2x1xf32>
    %585 = vector.broadcast %577 : vector<2x1xf32> to vector<2x32xf32>
    %586 = arith.subf %573, %585 : vector<2x32xf32>
    %cst_254 = arith.constant 9.99999974E-6 : f32
    %587 = vector.broadcast %cst_254 : f32 to vector<2x1xf32>
    %588 = arith.addf %584, %587 : vector<2x1xf32>
    %589 = math.rsqrt %588 : vector<2x1xf32>
    %590 = vector.broadcast %589 : vector<2x1xf32> to vector<2x32xf32>
    %591 = arith.mulf %586, %590 : vector<2x32xf32>
    %592 = vector.broadcast %437 : vector<1x32xf32> to vector<2x32xf32>
    %593 = arith.mulf %591, %592 : vector<2x32xf32>
    %594 = vector.broadcast %438 : vector<1x32xf32> to vector<2x32xf32>
    %595 = arith.addf %593, %594 : vector<2x32xf32>
    %cst_255 = arith.constant 1.0017544 : f32
    %596 = vector.broadcast %cst_255 : f32 to vector<2x32xf32>
    %597 = arith.mulf %596, %404 : vector<2x32xf32>
    %cst_256 = arith.constant 0.0592617132 : f32
    %598 = vector.broadcast %cst_256 : f32 to vector<2x32xf32>
    %599 = arith.mulf %598, %595 : vector<2x32xf32>
    %600 = arith.subf %597, %599 : vector<2x32xf32>
    %cst_257 = arith.constant 0.971474349 : f32
    %601 = vector.broadcast %cst_257 : f32 to vector<2x32xf32>
    %602 = arith.mulf %601, %600 : vector<2x32xf32>
    %cst_258 = arith.constant 0.0285255872 : f32
    %603 = vector.broadcast %cst_258 : f32 to vector<2x32xf32>
    %604 = arith.mulf %603, %404 : vector<2x32xf32>
    %605 = arith.addf %602, %604 : vector<2x32xf32>
    %c1_259 = arith.constant 1 : index
    %c0_260 = arith.constant 0 : index
    %c0_261 = arith.constant 0 : index
    %606 = vector.load %arg2[%c1_259, %c0_260, %c0_261] : memref<3x2x32xf32, #tpu.memory_space<vmem>>, vector<1x2x32xf32>
    %607 = vector.shape_cast %606 : vector<1x2x32xf32> to vector<2x32xf32>
    %cst_262 = arith.constant 0.00985658634 : f32
    %608 = vector.broadcast %cst_262 : f32 to vector<2x32xf32>
    %609 = arith.mulf %608, %607 : vector<2x32xf32>
    %610 = arith.addf %605, %609 : vector<2x32xf32>
    %c3_263 = arith.constant 3 : index
    %c0_264 = arith.constant 0 : index
    %611 = vector.load %arg3[%c3_263, %c0_264] : memref<4x16xf32, #tpu.memory_space<vmem>>, vector<1x16xf32>
    %c0_265 = arith.constant 0 : index
    %c0_266 = arith.constant 0 : index
    %612 = vector.load %arg4[%c0_265, %c0_266] : memref<16x64xf32, #tpu.memory_space<vmem>>, vector<16x64xf32>
    %cst_267 = arith.constant dense<0.000000e+00> : vector<1x64xf32>
    %613 = tpu.matmul %611, %612, %cst_267 {dimension_numbers = #tpu.dot_dimension_numbers<[1], [0], [0], [1], [0, 0, 1, 1], [], []>} : vector<1x16xf32>, vector<16x64xf32>, vector<1x64xf32> -> vector<1x64xf32>
    %c0_268 = arith.constant 0 : index
    %c0_269 = arith.constant 0 : index
    %614 = vector.load %arg5[%c0_268, %c0_269] : memref<1x64xf32, #tpu.memory_space<vmem>>, vector<1x64xf32>
    %615 = arith.addf %613, %614 : vector<1x64xf32>
    %cst_270 = arith.constant 2.000000e+01 : f32
    %616 = vector.broadcast %cst_270 : f32 to vector<1x64xf32>
    %617 = arith.cmpf ogt, %615, %616 : vector<1x64xf32>
    %cst_271 = arith.constant 2.000000e+01 : f32
    %618 = vector.broadcast %cst_271 : f32 to vector<1x64xf32>
    %619 = arith.minimumf %615, %618 : vector<1x64xf32>
    %620 = math.exp %619 : vector<1x64xf32>
    %621 = math.log1p %620 : vector<1x64xf32>
    %622 = arith.select %617, %615, %621 : vector<1x64xi1>, vector<1x64xf32>
    %623 = math.tanh %622 : vector<1x64xf32>
    %624 = arith.mulf %615, %623 : vector<1x64xf32>
    %c0_272 = arith.constant 0 : index
    %c0_273 = arith.constant 0 : index
    %625 = vector.load %arg6[%c0_272, %c0_273] : memref<64x16xf32, #tpu.memory_space<vmem>>, vector<64x16xf32>
    %cst_274 = arith.constant dense<0.000000e+00> : vector<1x16xf32>
    %626 = tpu.matmul %624, %625, %cst_274 {dimension_numbers = #tpu.dot_dimension_numbers<[1], [0], [0], [1], [0, 0, 1, 1], [], []>} : vector<1x64xf32>, vector<64x16xf32>, vector<1x16xf32> -> vector<1x16xf32>
    %c0_275 = arith.constant 0 : index
    %c0_276 = arith.constant 0 : index
    %627 = vector.load %arg7[%c0_275, %c0_276] : memref<1x16xf32, #tpu.memory_space<vmem>>, vector<1x16xf32>
    %628 = arith.addf %626, %627 : vector<1x16xf32>
    %c0_277 = arith.constant 0 : index
    %c0_278 = arith.constant 0 : index
    %629 = vector.load %arg8[%c0_277, %c0_278] : memref<32x32xf32, #tpu.memory_space<vmem>>, vector<32x32xf32>
    %cst_279 = arith.constant dense<0.000000e+00> : vector<2x32xf32>
    %630 = tpu.matmul %610, %629, %cst_279 {dimension_numbers = #tpu.dot_dimension_numbers<[1], [0], [0], [1], [0, 0, 1, 1], [], []>} : vector<2x32xf32>, vector<32x32xf32>, vector<2x32xf32> -> vector<2x32xf32>
    %c0_280 = arith.constant 0 : index
    %c0_281 = arith.constant 0 : index
    %631 = vector.load %arg9[%c0_280, %c0_281] : memref<16x32xf32, #tpu.memory_space<vmem>>, vector<16x32xf32>
    %cst_282 = arith.constant dense<0.000000e+00> : vector<1x32xf32>
    %632 = tpu.matmul %628, %631, %cst_282 {dimension_numbers = #tpu.dot_dimension_numbers<[1], [0], [0], [1], [0, 0, 1, 1], [], []>} : vector<1x16xf32>, vector<16x32xf32>, vector<1x32xf32> -> vector<1x32xf32>
    %633 = vector.broadcast %632 : vector<1x32xf32> to vector<2x32xf32>
    %634 = arith.addf %630, %633 : vector<2x32xf32>
    %c0_283 = arith.constant 0 : index
    %c0_284 = arith.constant 0 : index
    %635 = vector.load %arg10[%c0_283, %c0_284] : memref<1x32xf32, #tpu.memory_space<vmem>>, vector<1x32xf32>
    %636 = vector.broadcast %635 : vector<1x32xf32> to vector<2x32xf32>
    %637 = arith.addf %634, %636 : vector<2x32xf32>
    %c0_285 = arith.constant 0 : index
    %c0_286 = arith.constant 0 : index
    %638 = vector.load %arg12[%c0_285, %c0_286] : memref<1x32xf32, #tpu.memory_space<vmem>>, vector<1x32xf32>
    %c0_287 = arith.constant 0 : index
    %c0_288 = arith.constant 0 : index
    %639 = vector.load %arg13[%c0_287, %c0_288] : memref<1x32xf32, #tpu.memory_space<vmem>>, vector<1x32xf32>
    %c0_289 = arith.constant 0 : index
    %c0_290 = arith.constant 0 : index
    %640 = vector.load %arg14[%c0_289, %c0_290] : memref<3x64xf32, #tpu.memory_space<vmem>>, vector<3x64xf32>
    %c0_291 = arith.constant 0 : index
    %c0_292 = arith.constant 0 : index
    %641 = vector.load %arg15[%c0_291, %c0_292] : memref<1x64xf32, #tpu.memory_space<vmem>>, vector<1x64xf32>
    %c0_293 = arith.constant 0 : index
    %c0_294 = arith.constant 0 : index
    %642 = vector.load %arg16[%c0_293, %c0_294] : memref<3x64xf32, #tpu.memory_space<vmem>>, vector<3x64xf32>
    %c0_295 = arith.constant 0 : index
    %c0_296 = arith.constant 0 : index
    %643 = vector.load %arg17[%c0_295, %c0_296] : memref<1x32xf32, #tpu.memory_space<vmem>>, vector<1x32xf32>
    %c0_297 = arith.constant 0 : index
    %c0_298 = arith.constant 0 : index
    %644 = vector.load %arg18[%c0_297, %c0_298] : memref<1x32xf32, #tpu.memory_space<vmem>>, vector<1x32xf32>
    %c0_299 = arith.constant 0 : index
    %c0_300 = arith.constant 0 : index
    %645 = memref.load %arg11[%c0_299, %c0_300] : memref<1x9xf32, #tpu.memory_space<smem>>
    %c0_301 = arith.constant 0 : index
    %c1_302 = arith.constant 1 : index
    %646 = memref.load %arg11[%c0_301, %c1_302] : memref<1x9xf32, #tpu.memory_space<smem>>
    %c0_303 = arith.constant 0 : index
    %c2_304 = arith.constant 2 : index
    %647 = memref.load %arg11[%c0_303, %c2_304] : memref<1x9xf32, #tpu.memory_space<smem>>
    %c0_305 = arith.constant 0 : index
    %c3_306 = arith.constant 3 : index
    %648 = memref.load %arg11[%c0_305, %c3_306] : memref<1x9xf32, #tpu.memory_space<smem>>
    %c0_307 = arith.constant 0 : index
    %c4_308 = arith.constant 4 : index
    %649 = memref.load %arg11[%c0_307, %c4_308] : memref<1x9xf32, #tpu.memory_space<smem>>
    %c0_309 = arith.constant 0 : index
    %c5_310 = arith.constant 5 : index
    %650 = memref.load %arg11[%c0_309, %c5_310] : memref<1x9xf32, #tpu.memory_space<smem>>
    %c0_311 = arith.constant 0 : index
    %c6_312 = arith.constant 6 : index
    %651 = memref.load %arg11[%c0_311, %c6_312] : memref<1x9xf32, #tpu.memory_space<smem>>
    %c0_313 = arith.constant 0 : index
    %c7_314 = arith.constant 7 : index
    %652 = memref.load %arg11[%c0_313, %c7_314] : memref<1x9xf32, #tpu.memory_space<smem>>
    %c0_315 = arith.constant 0 : index
    %c8_316 = arith.constant 8 : index
    %653 = memref.load %arg11[%c0_315, %c8_316] : memref<1x9xf32, #tpu.memory_space<smem>>
    %654 = vector.broadcast %645 : f32 to vector<2x32xf32>
    %655 = arith.mulf %654, %637 : vector<2x32xf32>
    %656 = vector.broadcast %648 : f32 to vector<2x32xf32>
    %657 = arith.addf %655, %656 : vector<2x32xf32>
    %658 = vector.broadcast %646 : f32 to vector<2x32xf32>
    %659 = arith.mulf %658, %637 : vector<2x32xf32>
    %660 = vector.broadcast %649 : f32 to vector<2x32xf32>
    %661 = arith.addf %659, %660 : vector<2x32xf32>
    %662 = vector.broadcast %647 : f32 to vector<2x32xf32>
    %663 = arith.mulf %662, %637 : vector<2x32xf32>
    %664 = vector.broadcast %650 : f32 to vector<2x32xf32>
    %665 = arith.addf %663, %664 : vector<2x32xf32>
    %666 = vector.shape_cast %657 : vector<2x32xf32> to vector<2x32x1xf32>
    %667 = vector.shape_cast %661 : vector<2x32xf32> to vector<2x1x32xf32>
    %668 = vector.broadcast %666 : vector<2x32x1xf32> to vector<2x32x32xf32>
    %669 = vector.broadcast %667 : vector<2x1x32xf32> to vector<2x32x32xf32>
    %670 = arith.mulf %668, %669 : vector<2x32x32xf32>
    %cst_317 = arith.constant dense<0xFF800000> : vector<2x32xf32>
    %671 = vector.multi_reduction <maximumf>, %670, %cst_317 [2] : vector<2x32x32xf32> to vector<2x32xf32>
    %672 = vector.shape_cast %671 : vector<2x32xf32> to vector<2x32x1xf32>
    %673 = vector.broadcast %672 : vector<2x32x1xf32> to vector<2x32x32xf32>
    %674 = arith.subf %670, %673 : vector<2x32x32xf32>
    %675 = math.exp %674 : vector<2x32x32xf32>
    %cst_318 = arith.constant dense<0.000000e+00> : vector<2x32xf32>
    %676 = vector.multi_reduction <add>, %675, %cst_318 [2] : vector<2x32x32xf32> to vector<2x32xf32>
    %677 = vector.shape_cast %676 : vector<2x32xf32> to vector<2x32x1xf32>
    %678 = vector.broadcast %677 : vector<2x32x1xf32> to vector<2x32x32xf32>
    %679 = arith.divf %675, %678 : vector<2x32x32xf32>
    %680 = vector.shape_cast %665 : vector<2x32xf32> to vector<2x1x32xf32>
    %681 = vector.broadcast %680 : vector<2x1x32xf32> to vector<2x32x32xf32>
    %682 = arith.mulf %679, %681 : vector<2x32x32xf32>
    %cst_319 = arith.constant dense<0.000000e+00> : vector<2x32xf32>
    %683 = vector.multi_reduction <add>, %682, %cst_319 [2] : vector<2x32x32xf32> to vector<2x32xf32>
    %684 = vector.broadcast %651 : f32 to vector<2x32xf32>
    %685 = arith.mulf %684, %683 : vector<2x32xf32>
    %686 = vector.broadcast %652 : f32 to vector<2x32xf32>
    %687 = arith.addf %685, %686 : vector<2x32xf32>
    %cst_320 = arith.constant 2.000000e+00 : f32
    %688 = vector.broadcast %cst_320 : f32 to vector<2x32xf32>
    %689 = arith.mulf %688, %687 : vector<2x32xf32>
    %690 = arith.addf %637, %689 : vector<2x32xf32>
    %cst_321 = arith.constant dense<0.000000e+00> : vector<2xf32>
    %691 = vector.multi_reduction <add>, %690, %cst_321 [1] : vector<2x32xf32> to vector<2xf32>
    %692 = vector.shape_cast %691 : vector<2xf32> to vector<2x1xf32>
    %cst_322 = arith.constant 3.200000e+01 : f32
    %693 = vector.broadcast %cst_322 : f32 to vector<2x1xf32>
    %694 = arith.divf %692, %693 : vector<2x1xf32>
    %695 = vector.broadcast %694 : vector<2x1xf32> to vector<2x32xf32>
    %696 = arith.subf %690, %695 : vector<2x32xf32>
    %697 = arith.mulf %696, %696 : vector<2x32xf32>
    %cst_323 = arith.constant dense<0.000000e+00> : vector<2xf32>
    %698 = vector.multi_reduction <add>, %697, %cst_323 [1] : vector<2x32xf32> to vector<2xf32>
    %699 = vector.shape_cast %698 : vector<2xf32> to vector<2x1xf32>
    %cst_324 = arith.constant 3.200000e+01 : f32
    %700 = vector.broadcast %cst_324 : f32 to vector<2x1xf32>
    %701 = arith.divf %699, %700 : vector<2x1xf32>
    %702 = vector.broadcast %694 : vector<2x1xf32> to vector<2x32xf32>
    %703 = arith.subf %690, %702 : vector<2x32xf32>
    %cst_325 = arith.constant 9.99999974E-6 : f32
    %704 = vector.broadcast %cst_325 : f32 to vector<2x1xf32>
    %705 = arith.addf %701, %704 : vector<2x1xf32>
    %706 = math.rsqrt %705 : vector<2x1xf32>
    %707 = vector.broadcast %706 : vector<2x1xf32> to vector<2x32xf32>
    %708 = arith.mulf %703, %707 : vector<2x32xf32>
    %709 = vector.broadcast %638 : vector<1x32xf32> to vector<2x32xf32>
    %710 = arith.mulf %708, %709 : vector<2x32xf32>
    %711 = vector.broadcast %639 : vector<1x32xf32> to vector<2x32xf32>
    %712 = arith.addf %710, %711 : vector<2x32xf32>
    %713 = tpu.iota {dimensions = array<i32: 1>} : vector<2x32xi32>
    %c0_i32_326 = arith.constant 0 : i32
    %714 = vector.broadcast %c0_i32_326 : i32 to vector<2x32xi32>
    %715 = arith.cmpi eq, %713, %714 : vector<2x32xi32>
    %c1_i32_327 = arith.constant 1 : i32
    %716 = tpu.dynamic_rotate %712 by %c1_i32_327 dim 1 : vector<2x32xf32>, i32 -> vector<2x32xf32>
    %cst_328 = arith.constant 0.000000e+00 : f32
    %717 = vector.broadcast %cst_328 : f32 to vector<2x32xf32>
    %718 = arith.select %715, %717, %716 : vector<2x32xi1>, vector<2x32xf32>
    %c31_i32_329 = arith.constant 31 : i32
    %719 = vector.broadcast %c31_i32_329 : i32 to vector<2x32xi32>
    %720 = arith.cmpi eq, %713, %719 : vector<2x32xi32>
    %c31_i32_330 = arith.constant 31 : i32
    %721 = tpu.dynamic_rotate %712 by %c31_i32_330 dim 1 : vector<2x32xf32>, i32 -> vector<2x32xf32>
    %cst_331 = arith.constant 0.000000e+00 : f32
    %722 = vector.broadcast %cst_331 : f32 to vector<2x32xf32>
    %723 = arith.select %720, %722, %721 : vector<2x32xi1>, vector<2x32xf32>
    %724 = vector.extract_strided_slice %640 {offsets = [0, 0], sizes = [1, 64], strides = [1, 1]} : vector<3x64xf32> to vector<1x64xf32>
    %725 = vector.shape_cast %724 : vector<1x64xf32> to vector<1x64x1xf32>
    %726 = vector.extract_strided_slice %640 {offsets = [1, 0], sizes = [1, 64], strides = [1, 1]} : vector<3x64xf32> to vector<1x64xf32>
    %727 = vector.shape_cast %726 : vector<1x64xf32> to vector<1x64x1xf32>
    %728 = vector.extract_strided_slice %640 {offsets = [2, 0], sizes = [1, 64], strides = [1, 1]} : vector<3x64xf32> to vector<1x64xf32>
    %729 = vector.shape_cast %728 : vector<1x64xf32> to vector<1x64x1xf32>
    %730 = vector.shape_cast %718 : vector<2x32xf32> to vector<2x1x32xf32>
    %731 = vector.broadcast %730 : vector<2x1x32xf32> to vector<2x64x32xf32>
    %732 = vector.broadcast %725 : vector<1x64x1xf32> to vector<2x64x32xf32>
    %733 = arith.mulf %731, %732 : vector<2x64x32xf32>
    %734 = vector.shape_cast %712 : vector<2x32xf32> to vector<2x1x32xf32>
    %735 = vector.broadcast %734 : vector<2x1x32xf32> to vector<2x64x32xf32>
    %736 = vector.broadcast %727 : vector<1x64x1xf32> to vector<2x64x32xf32>
    %737 = arith.mulf %735, %736 : vector<2x64x32xf32>
    %738 = arith.addf %733, %737 : vector<2x64x32xf32>
    %739 = vector.shape_cast %723 : vector<2x32xf32> to vector<2x1x32xf32>
    %740 = vector.broadcast %739 : vector<2x1x32xf32> to vector<2x64x32xf32>
    %741 = vector.broadcast %729 : vector<1x64x1xf32> to vector<2x64x32xf32>
    %742 = arith.mulf %740, %741 : vector<2x64x32xf32>
    %743 = arith.addf %738, %742 : vector<2x64x32xf32>
    %744 = vector.shape_cast %641 : vector<1x64xf32> to vector<1x64x1xf32>
    %745 = vector.broadcast %744 : vector<1x64x1xf32> to vector<2x64x32xf32>
    %746 = arith.addf %743, %745 : vector<2x64x32xf32>
    %cst_332 = arith.constant 0.000000e+00 : f32
    %747 = vector.broadcast %cst_332 : f32 to vector<2x64x32xf32>
    %748 = arith.maximumf %746, %747 : vector<2x64x32xf32>
    %749 = tpu.iota {dimensions = array<i32: 2>} : vector<2x64x32xi32>
    %c0_i32_333 = arith.constant 0 : i32
    %750 = vector.broadcast %c0_i32_333 : i32 to vector<2x64x32xi32>
    %751 = arith.cmpi eq, %749, %750 : vector<2x64x32xi32>
    %c1_i32_334 = arith.constant 1 : i32
    %752 = tpu.dynamic_rotate %748 by %c1_i32_334 dim 2 : vector<2x64x32xf32>, i32 -> vector<2x64x32xf32>
    %cst_335 = arith.constant 0.000000e+00 : f32
    %753 = vector.broadcast %cst_335 : f32 to vector<2x64x32xf32>
    %754 = arith.select %751, %753, %752 : vector<2x64x32xi1>, vector<2x64x32xf32>
    %c31_i32_336 = arith.constant 31 : i32
    %755 = vector.broadcast %c31_i32_336 : i32 to vector<2x64x32xi32>
    %756 = arith.cmpi eq, %749, %755 : vector<2x64x32xi32>
    %c31_i32_337 = arith.constant 31 : i32
    %757 = tpu.dynamic_rotate %748 by %c31_i32_337 dim 2 : vector<2x64x32xf32>, i32 -> vector<2x64x32xf32>
    %cst_338 = arith.constant 0.000000e+00 : f32
    %758 = vector.broadcast %cst_338 : f32 to vector<2x64x32xf32>
    %759 = arith.select %756, %758, %757 : vector<2x64x32xi1>, vector<2x64x32xf32>
    %760 = vector.extract_strided_slice %642 {offsets = [0, 0], sizes = [1, 64], strides = [1, 1]} : vector<3x64xf32> to vector<1x64xf32>
    %761 = vector.shape_cast %760 : vector<1x64xf32> to vector<1x64x1xf32>
    %762 = vector.extract_strided_slice %642 {offsets = [1, 0], sizes = [1, 64], strides = [1, 1]} : vector<3x64xf32> to vector<1x64xf32>
    %763 = vector.shape_cast %762 : vector<1x64xf32> to vector<1x64x1xf32>
    %764 = vector.extract_strided_slice %642 {offsets = [2, 0], sizes = [1, 64], strides = [1, 1]} : vector<3x64xf32> to vector<1x64xf32>
    %765 = vector.shape_cast %764 : vector<1x64xf32> to vector<1x64x1xf32>
    %766 = vector.broadcast %761 : vector<1x64x1xf32> to vector<2x64x32xf32>
    %767 = arith.mulf %754, %766 : vector<2x64x32xf32>
    %cst_339 = arith.constant dense<0.000000e+00> : vector<2x32xf32>
    %768 = vector.multi_reduction <add>, %767, %cst_339 [1] : vector<2x64x32xf32> to vector<2x32xf32>
    %769 = vector.broadcast %763 : vector<1x64x1xf32> to vector<2x64x32xf32>
    %770 = arith.mulf %748, %769 : vector<2x64x32xf32>
    %cst_340 = arith.constant dense<0.000000e+00> : vector<2x32xf32>
    %771 = vector.multi_reduction <add>, %770, %cst_340 [1] : vector<2x64x32xf32> to vector<2x32xf32>
    %772 = arith.addf %768, %771 : vector<2x32xf32>
    %773 = vector.broadcast %765 : vector<1x64x1xf32> to vector<2x64x32xf32>
    %774 = arith.mulf %759, %773 : vector<2x64x32xf32>
    %cst_341 = arith.constant dense<0.000000e+00> : vector<2x32xf32>
    %775 = vector.multi_reduction <add>, %774, %cst_341 [1] : vector<2x64x32xf32> to vector<2x32xf32>
    %776 = arith.addf %772, %775 : vector<2x32xf32>
    %777 = vector.broadcast %653 : f32 to vector<2x32xf32>
    %778 = arith.addf %776, %777 : vector<2x32xf32>
    %779 = arith.addf %712, %778 : vector<2x32xf32>
    %cst_342 = arith.constant dense<0.000000e+00> : vector<2xf32>
    %780 = vector.multi_reduction <add>, %779, %cst_342 [1] : vector<2x32xf32> to vector<2xf32>
    %781 = vector.shape_cast %780 : vector<2xf32> to vector<2x1xf32>
    %cst_343 = arith.constant 3.200000e+01 : f32
    %782 = vector.broadcast %cst_343 : f32 to vector<2x1xf32>
    %783 = arith.divf %781, %782 : vector<2x1xf32>
    %784 = vector.broadcast %783 : vector<2x1xf32> to vector<2x32xf32>
    %785 = arith.subf %779, %784 : vector<2x32xf32>
    %786 = arith.mulf %785, %785 : vector<2x32xf32>
    %cst_344 = arith.constant dense<0.000000e+00> : vector<2xf32>
    %787 = vector.multi_reduction <add>, %786, %cst_344 [1] : vector<2x32xf32> to vector<2xf32>
    %788 = vector.shape_cast %787 : vector<2xf32> to vector<2x1xf32>
    %cst_345 = arith.constant 3.200000e+01 : f32
    %789 = vector.broadcast %cst_345 : f32 to vector<2x1xf32>
    %790 = arith.divf %788, %789 : vector<2x1xf32>
    %791 = vector.broadcast %783 : vector<2x1xf32> to vector<2x32xf32>
    %792 = arith.subf %779, %791 : vector<2x32xf32>
    %cst_346 = arith.constant 9.99999974E-6 : f32
    %793 = vector.broadcast %cst_346 : f32 to vector<2x1xf32>
    %794 = arith.addf %790, %793 : vector<2x1xf32>
    %795 = math.rsqrt %794 : vector<2x1xf32>
    %796 = vector.broadcast %795 : vector<2x1xf32> to vector<2x32xf32>
    %797 = arith.mulf %792, %796 : vector<2x32xf32>
    %798 = vector.broadcast %643 : vector<1x32xf32> to vector<2x32xf32>
    %799 = arith.mulf %797, %798 : vector<2x32xf32>
    %800 = vector.broadcast %644 : vector<1x32xf32> to vector<2x32xf32>
    %801 = arith.addf %799, %800 : vector<2x32xf32>
    %cst_347 = arith.constant 1.000050e+00 : f32
    %802 = vector.broadcast %cst_347 : f32 to vector<2x32xf32>
    %803 = arith.mulf %802, %610 : vector<2x32xf32>
    %cst_348 = arith.constant 1.000050e-02 : f32
    %804 = vector.broadcast %cst_348 : f32 to vector<2x32xf32>
    %805 = arith.mulf %804, %801 : vector<2x32xf32>
    %806 = arith.subf %803, %805 : vector<2x32xf32>
    %cst_349 = arith.constant 1.000000e+00 : f32
    %807 = vector.broadcast %cst_349 : f32 to vector<2x32xf32>
    %808 = arith.mulf %807, %806 : vector<2x32xf32>
    %cst_350 = arith.constant 0.000000e+00 : f32
    %809 = vector.broadcast %cst_350 : f32 to vector<2x32xf32>
    %810 = arith.mulf %809, %610 : vector<2x32xf32>
    %811 = arith.addf %808, %810 : vector<2x32xf32>
    %c0_351 = arith.constant 0 : index
    %c0_352 = arith.constant 0 : index
    %812 = vector.load %arg20[%c0_351, %c0_352] : memref<2x32xf32, #tpu.memory_space<vmem>>, vector<2x32xf32>
    tpu.vector_store %arg20[%c0_351, %c0_352], %811 {strides = array<i32>} : memref<2x32xf32, #tpu.memory_space<vmem>>, vector<2x32xf32>,
    return
  }
}

</mosaic_0001>

<llo_original>
// kernel: diff_style_forward.4
$region0: #{diff_style_forward.4}
  #allocation0 [shape = 'u32[]', space=smem, size = 0x4, offset = 0x4, fixed_abs, tag = 'smem constant byte address 0x4 - core index']
  #allocation1 [shape = 'u32[144,128]{1,0:T(1,128)}', space=vmem, size = 0x12000, scoped, tag = 'internal scratch']
  %s0 = inlined_call_operand.vmem [shape: f32[64,16], index: 0, kind: input, shape index: {}]
  %s1 = inlined_call_operand.hbm [shape: f32[3,32,64], index: 1, kind: input, shape index: {}]
  %s2 = inlined_call_operand.hbm [shape: f32[3,16,256], index: 2, kind: input, shape index: {}]
  %s3 = inlined_call_operand.hbm [shape: f32[1,256], index: 3, kind: input, shape index: {}]
  %s4 = inlined_call_operand.hbm [shape: f32[3,16,32], index: 4, kind: input, shape index: {}]
  %s5 = inlined_call_operand.vmem [shape: f32[3,256,128], index: 5, kind: input, shape index: {}]
  %s6 = inlined_call_operand.hbm [shape: f32[1,128], index: 6, kind: input, shape index: {}]
  %s7 = inlined_call_operand.hbm [shape: f32[3,8,16], index: 7, kind: input, shape index: {}]
  %s8 = inlined_call_operand.hbm [shape: f32[3,128,128], index: 8, kind: input, shape index: {}]
  %s9 = inlined_call_operand.hbm [shape: f32[1,128], index: 9, kind: input, shape index: {}]
  %s10 = inlined_call_operand.hbm [shape: f32[3,4,8], index: 10, kind: input, shape index: {}]
  %s11 = inlined_call_operand.vmem [shape: f32[3,128,64], index: 11, kind: input, shape index: {}]
  %s12 = inlined_call_operand.hbm [shape: f32[1,64], index: 12, kind: input, shape index: {}]
  %s13 = inlined_call_operand.vmem [shape: f32[3,2,4], index: 13, kind: input, shape index: {}]
  %s14 = inlined_call_operand.hbm [shape: f32[3,64,128], index: 14, kind: input, shape index: {}]
  %s15 = inlined_call_operand.hbm [shape: f32[1,128], index: 15, kind: input, shape index: {}]
  %s16 = inlined_call_operand.vmem [shape: f32[3,2,2], index: 16, kind: input, shape index: {}]
  %s17 = inlined_call_operand.hbm [shape: f32[3,128,128], index: 17, kind: input, shape index: {}]
  %s18 = inlined_call_operand.hbm [shape: f32[1,128], index: 18, kind: input, shape index: {}]
  %s19 = inlined_call_operand.hbm [shape: f32[128,128], index: 19, kind: input, shape index: {}]
  %s20 = inlined_call_operand.hbm [shape: f32[1,128], index: 20, kind: input, shape index: {}]
  %s21 = inlined_call_operand.vmem [shape: f32[32,128], index: 21, kind: input, shape index: {}]
  %s22 = inlined_call_operand.hbm [shape: f32[1,128], index: 22, kind: input, shape index: {}]
  %s23 = inlined_call_operand.vmem [shape: f32[2,32], index: 23, kind: output, shape index: {}]
  %s24 = sld [smem:[#allocation0]]
  $region170: #{diff_style_forward.4} parent=0
    _
  %s26 = ssub.s32 1, %s24
  %s27 = scalar_select 0, %s26, %s24
  $region1: #{diff_style_forward.4} parent=0
    #allocation2 [shape = 'u8[49152]{0}', space=vmem, size = 0xc000, scoped, tag = 'input window, operand 1, single buffered']
    #allocation3 [shape = 's32[1]{0}', space=sflag, size = 0x4, scoped, tag = 'scoped memory for diff_style_forward.4']
    #allocation4 [shape = 'u8[49152]{0}', space=vmem, size = 0xc000, scoped, tag = 'input window, operand 2, single buffered']
    #allocation5 [shape = 's32[1]{0}', space=sflag, size = 0x4, scoped, tag = 'scoped memory for diff_style_forward.4']
    #allocation6 [shape = 'u8[1024]{0}', space=vmem, size = 0x400, scoped, tag = 'input window, operand 3, single buffered']
    #allocation7 [shape = 'u8[24576]{0}', space=vmem, size = 0x6000, scoped, tag = 'input window, operand 4, single buffered']
    #allocation8 [shape = 's32[1]{0}', space=sflag, size = 0x4, scoped, tag = 'scoped memory for diff_style_forward.4']
    #allocation9 [shape = 'u8[512]{0}', space=vmem, size = 0x400, scoped, tag = 'input window, operand 6, single buffered']
    #allocation10 [shape = 'u8[12288]{0}', space=vmem, size = 0x3000, scoped, tag = 'input window, operand 7, single buffered']
    #allocation11 [shape = 's32[1]{0}', space=sflag, size = 0x4, scoped, tag = 'scoped memory for diff_style_forward.4']
    #allocation12 [shape = 'u8[196608]{0}', space=vmem, size = 0x30000, scoped, tag = 'input window, operand 8, single buffered']
    #allocation13 [shape = 'u8[512]{0}', space=vmem, size = 0x400, scoped, tag = 'input window, operand 9, single buffered']
    #allocation14 [shape = 's32[1]{0}', space=sflag, size = 0x4, scoped, tag = 'scoped memory for diff_style_forward.4']
    #allocation15 [shape = 'u8[6144]{0}', space=vmem, size = 0x1800, scoped, tag = 'input window, operand 10, single buffered']
    #allocation16 [shape = 'u8[512]{0}', space=vmem, size = 0x400, scoped, tag = 'input window, operand 12, single buffered']
    #allocation17 [shape = 's32[1]{0}', space=sflag, size = 0x4, scoped, tag = 'scoped memory for diff_style_forward.4']
    #allocation18 [shape = 'u8[98304]{0}', space=vmem, size = 0x18000, scoped, tag = 'input window, operand 14, single buffered']
    #allocation19 [shape = 'u8[512]{0}', space=vmem, size = 0x400, scoped, tag = 'input window, operand 15, single buffered']
    #allocation20 [shape = 's32[1]{0}', space=sflag, size = 0x4, scoped, tag = 'scoped memory for diff_style_forward.4']
    #allocation21 [shape = 'u8[196608]{0}', space=vmem, size = 0x30000, scoped, tag = 'input window, operand 17, single buffered']
    #allocation22 [shape = 'u8[512]{0}', space=vmem, size = 0x400, scoped, tag = 'input window, operand 18, single buffered']
    #allocation23 [shape = 's32[1]{0}', space=sflag, size = 0x4, scoped, tag = 'scoped memory for diff_style_forward.4']
    #allocation24 [shape = 'u8[65536]{0}', space=vmem, size = 0x10000, scoped, tag = 'input window, operand 19, single buffered']
    #allocation25 [shape = 'u8[512]{0}', space=vmem, size = 0x400, scoped, tag = 'input window, operand 20, single buffered']
    #allocation26 [shape = 's32[1]{0}', space=sflag, size = 0x4, scoped, tag = 'scoped memory for diff_style_forward.4']
    #allocation27 [shape = 'u8[512]{0}', space=vmem, size = 0x400, scoped, tag = 'input window, operand 22, single buffered']
    %28 = vsyncpa [#allocation3], 0
    %29 = vsyncpa [#allocation5], 0
    %30 = vsyncpa [#allocation8], 0
    %31 = vsyncpa [#allocation11], 0
    %32 = vsyncpa [#allocation14], 0
    %33 = vsyncpa [#allocation17], 0
    %34 = vsyncpa [#allocation20], 0
    %35 = vsyncpa [#allocation23], 0
    %36 = vsyncpa [#allocation26], 0
    // Predicated region
    $region2: #{diff_style_forward.4} parent=1 // pred_check
      _
    $region3: #{diff_style_forward.4} parent=1 // pred_check_branch
      %38 = sbr.rel (0) target = $region5
    $region4: #{diff_style_forward.4} parent=1 // pred_region
      _
    $region5: #{diff_style_forward.4} parent=1 // pred_fallthru
      _
    // Predicated region
    $region6: #{diff_style_forward.4} parent=1 // pred_check
      _
    $region7: #{diff_style_forward.4} parent=1 // pred_check_branch
      %40 = sbr.rel (0) target = $region9
    $region8: #{diff_style_forward.4} parent=1 // pred_region
      %s42 = ssub.s32 1536, 1536
      %43 = vsyncadd [#allocation3], %s42
      %s44 = sshll.u32 [#allocation2], 4
      %s45 = int_to_ptr.vmem [resolvable:$true] %s44
      %50 = dma.hbm_to_vmem [thread:$0]  %s1, 1536, %s45, [#allocation3], 128, 128, 8
    $region9: #{diff_style_forward.4} parent=1 // pred_fallthru
      _
    // Predicated region
    $region10: #{diff_style_forward.4} parent=1 // pred_check
      _
    $region11: #{diff_style_forward.4} parent=1 // pred_check_branch
      %52 = sbr.rel (0) target = $region13
    $region12: #{diff_style_forward.4} parent=1 // pred_region
      %s54 = ssub.s32 1536, 1536
      %55 = vsyncadd [#allocation5], %s54
      %s56 = sshll.u32 [#allocation4], 4
      %s57 = int_to_ptr.vmem [resolvable:$true] %s56
      %62 = dma.hbm_to_vmem [thread:$0]  %s2, 1536, %s57, [#allocation5], 256, 256, 16
    $region13: #{diff_style_forward.4} parent=1 // pred_fallthru
      _
    // Predicated region
    $region14: #{diff_style_forward.4} parent=1 // pred_check
      _
    $region15: #{diff_style_forward.4} parent=1 // pred_check_branch
      %64 = sbr.rel (0) target = $region17
    $region16: #{diff_style_forward.4} parent=1 // pred_region
      %s66 = ssub.s32 32, 32
      %67 = vsyncadd [#allocation5], %s66
      %s69 = sshll.u32 [#allocation6], 4
      %s70 = int_to_ptr.vmem [resolvable:$true] %s69
      %72 = dma.hbm_to_vmem [thread:$0]  %s3, 32, %s70, [#allocation5]
    $region17: #{diff_style_forward.4} parent=1 // pred_fallthru
      _
    // Predicated region
    $region18: #{diff_style_forward.4} parent=1 // pred_check
      _
    $region19: #{diff_style_forward.4} parent=1 // pred_check_branch
      %74 = sbr.rel (0) target = $region21
    $region20: #{diff_style_forward.4} parent=1 // pred_region
      %s76 = ssub.s32 768, 768
      %77 = vsyncadd [#allocation8], %s76
      %s78 = sshll.u32 [#allocation7], 4
      %s79 = int_to_ptr.vmem [resolvable:$true] %s78
      %84 = dma.hbm_to_vmem [thread:$0]  %s4, 768, %s79, [#allocation8], 128, 128, 8
    $region21: #{diff_style_forward.4} parent=1 // pred_fallthru
      _
    // Predicated region
    $region22: #{diff_style_forward.4} parent=1 // pred_check
      _
    $region23: #{diff_style_forward.4} parent=1 // pred_check_branch
      %86 = sbr.rel (0) target = $region25
    $region24: #{diff_style_forward.4} parent=1 // pred_region
      _
    $region25: #{diff_style_forward.4} parent=1 // pred_fallthru
      _
    // Predicated region
    $region26: #{diff_style_forward.4} parent=1 // pred_check
      _
    $region27: #{diff_style_forward.4} parent=1 // pred_check_branch
      %88 = sbr.rel (0) target = $region29
    $region28: #{diff_style_forward.4} parent=1 // pred_region
      %s90 = ssub.s32 16, 16
      %91 = vsyncadd [#allocation8], %s90
      %s93 = sshll.u32 [#allocation9], 4
      %s94 = int_to_ptr.vmem [resolvable:$true] %s93
      %96 = dma.hbm_to_vmem [thread:$0]  %s6, 16, %s94, [#allocation8]
    $region29: #{diff_style_forward.4} parent=1 // pred_fallthru
      _
    // Predicated region
    $region30: #{diff_style_forward.4} parent=1 // pred_check
      _
    $region31: #{diff_style_forward.4} parent=1 // pred_check_branch
      %98 = sbr.rel (0) target = $region33
    $region32: #{diff_style_forward.4} parent=1 // pred_region
      %s100 = ssub.s32 384, 384
      %101 = vsyncadd [#allocation11], %s100
      %s102 = sshll.u32 [#allocation10], 4
      %s103 = int_to_ptr.vmem [resolvable:$true] %s102
      %108 = dma.hbm_to_vmem [thread:$0]  %s7, 384, %s103, [#allocation11], 128, 128, 8
    $region33: #{diff_style_forward.4} parent=1 // pred_fallthru
      _
    // Predicated region
    $region34: #{diff_style_forward.4} parent=1 // pred_check
      _
    $region35: #{diff_style_forward.4} parent=1 // pred_check_branch
      %110 = sbr.rel (0) target = $region37
    $region36: #{diff_style_forward.4} parent=1 // pred_region
      %s112 = ssub.s32 6144, 6144
      %113 = vsyncadd [#allocation11], %s112
      %s114 = sshll.u32 [#allocation12], 4
      %s115 = int_to_ptr.vmem [resolvable:$true] %s114
      %120 = dma.hbm_to_vmem [thread:$0]  %s8, 6144, %s115, [#allocation11], 128, 128, 8
    $region37: #{diff_style_forward.4} parent=1 // pred_fallthru
      _
    // Predicated region
    $region38: #{diff_style_forward.4} parent=1 // pred_check
      _
    $region39: #{diff_style_forward.4} parent=1 // pred_check_branch
      %122 = sbr.rel (0) target = $region41
    $region40: #{diff_style_forward.4} parent=1 // pred_region
      %s124 = ssub.s32 16, 16
      %125 = vsyncadd [#allocation14], %s124
      %s127 = sshll.u32 [#allocation13], 4
      %s128 = int_to_ptr.vmem [resolvable:$true] %s127
      %130 = dma.hbm_to_vmem [thread:$0]  %s9, 16, %s128, [#allocation14]
    $region41: #{diff_style_forward.4} parent=1 // pred_fallthru
      _
    // Predicated region
    $region42: #{diff_style_forward.4} parent=1 // pred_check
      _
    $region43: #{diff_style_forward.4} parent=1 // pred_check_branch
      %132 = sbr.rel (0) target = $region45
    $region44: #{diff_style_forward.4} parent=1 // pred_region
      %s134 = ssub.s32 192, 192
      %135 = vsyncadd [#allocation14], %s134
      %s136 = sshll.u32 [#allocation15], 4
      %s137 = int_to_ptr.vmem [resolvable:$true] %s136
      %142 = dma.hbm_to_vmem [thread:$0]  %s10, 192, %s137, [#allocation14], 64, 64, 4
    $region45: #{diff_style_forward.4} parent=1 // pred_fallthru
      _
    // Predicated region
    $region46: #{diff_style_forward.4} parent=1 // pred_check
      _
    $region47: #{diff_style_forward.4} parent=1 // pred_check_branch
      %144 = sbr.rel (0) target = $region49
    $region48: #{diff_style_forward.4} parent=1 // pred_region
      _
    $region49: #{diff_style_forward.4} parent=1 // pred_fallthru
      _
    // Predicated region
    $region50: #{diff_style_forward.4} parent=1 // pred_check
      _
    $region51: #{diff_style_forward.4} parent=1 // pred_check_branch
      %146 = sbr.rel (0) target = $region53
    $region52: #{diff_style_forward.4} parent=1 // pred_region
      %s148 = ssub.s32 16, 16
      %149 = vsyncadd [#allocation17], %s148
      %s151 = sshll.u32 [#allocation16], 4
      %s152 = int_to_ptr.vmem [resolvable:$true] %s151
      %154 = dma.hbm_to_vmem [thread:$0]  %s12, 16, %s152, [#allocation17]
    $region53: #{diff_style_forward.4} parent=1 // pred_fallthru
      _
    // Predicated region
    $region54: #{diff_style_forward.4} parent=1 // pred_check
      _
    $region55: #{diff_style_forward.4} parent=1 // pred_check_branch
      %156 = sbr.rel (0) target = $region57
    $region56: #{diff_style_forward.4} parent=1 // pred_region
      _
    $region57: #{diff_style_forward.4} parent=1 // pred_fallthru
      _
    // Predicated region
    $region58: #{diff_style_forward.4} parent=1 // pred_check
      _
    $region59: #{diff_style_forward.4} parent=1 // pred_check_branch
      %158 = sbr.rel (0) target = $region61
    $region60: #{diff_style_forward.4} parent=1 // pred_region
      %s160 = ssub.s32 3072, 3072
      %161 = vsyncadd [#allocation17], %s160
      %s162 = sshll.u32 [#allocation18], 4
      %s163 = int_to_ptr.vmem [resolvable:$true] %s162
      %168 = dma.hbm_to_vmem [thread:$0]  %s14, 3072, %s163, [#allocation17], 128, 128, 8
    $region61: #{diff_style_forward.4} parent=1 // pred_fallthru
      _
    // Predicated region
    $region62: #{diff_style_forward.4} parent=1 // pred_check
      _
    $region63: #{diff_style_forward.4} parent=1 // pred_check_branch
      %170 = sbr.rel (0) target = $region65
    $region64: #{diff_style_forward.4} parent=1 // pred_region
      %s172 = ssub.s32 16, 16
      %173 = vsyncadd [#allocation20], %s172
      %s175 = sshll.u32 [#allocation19], 4
      %s176 = int_to_ptr.vmem [resolvable:$true] %s175
      %178 = dma.hbm_to_vmem [thread:$0]  %s15, 16, %s176, [#allocation20]
    $region65: #{diff_style_forward.4} parent=1 // pred_fallthru
      _
    // Predicated region
    $region66: #{diff_style_forward.4} parent=1 // pred_check
      _
    $region67: #{diff_style_forward.4} parent=1 // pred_check_branch
      %180 = sbr.rel (0) target = $region69
    $region68: #{diff_style_forward.4} parent=1 // pred_region
      _
    $region69: #{diff_style_forward.4} parent=1 // pred_fallthru
      _
    // Predicated region
    $region70: #{diff_style_forward.4} parent=1 // pred_check
      _
    $region71: #{diff_style_forward.4} parent=1 // pred_check_branch
      %182 = sbr.rel (0) target = $region73
    $region72: #{diff_style_forward.4} parent=1 // pred_region
      %s184 = ssub.s32 6144, 6144
      %185 = vsyncadd [#allocation20], %s184
      %s186 = sshll.u32 [#allocation21], 4
      %s187 = int_to_ptr.vmem [resolvable:$true] %s186
      %192 = dma.hbm_to_vmem [thread:$0]  %s17, 6144, %s187, [#allocation20], 128, 128, 8
    $region73: #{diff_style_forward.4} parent=1 // pred_fallthru
      _
    // Predicated region
    $region74: #{diff_style_forward.4} parent=1 // pred_check
      _
    $region75: #{diff_style_forward.4} parent=1 // pred_check_branch
      %194 = sbr.rel (0) target = $region77
    $region76: #{diff_style_forward.4} parent=1 // pred_region
      %s196 = ssub.s32 16, 16
      %197 = vsyncadd [#allocation23], %s196
      %s199 = sshll.u32 [#allocation22], 4
      %s200 = int_to_ptr.vmem [resolvable:$true] %s199
      %202 = dma.hbm_to_vmem [thread:$0]  %s18, 16, %s200, [#allocation23]
    $region77: #{diff_style_forward.4} parent=1 // pred_fallthru
      _
    // Predicated region
    $region78: #{diff_style_forward.4} parent=1 // pred_check
      _
    $region79: #{diff_style_forward.4} parent=1 // pred_check_branch
      %204 = sbr.rel (0) target = $region81
    $region80: #{diff_style_forward.4} parent=1 // pred_region
      %s206 = ssub.s32 2048, 2048
      %207 = vsyncadd [#allocation23], %s206
      %s208 = sshll.u32 [#allocation24], 4
      %s209 = int_to_ptr.vmem [resolvable:$true] %s208
      %214 = dma.hbm_to_vmem [thread:$0]  %s19, 2048, %s209, [#allocation23], 128, 128, 8
    $region81: #{diff_style_forward.4} parent=1 // pred_fallthru
      _
    // Predicated region
    $region82: #{diff_style_forward.4} parent=1 // pred_check
      _
    $region83: #{diff_style_forward.4} parent=1 // pred_check_branch
      %216 = sbr.rel (0) target = $region85
    $region84: #{diff_style_forward.4} parent=1 // pred_region
      %s218 = ssub.s32 16, 16
      %219 = vsyncadd [#allocation26], %s218
      %s221 = sshll.u32 [#allocation25], 4
      %s222 = int_to_ptr.vmem [resolvable:$true] %s221
      %224 = dma.hbm_to_vmem [thread:$0]  %s20, 16, %s222, [#allocation26]
    $region85: #{diff_style_forward.4} parent=1 // pred_fallthru
      _
    // Predicated region
    $region86: #{diff_style_forward.4} parent=1 // pred_check
      _
    $region87: #{diff_style_forward.4} parent=1 // pred_check_branch
      %226 = sbr.rel (0) target = $region89
    $region88: #{diff_style_forward.4} parent=1 // pred_region
      _
    $region89: #{diff_style_forward.4} parent=1 // pred_fallthru
      _
    // Predicated region
    $region90: #{diff_style_forward.4} parent=1 // pred_check
      _
    $region91: #{diff_style_forward.4} parent=1 // pred_check_branch
      %228 = sbr.rel (0) target = $region93
    $region92: #{diff_style_forward.4} parent=1 // pred_region
      %s230 = ssub.s32 16, 16
      %231 = vsyncadd [#allocation26], %s230
      %s233 = sshll.u32 [#allocation27], 4
      %s234 = int_to_ptr.vmem [resolvable:$true] %s233
      %236 = dma.hbm_to_vmem [thread:$0]  %s22, 16, %s234, [#allocation26]
    $region93: #{diff_style_forward.4} parent=1 // pred_fallthru
      _
    // Predicated region
    $region94: #{diff_style_forward.4} parent=1 // pred_check
      _
    $region95: #{diff_style_forward.4} parent=1 // pred_check_branch
      %238 = sbr.rel (0) target = $region97
    $region96: #{diff_style_forward.4} parent=1 // pred_region
      %239 = dma.done [#allocation3], 1536
    $region97: #{diff_style_forward.4} parent=1 // pred_fallthru
      _
    // Predicated region
    $region98: #{diff_style_forward.4} parent=1 // pred_check
      _
    $region99: #{diff_style_forward.4} parent=1 // pred_check_branch
      %241 = sbr.rel (0) target = $region101
    $region100: #{diff_style_forward.4} parent=1 // pred_region
      %242 = dma.done [#allocation5], 1536
    $region101: #{diff_style_forward.4} parent=1 // pred_fallthru
      _
    // Predicated region
    $region102: #{diff_style_forward.4} parent=1 // pred_check
      _
    $region103: #{diff_style_forward.4} parent=1 // pred_check_branch
      %244 = sbr.rel (0) target = $region105
    $region104: #{diff_style_forward.4} parent=1 // pred_region
      %245 = dma.done [#allocation5], 32
    $region105: #{diff_style_forward.4} parent=1 // pred_fallthru
      _
    // Predicated region
    $region106: #{diff_style_forward.4} parent=1 // pred_check
      _
    $region107: #{diff_style_forward.4} parent=1 // pred_check_branch
      %247 = sbr.rel (0) target = $region109
    $region108: #{diff_style_forward.4} parent=1 // pred_region
      %248 = dma.done [#allocation8], 768
    $region109: #{diff_style_forward.4} parent=1 // pred_fallthru
      _
    // Predicated region
    $region110: #{diff_style_forward.4} parent=1 // pred_check
      _
    $region111: #{diff_style_forward.4} parent=1 // pred_check_branch
      %250 = sbr.rel (0) target = $region113
    $region112: #{diff_style_forward.4} parent=1 // pred_region
      %251 = dma.done [#allocation8], 16
    $region113: #{diff_style_forward.4} parent=1 // pred_fallthru
      _
    // Predicated region
    $region114: #{diff_style_forward.4} parent=1 // pred_check
      _
    $region115: #{diff_style_forward.4} parent=1 // pred_check_branch
      %253 = sbr.rel (0) target = $region117
    $region116: #{diff_style_forward.4} parent=1 // pred_region
      %254 = dma.done [#allocation11], 384
    $region117: #{diff_style_forward.4} parent=1 // pred_fallthru
      _
    // Predicated region
    $region118: #{diff_style_forward.4} parent=1 // pred_check
      _
    $region119: #{diff_style_forward.4} parent=1 // pred_check_branch
      %256 = sbr.rel (0) target = $region121
    $region120: #{diff_style_forward.4} parent=1 // pred_region
      %257 = dma.done [#allocation11], 6144
    $region121: #{diff_style_forward.4} parent=1 // pred_fallthru
      _
    // Predicated region
    $region122: #{diff_style_forward.4} parent=1 // pred_check
      _
    $region123: #{diff_style_forward.4} parent=1 // pred_check_branch
      %259 = sbr.rel (0) target = $region125
    $region124: #{diff_style_forward.4} parent=1 // pred_region
      %260 = dma.done [#allocation14], 16
    $region125: #{diff_style_forward.4} parent=1 // pred_fallthru
      _
    // Predicated region
    $region126: #{diff_style_forward.4} parent=1 // pred_check
      _
    $region127: #{diff_style_forward.4} parent=1 // pred_check_branch
      %262 = sbr.rel (0) target = $region129
    $region128: #{diff_style_forward.4} parent=1 // pred_region
      %263 = dma.done [#allocation14], 192
    $region129: #{diff_style_forward.4} parent=1 // pred_fallthru
      _
    // Predicated region
    $region130: #{diff_style_forward.4} parent=1 // pred_check
      _
    $region131: #{diff_style_forward.4} parent=1 // pred_check_branch
      %265 = sbr.rel (0) target = $region133
    $region132: #{diff_style_forward.4} parent=1 // pred_region
      %266 = dma.done [#allocation17], 16
    $region133: #{diff_style_forward.4} parent=1 // pred_fallthru
      _
    // Predicated region
    $region134: #{diff_style_forward.4} parent=1 // pred_check
      _
    $region135: #{diff_style_forward.4} parent=1 // pred_check_branch
      %268 = sbr.rel (0) target = $region137
    $region136: #{diff_style_forward.4} parent=1 // pred_region
      %269 = dma.done [#allocation17], 3072
    $region137: #{diff_style_forward.4} parent=1 // pred_fallthru
      _
    // Predicated region
    $region138: #{diff_style_forward.4} parent=1 // pred_check
      _
    $region139: #{diff_style_forward.4} parent=1 // pred_check_branch
      %271 = sbr.rel (0) target = $region141
    $region140: #{diff_style_forward.4} parent=1 // pred_region
      %272 = dma.done [#allocation20], 16
    $region141: #{diff_style_forward.4} parent=1 // pred_fallthru
      _
    // Predicated region
    $region142: #{diff_style_forward.4} parent=1 // pred_check
      _
    $region143: #{diff_style_forward.4} parent=1 // pred_check_branch
      %274 = sbr.rel (0) target = $region145
    $region144: #{diff_style_forward.4} parent=1 // pred_region
      %275 = dma.done [#allocation20], 6144
    $region145: #{diff_style_forward.4} parent=1 // pred_fallthru
      _
    // Predicated region
    $region146: #{diff_style_forward.4} parent=1 // pred_check
      _
    $region147: #{diff_style_forward.4} parent=1 // pred_check_branch
      %277 = sbr.rel (0) target = $region149
    $region148: #{diff_style_forward.4} parent=1 // pred_region
      %278 = dma.done [#allocation23], 16
    $region149: #{diff_style_forward.4} parent=1 // pred_fallthru
      _
    // Predicated region
    $region150: #{diff_style_forward.4} parent=1 // pred_check
      _
    $region151: #{diff_style_forward.4} parent=1 // pred_check_branch
      %280 = sbr.rel (0) target = $region153
    $region152: #{diff_style_forward.4} parent=1 // pred_region
      %281 = dma.done [#allocation23], 2048
    $region153: #{diff_style_forward.4} parent=1 // pred_fallthru
      _
    // Predicated region
    $region154: #{diff_style_forward.4} parent=1 // pred_check
      _
    $region155: #{diff_style_forward.4} parent=1 // pred_check_branch
      %283 = sbr.rel (0) target = $region157
    $region156: #{diff_style_forward.4} parent=1 // pred_region
      %284 = dma.done [#allocation26], 16
    $region157: #{diff_style_forward.4} parent=1 // pred_fallthru
      _
    // Predicated region
    $region158: #{diff_style_forward.4} parent=1 // pred_check
      _
    $region159: #{diff_style_forward.4} parent=1 // pred_check_branch
      %286 = sbr.rel (0) target = $region161
    $region160: #{diff_style_forward.4} parent=1 // pred_region
      %287 = dma.done [#allocation26], 16
    $region161: #{diff_style_forward.4} parent=1 // pred_fallthru
      _
    %v288 = vld [vmem:[%s0] sm:$0xff]
    %v289 = vld [vmem:[%s0 + $0x8] sm:$0xff]
    %v290 = vld [vmem:[%s0 + $0x10] sm:$0xff]
    %v291 = vld [vmem:[%s0 + $0x18] sm:$0xff]
    %v292 = vld [vmem:[%s0 + $0x20] sm:$0xff]
    %v293 = vld [vmem:[%s0 + $0x28] sm:$0xff]
    %v294 = vld [vmem:[%s0 + $0x30] sm:$0xff]
    %v295 = vld [vmem:[%s0 + $0x38] sm:$0xff]
    %v296 = vld [vmem:[#allocation6] sm:$0x3]
    %v297 = vld [vmem:[#allocation2] sm:$0xff]
    %v298 = vld [vmem:[#allocation2 + $0x8] sm:$0xff]
    %v299 = vld [vmem:[#allocation2 + $0x10] sm:$0xff]
    %v300 = vld [vmem:[#allocation2 + $0x18] sm:$0xff]
    %vm301 = vcmask 523264
    %v303 = vsel %vm301, %v297, 0
    %v306 = vsel %vm301, %v298, 0
    %v309 = vsel %vm301, %v299, 0
    %v312 = vsel %vm301, %v300, 0
    %314 = vmatprep.subr.mxu0 0.0
    %315 = vmatpush1.msra.mxu0 %v288
    %316 = vmatprep.subr.mxu0 0.0
    %317 = vmatpush1.msra.mxu0 %v289
    %318 = vmatprep.subr.mxu0 0.0
    %319 = vmatpush1.msra.mxu0 %v290
    %320 = vmatprep.subr.mxu0 0.0
    %321 = vmatpush1.msra.mxu0 %v291
    %322 = vmatprep.subr.mxu0 0.0
    %323 = vmatpush1.msra.mxu0 %v292
    %324 = vmatprep.subr.mxu0 0.0
    %325 = vmatpush1.msra.mxu0 %v293
    %326 = vmatprep.subr.mxu0 0.0
    %327 = vmatpush1.msra.mxu0 %v294
    %328 = vmatprep.subr.mxu0 0.0
    %329 = vmatpush1.msra.mxu0 %v295
    %330 = vmatprep.subr.mxu0 0.0
    %331 = vmatpush1.msra.mxu0 0.0
    %332 = vmatprep.subr.mxu0 0.0
    %333 = vmatpush1.msra.mxu0 0.0
    %334 = vmatprep.subr.mxu0 0.0
    %335 = vmatpush1.msra.mxu0 0.0
    %336 = vmatprep.subr.mxu0 0.0
    %337 = vmatpush1.msra.mxu0 0.0
    %338 = vmatprep.subr.mxu0 0.0
    %339 = vmatpush1.msra.mxu0 0.0
    %340 = vmatprep.subr.mxu0 0.0
    %341 = vmatpush1.msra.mxu0 0.0
    %342 = vmatprep.subr.mxu0 0.0
    %343 = vmatpush1.msra.mxu0 0.0
    %344 = vmatprep.subr.mxu0 0.0
    %345 = vmatpush1.msra.mxu0 0.0
    %346 = vmatprep.subr.mxu0 0.0
    %347 = vmatpush1.msra.mxu0 0.0
    %348 = vmatprep.subr.mxu0 0.0
    %349 = vmatpush1.msra.mxu0 0.0
    %350 = vmatprep.subr.mxu0 0.0
    %351 = vmatpush1.msra.mxu0 0.0
    %352 = vmatprep.subr.mxu0 0.0
    %353 = vmatpush1.msra.mxu0 0.0
    %354 = vmatprep.subr.mxu0 0.0
    %355 = vmatpush1.msra.mxu0 0.0
    %356 = vmatprep.subr.mxu0 0.0
    %357 = vmatpush1.msra.mxu0 0.0
    %358 = vmatprep.subr.mxu0 0.0
    %359 = vmatpush1.msra.mxu0 0.0
    %360 = vmatprep.subr.mxu0 0.0
    %361 = vmatpush1.msra.mxu0 0.0
    %362 = vmatprep.subr.mxu0 0.0
    %363 = vmatpush1.msra.mxu0 0.0
    %364 = vmatprep.subr.mxu0 0.0
    %365 = vmatpush1.msra.mxu0 0.0
    %366 = vmatprep.subr.mxu0 0.0
    %367 = vmatpush1.msra.mxu0 0.0
    %368 = vmatprep.subr.mxu0 0.0
    %369 = vmatpush1.msra.mxu0 0.0
    %370 = vmatprep.subr.mxu0 0.0
    %371 = vmatpush1.msra.mxu0 0.0
    %372 = vmatprep.subr.mxu0 0.0
    %373 = vmatpush1.msra.mxu0 0.0
    %374 = vmatprep.subr.mxu0 0.0
    %375 = vmatpush1.msra.mxu0 0.0
    %376 = vmatprep.subr.mxu0 0.0
    %377 = vmatpush1.msra.mxu0 0.0
    %378 = vmatprep.mubr.f32.mxu0 0.0
    %379 = vmatmul.mubr.f32.gmra.mrb[0].mxu0 %v303
    %v380 = vpop.f32.mrb[0].mxu0
    %v381 = vadd.f32 0.0, %v380
    %v382 = vpop.f32.mrb[0].mxu0
    %383 = vmatprep.mubr.f32.mxu0 0.0
    %384 = vmatmul.mubr.f32.gmra.mrb[0].mxu0 %v306
    %v385 = vpop.f32.mrb[0].mxu0
    %v386 = vadd.f32 0.0, %v385
    %v387 = vpop.f32.mrb[0].mxu0
    %388 = vmatprep.mubr.f32.mxu0 0.0
    %389 = vmatmul.mubr.f32.gmra.mrb[0].mxu0 %v309
    %v390 = vpop.f32.mrb[0].mxu0
    %v391 = vadd.f32 0.0, %v390
    %v392 = vpop.f32.mrb[0].mxu0
    %393 = vmatprep.mubr.f32.mxu0 0.0
    %394 = vmatmul.mubr.f32.gmra.mrb[0].mxu0 %v312
    %v395 = vpop.f32.mrb[0].mxu0
    %v396 = vadd.f32 0.0, %v395
    %v397 = vpop.f32.mrb[0].mxu0
    %398 = vdwg.mxu0
    %v399 = vld [vmem:[#allocation4] sm:$0xff]
    %v400 = vld [vmem:[#allocation4 + $0x8] sm:$0xff]
    %v401 = vld [vmem:[#allocation4 + $0x10] sm:$0xff]
    %v402 = vld [vmem:[#allocation4 + $0x18] sm:$0xff]
    %s403 = scalar_lea.vmem [#allocation2], 32
    %v404 = vld [vmem:[%s403] sm:$0xff]
    %v405 = vld [vmem:[%s403 + $0x8] sm:$0xff]
    %v406 = vld [vmem:[%s403 + $0x10] sm:$0xff]
    %v407 = vld [vmem:[%s403 + $0x18] sm:$0xff]
    %v409 = vsel %vm301, %v404, 0
    %v412 = vsel %vm301, %v405, 0
    %v415 = vsel %vm301, %v406, 0
    %v418 = vsel %vm301, %v407, 0
    %420 = vmatprep.subr.mxu0 0.0
    %421 = vmatpush1.msra.mxu0 %v288
    %422 = vmatprep.subr.mxu0 0.0
    %423 = vmatpush1.msra.mxu0 %v289
    %424 = vmatprep.subr.mxu0 0.0
    %425 = vmatpush1.msra.mxu0 %v290
    %426 = vmatprep.subr.mxu0 0.0
    %427 = vmatpush1.msra.mxu0 %v291
    %428 = vmatprep.subr.mxu0 0.0
    %429 = vmatpush1.msra.mxu0 %v292
    %430 = vmatprep.subr.mxu0 0.0
    %431 = vmatpush1.msra.mxu0 %v293
    %432 = vmatprep.subr.mxu0 0.0
    %433 = vmatpush1.msra.mxu0 %v294
    %434 = vmatprep.subr.mxu0 0.0
    %435 = vmatpush1.msra.mxu0 %v295
    %436 = vmatprep.subr.mxu0 0.0
    %437 = vmatpush1.msra.mxu0 0.0
    %438 = vmatprep.subr.mxu0 0.0
    %439 = vmatpush1.msra.mxu0 0.0
    %440 = vmatprep.subr.mxu0 0.0
    %441 = vmatpush1.msra.mxu0 0.0
    %442 = vmatprep.subr.mxu0 0.0
    %443 = vmatpush1.msra.mxu0 0.0
    %444 = vmatprep.subr.mxu0 0.0
    %445 = vmatpush1.msra.mxu0 0.0
    %446 = vmatprep.subr.mxu0 0.0
    %447 = vmatpush1.msra.mxu0 0.0
    %448 = vmatprep.subr.mxu0 0.0
    %449 = vmatpush1.msra.mxu0 0.0
    %450 = vmatprep.subr.mxu0 0.0
    %451 = vmatpush1.msra.mxu0 0.0
    %452 = vmatprep.subr.mxu0 0.0
    %453 = vmatpush1.msra.mxu0 0.0
    %454 = vmatprep.subr.mxu0 0.0
    %455 = vmatpush1.msra.mxu0 0.0
    %456 = vmatprep.subr.mxu0 0.0
    %457 = vmatpush1.msra.mxu0 0.0
    %458 = vmatprep.subr.mxu0 0.0
    %459 = vmatpush1.msra.mxu0 0.0
    %460 = vmatprep.subr.mxu0 0.0
    %461 = vmatpush1.msra.mxu0 0.0
    %462 = vmatprep.subr.mxu0 0.0
    %463 = vmatpush1.msra.mxu0 0.0
    %464 = vmatprep.subr.mxu0 0.0
    %465 = vmatpush1.msra.mxu0 0.0
    %466 = vmatprep.subr.mxu0 0.0
    %467 = vmatpush1.msra.mxu0 0.0
    %468 = vmatprep.subr.mxu0 0.0
    %469 = vmatpush1.msra.mxu0 0.0
    %470 = vmatprep.subr.mxu0 0.0
    %471 = vmatpush1.msra.mxu0 0.0
    %472 = vmatprep.subr.mxu0 0.0
    %473 = vmatpush1.msra.mxu0 0.0
    %474 = vmatprep.subr.mxu0 0.0
    %475 = vmatpush1.msra.mxu0 0.0
    %476 = vmatprep.subr.mxu0 0.0
    %477 = vmatpush1.msra.mxu0 0.0
    %478 = vmatprep.subr.mxu0 0.0
    %479 = vmatpush1.msra.mxu0 0.0
    %480 = vmatprep.subr.mxu0 0.0
    %481 = vmatpush1.msra.mxu0 0.0
    %482 = vmatprep.subr.mxu0 0.0
    %483 = vmatpush1.msra.mxu0 0.0
    %484 = vmatprep.mubr.f32.mxu0 0.0
    %485 = vmatmul.mubr.f32.gmra.mrb[0].mxu0 %v409
    %v486 = vpop.f32.mrb[0].mxu0
    %v487 = vadd.f32 0.0, %v486
    %v488 = vpop.f32.mrb[0].mxu0
    %489 = vmatprep.mubr.f32.mxu0 0.0
    %490 = vmatmul.mubr.f32.gmra.mrb[0].mxu0 %v412
    %v491 = vpop.f32.mrb[0].mxu0
    %v492 = vadd.f32 0.0, %v491
    %v493 = vpop.f32.mrb[0].mxu0
    %494 = vmatprep.mubr.f32.mxu0 0.0
    %495 = vmatmul.mubr.f32.gmra.mrb[0].mxu0 %v415
    %v496 = vpop.f32.mrb[0].mxu0
    %v497 = vadd.f32 0.0, %v496
    %v498 = vpop.f32.mrb[0].mxu0
    %499 = vmatprep.mubr.f32.mxu0 0.0
    %500 = vmatmul.mubr.f32.gmra.mrb[0].mxu0 %v418
    %v501 = vpop.f32.mrb[0].mxu0
    %v502 = vadd.f32 0.0, %v501
    %v503 = vpop.f32.mrb[0].mxu0
    %504 = vdwg.mxu0
    %s505 = scalar_lea.vmem [#allocation4], 32
    %v506 = vld [vmem:[%s505] sm:$0xff]
    %v507 = vld [vmem:[%s505 + $0x8] sm:$0xff]
    %v508 = vld [vmem:[%s505 + $0x10] sm:$0xff]
    %v509 = vld [vmem:[%s505 + $0x18] sm:$0xff]
    %vm510 = vcmask 130048
    %v512 = vsel %vm510, %v487, 0
    %v515 = vsel %vm510, %v492, 0
    %v518 = vsel %vm510, %v497, 0
    %v521 = vsel %vm510, %v502, 0
    %523 = vmatprep.subr.mxu0 %v507
    %524 = vmatpush1.msra.mxu0 %v506
    %525 = vmatprep.subr.mxu0 %v509
    %526 = vmatpush1.msra.mxu0 %v508
    %527 = vmatprep.subr.mxu0 0.0
    %528 = vmatpush1.msra.mxu0 0.0
    %529 = vmatprep.subr.mxu0 0.0
    %530 = vmatpush1.msra.mxu0 0.0
    %531 = vmatprep.subr.mxu0 0.0
    %532 = vmatpush1.msra.mxu0 0.0
    %533 = vmatprep.subr.mxu0 0.0
    %534 = vmatpush1.msra.mxu0 0.0
    %535 = vmatprep.subr.mxu0 0.0
    %536 = vmatpush1.msra.mxu0 0.0
    %537 = vmatprep.subr.mxu0 0.0
    %538 = vmatpush1.msra.mxu0 0.0
    %539 = vmatprep.subr.mxu0 0.0
    %540 = vmatpush1.msra.mxu0 0.0
    %541 = vmatprep.subr.mxu0 0.0
    %542 = vmatpush1.msra.mxu0 0.0
    %543 = vmatprep.subr.mxu0 0.0
    %544 = vmatpush1.msra.mxu0 0.0
    %545 = vmatprep.subr.mxu0 0.0
    %546 = vmatpush1.msra.mxu0 0.0
    %547 = vmatprep.subr.mxu0 0.0
    %548 = vmatpush1.msra.mxu0 0.0
    %549 = vmatprep.subr.mxu0 0.0
    %550 = vmatpush1.msra.mxu0 0.0
    %551 = vmatprep.subr.mxu0 0.0
    %552 = vmatpush1.msra.mxu0 0.0
    %553 = vmatprep.subr.mxu0 0.0
    %554 = vmatpush1.msra.mxu0 0.0
    %555 = vmatprep.subr.mxu0 0.0
    %556 = vmatpush1.msra.mxu0 0.0
    %557 = vmatprep.subr.mxu0 0.0
    %558 = vmatpush1.msra.mxu0 0.0
    %559 = vmatprep.subr.mxu0 0.0
    %560 = vmatpush1.msra.mxu0 0.0
    %561 = vmatprep.subr.mxu0 0.0
    %562 = vmatpush1.msra.mxu0 0.0
    %563 = vmatprep.subr.mxu0 0.0
    %564 = vmatpush1.msra.mxu0 0.0
    %565 = vmatprep.subr.mxu0 0.0
    %566 = vmatpush1.msra.mxu0 0.0
    %567 = vmatprep.subr.mxu0 0.0
    %568 = vmatpush1.msra.mxu0 0.0
    %569 = vmatprep.subr.mxu0 0.0
    %570 = vmatpush1.msra.mxu0 0.0
    %571 = vmatprep.subr.mxu0 0.0
    %572 = vmatpush1.msra.mxu0 0.0
    %573 = vmatprep.subr.mxu0 0.0
    %574 = vmatpush1.msra.mxu0 0.0
    %575 = vmatprep.subr.mxu0 0.0
    %576 = vmatpush1.msra.mxu0 0.0
    %577 = vmatprep.subr.mxu0 0.0
    %578 = vmatpush1.msra.mxu0 0.0
    %579 = vmatprep.subr.mxu0 0.0
    %580 = vmatpush1.msra.mxu0 0.0
    %581 = vmatprep.subr.mxu0 0.0
    %582 = vmatpush1.msra.mxu0 0.0
    %583 = vmatprep.subr.mxu0 0.0
    %584 = vmatpush1.msra.mxu0 0.0
    %585 = vmatprep.subr.mxu0 0.0
    %586 = vmatpush1.msra.mxu0 0.0
    %587 = vmatprep.mubr.f32.mxu0 0.0
    %588 = vmatmul.mubr.f32.gmra.mrb[0].mxu0 %v512
    %v589 = vpop.f32.mrb[0].mxu0
    %v590 = vadd.f32 0.0, %v589
    %v591 = vpop.f32.mrb[0].mxu0
    %v592 = vadd.f32 0.0, %v591
    %593 = vmatprep.mubr.f32.mxu0 0.0
    %594 = vmatmul.mubr.f32.gmra.mrb[0].mxu0 %v515
    %v595 = vpop.f32.mrb[0].mxu0
    %v596 = vadd.f32 0.0, %v595
    %v597 = vpop.f32.mrb[0].mxu0
    %v598 = vadd.f32 0.0, %v597
    %599 = vmatprep.mubr.f32.mxu0 0.0
    %600 = vmatmul.mubr.f32.gmra.mrb[0].mxu0 %v518
    %v601 = vpop.f32.mrb[0].mxu0
    %v602 = vadd.f32 0.0, %v601
    %v603 = vpop.f32.mrb[0].mxu0
    %v604 = vadd.f32 0.0, %v603
    %605 = vmatprep.mubr.f32.mxu0 0.0
    %606 = vmatmul.mubr.f32.gmra.mrb[0].mxu0 %v521
    %v607 = vpop.f32.mrb[0].mxu0
    %v608 = vadd.f32 0.0, %v607
    %v609 = vpop.f32.mrb[0].mxu0
    %v610 = vadd.f32 0.0, %v609
    %611 = vdwg.mxu0
    %v613 = vsel %vm510, %v381, 0
    %v616 = vsel %vm510, %v386, 0
    %v619 = vsel %vm510, %v391, 0
    %v622 = vsel %vm510, %v396, 0
    %624 = vmatprep.subr.mxu0 %v400
    %625 = vmatpush1.msra.mxu0 %v399
    %626 = vmatprep.subr.mxu0 %v402
    %627 = vmatpush1.msra.mxu0 %v401
    %628 = vmatprep.subr.mxu0 0.0
    %629 = vmatpush1.msra.mxu0 0.0
    %630 = vmatprep.subr.mxu0 0.0
    %631 = vmatpush1.msra.mxu0 0.0
    %632 = vmatprep.subr.mxu0 0.0
    %633 = vmatpush1.msra.mxu0 0.0
    %634 = vmatprep.subr.mxu0 0.0
    %635 = vmatpush1.msra.mxu0 0.0
    %636 = vmatprep.subr.mxu0 0.0
    %637 = vmatpush1.msra.mxu0 0.0
    %638 = vmatprep.subr.mxu0 0.0
    %639 = vmatpush1.msra.mxu0 0.0
    %640 = vmatprep.subr.mxu0 0.0
    %641 = vmatpush1.msra.mxu0 0.0
    %642 = vmatprep.subr.mxu0 0.0
    %643 = vmatpush1.msra.mxu0 0.0
    %644 = vmatprep.subr.mxu0 0.0
    %645 = vmatpush1.msra.mxu0 0.0
    %646 = vmatprep.subr.mxu0 0.0
    %647 = vmatpush1.msra.mxu0 0.0
    %648 = vmatprep.subr.mxu0 0.0
    %649 = vmatpush1.msra.mxu0 0.0
    %650 = vmatprep.subr.mxu0 0.0
    %651 = vmatpush1.msra.mxu0 0.0
    %652 = vmatprep.subr.mxu0 0.0
    %653 = vmatpush1.msra.mxu0 0.0
    %654 = vmatprep.subr.mxu0 0.0
    %655 = vmatpush1.msra.mxu0 0.0
    %656 = vmatprep.subr.mxu0 0.0
    %657 = vmatpush1.msra.mxu0 0.0
    %658 = vmatprep.subr.mxu0 0.0
    %659 = vmatpush1.msra.mxu0 0.0
    %660 = vmatprep.subr.mxu0 0.0
    %661 = vmatpush1.msra.mxu0 0.0
    %662 = vmatprep.subr.mxu0 0.0
    %663 = vmatpush1.msra.mxu0 0.0
    %664 = vmatprep.subr.mxu0 0.0
    %665 = vmatpush1.msra.mxu0 0.0
    %666 = vmatprep.subr.mxu0 0.0
    %667 = vmatpush1.msra.mxu0 0.0
    %668 = vmatprep.subr.mxu0 0.0
    %669 = vmatpush1.msra.mxu0 0.0
    %670 = vmatprep.subr.mxu0 0.0
    %671 = vmatpush1.msra.mxu0 0.0
    %672 = vmatprep.subr.mxu0 0.0
    %673 = vmatpush1.msra.mxu0 0.0
    %674 = vmatprep.subr.mxu0 0.0
    %675 = vmatpush1.msra.mxu0 0.0
    %676 = vmatprep.subr.mxu0 0.0
    %677 = vmatpush1.msra.mxu0 0.0
    %678 = vmatprep.subr.mxu0 0.0
    %679 = vmatpush1.msra.mxu0 0.0
    %680 = vmatprep.subr.mxu0 0.0
    %681 = vmatpush1.msra.mxu0 0.0
    %682 = vmatprep.subr.mxu0 0.0
    %683 = vmatpush1.msra.mxu0 0.0
    %684 = vmatprep.subr.mxu0 0.0
    %685 = vmatpush1.msra.mxu0 0.0
    %686 = vmatprep.subr.mxu0 0.0
    %687 = vmatpush1.msra.mxu0 0.0
    %688 = vmatprep.mubr.f32.mxu0 0.0
    %689 = vmatmul.mubr.f32.gmra.mrb[0].mxu0 %v613
    %v690 = vpop.f32.mrb[0].mxu0
    %v691 = vadd.f32 %v590, %v690
    %v692 = vpop.f32.mrb[0].mxu0
    %v693 = vadd.f32 %v592, %v692
    %694 = vmatprep.mubr.f32.mxu0 0.0
    %695 = vmatmul.mubr.f32.gmra.mrb[0].mxu0 %v616
    %v696 = vpop.f32.mrb[0].mxu0
    %v697 = vadd.f32 %v596, %v696
    %v698 = vpop.f32.mrb[0].mxu0
    %v699 = vadd.f32 %v598, %v698
    %700 = vmatprep.mubr.f32.mxu0 0.0
    %701 = vmatmul.mubr.f32.gmra.mrb[0].mxu0 %v619
    %v702 = vpop.f32.mrb[0].mxu0
    %v703 = vadd.f32 %v602, %v702
    %v704 = vpop.f32.mrb[0].mxu0
    %v705 = vadd.f32 %v604, %v704
    %706 = vmatprep.mubr.f32.mxu0 0.0
    %707 = vmatmul.mubr.f32.gmra.mrb[0].mxu0 %v622
    %v708 = vpop.f32.mrb[0].mxu0
    %v709 = vadd.f32 %v608, %v708
    %v710 = vpop.f32.mrb[0].mxu0
    %v711 = vadd.f32 %v610, %v710
    %712 = vdwg.mxu0
    %s713 = scalar_lea.vmem [#allocation2], 64
    %v714 = vld [vmem:[%s713] sm:$0xff]
    %v715 = vld [vmem:[%s713 + $0x8] sm:$0xff]
    %v716 = vld [vmem:[%s713 + $0x10] sm:$0xff]
    %v717 = vld [vmem:[%s713 + $0x18] sm:$0xff]
    %v719 = vsel %vm301, %v714, 0
    %v722 = vsel %vm301, %v715, 0
    %v725 = vsel %vm301, %v716, 0
    %v728 = vsel %vm301, %v717, 0
    %730 = vmatprep.subr.mxu0 0.0
    %731 = vmatpush1.msra.mxu0 %v288
    %732 = vmatprep.subr.mxu0 0.0
    %733 = vmatpush1.msra.mxu0 %v289
    %734 = vmatprep.subr.mxu0 0.0
    %735 = vmatpush1.msra.mxu0 %v290
    %736 = vmatprep.subr.mxu0 0.0
    %737 = vmatpush1.msra.mxu0 %v291
    %738 = vmatprep.subr.mxu0 0.0
    %739 = vmatpush1.msra.mxu0 %v292
    %740 = vmatprep.subr.mxu0 0.0
    %741 = vmatpush1.msra.mxu0 %v293
    %742 = vmatprep.subr.mxu0 0.0
    %743 = vmatpush1.msra.mxu0 %v294
    %744 = vmatprep.subr.mxu0 0.0
    %745 = vmatpush1.msra.mxu0 %v295
    %746 = vmatprep.subr.mxu0 0.0
    %747 = vmatpush1.msra.mxu0 0.0
    %748 = vmatprep.subr.mxu0 0.0
    %749 = vmatpush1.msra.mxu0 0.0
    %750 = vmatprep.subr.mxu0 0.0
    %751 = vmatpush1.msra.mxu0 0.0
    %752 = vmatprep.subr.mxu0 0.0
    %753 = vmatpush1.msra.mxu0 0.0
    %754 = vmatprep.subr.mxu0 0.0
    %755 = vmatpush1.msra.mxu0 0.0
    %756 = vmatprep.subr.mxu0 0.0
    %757 = vmatpush1.msra.mxu0 0.0
    %758 = vmatprep.subr.mxu0 0.0
    %759 = vmatpush1.msra.mxu0 0.0
    %760 = vmatprep.subr.mxu0 0.0
    %761 = vmatpush1.msra.mxu0 0.0
    %762 = vmatprep.subr.mxu0 0.0
    %763 = vmatpush1.msra.mxu0 0.0
    %764 = vmatprep.subr.mxu0 0.0
    %765 = vmatpush1.msra.mxu0 0.0
    %766 = vmatprep.subr.mxu0 0.0
    %767 = vmatpush1.msra.mxu0 0.0
    %768 = vmatprep.subr.mxu0 0.0
    %769 = vmatpush1.msra.mxu0 0.0
    %770 = vmatprep.subr.mxu0 0.0
    %771 = vmatpush1.msra.mxu0 0.0
    %772 = vmatprep.subr.mxu0 0.0
    %773 = vmatpush1.msra.mxu0 0.0
    %774 = vmatprep.subr.mxu0 0.0
    %775 = vmatpush1.msra.mxu0 0.0
    %776 = vmatprep.subr.mxu0 0.0
    %777 = vmatpush1.msra.mxu0 0.0
    %778 = vmatprep.subr.mxu0 0.0
    %779 = vmatpush1.msra.mxu0 0.0
    %780 = vmatprep.subr.mxu0 0.0
    %781 = vmatpush1.msra.mxu0 0.0
    %782 = vmatprep.subr.mxu0 0.0
    %783 = vmatpush1.msra.mxu0 0.0
    %784 = vmatprep.subr.mxu0 0.0
    %785 = vmatpush1.msra.mxu0 0.0
    %786 = vmatprep.subr.mxu0 0.0
    %787 = vmatpush1.msra.mxu0 0.0
    %788 = vmatprep.subr.mxu0 0.0
    %789 = vmatpush1.msra.mxu0 0.0
    %790 = vmatprep.subr.mxu0 0.0
    %791 = vmatpush1.msra.mxu0 0.0
    %792 = vmatprep.subr.mxu0 0.0
    %793 = vmatpush1.msra.mxu0 0.0
    %794 = vmatprep.mubr.f32.mxu0 0.0
    %795 = vmatmul.mubr.f32.gmra.mrb[0].mxu0 %v719
    %v796 = vpop.f32.mrb[0].mxu0
    %v797 = vadd.f32 0.0, %v796
    %v798 = vpop.f32.mrb[0].mxu0
    %799 = vmatprep.mubr.f32.mxu0 0.0
    %800 = vmatmul.mubr.f32.gmra.mrb[0].mxu0 %v722
    %v801 = vpop.f32.mrb[0].mxu0
    %v802 = vadd.f32 0.0, %v801
    %v803 = vpop.f32.mrb[0].mxu0
    %804 = vmatprep.mubr.f32.mxu0 0.0
    %805 = vmatmul.mubr.f32.gmra.mrb[0].mxu0 %v725
    %v806 = vpop.f32.mrb[0].mxu0
    %v807 = vadd.f32 0.0, %v806
    %v808 = vpop.f32.mrb[0].mxu0
    %809 = vmatprep.mubr.f32.mxu0 0.0
    %810 = vmatmul.mubr.f32.gmra.mrb[0].mxu0 %v728
    %v811 = vpop.f32.mrb[0].mxu0
    %v812 = vadd.f32 0.0, %v811
    %v813 = vpop.f32.mrb[0].mxu0
    %814 = vdwg.mxu0
    %s815 = scalar_lea.vmem [#allocation4], 64
    %v816 = vld [vmem:[%s815] sm:$0xff]
    %v817 = vld [vmem:[%s815 + $0x8] sm:$0xff]
    %v818 = vld [vmem:[%s815 + $0x10] sm:$0xff]
    %v819 = vld [vmem:[%s815 + $0x18] sm:$0xff]
    %v821 = vsel %vm510, %v797, 0
    %v824 = vsel %vm510, %v802, 0
    %v827 = vsel %vm510, %v807, 0
    %v830 = vsel %vm510, %v812, 0
    %832 = vmatprep.subr.mxu0 %v817
    %833 = vmatpush1.msra.mxu0 %v816
    %834 = vmatprep.subr.mxu0 %v819
    %835 = vmatpush1.msra.mxu0 %v818
    %836 = vmatprep.subr.mxu0 0.0
    %837 = vmatpush1.msra.mxu0 0.0
    %838 = vmatprep.subr.mxu0 0.0
    %839 = vmatpush1.msra.mxu0 0.0
    %840 = vmatprep.subr.mxu0 0.0
    %841 = vmatpush1.msra.mxu0 0.0
    %842 = vmatprep.subr.mxu0 0.0
    %843 = vmatpush1.msra.mxu0 0.0
    %844 = vmatprep.subr.mxu0 0.0
    %845 = vmatpush1.msra.mxu0 0.0
    %846 = vmatprep.subr.mxu0 0.0
    %847 = vmatpush1.msra.mxu0 0.0
    %848 = vmatprep.subr.mxu0 0.0
    %849 = vmatpush1.msra.mxu0 0.0
    %850 = vmatprep.subr.mxu0 0.0
    %851 = vmatpush1.msra.mxu0 0.0
    %852 = vmatprep.subr.mxu0 0.0
    %853 = vmatpush1.msra.mxu0 0.0
    %854 = vmatprep.subr.mxu0 0.0
    %855 = vmatpush1.msra.mxu0 0.0
    %856 = vmatprep.subr.mxu0 0.0
    %857 = vmatpush1.msra.mxu0 0.0
    %858 = vmatprep.subr.mxu0 0.0
    %859 = vmatpush1.msra.mxu0 0.0
    %860 = vmatprep.subr.mxu0 0.0
    %861 = vmatpush1.msra.mxu0 0.0
    %862 = vmatprep.subr.mxu0 0.0
    %863 = vmatpush1.msra.mxu0 0.0
    %864 = vmatprep.subr.mxu0 0.0
    %865 = vmatpush1.msra.mxu0 0.0
    %866 = vmatprep.subr.mxu0 0.0
    %867 = vmatpush1.msra.mxu0 0.0
    %868 = vmatprep.subr.mxu0 0.0
    %869 = vmatpush1.msra.mxu0 0.0
    %870 = vmatprep.subr.mxu0 0.0
    %871 = vmatpush1.msra.mxu0 0.0
    %872 = vmatprep.subr.mxu0 0.0
    %873 = vmatpush1.msra.mxu0 0.0
    %874 = vmatprep.subr.mxu0 0.0
    %875 = vmatpush1.msra.mxu0 0.0
    %876 = vmatprep.subr.mxu0 0.0
    %877 = vmatpush1.msra.mxu0 0.0
    %878 = vmatprep.subr.mxu0 0.0
    %879 = vmatpush1.msra.mxu0 0.0
    %880 = vmatprep.subr.mxu0 0.0
    %881 = vmatpush1.msra.mxu0 0.0
    %882 = vmatprep.subr.mxu0 0.0
    %883 = vmatpush1.msra.mxu0 0.0
    %884 = vmatprep.subr.mxu0 0.0
    %885 = vmatpush1.msra.mxu0 0.0
    %886 = vmatprep.subr.mxu0 0.0
    %887 = vmatpush1.msra.mxu0 0.0
    %888 = vmatprep.subr.mxu0 0.0
    %889 = vmatpush1.msra.mxu0 0.0
    %890 = vmatprep.subr.mxu0 0.0
    %891 = vmatpush1.msra.mxu0 0.0
    %892 = vmatprep.subr.mxu0 0.0
    %893 = vmatpush1.msra.mxu0 0.0
    %894 = vmatprep.subr.mxu0 0.0
    %895 = vmatpush1.msra.mxu0 0.0
    %896 = vmatprep.mubr.f32.mxu0 0.0
    %897 = vmatmul.mubr.f32.gmra.mrb[0].mxu0 %v821
    %v898 = vpop.f32.mrb[0].mxu0
    %v899 = vadd.f32 0.0, %v898
    %v900 = vpop.f32.mrb[0].mxu0
    %v901 = vadd.f32 0.0, %v900
    %902 = vmatprep.mubr.f32.mxu0 0.0
    %903 = vmatmul.mubr.f32.gmra.mrb[0].mxu0 %v824
    %v904 = vpop.f32.mrb[0].mxu0
    %v905 = vadd.f32 0.0, %v904
    %v906 = vpop.f32.mrb[0].mxu0
    %v907 = vadd.f32 0.0, %v906
    %908 = vmatprep.mubr.f32.mxu0 0.0
    %909 = vmatmul.mubr.f32.gmra.mrb[0].mxu0 %v827
    %v910 = vpop.f32.mrb[0].mxu0
    %v911 = vadd.f32 0.0, %v910
    %v912 = vpop.f32.mrb[0].mxu0
    %v913 = vadd.f32 0.0, %v912
    %914 = vmatprep.mubr.f32.mxu0 0.0
    %915 = vmatmul.mubr.f32.gmra.mrb[0].mxu0 %v830
    %v916 = vpop.f32.mrb[0].mxu0
    %v917 = vadd.f32 0.0, %v916
    %v918 = vpop.f32.mrb[0].mxu0
    %v919 = vadd.f32 0.0, %v918
    %920 = vdwg.mxu0
    %v921 = vadd.f32 %v691, %v899
    %v922 = vadd.f32 %v693, %v901
    %v923 = vadd.f32 %v697, %v905
    %v924 = vadd.f32 %v699, %v907
    %v925 = vadd.f32 %v703, %v911
    %v926 = vadd.f32 %v705, %v913
    %v927 = vadd.f32 %v709, %v917
    %v928 = vadd.f32 %v711, %v919
    %v930 = vlaneseq
    %v931 = vshrl.u32 %v930, 7
    %v932 = vsub.s32 0, %v931
    %v933 = vrot.slane %v296, %v932
    %v934 = vlaneseq
    %v935 = vshrl.u32 %v934, 7
    %v936 = vsub.s32 1, %v935
    %v937 = vrot.slane %v296, %v936
    %v940 = vadd.f32 %v921, %v933
    %v941 = vadd.f32 %v922, %v937
    %v942 = vadd.f32 %v923, %v933
    %v943 = vadd.f32 %v924, %v937
    %v944 = vadd.f32 %v925, %v933
    %v945 = vadd.f32 %v926, %v937
    %v946 = vadd.f32 %v927, %v933
    %v947 = vadd.f32 %v928, %v937
    %v948 = vmax.f32 %v940, 0.0
    %v949 = vmax.f32 %v941, 0.0
    %v950 = vmax.f32 %v942, 0.0
    %v951 = vmax.f32 %v943, 0.0
    %v952 = vmax.f32 %v944, 0.0
    %v953 = vmax.f32 %v945, 0.0
    %v954 = vmax.f32 %v946, 0.0
    %v955 = vmax.f32 %v947, 0.0
    %v956 = vld [vmem:[#allocation9] sm:$0x1]
    %v957 = vld [vmem:[#allocation7] sm:$0xff]
    %v958 = vld [vmem:[#allocation7 + $0x8] sm:$0xff]
    %vm959 = vcmask 261120
    %v961 = vsel %vm959, %v957, 0
    %v964 = vsel %vm959, %v958, 0
    %966 = vmatprep.subr.mxu0 %v949
    %967 = vmatpush1.msra.mxu0 %v948
    %968 = vmatprep.subr.mxu0 %v951
    %969 = vmatpush1.msra.mxu0 %v950
    %970 = vmatprep.subr.mxu0 %v953
    %971 = vmatpush1.msra.mxu0 %v952
    %972 = vmatprep.subr.mxu0 %v955
    %973 = vmatpush1.msra.mxu0 %v954
    %974 = vmatprep.subr.mxu0 0.0
    %975 = vmatpush1.msra.mxu0 0.0
    %976 = vmatprep.subr.mxu0 0.0
    %977 = vmatpush1.msra.mxu0 0.0
    %978 = vmatprep.subr.mxu0 0.0
    %979 = vmatpush1.msra.mxu0 0.0
    %980 = vmatprep.subr.mxu0 0.0
    %981 = vmatpush1.msra.mxu0 0.0
    %982 = vmatprep.subr.mxu0 0.0
    %983 = vmatpush1.msra.mxu0 0.0
    %984 = vmatprep.subr.mxu0 0.0
    %985 = vmatpush1.msra.mxu0 0.0
    %986 = vmatprep.subr.mxu0 0.0
    %987 = vmatpush1.msra.mxu0 0.0
    %988 = vmatprep.subr.mxu0 0.0
    %989 = vmatpush1.msra.mxu0 0.0
    %990 = vmatprep.subr.mxu0 0.0
    %991 = vmatpush1.msra.mxu0 0.0
    %992 = vmatprep.subr.mxu0 0.0
    %993 = vmatpush1.msra.mxu0 0.0
    %994 = vmatprep.subr.mxu0 0.0
    %995 = vmatpush1.msra.mxu0 0.0
    %996 = vmatprep.subr.mxu0 0.0
    %997 = vmatpush1.msra.mxu0 0.0
    %998 = vmatprep.subr.mxu0 0.0
    %999 = vmatpush1.msra.mxu0 0.0
    %1000 = vmatprep.subr.mxu0 0.0
    %1001 = vmatpush1.msra.mxu0 0.0
    %1002 = vmatprep.subr.mxu0 0.0
    %1003 = vmatpush1.msra.mxu0 0.0
    %1004 = vmatprep.subr.mxu0 0.0
    %1005 = vmatpush1.msra.mxu0 0.0
    %1006 = vmatprep.subr.mxu0 0.0
    %1007 = vmatpush1.msra.mxu0 0.0
    %1008 = vmatprep.subr.mxu0 0.0
    %1009 = vmatpush1.msra.mxu0 0.0
    %1010 = vmatprep.subr.mxu0 0.0
    %1011 = vmatpush1.msra.mxu0 0.0
    %1012 = vmatprep.subr.mxu0 0.0
    %1013 = vmatpush1.msra.mxu0 0.0
    %1014 = vmatprep.subr.mxu0 0.0
    %1015 = vmatpush1.msra.mxu0 0.0
    %1016 = vmatprep.subr.mxu0 0.0
    %1017 = vmatpush1.msra.mxu0 0.0
    %1018 = vmatprep.subr.mxu0 0.0
    %1019 = vmatpush1.msra.mxu0 0.0
    %1020 = vmatprep.subr.mxu0 0.0
    %1021 = vmatpush1.msra.mxu0 0.0
    %1022 = vmatprep.subr.mxu0 0.0
    %1023 = vmatpush1.msra.mxu0 0.0
    %1024 = vmatprep.subr.mxu0 0.0
    %1025 = vmatpush1.msra.mxu0 0.0
    %1026 = vmatprep.subr.mxu0 0.0
    %1027 = vmatpush1.msra.mxu0 0.0
    %1028 = vmatprep.subr.mxu0 0.0
    %1029 = vmatpush1.msra.mxu0 0.0
    %1030 = vmatprep.mubr.f32.mxu0 0.0
    %1031 = vmatmul.mubr.f32.gmra.mrb[0].mxu0 %v961
    %v1032 = vpop.f32.mrb[0].mxu0
    %v1033 = vadd.f32 0.0, %v1032
    %v1034 = vpop.f32.mrb[0].mxu0
    %v1035 = vadd.f32 0.0, %v1034
    %1036 = vmatprep.mubr.f32.mxu0 0.0
    %1037 = vmatmul.mubr.f32.gmra.mrb[0].mxu0 %v964
    %v1038 = vpop.f32.mrb[0].mxu0
    %v1039 = vadd.f32 0.0, %v1038
    %v1040 = vpop.f32.mrb[0].mxu0
    %v1041 = vadd.f32 0.0, %v1040
    %1042 = vdwg.mxu0
    %v1043 = vld [vmem:[%s5] sm:$0xff]
    %v1044 = vld [vmem:[%s5 + $0x8] sm:$0xff]
    %v1045 = vld [vmem:[%s5 + $0x10] sm:$0xff]
    %v1046 = vld [vmem:[%s5 + $0x18] sm:$0xff]
    %v1047 = vld [vmem:[%s5 + $0x20] sm:$0xff]
    %v1048 = vld [vmem:[%s5 + $0x28] sm:$0xff]
    %v1049 = vld [vmem:[%s5 + $0x30] sm:$0xff]
    %v1050 = vld [vmem:[%s5 + $0x38] sm:$0xff]
    %v1051 = vld [vmem:[%s5 + $0x40] sm:$0xff]
    %v1052 = vld [vmem:[%s5 + $0x48] sm:$0xff]
    %v1053 = vld [vmem:[%s5 + $0x50] sm:$0xff]
    %v1054 = vld [vmem:[%s5 + $0x58] sm:$0xff]
    %v1055 = vld [vmem:[%s5 + $0x60] sm:$0xff]
    %v1056 = vld [vmem:[%s5 + $0x68] sm:$0xff]
    %v1057 = vld [vmem:[%s5 + $0x70] sm:$0xff]
    %v1058 = vld [vmem:[%s5 + $0x78] sm:$0xff]
    %v1059 = vld [vmem:[%s5 + $0x80] sm:$0xff]
    %v1060 = vld [vmem:[%s5 + $0x88] sm:$0xff]
    %v1061 = vld [vmem:[%s5 + $0x90] sm:$0xff]
    %v1062 = vld [vmem:[%s5 + $0x98] sm:$0xff]
    %v1063 = vld [vmem:[%s5 + $0xa0] sm:$0xff]
    %v1064 = vld [vmem:[%s5 + $0xa8] sm:$0xff]
    %v1065 = vld [vmem:[%s5 + $0xb0] sm:$0xff]
    %v1066 = vld [vmem:[%s5 + $0xb8] sm:$0xff]
    %v1067 = vld [vmem:[%s5 + $0xc0] sm:$0xff]
    %v1068 = vld [vmem:[%s5 + $0xc8] sm:$0xff]
    %v1069 = vld [vmem:[%s5 + $0xd0] sm:$0xff]
    %v1070 = vld [vmem:[%s5 + $0xd8] sm:$0xff]
    %v1071 = vld [vmem:[%s5 + $0xe0] sm:$0xff]
    %v1072 = vld [vmem:[%s5 + $0xe8] sm:$0xff]
    %v1073 = vld [vmem:[%s5 + $0xf0] sm:$0xff]
    %v1074 = vld [vmem:[%s5 + $0xf8] sm:$0xff]
    %s1075 = scalar_lea.vmem [#allocation7], 16
    %v1076 = vld [vmem:[%s1075] sm:$0xff]
    %v1077 = vld [vmem:[%s1075 + $0x8] sm:$0xff]
    %v1079 = vsel %vm959, %v1076, 0
    %v1082 = vsel %vm959, %v1077, 0
    %1084 = vmatprep.subr.mxu0 %v949
    %1085 = vmatpush1.msra.mxu0 %v948
    %1086 = vmatprep.subr.mxu0 %v951
    %1087 = vmatpush1.msra.mxu0 %v950
    %1088 = vmatprep.subr.mxu0 %v953
    %1089 = vmatpush1.msra.mxu0 %v952
    %1090 = vmatprep.subr.mxu0 %v955
    %1091 = vmatpush1.msra.mxu0 %v954
    %1092 = vmatprep.subr.mxu0 0.0
    %1093 = vmatpush1.msra.mxu0 0.0
    %1094 = vmatprep.subr.mxu0 0.0
    %1095 = vmatpush1.msra.mxu0 0.0
    %1096 = vmatprep.subr.mxu0 0.0
    %1097 = vmatpush1.msra.mxu0 0.0
    %1098 = vmatprep.subr.mxu0 0.0
    %1099 = vmatpush1.msra.mxu0 0.0
    %1100 = vmatprep.subr.mxu0 0.0
    %1101 = vmatpush1.msra.mxu0 0.0
    %1102 = vmatprep.subr.mxu0 0.0
    %1103 = vmatpush1.msra.mxu0 0.0
    %1104 = vmatprep.subr.mxu0 0.0
    %1105 = vmatpush1.msra.mxu0 0.0
    %1106 = vmatprep.subr.mxu0 0.0
    %1107 = vmatpush1.msra.mxu0 0.0
    %1108 = vmatprep.subr.mxu0 0.0
    %1109 = vmatpush1.msra.mxu0 0.0
    %1110 = vmatprep.subr.mxu0 0.0
    %1111 = vmatpush1.msra.mxu0 0.0
    %1112 = vmatprep.subr.mxu0 0.0
    %1113 = vmatpush1.msra.mxu0 0.0
    %1114 = vmatprep.subr.mxu0 0.0
    %1115 = vmatpush1.msra.mxu0 0.0
    %1116 = vmatprep.subr.mxu0 0.0
    %1117 = vmatpush1.msra.mxu0 0.0
    %1118 = vmatprep.subr.mxu0 0.0
    %1119 = vmatpush1.msra.mxu0 0.0
    %1120 = vmatprep.subr.mxu0 0.0
    %1121 = vmatpush1.msra.mxu0 0.0
    %1122 = vmatprep.subr.mxu0 0.0
    %1123 = vmatpush1.msra.mxu0 0.0
    %1124 = vmatprep.subr.mxu0 0.0
    %1125 = vmatpush1.msra.mxu0 0.0
    %1126 = vmatprep.subr.mxu0 0.0
    %1127 = vmatpush1.msra.mxu0 0.0
    %1128 = vmatprep.subr.mxu0 0.0
    %1129 = vmatpush1.msra.mxu0 0.0
    %1130 = vmatprep.subr.mxu0 0.0
    %1131 = vmatpush1.msra.mxu0 0.0
    %1132 = vmatprep.subr.mxu0 0.0
    %1133 = vmatpush1.msra.mxu0 0.0
    %1134 = vmatprep.subr.mxu0 0.0
    %1135 = vmatpush1.msra.mxu0 0.0
    %1136 = vmatprep.subr.mxu0 0.0
    %1137 = vmatpush1.msra.mxu0 0.0
    %1138 = vmatprep.subr.mxu0 0.0
    %1139 = vmatpush1.msra.mxu0 0.0
    %1140 = vmatprep.subr.mxu0 0.0
    %1141 = vmatpush1.msra.mxu0 0.0
    %1142 = vmatprep.subr.mxu0 0.0
    %1143 = vmatpush1.msra.mxu0 0.0
    %1144 = vmatprep.subr.mxu0 0.0
    %1145 = vmatpush1.msra.mxu0 0.0
    %1146 = vmatprep.subr.mxu0 0.0
    %1147 = vmatpush1.msra.mxu0 0.0
    %1148 = vmatprep.mubr.f32.mxu0 0.0
    %1149 = vmatmul.mubr.f32.gmra.mrb[0].mxu0 %v1079
    %v1150 = vpop.f32.mrb[0].mxu0
    %v1151 = vadd.f32 0.0, %v1150
    %v1152 = vpop.f32.mrb[0].mxu0
    %v1153 = vadd.f32 0.0, %v1152
    %1154 = vmatprep.mubr.f32.mxu0 0.0
    %1155 = vmatmul.mubr.f32.gmra.mrb[0].mxu0 %v1082
    %v1156 = vpop.f32.mrb[0].mxu0
    %v1157 = vadd.f32 0.0, %v1156
    %v1158 = vpop.f32.mrb[0].mxu0
    %v1159 = vadd.f32 0.0, %v1158
    %1160 = vdwg.mxu0
    %s1161 = scalar_lea.vmem %s5, 256
    %v1162 = vld [vmem:[%s1161] sm:$0xff]
    %v1163 = vld [vmem:[%s1161 + $0x8] sm:$0xff]
    %v1164 = vld [vmem:[%s1161 + $0x10] sm:$0xff]
    %v1165 = vld [vmem:[%s1161 + $0x18] sm:$0xff]
    %v1166 = vld [vmem:[%s1161 + $0x20] sm:$0xff]
    %v1167 = vld [vmem:[%s1161 + $0x28] sm:$0xff]
    %v1168 = vld [vmem:[%s1161 + $0x30] sm:$0xff]
    %v1169 = vld [vmem:[%s1161 + $0x38] sm:$0xff]
    %v1170 = vld [vmem:[%s1161 + $0x40] sm:$0xff]
    %v1171 = vld [vmem:[%s1161 + $0x48] sm:$0xff]
    %v1172 = vld [vmem:[%s1161 + $0x50] sm:$0xff]
    %v1173 = vld [vmem:[%s1161 + $0x58] sm:$0xff]
    %v1174 = vld [vmem:[%s1161 + $0x60] sm:$0xff]
    %v1175 = vld [vmem:[%s1161 + $0x68] sm:$0xff]
    %v1176 = vld [vmem:[%s1161 + $0x70] sm:$0xff]
    %v1177 = vld [vmem:[%s1161 + $0x78] sm:$0xff]
    %v1178 = vld [vmem:[%s1161 + $0x80] sm:$0xff]
    %v1179 = vld [vmem:[%s1161 + $0x88] sm:$0xff]
    %v1180 = vld [vmem:[%s1161 + $0x90] sm:$0xff]
    %v1181 = vld [vmem:[%s1161 + $0x98] sm:$0xff]
    %v1182 = vld [vmem:[%s1161 + $0xa0] sm:$0xff]
    %v1183 = vld [vmem:[%s1161 + $0xa8] sm:$0xff]
    %v1184 = vld [vmem:[%s1161 + $0xb0] sm:$0xff]
    %v1185 = vld [vmem:[%s1161 + $0xb8] sm:$0xff]
    %v1186 = vld [vmem:[%s1161 + $0xc0] sm:$0xff]
    %v1187 = vld [vmem:[%s1161 + $0xc8] sm:$0xff]
    %v1188 = vld [vmem:[%s1161 + $0xd0] sm:$0xff]
    %v1189 = vld [vmem:[%s1161 + $0xd8] sm:$0xff]
    %v1190 = vld [vmem:[%s1161 + $0xe0] sm:$0xff]
    %v1191 = vld [vmem:[%s1161 + $0xe8] sm:$0xff]
    %v1192 = vld [vmem:[%s1161 + $0xf0] sm:$0xff]
    %v1193 = vld [vmem:[%s1161 + $0xf8] sm:$0xff]
    %1194 = vmatprep.subr.mxu0 0.0
    %1195 = vmatpush1.msra.mxu0 %v1162
    %1196 = vmatprep.subr.mxu0 0.0
    %1197 = vmatpush1.msra.mxu0 %v1163
    %1198 = vmatprep.subr.mxu0 0.0
    %1199 = vmatpush1.msra.mxu0 %v1164
    %1200 = vmatprep.subr.mxu0 0.0
    %1201 = vmatpush1.msra.mxu0 %v1165
    %1202 = vmatprep.subr.mxu0 0.0
    %1203 = vmatpush1.msra.mxu0 %v1166
    %1204 = vmatprep.subr.mxu0 0.0
    %1205 = vmatpush1.msra.mxu0 %v1167
    %1206 = vmatprep.subr.mxu0 0.0
    %1207 = vmatpush1.msra.mxu0 %v1168
    %1208 = vmatprep.subr.mxu0 0.0
    %1209 = vmatpush1.msra.mxu0 %v1169
    %1210 = vmatprep.subr.mxu0 0.0
    %1211 = vmatpush1.msra.mxu0 %v1170
    %1212 = vmatprep.subr.mxu0 0.0
    %1213 = vmatpush1.msra.mxu0 %v1171
    %1214 = vmatprep.subr.mxu0 0.0
    %1215 = vmatpush1.msra.mxu0 %v1172
    %1216 = vmatprep.subr.mxu0 0.0
    %1217 = vmatpush1.msra.mxu0 %v1173
    %1218 = vmatprep.subr.mxu0 0.0
    %1219 = vmatpush1.msra.mxu0 %v1174
    %1220 = vmatprep.subr.mxu0 0.0
    %1221 = vmatpush1.msra.mxu0 %v1175
    %1222 = vmatprep.subr.mxu0 0.0
    %1223 = vmatpush1.msra.mxu0 %v1176
    %1224 = vmatprep.subr.mxu0 0.0
    %1225 = vmatpush1.msra.mxu0 %v1177
    %1226 = vmatprep.subr.mxu0 0.0
    %1227 = vmatpush1.msra.mxu0 %v1178
    %1228 = vmatprep.subr.mxu0 0.0
    %1229 = vmatpush1.msra.mxu0 %v1179
    %1230 = vmatprep.subr.mxu0 0.0
    %1231 = vmatpush1.msra.mxu0 %v1180
    %1232 = vmatprep.subr.mxu0 0.0
    %1233 = vmatpush1.msra.mxu0 %v1181
    %1234 = vmatprep.subr.mxu0 0.0
    %1235 = vmatpush1.msra.mxu0 %v1182
    %1236 = vmatprep.subr.mxu0 0.0
    %1237 = vmatpush1.msra.mxu0 %v1183
    %1238 = vmatprep.subr.mxu0 0.0
    %1239 = vmatpush1.msra.mxu0 %v1184
    %1240 = vmatprep.subr.mxu0 0.0
    %1241 = vmatpush1.msra.mxu0 %v1185
    %1242 = vmatprep.subr.mxu0 0.0
    %1243 = vmatpush1.msra.mxu0 %v1186
    %1244 = vmatprep.subr.mxu0 0.0
    %1245 = vmatpush1.msra.mxu0 %v1187
    %1246 = vmatprep.subr.mxu0 0.0
    %1247 = vmatpush1.msra.mxu0 %v1188
    %1248 = vmatprep.subr.mxu0 0.0
    %1249 = vmatpush1.msra.mxu0 %v1189
    %1250 = vmatprep.subr.mxu0 0.0
    %1251 = vmatpush1.msra.mxu0 %v1190
    %1252 = vmatprep.subr.mxu0 0.0
    %1253 = vmatpush1.msra.mxu0 %v1191
    %1254 = vmatprep.subr.mxu0 0.0
    %1255 = vmatpush1.msra.mxu0 %v1192
    %1256 = vmatprep.subr.mxu0 0.0
    %1257 = vmatpush1.msra.mxu0 %v1193
    %1258 = vmatprep.mubr.f32.mxu0 %v1153
    %1259 = vmatmul.mubr.f32.gmra.mrb[0].mxu0 %v1151
    %v1260 = vpop.f32.mrb[0].mxu0
    %v1261 = vadd.f32 0.0, %v1260
    %v1262 = vpop.f32.mrb[0].mxu0
    %1263 = vmatprep.mubr.f32.mxu0 %v1159
    %1264 = vmatmul.mubr.f32.gmra.mrb[0].mxu0 %v1157
    %v1265 = vpop.f32.mrb[0].mxu0
    %v1266 = vadd.f32 0.0, %v1265
    %v1267 = vpop.f32.mrb[0].mxu0
    %1268 = vdwg.mxu0
    %1269 = vmatprep.subr.mxu0 0.0
    %1270 = vmatpush1.msra.mxu0 %v1043
    %1271 = vmatprep.subr.mxu0 0.0
    %1272 = vmatpush1.msra.mxu0 %v1044
    %1273 = vmatprep.subr.mxu0 0.0
    %1274 = vmatpush1.msra.mxu0 %v1045
    %1275 = vmatprep.subr.mxu0 0.0
    %1276 = vmatpush1.msra.mxu0 %v1046
    %1277 = vmatprep.subr.mxu0 0.0
    %1278 = vmatpush1.msra.mxu0 %v1047
    %1279 = vmatprep.subr.mxu0 0.0
    %1280 = vmatpush1.msra.mxu0 %v1048
    %1281 = vmatprep.subr.mxu0 0.0
    %1282 = vmatpush1.msra.mxu0 %v1049
    %1283 = vmatprep.subr.mxu0 0.0
    %1284 = vmatpush1.msra.mxu0 %v1050
    %1285 = vmatprep.subr.mxu0 0.0
    %1286 = vmatpush1.msra.mxu0 %v1051
    %1287 = vmatprep.subr.mxu0 0.0
    %1288 = vmatpush1.msra.mxu0 %v1052
    %1289 = vmatprep.subr.mxu0 0.0
    %1290 = vmatpush1.msra.mxu0 %v1053
    %1291 = vmatprep.subr.mxu0 0.0
    %1292 = vmatpush1.msra.mxu0 %v1054
    %1293 = vmatprep.subr.mxu0 0.0
    %1294 = vmatpush1.msra.mxu0 %v1055
    %1295 = vmatprep.subr.mxu0 0.0
    %1296 = vmatpush1.msra.mxu0 %v1056
    %1297 = vmatprep.subr.mxu0 0.0
    %1298 = vmatpush1.msra.mxu0 %v1057
    %1299 = vmatprep.subr.mxu0 0.0
    %1300 = vmatpush1.msra.mxu0 %v1058
    %1301 = vmatprep.subr.mxu0 0.0
    %1302 = vmatpush1.msra.mxu0 %v1059
    %1303 = vmatprep.subr.mxu0 0.0
    %1304 = vmatpush1.msra.mxu0 %v1060
    %1305 = vmatprep.subr.mxu0 0.0
    %1306 = vmatpush1.msra.mxu0 %v1061
    %1307 = vmatprep.subr.mxu0 0.0
    %1308 = vmatpush1.msra.mxu0 %v1062
    %1309 = vmatprep.subr.mxu0 0.0
    %1310 = vmatpush1.msra.mxu0 %v1063
    %1311 = vmatprep.subr.mxu0 0.0
    %1312 = vmatpush1.msra.mxu0 %v1064
    %1313 = vmatprep.subr.mxu0 0.0
    %1314 = vmatpush1.msra.mxu0 %v1065
    %1315 = vmatprep.subr.mxu0 0.0
    %1316 = vmatpush1.msra.mxu0 %v1066
    %1317 = vmatprep.subr.mxu0 0.0
    %1318 = vmatpush1.msra.mxu0 %v1067
    %1319 = vmatprep.subr.mxu0 0.0
    %1320 = vmatpush1.msra.mxu0 %v1068
    %1321 = vmatprep.subr.mxu0 0.0
    %1322 = vmatpush1.msra.mxu0 %v1069
    %1323 = vmatprep.subr.mxu0 0.0
    %1324 = vmatpush1.msra.mxu0 %v1070
    %1325 = vmatprep.subr.mxu0 0.0
    %1326 = vmatpush1.msra.mxu0 %v1071
    %1327 = vmatprep.subr.mxu0 0.0
    %1328 = vmatpush1.msra.mxu0 %v1072
    %1329 = vmatprep.subr.mxu0 0.0
    %1330 = vmatpush1.msra.mxu0 %v1073
    %1331 = vmatprep.subr.mxu0 0.0
    %1332 = vmatpush1.msra.mxu0 %v1074
    %1333 = vmatprep.mubr.f32.mxu0 %v1035
    %1334 = vmatmul.mubr.f32.gmra.mrb[0].mxu0 %v1033
    %v1335 = vpop.f32.mrb[0].mxu0
    %v1336 = vadd.f32 %v1261, %v1335
    %v1337 = vpop.f32.mrb[0].mxu0
    %1338 = vmatprep.mubr.f32.mxu0 %v1041
    %1339 = vmatmul.mubr.f32.gmra.mrb[0].mxu0 %v1039
    %v1340 = vpop.f32.mrb[0].mxu0
    %v1341 = vadd.f32 %v1266, %v1340
    %v1342 = vpop.f32.mrb[0].mxu0
    %1343 = vdwg.mxu0
    %s1344 = scalar_lea.vmem [#allocation7], 32
    %v1345 = vld [vmem:[%s1344] sm:$0xff]
    %v1346 = vld [vmem:[%s1344 + $0x8] sm:$0xff]
    %v1348 = vsel %vm959, %v1345, 0
    %v1351 = vsel %vm959, %v1346, 0
    %1353 = vmatprep.subr.mxu0 %v949
    %1354 = vmatpush1.msra.mxu0 %v948
    %1355 = vmatprep.subr.mxu0 %v951
    %1356 = vmatpush1.msra.mxu0 %v950
    %1357 = vmatprep.subr.mxu0 %v953
    %1358 = vmatpush1.msra.mxu0 %v952
    %1359 = vmatprep.subr.mxu0 %v955
    %1360 = vmatpush1.msra.mxu0 %v954
    %1361 = vmatprep.subr.mxu0 0.0
    %1362 = vmatpush1.msra.mxu0 0.0
    %1363 = vmatprep.subr.mxu0 0.0
    %1364 = vmatpush1.msra.mxu0 0.0
    %1365 = vmatprep.subr.mxu0 0.0
    %1366 = vmatpush1.msra.mxu0 0.0
    %1367 = vmatprep.subr.mxu0 0.0
    %1368 = vmatpush1.msra.mxu0 0.0
    %1369 = vmatprep.subr.mxu0 0.0
    %1370 = vmatpush1.msra.mxu0 0.0
    %1371 = vmatprep.subr.mxu0 0.0
    %1372 = vmatpush1.msra.mxu0 0.0
    %1373 = vmatprep.subr.mxu0 0.0
    %1374 = vmatpush1.msra.mxu0 0.0
    %1375 = vmatprep.subr.mxu0 0.0
    %1376 = vmatpush1.msra.mxu0 0.0
    %1377 = vmatprep.subr.mxu0 0.0
    %1378 = vmatpush1.msra.mxu0 0.0
    %1379 = vmatprep.subr.mxu0 0.0
    %1380 = vmatpush1.msra.mxu0 0.0
    %1381 = vmatprep.subr.mxu0 0.0
    %1382 = vmatpush1.msra.mxu0 0.0
    %1383 = vmatprep.subr.mxu0 0.0
    %1384 = vmatpush1.msra.mxu0 0.0
    %1385 = vmatprep.subr.mxu0 0.0
    %1386 = vmatpush1.msra.mxu0 0.0
    %1387 = vmatprep.subr.mxu0 0.0
    %1388 = vmatpush1.msra.mxu0 0.0
    %1389 = vmatprep.subr.mxu0 0.0
    %1390 = vmatpush1.msra.mxu0 0.0
    %1391 = vmatprep.subr.mxu0 0.0
    %1392 = vmatpush1.msra.mxu0 0.0
    %1393 = vmatprep.subr.mxu0 0.0
    %1394 = vmatpush1.msra.mxu0 0.0
    %1395 = vmatprep.subr.mxu0 0.0
    %1396 = vmatpush1.msra.mxu0 0.0
    %1397 = vmatprep.subr.mxu0 0.0
    %1398 = vmatpush1.msra.mxu0 0.0
    %1399 = vmatprep.subr.mxu0 0.0
    %1400 = vmatpush1.msra.mxu0 0.0
    %1401 = vmatprep.subr.mxu0 0.0
    %1402 = vmatpush1.msra.mxu0 0.0
    %1403 = vmatprep.subr.mxu0 0.0
    %1404 = vmatpush1.msra.mxu0 0.0
    %1405 = vmatprep.subr.mxu0 0.0
    %1406 = vmatpush1.msra.mxu0 0.0
    %1407 = vmatprep.subr.mxu0 0.0
    %1408 = vmatpush1.msra.mxu0 0.0
    %1409 = vmatprep.subr.mxu0 0.0
    %1410 = vmatpush1.msra.mxu0 0.0
    %1411 = vmatprep.subr.mxu0 0.0
    %1412 = vmatpush1.msra.mxu0 0.0
    %1413 = vmatprep.subr.mxu0 0.0
    %1414 = vmatpush1.msra.mxu0 0.0
    %1415 = vmatprep.subr.mxu0 0.0
    %1416 = vmatpush1.msra.mxu0 0.0
    %1417 = vmatprep.mubr.f32.mxu0 0.0
    %1418 = vmatmul.mubr.f32.gmra.mrb[0].mxu0 %v1348
    %v1419 = vpop.f32.mrb[0].mxu0
    %v1420 = vadd.f32 0.0, %v1419
    %v1421 = vpop.f32.mrb[0].mxu0
    %v1422 = vadd.f32 0.0, %v1421
    %1423 = vmatprep.mubr.f32.mxu0 0.0
    %1424 = vmatmul.mubr.f32.gmra.mrb[0].mxu0 %v1351
    %v1425 = vpop.f32.mrb[0].mxu0
    %v1426 = vadd.f32 0.0, %v1425
    %v1427 = vpop.f32.mrb[0].mxu0
    %v1428 = vadd.f32 0.0, %v1427
    %1429 = vdwg.mxu0
    %s1430 = scalar_lea.vmem %s5, 512
    %v1431 = vld [vmem:[%s1430] sm:$0xff]
    %v1432 = vld [vmem:[%s1430 + $0x8] sm:$0xff]
    %v1433 = vld [vmem:[%s1430 + $0x10] sm:$0xff]
    %v1434 = vld [vmem:[%s1430 + $0x18] sm:$0xff]
    %v1435 = vld [vmem:[%s1430 + $0x20] sm:$0xff]
    %v1436 = vld [vmem:[%s1430 + $0x28] sm:$0xff]
    %v1437 = vld [vmem:[%s1430 + $0x30] sm:$0xff]
    %v1438 = vld [vmem:[%s1430 + $0x38] sm:$0xff]
    %v1439 = vld [vmem:[%s1430 + $0x40] sm:$0xff]
    %v1440 = vld [vmem:[%s1430 + $0x48] sm:$0xff]
    %v1441 = vld [vmem:[%s1430 + $0x50] sm:$0xff]
    %v1442 = vld [vmem:[%s1430 + $0x58] sm:$0xff]
    %v1443 = vld [vmem:[%s1430 + $0x60] sm:$0xff]
    %v1444 = vld [vmem:[%s1430 + $0x68] sm:$0xff]
    %v1445 = vld [vmem:[%s1430 + $0x70] sm:$0xff]
    %v1446 = vld [vmem:[%s1430 + $0x78] sm:$0xff]
    %v1447 = vld [vmem:[%s1430 + $0x80] sm:$0xff]
    %v1448 = vld [vmem:[%s1430 + $0x88] sm:$0xff]
    %v1449 = vld [vmem:[%s1430 + $0x90] sm:$0xff]
    %v1450 = vld [vmem:[%s1430 + $0x98] sm:$0xff]
    %v1451 = vld [vmem:[%s1430 + $0xa0] sm:$0xff]
    %v1452 = vld [vmem:[%s1430 + $0xa8] sm:$0xff]
    %v1453 = vld [vmem:[%s1430 + $0xb0] sm:$0xff]
    %v1454 = vld [vmem:[%s1430 + $0xb8] sm:$0xff]
    %v1455 = vld [vmem:[%s1430 + $0xc0] sm:$0xff]
    %v1456 = vld [vmem:[%s1430 + $0xc8] sm:$0xff]
    %v1457 = vld [vmem:[%s1430 + $0xd0] sm:$0xff]
    %v1458 = vld [vmem:[%s1430 + $0xd8] sm:$0xff]
    %v1459 = vld [vmem:[%s1430 + $0xe0] sm:$0xff]
    %v1460 = vld [vmem:[%s1430 + $0xe8] sm:$0xff]
    %v1461 = vld [vmem:[%s1430 + $0xf0] sm:$0xff]
    %v1462 = vld [vmem:[%s1430 + $0xf8] sm:$0xff]
    %1463 = vmatprep.subr.mxu0 0.0
    %1464 = vmatpush1.msra.mxu0 %v1431
    %1465 = vmatprep.subr.mxu0 0.0
    %1466 = vmatpush1.msra.mxu0 %v1432
    %1467 = vmatprep.subr.mxu0 0.0
    %1468 = vmatpush1.msra.mxu0 %v1433
    %1469 = vmatprep.subr.mxu0 0.0
    %1470 = vmatpush1.msra.mxu0 %v1434
    %1471 = vmatprep.subr.mxu0 0.0
    %1472 = vmatpush1.msra.mxu0 %v1435
    %1473 = vmatprep.subr.mxu0 0.0
    %1474 = vmatpush1.msra.mxu0 %v1436
    %1475 = vmatprep.subr.mxu0 0.0
    %1476 = vmatpush1.msra.mxu0 %v1437
    %1477 = vmatprep.subr.mxu0 0.0
    %1478 = vmatpush1.msra.mxu0 %v1438
    %1479 = vmatprep.subr.mxu0 0.0
    %1480 = vmatpush1.msra.mxu0 %v1439
    %1481 = vmatprep.subr.mxu0 0.0
    %1482 = vmatpush1.msra.mxu0 %v1440
    %1483 = vmatprep.subr.mxu0 0.0
    %1484 = vmatpush1.msra.mxu0 %v1441
    %1485 = vmatprep.subr.mxu0 0.0
    %1486 = vmatpush1.msra.mxu0 %v1442
    %1487 = vmatprep.subr.mxu0 0.0
    %1488 = vmatpush1.msra.mxu0 %v1443
    %1489 = vmatprep.subr.mxu0 0.0
    %1490 = vmatpush1.msra.mxu0 %v1444
    %1491 = vmatprep.subr.mxu0 0.0
    %1492 = vmatpush1.msra.mxu0 %v1445
    %1493 = vmatprep.subr.mxu0 0.0
    %1494 = vmatpush1.msra.mxu0 %v1446
    %1495 = vmatprep.subr.mxu0 0.0
    %1496 = vmatpush1.msra.mxu0 %v1447
    %1497 = vmatprep.subr.mxu0 0.0
    %1498 = vmatpush1.msra.mxu0 %v1448
    %1499 = vmatprep.subr.mxu0 0.0
    %1500 = vmatpush1.msra.mxu0 %v1449
    %1501 = vmatprep.subr.mxu0 0.0
    %1502 = vmatpush1.msra.mxu0 %v1450
    %1503 = vmatprep.subr.mxu0 0.0
    %1504 = vmatpush1.msra.mxu0 %v1451
    %1505 = vmatprep.subr.mxu0 0.0
    %1506 = vmatpush1.msra.mxu0 %v1452
    %1507 = vmatprep.subr.mxu0 0.0
    %1508 = vmatpush1.msra.mxu0 %v1453
    %1509 = vmatprep.subr.mxu0 0.0
    %1510 = vmatpush1.msra.mxu0 %v1454
    %1511 = vmatprep.subr.mxu0 0.0
    %1512 = vmatpush1.msra.mxu0 %v1455
    %1513 = vmatprep.subr.mxu0 0.0
    %1514 = vmatpush1.msra.mxu0 %v1456
    %1515 = vmatprep.subr.mxu0 0.0
    %1516 = vmatpush1.msra.mxu0 %v1457
    %1517 = vmatprep.subr.mxu0 0.0
    %1518 = vmatpush1.msra.mxu0 %v1458
    %1519 = vmatprep.subr.mxu0 0.0
    %1520 = vmatpush1.msra.mxu0 %v1459
    %1521 = vmatprep.subr.mxu0 0.0
    %1522 = vmatpush1.msra.mxu0 %v1460
    %1523 = vmatprep.subr.mxu0 0.0
    %1524 = vmatpush1.msra.mxu0 %v1461
    %1525 = vmatprep.subr.mxu0 0.0
    %1526 = vmatpush1.msra.mxu0 %v1462
    %1527 = vmatprep.mubr.f32.mxu0 %v1422
    %1528 = vmatmul.mubr.f32.gmra.mrb[0].mxu0 %v1420
    %v1529 = vpop.f32.mrb[0].mxu0
    %v1530 = vadd.f32 0.0, %v1529
    %v1531 = vpop.f32.mrb[0].mxu0
    %1532 = vmatprep.mubr.f32.mxu0 %v1428
    %1533 = vmatmul.mubr.f32.gmra.mrb[0].mxu0 %v1426
    %v1534 = vpop.f32.mrb[0].mxu0
    %v1535 = vadd.f32 0.0, %v1534
    %v1536 = vpop.f32.mrb[0].mxu0
    %1537 = vdwg.mxu0
    %v1538 = vadd.f32 %v1336, %v1530
    %v1539 = vadd.f32 %v1341, %v1535
    %v1541 = vlaneseq
    %v1542 = vshrl.u32 %v1541, 7
    %v1543 = vsub.s32 0, %v1542
    %v1544 = vrot.slane %v956, %v1543
    %v1546 = vadd.f32 %v1538, %v1544
    %v1547 = vadd.f32 %v1539, %v1544
    %v1548 = vmax.f32 %v1546, 0.0
    %v1549 = vmax.f32 %v1547, 0.0
    %v1550 = vld [vmem:[#allocation13] sm:$0x1]
    %v1551 = vld [vmem:[#allocation10] sm:$0xff]
    %v1553 = vsel %vm510, %v1551, 0
    %1555 = vmatprep.subr.mxu0 0.0
    %1556 = vmatpush1.msra.mxu0 %v1548
    %1557 = vmatprep.subr.mxu0 0.0
    %1558 = vmatpush1.msra.mxu0 %v1549
    %1559 = vmatprep.subr.mxu0 0.0
    %1560 = vmatpush1.msra.mxu0 0.0
    %1561 = vmatprep.subr.mxu0 0.0
    %1562 = vmatpush1.msra.mxu0 0.0
    %1563 = vmatprep.subr.mxu0 0.0
    %1564 = vmatpush1.msra.mxu0 0.0
    %1565 = vmatprep.subr.mxu0 0.0
    %1566 = vmatpush1.msra.mxu0 0.0
    %1567 = vmatprep.subr.mxu0 0.0
    %1568 = vmatpush1.msra.mxu0 0.0
    %1569 = vmatprep.subr.mxu0 0.0
    %1570 = vmatpush1.msra.mxu0 0.0
    %1571 = vmatprep.subr.mxu0 0.0
    %1572 = vmatpush1.msra.mxu0 0.0
    %1573 = vmatprep.subr.mxu0 0.0
    %1574 = vmatpush1.msra.mxu0 0.0
    %1575 = vmatprep.subr.mxu0 0.0
    %1576 = vmatpush1.msra.mxu0 0.0
    %1577 = vmatprep.subr.mxu0 0.0
    %1578 = vmatpush1.msra.mxu0 0.0
    %1579 = vmatprep.subr.mxu0 0.0
    %1580 = vmatpush1.msra.mxu0 0.0
    %1581 = vmatprep.subr.mxu0 0.0
    %1582 = vmatpush1.msra.mxu0 0.0
    %1583 = vmatprep.subr.mxu0 0.0
    %1584 = vmatpush1.msra.mxu0 0.0
    %1585 = vmatprep.subr.mxu0 0.0
    %1586 = vmatpush1.msra.mxu0 0.0
    %1587 = vmatprep.subr.mxu0 0.0
    %1588 = vmatpush1.msra.mxu0 0.0
    %1589 = vmatprep.subr.mxu0 0.0
    %1590 = vmatpush1.msra.mxu0 0.0
    %1591 = vmatprep.subr.mxu0 0.0
    %1592 = vmatpush1.msra.mxu0 0.0
    %1593 = vmatprep.subr.mxu0 0.0
    %1594 = vmatpush1.msra.mxu0 0.0
    %1595 = vmatprep.subr.mxu0 0.0
    %1596 = vmatpush1.msra.mxu0 0.0
    %1597 = vmatprep.subr.mxu0 0.0
    %1598 = vmatpush1.msra.mxu0 0.0
    %1599 = vmatprep.subr.mxu0 0.0
    %1600 = vmatpush1.msra.mxu0 0.0
    %1601 = vmatprep.subr.mxu0 0.0
    %1602 = vmatpush1.msra.mxu0 0.0
    %1603 = vmatprep.subr.mxu0 0.0
    %1604 = vmatpush1.msra.mxu0 0.0
    %1605 = vmatprep.subr.mxu0 0.0
    %1606 = vmatpush1.msra.mxu0 0.0
    %1607 = vmatprep.subr.mxu0 0.0
    %1608 = vmatpush1.msra.mxu0 0.0
    %1609 = vmatprep.subr.mxu0 0.0
    %1610 = vmatpush1.msra.mxu0 0.0
    %1611 = vmatprep.subr.mxu0 0.0
    %1612 = vmatpush1.msra.mxu0 0.0
    %1613 = vmatprep.subr.mxu0 0.0
    %1614 = vmatpush1.msra.mxu0 0.0
    %1615 = vmatprep.subr.mxu0 0.0
    %1616 = vmatpush1.msra.mxu0 0.0
    %1617 = vmatprep.subr.mxu0 0.0
    %1618 = vmatpush1.msra.mxu0 0.0
    %1619 = vmatprep.mubr.f32.mxu0 0.0
    %1620 = vmatmul.mubr.f32.gmra.mrb[0].mxu0 %v1553
    %v1621 = vpop.f32.mrb[0].mxu0
    %v1622 = vadd.f32 0.0, %v1621
    %v1623 = vpop.f32.mrb[0].mxu0
    %1624 = vdwg.mxu0
    %v1625 = vld [vmem:[#allocation12] sm:$0xff]
    %v1626 = vld [vmem:[#allocation12 + $0x8] sm:$0xff]
    %v1627 = vld [vmem:[#allocation12 + $0x10] sm:$0xff]
    %v1628 = vld [vmem:[#allocation12 + $0x18] sm:$0xff]
    %v1629 = vld [vmem:[#allocation12 + $0x20] sm:$0xff]
    %v1630 = vld [vmem:[#allocation12 + $0x28] sm:$0xff]
    %v1631 = vld [vmem:[#allocation12 + $0x30] sm:$0xff]
    %v1632 = vld [vmem:[#allocation12 + $0x38] sm:$0xff]
    %v1633 = vld [vmem:[#allocation12 + $0x40] sm:$0xff]
    %v1634 = vld [vmem:[#allocation12 + $0x48] sm:$0xff]
    %v1635 = vld [vmem:[#allocation12 + $0x50] sm:$0xff]
    %v1636 = vld [vmem:[#allocation12 + $0x58] sm:$0xff]
    %v1637 = vld [vmem:[#allocation12 + $0x60] sm:$0xff]
    %v1638 = vld [vmem:[#allocation12 + $0x68] sm:$0xff]
    %v1639 = vld [vmem:[#allocation12 + $0x70] sm:$0xff]
    %v1640 = vld [vmem:[#allocation12 + $0x78] sm:$0xff]
    %s1641 = scalar_lea.vmem [#allocation10], 8
    %v1642 = vld [vmem:[%s1641] sm:$0xff]
    %v1644 = vsel %vm510, %v1642, 0
    %1646 = vmatprep.subr.mxu0 0.0
    %1647 = vmatpush1.msra.mxu0 %v1548
    %1648 = vmatprep.subr.mxu0 0.0
    %1649 = vmatpush1.msra.mxu0 %v1549
    %1650 = vmatprep.subr.mxu0 0.0
    %1651 = vmatpush1.msra.mxu0 0.0
    %1652 = vmatprep.subr.mxu0 0.0
    %1653 = vmatpush1.msra.mxu0 0.0
    %1654 = vmatprep.subr.mxu0 0.0
    %1655 = vmatpush1.msra.mxu0 0.0
    %1656 = vmatprep.subr.mxu0 0.0
    %1657 = vmatpush1.msra.mxu0 0.0
    %1658 = vmatprep.subr.mxu0 0.0
    %1659 = vmatpush1.msra.mxu0 0.0
    %1660 = vmatprep.subr.mxu0 0.0
    %1661 = vmatpush1.msra.mxu0 0.0
    %1662 = vmatprep.subr.mxu0 0.0
    %1663 = vmatpush1.msra.mxu0 0.0
    %1664 = vmatprep.subr.mxu0 0.0
    %1665 = vmatpush1.msra.mxu0 0.0
    %1666 = vmatprep.subr.mxu0 0.0
    %1667 = vmatpush1.msra.mxu0 0.0
    %1668 = vmatprep.subr.mxu0 0.0
    %1669 = vmatpush1.msra.mxu0 0.0
    %1670 = vmatprep.subr.mxu0 0.0
    %1671 = vmatpush1.msra.mxu0 0.0
    %1672 = vmatprep.subr.mxu0 0.0
    %1673 = vmatpush1.msra.mxu0 0.0
    %1674 = vmatprep.subr.mxu0 0.0
    %1675 = vmatpush1.msra.mxu0 0.0
    %1676 = vmatprep.subr.mxu0 0.0
    %1677 = vmatpush1.msra.mxu0 0.0
    %1678 = vmatprep.subr.mxu0 0.0
    %1679 = vmatpush1.msra.mxu0 0.0
    %1680 = vmatprep.subr.mxu0 0.0
    %1681 = vmatpush1.msra.mxu0 0.0
    %1682 = vmatprep.subr.mxu0 0.0
    %1683 = vmatpush1.msra.mxu0 0.0
    %1684 = vmatprep.subr.mxu0 0.0
    %1685 = vmatpush1.msra.mxu0 0.0
    %1686 = vmatprep.subr.mxu0 0.0
    %1687 = vmatpush1.msra.mxu0 0.0
    %1688 = vmatprep.subr.mxu0 0.0
    %1689 = vmatpush1.msra.mxu0 0.0
    %1690 = vmatprep.subr.mxu0 0.0
    %1691 = vmatpush1.msra.mxu0 0.0
    %1692 = vmatprep.subr.mxu0 0.0
    %1693 = vmatpush1.msra.mxu0 0.0
    %1694 = vmatprep.subr.mxu0 0.0
    %1695 = vmatpush1.msra.mxu0 0.0
    %1696 = vmatprep.subr.mxu0 0.0
    %1697 = vmatpush1.msra.mxu0 0.0
    %1698 = vmatprep.subr.mxu0 0.0
    %1699 = vmatpush1.msra.mxu0 0.0
    %1700 = vmatprep.subr.mxu0 0.0
    %1701 = vmatpush1.msra.mxu0 0.0
    %1702 = vmatprep.subr.mxu0 0.0
    %1703 = vmatpush1.msra.mxu0 0.0
    %1704 = vmatprep.subr.mxu0 0.0
    %1705 = vmatpush1.msra.mxu0 0.0
    %1706 = vmatprep.subr.mxu0 0.0
    %1707 = vmatpush1.msra.mxu0 0.0
    %1708 = vmatprep.subr.mxu0 0.0
    %1709 = vmatpush1.msra.mxu0 0.0
    %1710 = vmatprep.mubr.f32.mxu0 0.0
    %1711 = vmatmul.mubr.f32.gmra.mrb[0].mxu0 %v1644
    %v1712 = vpop.f32.mrb[0].mxu0
    %v1713 = vadd.f32 0.0, %v1712
    %v1714 = vpop.f32.mrb[0].mxu0
    %1715 = vdwg.mxu0
    %s1716 = scalar_lea.vmem [#allocation12], 128
    %v1717 = vld [vmem:[%s1716] sm:$0xff]
    %v1718 = vld [vmem:[%s1716 + $0x8] sm:$0xff]
    %v1719 = vld [vmem:[%s1716 + $0x10] sm:$0xff]
    %v1720 = vld [vmem:[%s1716 + $0x18] sm:$0xff]
    %v1721 = vld [vmem:[%s1716 + $0x20] sm:$0xff]
    %v1722 = vld [vmem:[%s1716 + $0x28] sm:$0xff]
    %v1723 = vld [vmem:[%s1716 + $0x30] sm:$0xff]
    %v1724 = vld [vmem:[%s1716 + $0x38] sm:$0xff]
    %v1725 = vld [vmem:[%s1716 + $0x40] sm:$0xff]
    %v1726 = vld [vmem:[%s1716 + $0x48] sm:$0xff]
    %v1727 = vld [vmem:[%s1716 + $0x50] sm:$0xff]
    %v1728 = vld [vmem:[%s1716 + $0x58] sm:$0xff]
    %v1729 = vld [vmem:[%s1716 + $0x60] sm:$0xff]
    %v1730 = vld [vmem:[%s1716 + $0x68] sm:$0xff]
    %v1731 = vld [vmem:[%s1716 + $0x70] sm:$0xff]
    %v1732 = vld [vmem:[%s1716 + $0x78] sm:$0xff]
    %1733 = vmatprep.subr.mxu0 0.0
    %1734 = vmatpush1.msra.mxu0 %v1717
    %1735 = vmatprep.subr.mxu0 0.0
    %1736 = vmatpush1.msra.mxu0 %v1718
    %1737 = vmatprep.subr.mxu0 0.0
    %1738 = vmatpush1.msra.mxu0 %v1719
    %1739 = vmatprep.subr.mxu0 0.0
    %1740 = vmatpush1.msra.mxu0 %v1720
    %1741 = vmatprep.subr.mxu0 0.0
    %1742 = vmatpush1.msra.mxu0 %v1721
    %1743 = vmatprep.subr.mxu0 0.0
    %1744 = vmatpush1.msra.mxu0 %v1722
    %1745 = vmatprep.subr.mxu0 0.0
    %1746 = vmatpush1.msra.mxu0 %v1723
    %1747 = vmatprep.subr.mxu0 0.0
    %1748 = vmatpush1.msra.mxu0 %v1724
    %1749 = vmatprep.subr.mxu0 0.0
    %1750 = vmatpush1.msra.mxu0 %v1725
    %1751 = vmatprep.subr.mxu0 0.0
    %1752 = vmatpush1.msra.mxu0 %v1726
    %1753 = vmatprep.subr.mxu0 0.0
    %1754 = vmatpush1.msra.mxu0 %v1727
    %1755 = vmatprep.subr.mxu0 0.0
    %1756 = vmatpush1.msra.mxu0 %v1728
    %1757 = vmatprep.subr.mxu0 0.0
    %1758 = vmatpush1.msra.mxu0 %v1729
    %1759 = vmatprep.subr.mxu0 0.0
    %1760 = vmatpush1.msra.mxu0 %v1730
    %1761 = vmatprep.subr.mxu0 0.0
    %1762 = vmatpush1.msra.mxu0 %v1731
    %1763 = vmatprep.subr.mxu0 0.0
    %1764 = vmatpush1.msra.mxu0 %v1732
    %1765 = vmatprep.subr.mxu0 0.0
    %1766 = vmatpush1.msra.mxu0 0.0
    %1767 = vmatprep.subr.mxu0 0.0
    %1768 = vmatpush1.msra.mxu0 0.0
    %1769 = vmatprep.subr.mxu0 0.0
    %1770 = vmatpush1.msra.mxu0 0.0
    %1771 = vmatprep.subr.mxu0 0.0
    %1772 = vmatpush1.msra.mxu0 0.0
    %1773 = vmatprep.subr.mxu0 0.0
    %1774 = vmatpush1.msra.mxu0 0.0
    %1775 = vmatprep.subr.mxu0 0.0
    %1776 = vmatpush1.msra.mxu0 0.0
    %1777 = vmatprep.subr.mxu0 0.0
    %1778 = vmatpush1.msra.mxu0 0.0
    %1779 = vmatprep.subr.mxu0 0.0
    %1780 = vmatpush1.msra.mxu0 0.0
    %1781 = vmatprep.subr.mxu0 0.0
    %1782 = vmatpush1.msra.mxu0 0.0
    %1783 = vmatprep.subr.mxu0 0.0
    %1784 = vmatpush1.msra.mxu0 0.0
    %1785 = vmatprep.subr.mxu0 0.0
    %1786 = vmatpush1.msra.mxu0 0.0
    %1787 = vmatprep.subr.mxu0 0.0
    %1788 = vmatpush1.msra.mxu0 0.0
    %1789 = vmatprep.subr.mxu0 0.0
    %1790 = vmatpush1.msra.mxu0 0.0
    %1791 = vmatprep.subr.mxu0 0.0
    %1792 = vmatpush1.msra.mxu0 0.0
    %1793 = vmatprep.subr.mxu0 0.0
    %1794 = vmatpush1.msra.mxu0 0.0
    %1795 = vmatprep.subr.mxu0 0.0
    %1796 = vmatpush1.msra.mxu0 0.0
    %1797 = vmatprep.mubr.f32.mxu0 0.0
    %1798 = vmatmul.mubr.f32.gmra.mrb[0].mxu0 %v1713
    %v1799 = vpop.f32.mrb[0].mxu0
    %v1800 = vadd.f32 0.0, %v1799
    %v1801 = vpop.f32.mrb[0].mxu0
    %1802 = vdwg.mxu0
    %1803 = vmatprep.subr.mxu0 0.0
    %1804 = vmatpush1.msra.mxu0 %v1625
    %1805 = vmatprep.subr.mxu0 0.0
    %1806 = vmatpush1.msra.mxu0 %v1626
    %1807 = vmatprep.subr.mxu0 0.0
    %1808 = vmatpush1.msra.mxu0 %v1627
    %1809 = vmatprep.subr.mxu0 0.0
    %1810 = vmatpush1.msra.mxu0 %v1628
    %1811 = vmatprep.subr.mxu0 0.0
    %1812 = vmatpush1.msra.mxu0 %v1629
    %1813 = vmatprep.subr.mxu0 0.0
    %1814 = vmatpush1.msra.mxu0 %v1630
    %1815 = vmatprep.subr.mxu0 0.0
    %1816 = vmatpush1.msra.mxu0 %v1631
    %1817 = vmatprep.subr.mxu0 0.0
    %1818 = vmatpush1.msra.mxu0 %v1632
    %1819 = vmatprep.subr.mxu0 0.0
    %1820 = vmatpush1.msra.mxu0 %v1633
    %1821 = vmatprep.subr.mxu0 0.0
    %1822 = vmatpush1.msra.mxu0 %v1634
    %1823 = vmatprep.subr.mxu0 0.0
    %1824 = vmatpush1.msra.mxu0 %v1635
    %1825 = vmatprep.subr.mxu0 0.0
    %1826 = vmatpush1.msra.mxu0 %v1636
    %1827 = vmatprep.subr.mxu0 0.0
    %1828 = vmatpush1.msra.mxu0 %v1637
    %1829 = vmatprep.subr.mxu0 0.0
    %1830 = vmatpush1.msra.mxu0 %v1638
    %1831 = vmatprep.subr.mxu0 0.0
    %1832 = vmatpush1.msra.mxu0 %v1639
    %1833 = vmatprep.subr.mxu0 0.0
    %1834 = vmatpush1.msra.mxu0 %v1640
    %1835 = vmatprep.subr.mxu0 0.0
    %1836 = vmatpush1.msra.mxu0 0.0
    %1837 = vmatprep.subr.mxu0 0.0
    %1838 = vmatpush1.msra.mxu0 0.0
    %1839 = vmatprep.subr.mxu0 0.0
    %1840 = vmatpush1.msra.mxu0 0.0
    %1841 = vmatprep.subr.mxu0 0.0
    %1842 = vmatpush1.msra.mxu0 0.0
    %1843 = vmatprep.subr.mxu0 0.0
    %1844 = vmatpush1.msra.mxu0 0.0
    %1845 = vmatprep.subr.mxu0 0.0
    %1846 = vmatpush1.msra.mxu0 0.0
    %1847 = vmatprep.subr.mxu0 0.0
    %1848 = vmatpush1.msra.mxu0 0.0
    %1849 = vmatprep.subr.mxu0 0.0
    %1850 = vmatpush1.msra.mxu0 0.0
    %1851 = vmatprep.subr.mxu0 0.0
    %1852 = vmatpush1.msra.mxu0 0.0
    %1853 = vmatprep.subr.mxu0 0.0
    %1854 = vmatpush1.msra.mxu0 0.0
    %1855 = vmatprep.subr.mxu0 0.0
    %1856 = vmatpush1.msra.mxu0 0.0
    %1857 = vmatprep.subr.mxu0 0.0
    %1858 = vmatpush1.msra.mxu0 0.0
    %1859 = vmatprep.subr.mxu0 0.0
    %1860 = vmatpush1.msra.mxu0 0.0
    %1861 = vmatprep.subr.mxu0 0.0
    %1862 = vmatpush1.msra.mxu0 0.0
    %1863 = vmatprep.subr.mxu0 0.0
    %1864 = vmatpush1.msra.mxu0 0.0
    %1865 = vmatprep.subr.mxu0 0.0
    %1866 = vmatpush1.msra.mxu0 0.0
    %1867 = vmatprep.mubr.f32.mxu0 0.0
    %1868 = vmatmul.mubr.f32.gmra.mrb[0].mxu0 %v1622
    %v1869 = vpop.f32.mrb[0].mxu0
    %v1870 = vadd.f32 %v1800, %v1869
    %v1871 = vpop.f32.mrb[0].mxu0
    %1872 = vdwg.mxu0
    %s1873 = scalar_lea.vmem [#allocation10], 16
    %v1874 = vld [vmem:[%s1873] sm:$0xff]
    %v1876 = vsel %vm510, %v1874, 0
    %1878 = vmatprep.subr.mxu0 0.0
    %1879 = vmatpush1.msra.mxu0 %v1548
    %1880 = vmatprep.subr.mxu0 0.0
    %1881 = vmatpush1.msra.mxu0 %v1549
    %1882 = vmatprep.subr.mxu0 0.0
    %1883 = vmatpush1.msra.mxu0 0.0
    %1884 = vmatprep.subr.mxu0 0.0
    %1885 = vmatpush1.msra.mxu0 0.0
    %1886 = vmatprep.subr.mxu0 0.0
    %1887 = vmatpush1.msra.mxu0 0.0
    %1888 = vmatprep.subr.mxu0 0.0
    %1889 = vmatpush1.msra.mxu0 0.0
    %1890 = vmatprep.subr.mxu0 0.0
    %1891 = vmatpush1.msra.mxu0 0.0
    %1892 = vmatprep.subr.mxu0 0.0
    %1893 = vmatpush1.msra.mxu0 0.0
    %1894 = vmatprep.subr.mxu0 0.0
    %1895 = vmatpush1.msra.mxu0 0.0
    %1896 = vmatprep.subr.mxu0 0.0
    %1897 = vmatpush1.msra.mxu0 0.0
    %1898 = vmatprep.subr.mxu0 0.0
    %1899 = vmatpush1.msra.mxu0 0.0
    %1900 = vmatprep.subr.mxu0 0.0
    %1901 = vmatpush1.msra.mxu0 0.0
    %1902 = vmatprep.subr.mxu0 0.0
    %1903 = vmatpush1.msra.mxu0 0.0
    %1904 = vmatprep.subr.mxu0 0.0
    %1905 = vmatpush1.msra.mxu0 0.0
    %1906 = vmatprep.subr.mxu0 0.0
    %1907 = vmatpush1.msra.mxu0 0.0
    %1908 = vmatprep.subr.mxu0 0.0
    %1909 = vmatpush1.msra.mxu0 0.0
    %1910 = vmatprep.subr.mxu0 0.0
    %1911 = vmatpush1.msra.mxu0 0.0
    %1912 = vmatprep.subr.mxu0 0.0
    %1913 = vmatpush1.msra.mxu0 0.0
    %1914 = vmatprep.subr.mxu0 0.0
    %1915 = vmatpush1.msra.mxu0 0.0
    %1916 = vmatprep.subr.mxu0 0.0
    %1917 = vmatpush1.msra.mxu0 0.0
    %1918 = vmatprep.subr.mxu0 0.0
    %1919 = vmatpush1.msra.mxu0 0.0
    %1920 = vmatprep.subr.mxu0 0.0
    %1921 = vmatpush1.msra.mxu0 0.0
    %1922 = vmatprep.subr.mxu0 0.0
    %1923 = vmatpush1.msra.mxu0 0.0
    %1924 = vmatprep.subr.mxu0 0.0
    %1925 = vmatpush1.msra.mxu0 0.0
    %1926 = vmatprep.subr.mxu0 0.0
    %1927 = vmatpush1.msra.mxu0 0.0
    %1928 = vmatprep.subr.mxu0 0.0
    %1929 = vmatpush1.msra.mxu0 0.0
    %1930 = vmatprep.subr.mxu0 0.0
    %1931 = vmatpush1.msra.mxu0 0.0
    %1932 = vmatprep.subr.mxu0 0.0
    %1933 = vmatpush1.msra.mxu0 0.0
    %1934 = vmatprep.subr.mxu0 0.0
    %1935 = vmatpush1.msra.mxu0 0.0
    %1936 = vmatprep.subr.mxu0 0.0
    %1937 = vmatpush1.msra.mxu0 0.0
    %1938 = vmatprep.subr.mxu0 0.0
    %1939 = vmatpush1.msra.mxu0 0.0
    %1940 = vmatprep.subr.mxu0 0.0
    %1941 = vmatpush1.msra.mxu0 0.0
    %1942 = vmatprep.mubr.f32.mxu0 0.0
    %1943 = vmatmul.mubr.f32.gmra.mrb[0].mxu0 %v1876
    %v1944 = vpop.f32.mrb[0].mxu0
    %v1945 = vadd.f32 0.0, %v1944
    %v1946 = vpop.f32.mrb[0].mxu0
    %1947 = vdwg.mxu0
    %s1948 = scalar_lea.vmem [#allocation12], 256
    %v1949 = vld [vmem:[%s1948] sm:$0xff]
    %v1950 = vld [vmem:[%s1948 + $0x8] sm:$0xff]
    %v1951 = vld [vmem:[%s1948 + $0x10] sm:$0xff]
    %v1952 = vld [vmem:[%s1948 + $0x18] sm:$0xff]
    %v1953 = vld [vmem:[%s1948 + $0x20] sm:$0xff]
    %v1954 = vld [vmem:[%s1948 + $0x28] sm:$0xff]
    %v1955 = vld [vmem:[%s1948 + $0x30] sm:$0xff]
    %v1956 = vld [vmem:[%s1948 + $0x38] sm:$0xff]
    %v1957 = vld [vmem:[%s1948 + $0x40] sm:$0xff]
    %v1958 = vld [vmem:[%s1948 + $0x48] sm:$0xff]
    %v1959 = vld [vmem:[%s1948 + $0x50] sm:$0xff]
    %v1960 = vld [vmem:[%s1948 + $0x58] sm:$0xff]
    %v1961 = vld [vmem:[%s1948 + $0x60] sm:$0xff]
    %v1962 = vld [vmem:[%s1948 + $0x68] sm:$0xff]
    %v1963 = vld [vmem:[%s1948 + $0x70] sm:$0xff]
    %v1964 = vld [vmem:[%s1948 + $0x78] sm:$0xff]
    %1965 = vmatprep.subr.mxu0 0.0
    %1966 = vmatpush1.msra.mxu0 %v1949
    %1967 = vmatprep.subr.mxu0 0.0
    %1968 = vmatpush1.msra.mxu0 %v1950
    %1969 = vmatprep.subr.mxu0 0.0
    %1970 = vmatpush1.msra.mxu0 %v1951
    %1971 = vmatprep.subr.mxu0 0.0
    %1972 = vmatpush1.msra.mxu0 %v1952
    %1973 = vmatprep.subr.mxu0 0.0
    %1974 = vmatpush1.msra.mxu0 %v1953
    %1975 = vmatprep.subr.mxu0 0.0
    %1976 = vmatpush1.msra.mxu0 %v1954
    %1977 = vmatprep.subr.mxu0 0.0
    %1978 = vmatpush1.msra.mxu0 %v1955
    %1979 = vmatprep.subr.mxu0 0.0
    %1980 = vmatpush1.msra.mxu0 %v1956
    %1981 = vmatprep.subr.mxu0 0.0
    %1982 = vmatpush1.msra.mxu0 %v1957
    %1983 = vmatprep.subr.mxu0 0.0
    %1984 = vmatpush1.msra.mxu0 %v1958
    %1985 = vmatprep.subr.mxu0 0.0
    %1986 = vmatpush1.msra.mxu0 %v1959
    %1987 = vmatprep.subr.mxu0 0.0
    %1988 = vmatpush1.msra.mxu0 %v1960
    %1989 = vmatprep.subr.mxu0 0.0
    %1990 = vmatpush1.msra.mxu0 %v1961
    %1991 = vmatprep.subr.mxu0 0.0
    %1992 = vmatpush1.msra.mxu0 %v1962
    %1993 = vmatprep.subr.mxu0 0.0
    %1994 = vmatpush1.msra.mxu0 %v1963
    %1995 = vmatprep.subr.mxu0 0.0
    %1996 = vmatpush1.msra.mxu0 %v1964
    %1997 = vmatprep.subr.mxu0 0.0
    %1998 = vmatpush1.msra.mxu0 0.0
    %1999 = vmatprep.subr.mxu0 0.0
    %2000 = vmatpush1.msra.mxu0 0.0
    %2001 = vmatprep.subr.mxu0 0.0
    %2002 = vmatpush1.msra.mxu0 0.0
    %2003 = vmatprep.subr.mxu0 0.0
    %2004 = vmatpush1.msra.mxu0 0.0
    %2005 = vmatprep.subr.mxu0 0.0
    %2006 = vmatpush1.msra.mxu0 0.0
    %2007 = vmatprep.subr.mxu0 0.0
    %2008 = vmatpush1.msra.mxu0 0.0
    %2009 = vmatprep.subr.mxu0 0.0
    %2010 = vmatpush1.msra.mxu0 0.0
    %2011 = vmatprep.subr.mxu0 0.0
    %2012 = vmatpush1.msra.mxu0 0.0
    %2013 = vmatprep.subr.mxu0 0.0
    %2014 = vmatpush1.msra.mxu0 0.0
    %2015 = vmatprep.subr.mxu0 0.0
    %2016 = vmatpush1.msra.mxu0 0.0
    %2017 = vmatprep.subr.mxu0 0.0
    %2018 = vmatpush1.msra.mxu0 0.0
    %2019 = vmatprep.subr.mxu0 0.0
    %2020 = vmatpush1.msra.mxu0 0.0
    %2021 = vmatprep.subr.mxu0 0.0
    %2022 = vmatpush1.msra.mxu0 0.0
    %2023 = vmatprep.subr.mxu0 0.0
    %2024 = vmatpush1.msra.mxu0 0.0
    %2025 = vmatprep.subr.mxu0 0.0
    %2026 = vmatpush1.msra.mxu0 0.0
    %2027 = vmatprep.subr.mxu0 0.0
    %2028 = vmatpush1.msra.mxu0 0.0
    %2029 = vmatprep.mubr.f32.mxu0 0.0
    %2030 = vmatmul.mubr.f32.gmra.mrb[0].mxu0 %v1945
    %v2031 = vpop.f32.mrb[0].mxu0
    %v2032 = vadd.f32 0.0, %v2031
    %v2033 = vpop.f32.mrb[0].mxu0
    %2034 = vdwg.mxu0
    %v2035 = vadd.f32 %v1870, %v2032
    %v2037 = vlaneseq
    %v2038 = vshrl.u32 %v2037, 7
    %v2039 = vsub.s32 0, %v2038
    %v2040 = vrot.slane %v1550, %v2039
    %v2042 = vadd.f32 %v2035, %v2040
    %v2043 = vmax.f32 %v2042, 0.0
    %v2044 = vld [vmem:[#allocation16] sm:$0x1]
    %v2045 = vld [vmem:[#allocation15] sm:$0xf]
    %vm2046 = vcmask 64512
    %v2048 = vsel %vm2046, %v2045, 0
    %2050 = vmatprep.subr.mxu0 0.0
    %2051 = vmatpush1.msra.mxu0 %v2043
    %2052 = vmatprep.subr.mxu0 0.0
    %2053 = vmatpush1.msra.mxu0 0.0
    %2054 = vmatprep.subr.mxu0 0.0
    %2055 = vmatpush1.msra.mxu0 0.0
    %2056 = vmatprep.subr.mxu0 0.0
    %2057 = vmatpush1.msra.mxu0 0.0
    %2058 = vmatprep.subr.mxu0 0.0
    %2059 = vmatpush1.msra.mxu0 0.0
    %2060 = vmatprep.subr.mxu0 0.0
    %2061 = vmatpush1.msra.mxu0 0.0
    %2062 = vmatprep.subr.mxu0 0.0
    %2063 = vmatpush1.msra.mxu0 0.0
    %2064 = vmatprep.subr.mxu0 0.0
    %2065 = vmatpush1.msra.mxu0 0.0
    %2066 = vmatprep.subr.mxu0 0.0
    %2067 = vmatpush1.msra.mxu0 0.0
    %2068 = vmatprep.subr.mxu0 0.0
    %2069 = vmatpush1.msra.mxu0 0.0
    %2070 = vmatprep.subr.mxu0 0.0
    %2071 = vmatpush1.msra.mxu0 0.0
    %2072 = vmatprep.subr.mxu0 0.0
    %2073 = vmatpush1.msra.mxu0 0.0
    %2074 = vmatprep.subr.mxu0 0.0
    %2075 = vmatpush1.msra.mxu0 0.0
    %2076 = vmatprep.subr.mxu0 0.0
    %2077 = vmatpush1.msra.mxu0 0.0
    %2078 = vmatprep.subr.mxu0 0.0
    %2079 = vmatpush1.msra.mxu0 0.0
    %2080 = vmatprep.subr.mxu0 0.0
    %2081 = vmatpush1.msra.mxu0 0.0
    %2082 = vmatprep.subr.mxu0 0.0
    %2083 = vmatpush1.msra.mxu0 0.0
    %2084 = vmatprep.subr.mxu0 0.0
    %2085 = vmatpush1.msra.mxu0 0.0
    %2086 = vmatprep.subr.mxu0 0.0
    %2087 = vmatpush1.msra.mxu0 0.0
    %2088 = vmatprep.subr.mxu0 0.0
    %2089 = vmatpush1.msra.mxu0 0.0
    %2090 = vmatprep.subr.mxu0 0.0
    %2091 = vmatpush1.msra.mxu0 0.0
    %2092 = vmatprep.subr.mxu0 0.0
    %2093 = vmatpush1.msra.mxu0 0.0
    %2094 = vmatprep.subr.mxu0 0.0
    %2095 = vmatpush1.msra.mxu0 0.0
    %2096 = vmatprep.subr.mxu0 0.0
    %2097 = vmatpush1.msra.mxu0 0.0
    %2098 = vmatprep.subr.mxu0 0.0
    %2099 = vmatpush1.msra.mxu0 0.0
    %2100 = vmatprep.subr.mxu0 0.0
    %2101 = vmatpush1.msra.mxu0 0.0
    %2102 = vmatprep.subr.mxu0 0.0
    %2103 = vmatpush1.msra.mxu0 0.0
    %2104 = vmatprep.subr.mxu0 0.0
    %2105 = vmatpush1.msra.mxu0 0.0
    %2106 = vmatprep.subr.mxu0 0.0
    %2107 = vmatpush1.msra.mxu0 0.0
    %2108 = vmatprep.subr.mxu0 0.0
    %2109 = vmatpush1.msra.mxu0 0.0
    %2110 = vmatprep.subr.mxu0 0.0
    %2111 = vmatpush1.msra.mxu0 0.0
    %2112 = vmatprep.subr.mxu0 0.0
    %2113 = vmatpush1.msra.mxu0 0.0
    %2114 = vmatprep.mubr.f32.mxu0 0.0
    %2115 = vmatmul.mubr.f32.gmra.mrb[0].mxu0 %v2048
    %v2116 = vpop.f32.mrb[0].mxu0
    %v2117 = vadd.f32 0.0, %v2116
    %v2118 = vpop.f32.mrb[0].mxu0
    %2119 = vdwg.mxu0
    %v2120 = vld [vmem:[%s11] sm:$0xff]
    %v2121 = vld [vmem:[%s11 + $0x8] sm:$0xff]
    %v2122 = vld [vmem:[%s11 + $0x10] sm:$0xff]
    %v2123 = vld [vmem:[%s11 + $0x18] sm:$0xff]
    %v2124 = vld [vmem:[%s11 + $0x20] sm:$0xff]
    %v2125 = vld [vmem:[%s11 + $0x28] sm:$0xff]
    %v2126 = vld [vmem:[%s11 + $0x30] sm:$0xff]
    %v2127 = vld [vmem:[%s11 + $0x38] sm:$0xff]
    %v2128 = vld [vmem:[%s11 + $0x40] sm:$0xff]
    %v2129 = vld [vmem:[%s11 + $0x48] sm:$0xff]
    %v2130 = vld [vmem:[%s11 + $0x50] sm:$0xff]
    %v2131 = vld [vmem:[%s11 + $0x58] sm:$0xff]
    %v2132 = vld [vmem:[%s11 + $0x60] sm:$0xff]
    %v2133 = vld [vmem:[%s11 + $0x68] sm:$0xff]
    %v2134 = vld [vmem:[%s11 + $0x70] sm:$0xff]
    %v2135 = vld [vmem:[%s11 + $0x78] sm:$0xff]
    %s2136 = scalar_lea.vmem [#allocation15], 4
    %v2137 = vld [vmem:[%s2136] sm:$0xf]
    %v2139 = vsel %vm2046, %v2137, 0
    %2141 = vmatprep.subr.mxu0 0.0
    %2142 = vmatpush1.msra.mxu0 %v2043
    %2143 = vmatprep.subr.mxu0 0.0
    %2144 = vmatpush1.msra.mxu0 0.0
    %2145 = vmatprep.subr.mxu0 0.0
    %2146 = vmatpush1.msra.mxu0 0.0
    %2147 = vmatprep.subr.mxu0 0.0
    %2148 = vmatpush1.msra.mxu0 0.0
    %2149 = vmatprep.subr.mxu0 0.0
    %2150 = vmatpush1.msra.mxu0 0.0
    %2151 = vmatprep.subr.mxu0 0.0
    %2152 = vmatpush1.msra.mxu0 0.0
    %2153 = vmatprep.subr.mxu0 0.0
    %2154 = vmatpush1.msra.mxu0 0.0
    %2155 = vmatprep.subr.mxu0 0.0
    %2156 = vmatpush1.msra.mxu0 0.0
    %2157 = vmatprep.subr.mxu0 0.0
    %2158 = vmatpush1.msra.mxu0 0.0
    %2159 = vmatprep.subr.mxu0 0.0
    %2160 = vmatpush1.msra.mxu0 0.0
    %2161 = vmatprep.subr.mxu0 0.0
    %2162 = vmatpush1.msra.mxu0 0.0
    %2163 = vmatprep.subr.mxu0 0.0
    %2164 = vmatpush1.msra.mxu0 0.0
    %2165 = vmatprep.subr.mxu0 0.0
    %2166 = vmatpush1.msra.mxu0 0.0
    %2167 = vmatprep.subr.mxu0 0.0
    %2168 = vmatpush1.msra.mxu0 0.0
    %2169 = vmatprep.subr.mxu0 0.0
    %2170 = vmatpush1.msra.mxu0 0.0
    %2171 = vmatprep.subr.mxu0 0.0
    %2172 = vmatpush1.msra.mxu0 0.0
    %2173 = vmatprep.subr.mxu0 0.0
    %2174 = vmatpush1.msra.mxu0 0.0
    %2175 = vmatprep.subr.mxu0 0.0
    %2176 = vmatpush1.msra.mxu0 0.0
    %2177 = vmatprep.subr.mxu0 0.0
    %2178 = vmatpush1.msra.mxu0 0.0
    %2179 = vmatprep.subr.mxu0 0.0
    %2180 = vmatpush1.msra.mxu0 0.0
    %2181 = vmatprep.subr.mxu0 0.0
    %2182 = vmatpush1.msra.mxu0 0.0
    %2183 = vmatprep.subr.mxu0 0.0
    %2184 = vmatpush1.msra.mxu0 0.0
    %2185 = vmatprep.subr.mxu0 0.0
    %2186 = vmatpush1.msra.mxu0 0.0
    %2187 = vmatprep.subr.mxu0 0.0
    %2188 = vmatpush1.msra.mxu0 0.0
    %2189 = vmatprep.subr.mxu0 0.0
    %2190 = vmatpush1.msra.mxu0 0.0
    %2191 = vmatprep.subr.mxu0 0.0
    %2192 = vmatpush1.msra.mxu0 0.0
    %2193 = vmatprep.subr.mxu0 0.0
    %2194 = vmatpush1.msra.mxu0 0.0
    %2195 = vmatprep.subr.mxu0 0.0
    %2196 = vmatpush1.msra.mxu0 0.0
    %2197 = vmatprep.subr.mxu0 0.0
    %2198 = vmatpush1.msra.mxu0 0.0
    %2199 = vmatprep.subr.mxu0 0.0
    %2200 = vmatpush1.msra.mxu0 0.0
    %2201 = vmatprep.subr.mxu0 0.0
    %2202 = vmatpush1.msra.mxu0 0.0
    %2203 = vmatprep.subr.mxu0 0.0
    %2204 = vmatpush1.msra.mxu0 0.0
    %2205 = vmatprep.mubr.f32.mxu0 0.0
    %2206 = vmatmul.mubr.f32.gmra.mrb[0].mxu0 %v2139
    %v2207 = vpop.f32.mrb[0].mxu0
    %v2208 = vadd.f32 0.0, %v2207
    %v2209 = vpop.f32.mrb[0].mxu0
    %2210 = vdwg.mxu0
    %s2211 = scalar_lea.vmem %s11, 128
    %v2212 = vld [vmem:[%s2211] sm:$0xff]
    %v2213 = vld [vmem:[%s2211 + $0x8] sm:$0xff]
    %v2214 = vld [vmem:[%s2211 + $0x10] sm:$0xff]
    %v2215 = vld [vmem:[%s2211 + $0x18] sm:$0xff]
    %v2216 = vld [vmem:[%s2211 + $0x20] sm:$0xff]
    %v2217 = vld [vmem:[%s2211 + $0x28] sm:$0xff]
    %v2218 = vld [vmem:[%s2211 + $0x30] sm:$0xff]
    %v2219 = vld [vmem:[%s2211 + $0x38] sm:$0xff]
    %v2220 = vld [vmem:[%s2211 + $0x40] sm:$0xff]
    %v2221 = vld [vmem:[%s2211 + $0x48] sm:$0xff]
    %v2222 = vld [vmem:[%s2211 + $0x50] sm:$0xff]
    %v2223 = vld [vmem:[%s2211 + $0x58] sm:$0xff]
    %v2224 = vld [vmem:[%s2211 + $0x60] sm:$0xff]
    %v2225 = vld [vmem:[%s2211 + $0x68] sm:$0xff]
    %v2226 = vld [vmem:[%s2211 + $0x70] sm:$0xff]
    %v2227 = vld [vmem:[%s2211 + $0x78] sm:$0xff]
    %2228 = vmatprep.subr.mxu0 0.0
    %2229 = vmatpush1.msra.mxu0 %v2212
    %2230 = vmatprep.subr.mxu0 0.0
    %2231 = vmatpush1.msra.mxu0 %v2213
    %2232 = vmatprep.subr.mxu0 0.0
    %2233 = vmatpush1.msra.mxu0 %v2214
    %2234 = vmatprep.subr.mxu0 0.0
    %2235 = vmatpush1.msra.mxu0 %v2215
    %2236 = vmatprep.subr.mxu0 0.0
    %2237 = vmatpush1.msra.mxu0 %v2216
    %2238 = vmatprep.subr.mxu0 0.0
    %2239 = vmatpush1.msra.mxu0 %v2217
    %2240 = vmatprep.subr.mxu0 0.0
    %2241 = vmatpush1.msra.mxu0 %v2218
    %2242 = vmatprep.subr.mxu0 0.0
    %2243 = vmatpush1.msra.mxu0 %v2219
    %2244 = vmatprep.subr.mxu0 0.0
    %2245 = vmatpush1.msra.mxu0 %v2220
    %2246 = vmatprep.subr.mxu0 0.0
    %2247 = vmatpush1.msra.mxu0 %v2221
    %2248 = vmatprep.subr.mxu0 0.0
    %2249 = vmatpush1.msra.mxu0 %v2222
    %2250 = vmatprep.subr.mxu0 0.0
    %2251 = vmatpush1.msra.mxu0 %v2223
    %2252 = vmatprep.subr.mxu0 0.0
    %2253 = vmatpush1.msra.mxu0 %v2224
    %2254 = vmatprep.subr.mxu0 0.0
    %2255 = vmatpush1.msra.mxu0 %v2225
    %2256 = vmatprep.subr.mxu0 0.0
    %2257 = vmatpush1.msra.mxu0 %v2226
    %2258 = vmatprep.subr.mxu0 0.0
    %2259 = vmatpush1.msra.mxu0 %v2227
    %2260 = vmatprep.subr.mxu0 0.0
    %2261 = vmatpush1.msra.mxu0 0.0
    %2262 = vmatprep.subr.mxu0 0.0
    %2263 = vmatpush1.msra.mxu0 0.0
    %2264 = vmatprep.subr.mxu0 0.0
    %2265 = vmatpush1.msra.mxu0 0.0
    %2266 = vmatprep.subr.mxu0 0.0
    %2267 = vmatpush1.msra.mxu0 0.0
    %2268 = vmatprep.subr.mxu0 0.0
    %2269 = vmatpush1.msra.mxu0 0.0
    %2270 = vmatprep.subr.mxu0 0.0
    %2271 = vmatpush1.msra.mxu0 0.0
    %2272 = vmatprep.subr.mxu0 0.0
    %2273 = vmatpush1.msra.mxu0 0.0
    %2274 = vmatprep.subr.mxu0 0.0
    %2275 = vmatpush1.msra.mxu0 0.0
    %2276 = vmatprep.subr.mxu0 0.0
    %2277 = vmatpush1.msra.mxu0 0.0
    %2278 = vmatprep.subr.mxu0 0.0
    %2279 = vmatpush1.msra.mxu0 0.0
    %2280 = vmatprep.subr.mxu0 0.0
    %2281 = vmatpush1.msra.mxu0 0.0
    %2282 = vmatprep.subr.mxu0 0.0
    %2283 = vmatpush1.msra.mxu0 0.0
    %2284 = vmatprep.subr.mxu0 0.0
    %2285 = vmatpush1.msra.mxu0 0.0
    %2286 = vmatprep.subr.mxu0 0.0
    %2287 = vmatpush1.msra.mxu0 0.0
    %2288 = vmatprep.subr.mxu0 0.0
    %2289 = vmatpush1.msra.mxu0 0.0
    %2290 = vmatprep.subr.mxu0 0.0
    %2291 = vmatpush1.msra.mxu0 0.0
    %2292 = vmatprep.mubr.f32.mxu0 0.0
    %2293 = vmatmul.mubr.f32.gmra.mrb[0].mxu0 %v2208
    %v2294 = vpop.f32.mrb[0].mxu0
    %v2295 = vadd.f32 0.0, %v2294
    %v2296 = vpop.f32.mrb[0].mxu0
    %2297 = vdwg.mxu0
    %2298 = vmatprep.subr.mxu0 0.0
    %2299 = vmatpush1.msra.mxu0 %v2120
    %2300 = vmatprep.subr.mxu0 0.0
    %2301 = vmatpush1.msra.mxu0 %v2121
    %2302 = vmatprep.subr.mxu0 0.0
    %2303 = vmatpush1.msra.mxu0 %v2122
    %2304 = vmatprep.subr.mxu0 0.0
    %2305 = vmatpush1.msra.mxu0 %v2123
    %2306 = vmatprep.subr.mxu0 0.0
    %2307 = vmatpush1.msra.mxu0 %v2124
    %2308 = vmatprep.subr.mxu0 0.0
    %2309 = vmatpush1.msra.mxu0 %v2125
    %2310 = vmatprep.subr.mxu0 0.0
    %2311 = vmatpush1.msra.mxu0 %v2126
    %2312 = vmatprep.subr.mxu0 0.0
    %2313 = vmatpush1.msra.mxu0 %v2127
    %2314 = vmatprep.subr.mxu0 0.0
    %2315 = vmatpush1.msra.mxu0 %v2128
    %2316 = vmatprep.subr.mxu0 0.0
    %2317 = vmatpush1.msra.mxu0 %v2129
    %2318 = vmatprep.subr.mxu0 0.0
    %2319 = vmatpush1.msra.mxu0 %v2130
    %2320 = vmatprep.subr.mxu0 0.0
    %2321 = vmatpush1.msra.mxu0 %v2131
    %2322 = vmatprep.subr.mxu0 0.0
    %2323 = vmatpush1.msra.mxu0 %v2132
    %2324 = vmatprep.subr.mxu0 0.0
    %2325 = vmatpush1.msra.mxu0 %v2133
    %2326 = vmatprep.subr.mxu0 0.0
    %2327 = vmatpush1.msra.mxu0 %v2134
    %2328 = vmatprep.subr.mxu0 0.0
    %2329 = vmatpush1.msra.mxu0 %v2135
    %2330 = vmatprep.subr.mxu0 0.0
    %2331 = vmatpush1.msra.mxu0 0.0
    %2332 = vmatprep.subr.mxu0 0.0
    %2333 = vmatpush1.msra.mxu0 0.0
    %2334 = vmatprep.subr.mxu0 0.0
    %2335 = vmatpush1.msra.mxu0 0.0
    %2336 = vmatprep.subr.mxu0 0.0
    %2337 = vmatpush1.msra.mxu0 0.0
    %2338 = vmatprep.subr.mxu0 0.0
    %2339 = vmatpush1.msra.mxu0 0.0
    %2340 = vmatprep.subr.mxu0 0.0
    %2341 = vmatpush1.msra.mxu0 0.0
    %2342 = vmatprep.subr.mxu0 0.0
    %2343 = vmatpush1.msra.mxu0 0.0
    %2344 = vmatprep.subr.mxu0 0.0
    %2345 = vmatpush1.msra.mxu0 0.0
    %2346 = vmatprep.subr.mxu0 0.0
    %2347 = vmatpush1.msra.mxu0 0.0
    %2348 = vmatprep.subr.mxu0 0.0
    %2349 = vmatpush1.msra.mxu0 0.0
    %2350 = vmatprep.subr.mxu0 0.0
    %2351 = vmatpush1.msra.mxu0 0.0
    %2352 = vmatprep.subr.mxu0 0.0
    %2353 = vmatpush1.msra.mxu0 0.0
    %2354 = vmatprep.subr.mxu0 0.0
    %2355 = vmatpush1.msra.mxu0 0.0
    %2356 = vmatprep.subr.mxu0 0.0
    %2357 = vmatpush1.msra.mxu0 0.0
    %2358 = vmatprep.subr.mxu0 0.0
    %2359 = vmatpush1.msra.mxu0 0.0
    %2360 = vmatprep.subr.mxu0 0.0
    %2361 = vmatpush1.msra.mxu0 0.0
    %2362 = vmatprep.mubr.f32.mxu0 0.0
    %2363 = vmatmul.mubr.f32.gmra.mrb[0].mxu0 %v2117
    %v2364 = vpop.f32.mrb[0].mxu0
    %v2365 = vadd.f32 %v2295, %v2364
    %v2366 = vpop.f32.mrb[0].mxu0
    %2367 = vdwg.mxu0
    %s2368 = scalar_lea.vmem [#allocation15], 8
    %v2369 = vld [vmem:[%s2368] sm:$0xf]
    %v2371 = vsel %vm2046, %v2369, 0
    %2373 = vmatprep.subr.mxu0 0.0
    %2374 = vmatpush1.msra.mxu0 %v2043
    %2375 = vmatprep.subr.mxu0 0.0
    %2376 = vmatpush1.msra.mxu0 0.0
    %2377 = vmatprep.subr.mxu0 0.0
    %2378 = vmatpush1.msra.mxu0 0.0
    %2379 = vmatprep.subr.mxu0 0.0
    %2380 = vmatpush1.msra.mxu0 0.0
    %2381 = vmatprep.subr.mxu0 0.0
    %2382 = vmatpush1.msra.mxu0 0.0
    %2383 = vmatprep.subr.mxu0 0.0
    %2384 = vmatpush1.msra.mxu0 0.0
    %2385 = vmatprep.subr.mxu0 0.0
    %2386 = vmatpush1.msra.mxu0 0.0
    %2387 = vmatprep.subr.mxu0 0.0
    %2388 = vmatpush1.msra.mxu0 0.0
    %2389 = vmatprep.subr.mxu0 0.0
    %2390 = vmatpush1.msra.mxu0 0.0
    %2391 = vmatprep.subr.mxu0 0.0
    %2392 = vmatpush1.msra.mxu0 0.0
    %2393 = vmatprep.subr.mxu0 0.0
    %2394 = vmatpush1.msra.mxu0 0.0
    %2395 = vmatprep.subr.mxu0 0.0
    %2396 = vmatpush1.msra.mxu0 0.0
    %2397 = vmatprep.subr.mxu0 0.0
    %2398 = vmatpush1.msra.mxu0 0.0
    %2399 = vmatprep.subr.mxu0 0.0
    %2400 = vmatpush1.msra.mxu0 0.0
    %2401 = vmatprep.subr.mxu0 0.0
    %2402 = vmatpush1.msra.mxu0 0.0
    %2403 = vmatprep.subr.mxu0 0.0
    %2404 = vmatpush1.msra.mxu0 0.0
    %2405 = vmatprep.subr.mxu0 0.0
    %2406 = vmatpush1.msra.mxu0 0.0
    %2407 = vmatprep.subr.mxu0 0.0
    %2408 = vmatpush1.msra.mxu0 0.0
    %2409 = vmatprep.subr.mxu0 0.0
    %2410 = vmatpush1.msra.mxu0 0.0
    %2411 = vmatprep.subr.mxu0 0.0
    %2412 = vmatpush1.msra.mxu0 0.0
    %2413 = vmatprep.subr.mxu0 0.0
    %2414 = vmatpush1.msra.mxu0 0.0
    %2415 = vmatprep.subr.mxu0 0.0
    %2416 = vmatpush1.msra.mxu0 0.0
    %2417 = vmatprep.subr.mxu0 0.0
    %2418 = vmatpush1.msra.mxu0 0.0
    %2419 = vmatprep.subr.mxu0 0.0
    %2420 = vmatpush1.msra.mxu0 0.0
    %2421 = vmatprep.subr.mxu0 0.0
    %2422 = vmatpush1.msra.mxu0 0.0
    %2423 = vmatprep.subr.mxu0 0.0
    %2424 = vmatpush1.msra.mxu0 0.0
    %2425 = vmatprep.subr.mxu0 0.0
    %2426 = vmatpush1.msra.mxu0 0.0
    %2427 = vmatprep.subr.mxu0 0.0
    %2428 = vmatpush1.msra.mxu0 0.0
    %2429 = vmatprep.subr.mxu0 0.0
    %2430 = vmatpush1.msra.mxu0 0.0
    %2431 = vmatprep.subr.mxu0 0.0
    %2432 = vmatpush1.msra.mxu0 0.0
    %2433 = vmatprep.subr.mxu0 0.0
    %2434 = vmatpush1.msra.mxu0 0.0
    %2435 = vmatprep.subr.mxu0 0.0
    %2436 = vmatpush1.msra.mxu0 0.0
    %2437 = vmatprep.mubr.f32.mxu0 0.0
    %2438 = vmatmul.mubr.f32.gmra.mrb[0].mxu0 %v2371
    %v2439 = vpop.f32.mrb[0].mxu0
    %v2440 = vadd.f32 0.0, %v2439
    %v2441 = vpop.f32.mrb[0].mxu0
    %2442 = vdwg.mxu0
    %s2443 = scalar_lea.vmem %s11, 256
    %v2444 = vld [vmem:[%s2443] sm:$0xff]
    %v2445 = vld [vmem:[%s2443 + $0x8] sm:$0xff]
    %v2446 = vld [vmem:[%s2443 + $0x10] sm:$0xff]
    %v2447 = vld [vmem:[%s2443 + $0x18] sm:$0xff]
    %v2448 = vld [vmem:[%s2443 + $0x20] sm:$0xff]
    %v2449 = vld [vmem:[%s2443 + $0x28] sm:$0xff]
    %v2450 = vld [vmem:[%s2443 + $0x30] sm:$0xff]
    %v2451 = vld [vmem:[%s2443 + $0x38] sm:$0xff]
    %v2452 = vld [vmem:[%s2443 + $0x40] sm:$0xff]
    %v2453 = vld [vmem:[%s2443 + $0x48] sm:$0xff]
    %v2454 = vld [vmem:[%s2443 + $0x50] sm:$0xff]
    %v2455 = vld [vmem:[%s2443 + $0x58] sm:$0xff]
    %v2456 = vld [vmem:[%s2443 + $0x60] sm:$0xff]
    %v2457 = vld [vmem:[%s2443 + $0x68] sm:$0xff]
    %v2458 = vld [vmem:[%s2443 + $0x70] sm:$0xff]
    %v2459 = vld [vmem:[%s2443 + $0x78] sm:$0xff]
    %2460 = vmatprep.subr.mxu0 0.0
    %2461 = vmatpush1.msra.mxu0 %v2444
    %2462 = vmatprep.subr.mxu0 0.0
    %2463 = vmatpush1.msra.mxu0 %v2445
    %2464 = vmatprep.subr.mxu0 0.0
    %2465 = vmatpush1.msra.mxu0 %v2446
    %2466 = vmatprep.subr.mxu0 0.0
    %2467 = vmatpush1.msra.mxu0 %v2447
    %2468 = vmatprep.subr.mxu0 0.0
    %2469 = vmatpush1.msra.mxu0 %v2448
    %2470 = vmatprep.subr.mxu0 0.0
    %2471 = vmatpush1.msra.mxu0 %v2449
    %2472 = vmatprep.subr.mxu0 0.0
    %2473 = vmatpush1.msra.mxu0 %v2450
    %2474 = vmatprep.subr.mxu0 0.0
    %2475 = vmatpush1.msra.mxu0 %v2451
    %2476 = vmatprep.subr.mxu0 0.0
    %2477 = vmatpush1.msra.mxu0 %v2452
    %2478 = vmatprep.subr.mxu0 0.0
    %2479 = vmatpush1.msra.mxu0 %v2453
    %2480 = vmatprep.subr.mxu0 0.0
    %2481 = vmatpush1.msra.mxu0 %v2454
    %2482 = vmatprep.subr.mxu0 0.0
    %2483 = vmatpush1.msra.mxu0 %v2455
    %2484 = vmatprep.subr.mxu0 0.0
    %2485 = vmatpush1.msra.mxu0 %v2456
    %2486 = vmatprep.subr.mxu0 0.0
    %2487 = vmatpush1.msra.mxu0 %v2457
    %2488 = vmatprep.subr.mxu0 0.0
    %2489 = vmatpush1.msra.mxu0 %v2458
    %2490 = vmatprep.subr.mxu0 0.0
    %2491 = vmatpush1.msra.mxu0 %v2459
    %2492 = vmatprep.subr.mxu0 0.0
    %2493 = vmatpush1.msra.mxu0 0.0
    %2494 = vmatprep.subr.mxu0 0.0
    %2495 = vmatpush1.msra.mxu0 0.0
    %2496 = vmatprep.subr.mxu0 0.0
    %2497 = vmatpush1.msra.mxu0 0.0
    %2498 = vmatprep.subr.mxu0 0.0
    %2499 = vmatpush1.msra.mxu0 0.0
    %2500 = vmatprep.subr.mxu0 0.0
    %2501 = vmatpush1.msra.mxu0 0.0
    %2502 = vmatprep.subr.mxu0 0.0
    %2503 = vmatpush1.msra.mxu0 0.0
    %2504 = vmatprep.subr.mxu0 0.0
    %2505 = vmatpush1.msra.mxu0 0.0
    %2506 = vmatprep.subr.mxu0 0.0
    %2507 = vmatpush1.msra.mxu0 0.0
    %2508 = vmatprep.subr.mxu0 0.0
    %2509 = vmatpush1.msra.mxu0 0.0
    %2510 = vmatprep.subr.mxu0 0.0
    %2511 = vmatpush1.msra.mxu0 0.0
    %2512 = vmatprep.subr.mxu0 0.0
    %2513 = vmatpush1.msra.mxu0 0.0
    %2514 = vmatprep.subr.mxu0 0.0
    %2515 = vmatpush1.msra.mxu0 0.0
    %2516 = vmatprep.subr.mxu0 0.0
    %2517 = vmatpush1.msra.mxu0 0.0
    %2518 = vmatprep.subr.mxu0 0.0
    %2519 = vmatpush1.msra.mxu0 0.0
    %2520 = vmatprep.subr.mxu0 0.0
    %2521 = vmatpush1.msra.mxu0 0.0
    %2522 = vmatprep.subr.mxu0 0.0
    %2523 = vmatpush1.msra.mxu0 0.0
    %2524 = vmatprep.mubr.f32.mxu0 0.0
    %2525 = vmatmul.mubr.f32.gmra.mrb[0].mxu0 %v2440
    %v2526 = vpop.f32.mrb[0].mxu0
    %v2527 = vadd.f32 0.0, %v2526
    %v2528 = vpop.f32.mrb[0].mxu0
    %2529 = vdwg.mxu0
    %v2530 = vadd.f32 %v2365, %v2527
    %v2532 = vlaneseq
    %v2533 = vshrl.u32 %v2532, 7
    %v2534 = vsub.s32 0, %v2533
    %v2535 = vrot.slane %v2044, %v2534
    %v2537 = vadd.f32 %v2530, %v2535
    %v2538 = vmax.f32 %v2537, 0.0
    %v2539 = vld [vmem:[#allocation19] sm:$0x1]
    %v2540 = vld [vmem:[%s13] sm:$0x3]
    %vm2541 = vcmask 31744
    %v2543 = vsel %vm2541, %v2540, 0
    %vm2545 = vcmask 1043456
    %v2547 = vsel %vm2545, %v2538, 0
    %2549 = vmatprep.subr.mxu0 0.0
    %2550 = vmatpush1.msra.mxu0 %v2547
    %2551 = vmatprep.subr.mxu0 0.0
    %2552 = vmatpush1.msra.mxu0 0.0
    %2553 = vmatprep.subr.mxu0 0.0
    %2554 = vmatpush1.msra.mxu0 0.0
    %2555 = vmatprep.subr.mxu0 0.0
    %2556 = vmatpush1.msra.mxu0 0.0
    %2557 = vmatprep.subr.mxu0 0.0
    %2558 = vmatpush1.msra.mxu0 0.0
    %2559 = vmatprep.subr.mxu0 0.0
    %2560 = vmatpush1.msra.mxu0 0.0
    %2561 = vmatprep.subr.mxu0 0.0
    %2562 = vmatpush1.msra.mxu0 0.0
    %2563 = vmatprep.subr.mxu0 0.0
    %2564 = vmatpush1.msra.mxu0 0.0
    %2565 = vmatprep.subr.mxu0 0.0
    %2566 = vmatpush1.msra.mxu0 0.0
    %2567 = vmatprep.subr.mxu0 0.0
    %2568 = vmatpush1.msra.mxu0 0.0
    %2569 = vmatprep.subr.mxu0 0.0
    %2570 = vmatpush1.msra.mxu0 0.0
    %2571 = vmatprep.subr.mxu0 0.0
    %2572 = vmatpush1.msra.mxu0 0.0
    %2573 = vmatprep.subr.mxu0 0.0
    %2574 = vmatpush1.msra.mxu0 0.0
    %2575 = vmatprep.subr.mxu0 0.0
    %2576 = vmatpush1.msra.mxu0 0.0
    %2577 = vmatprep.subr.mxu0 0.0
    %2578 = vmatpush1.msra.mxu0 0.0
    %2579 = vmatprep.subr.mxu0 0.0
    %2580 = vmatpush1.msra.mxu0 0.0
    %2581 = vmatprep.subr.mxu0 0.0
    %2582 = vmatpush1.msra.mxu0 0.0
    %2583 = vmatprep.subr.mxu0 0.0
    %2584 = vmatpush1.msra.mxu0 0.0
    %2585 = vmatprep.subr.mxu0 0.0
    %2586 = vmatpush1.msra.mxu0 0.0
    %2587 = vmatprep.subr.mxu0 0.0
    %2588 = vmatpush1.msra.mxu0 0.0
    %2589 = vmatprep.subr.mxu0 0.0
    %2590 = vmatpush1.msra.mxu0 0.0
    %2591 = vmatprep.subr.mxu0 0.0
    %2592 = vmatpush1.msra.mxu0 0.0
    %2593 = vmatprep.subr.mxu0 0.0
    %2594 = vmatpush1.msra.mxu0 0.0
    %2595 = vmatprep.subr.mxu0 0.0
    %2596 = vmatpush1.msra.mxu0 0.0
    %2597 = vmatprep.subr.mxu0 0.0
    %2598 = vmatpush1.msra.mxu0 0.0
    %2599 = vmatprep.subr.mxu0 0.0
    %2600 = vmatpush1.msra.mxu0 0.0
    %2601 = vmatprep.subr.mxu0 0.0
    %2602 = vmatpush1.msra.mxu0 0.0
    %2603 = vmatprep.subr.mxu0 0.0
    %2604 = vmatpush1.msra.mxu0 0.0
    %2605 = vmatprep.subr.mxu0 0.0
    %2606 = vmatpush1.msra.mxu0 0.0
    %2607 = vmatprep.subr.mxu0 0.0
    %2608 = vmatpush1.msra.mxu0 0.0
    %2609 = vmatprep.subr.mxu0 0.0
    %2610 = vmatpush1.msra.mxu0 0.0
    %2611 = vmatprep.subr.mxu0 0.0
    %2612 = vmatpush1.msra.mxu0 0.0
    %2613 = vmatprep.mubr.f32.mxu0 0.0
    %2614 = vmatmul.mubr.f32.gmra.mrb[0].mxu0 %v2543
    %v2615 = vpop.f32.mrb[0].mxu0
    %v2616 = vadd.f32 0.0, %v2615
    %v2617 = vpop.f32.mrb[0].mxu0
    %2618 = vdwg.mxu0
    %v2619 = vld [vmem:[#allocation18] sm:$0xff]
    %v2620 = vld [vmem:[#allocation18 + $0x8] sm:$0xff]
    %v2621 = vld [vmem:[#allocation18 + $0x10] sm:$0xff]
    %v2622 = vld [vmem:[#allocation18 + $0x18] sm:$0xff]
    %v2623 = vld [vmem:[#allocation18 + $0x20] sm:$0xff]
    %v2624 = vld [vmem:[#allocation18 + $0x28] sm:$0xff]
    %v2625 = vld [vmem:[#allocation18 + $0x30] sm:$0xff]
    %v2626 = vld [vmem:[#allocation18 + $0x38] sm:$0xff]
    %s2627 = scalar_lea.vmem %s13, 2
    %v2628 = vld [vmem:[%s2627] sm:$0x3]
    %v2630 = vsel %vm2541, %v2628, 0
    %2632 = vmatprep.subr.mxu0 0.0
    %2633 = vmatpush1.msra.mxu0 %v2547
    %2634 = vmatprep.subr.mxu0 0.0
    %2635 = vmatpush1.msra.mxu0 0.0
    %2636 = vmatprep.subr.mxu0 0.0
    %2637 = vmatpush1.msra.mxu0 0.0
    %2638 = vmatprep.subr.mxu0 0.0
    %2639 = vmatpush1.msra.mxu0 0.0
    %2640 = vmatprep.subr.mxu0 0.0
    %2641 = vmatpush1.msra.mxu0 0.0
    %2642 = vmatprep.subr.mxu0 0.0
    %2643 = vmatpush1.msra.mxu0 0.0
    %2644 = vmatprep.subr.mxu0 0.0
    %2645 = vmatpush1.msra.mxu0 0.0
    %2646 = vmatprep.subr.mxu0 0.0
    %2647 = vmatpush1.msra.mxu0 0.0
    %2648 = vmatprep.subr.mxu0 0.0
    %2649 = vmatpush1.msra.mxu0 0.0
    %2650 = vmatprep.subr.mxu0 0.0
    %2651 = vmatpush1.msra.mxu0 0.0
    %2652 = vmatprep.subr.mxu0 0.0
    %2653 = vmatpush1.msra.mxu0 0.0
    %2654 = vmatprep.subr.mxu0 0.0
    %2655 = vmatpush1.msra.mxu0 0.0
    %2656 = vmatprep.subr.mxu0 0.0
    %2657 = vmatpush1.msra.mxu0 0.0
    %2658 = vmatprep.subr.mxu0 0.0
    %2659 = vmatpush1.msra.mxu0 0.0
    %2660 = vmatprep.subr.mxu0 0.0
    %2661 = vmatpush1.msra.mxu0 0.0
    %2662 = vmatprep.subr.mxu0 0.0
    %2663 = vmatpush1.msra.mxu0 0.0
    %2664 = vmatprep.subr.mxu0 0.0
    %2665 = vmatpush1.msra.mxu0 0.0
    %2666 = vmatprep.subr.mxu0 0.0
    %2667 = vmatpush1.msra.mxu0 0.0
    %2668 = vmatprep.subr.mxu0 0.0
    %2669 = vmatpush1.msra.mxu0 0.0
    %2670 = vmatprep.subr.mxu0 0.0
    %2671 = vmatpush1.msra.mxu0 0.0
    %2672 = vmatprep.subr.mxu0 0.0
    %2673 = vmatpush1.msra.mxu0 0.0
    %2674 = vmatprep.subr.mxu0 0.0
    %2675 = vmatpush1.msra.mxu0 0.0
    %2676 = vmatprep.subr.mxu0 0.0
    %2677 = vmatpush1.msra.mxu0 0.0
    %2678 = vmatprep.subr.mxu0 0.0
    %2679 = vmatpush1.msra.mxu0 0.0
    %2680 = vmatprep.subr.mxu0 0.0
    %2681 = vmatpush1.msra.mxu0 0.0
    %2682 = vmatprep.subr.mxu0 0.0
    %2683 = vmatpush1.msra.mxu0 0.0
    %2684 = vmatprep.subr.mxu0 0.0
    %2685 = vmatpush1.msra.mxu0 0.0
    %2686 = vmatprep.subr.mxu0 0.0
    %2687 = vmatpush1.msra.mxu0 0.0
    %2688 = vmatprep.subr.mxu0 0.0
    %2689 = vmatpush1.msra.mxu0 0.0
    %2690 = vmatprep.subr.mxu0 0.0
    %2691 = vmatpush1.msra.mxu0 0.0
    %2692 = vmatprep.subr.mxu0 0.0
    %2693 = vmatpush1.msra.mxu0 0.0
    %2694 = vmatprep.subr.mxu0 0.0
    %2695 = vmatpush1.msra.mxu0 0.0
    %2696 = vmatprep.mubr.f32.mxu0 0.0
    %2697 = vmatmul.mubr.f32.gmra.mrb[0].mxu0 %v2630
    %v2698 = vpop.f32.mrb[0].mxu0
    %v2699 = vadd.f32 0.0, %v2698
    %v2700 = vpop.f32.mrb[0].mxu0
    %2701 = vdwg.mxu0
    %s2702 = scalar_lea.vmem [#allocation18], 64
    %v2703 = vld [vmem:[%s2702] sm:$0xff]
    %v2704 = vld [vmem:[%s2702 + $0x8] sm:$0xff]
    %v2705 = vld [vmem:[%s2702 + $0x10] sm:$0xff]
    %v2706 = vld [vmem:[%s2702 + $0x18] sm:$0xff]
    %v2707 = vld [vmem:[%s2702 + $0x20] sm:$0xff]
    %v2708 = vld [vmem:[%s2702 + $0x28] sm:$0xff]
    %v2709 = vld [vmem:[%s2702 + $0x30] sm:$0xff]
    %v2710 = vld [vmem:[%s2702 + $0x38] sm:$0xff]
    %v2712 = vsel %vm301, %v2699, 0
    %2714 = vmatprep.subr.mxu0 0.0
    %2715 = vmatpush1.msra.mxu0 %v2703
    %2716 = vmatprep.subr.mxu0 0.0
    %2717 = vmatpush1.msra.mxu0 %v2704
    %2718 = vmatprep.subr.mxu0 0.0
    %2719 = vmatpush1.msra.mxu0 %v2705
    %2720 = vmatprep.subr.mxu0 0.0
    %2721 = vmatpush1.msra.mxu0 %v2706
    %2722 = vmatprep.subr.mxu0 0.0
    %2723 = vmatpush1.msra.mxu0 %v2707
    %2724 = vmatprep.subr.mxu0 0.0
    %2725 = vmatpush1.msra.mxu0 %v2708
    %2726 = vmatprep.subr.mxu0 0.0
    %2727 = vmatpush1.msra.mxu0 %v2709
    %2728 = vmatprep.subr.mxu0 0.0
    %2729 = vmatpush1.msra.mxu0 %v2710
    %2730 = vmatprep.subr.mxu0 0.0
    %2731 = vmatpush1.msra.mxu0 0.0
    %2732 = vmatprep.subr.mxu0 0.0
    %2733 = vmatpush1.msra.mxu0 0.0
    %2734 = vmatprep.subr.mxu0 0.0
    %2735 = vmatpush1.msra.mxu0 0.0
    %2736 = vmatprep.subr.mxu0 0.0
    %2737 = vmatpush1.msra.mxu0 0.0
    %2738 = vmatprep.subr.mxu0 0.0
    %2739 = vmatpush1.msra.mxu0 0.0
    %2740 = vmatprep.subr.mxu0 0.0
    %2741 = vmatpush1.msra.mxu0 0.0
    %2742 = vmatprep.subr.mxu0 0.0
    %2743 = vmatpush1.msra.mxu0 0.0
    %2744 = vmatprep.subr.mxu0 0.0
    %2745 = vmatpush1.msra.mxu0 0.0
    %2746 = vmatprep.subr.mxu0 0.0
    %2747 = vmatpush1.msra.mxu0 0.0
    %2748 = vmatprep.subr.mxu0 0.0
    %2749 = vmatpush1.msra.mxu0 0.0
    %2750 = vmatprep.subr.mxu0 0.0
    %2751 = vmatpush1.msra.mxu0 0.0
    %2752 = vmatprep.subr.mxu0 0.0
    %2753 = vmatpush1.msra.mxu0 0.0
    %2754 = vmatprep.subr.mxu0 0.0
    %2755 = vmatpush1.msra.mxu0 0.0
    %2756 = vmatprep.subr.mxu0 0.0
    %2757 = vmatpush1.msra.mxu0 0.0
    %2758 = vmatprep.subr.mxu0 0.0
    %2759 = vmatpush1.msra.mxu0 0.0
    %2760 = vmatprep.subr.mxu0 0.0
    %2761 = vmatpush1.msra.mxu0 0.0
    %2762 = vmatprep.subr.mxu0 0.0
    %2763 = vmatpush1.msra.mxu0 0.0
    %2764 = vmatprep.subr.mxu0 0.0
    %2765 = vmatpush1.msra.mxu0 0.0
    %2766 = vmatprep.subr.mxu0 0.0
    %2767 = vmatpush1.msra.mxu0 0.0
    %2768 = vmatprep.subr.mxu0 0.0
    %2769 = vmatpush1.msra.mxu0 0.0
    %2770 = vmatprep.subr.mxu0 0.0
    %2771 = vmatpush1.msra.mxu0 0.0
    %2772 = vmatprep.subr.mxu0 0.0
    %2773 = vmatpush1.msra.mxu0 0.0
    %2774 = vmatprep.subr.mxu0 0.0
    %2775 = vmatpush1.msra.mxu0 0.0
    %2776 = vmatprep.subr.mxu0 0.0
    %2777 = vmatpush1.msra.mxu0 0.0
    %2778 = vmatprep.mubr.f32.mxu0 0.0
    %2779 = vmatmul.mubr.f32.gmra.mrb[0].mxu0 %v2712
    %v2780 = vpop.f32.mrb[0].mxu0
    %v2781 = vadd.f32 0.0, %v2780
    %v2782 = vpop.f32.mrb[0].mxu0
    %2783 = vdwg.mxu0
    %v2785 = vsel %vm301, %v2616, 0
    %2787 = vmatprep.subr.mxu0 0.0
    %2788 = vmatpush1.msra.mxu0 %v2619
    %2789 = vmatprep.subr.mxu0 0.0
    %2790 = vmatpush1.msra.mxu0 %v2620
    %2791 = vmatprep.subr.mxu0 0.0
    %2792 = vmatpush1.msra.mxu0 %v2621
    %2793 = vmatprep.subr.mxu0 0.0
    %2794 = vmatpush1.msra.mxu0 %v2622
    %2795 = vmatprep.subr.mxu0 0.0
    %2796 = vmatpush1.msra.mxu0 %v2623
    %2797 = vmatprep.subr.mxu0 0.0
    %2798 = vmatpush1.msra.mxu0 %v2624
    %2799 = vmatprep.subr.mxu0 0.0
    %2800 = vmatpush1.msra.mxu0 %v2625
    %2801 = vmatprep.subr.mxu0 0.0
    %2802 = vmatpush1.msra.mxu0 %v2626
    %2803 = vmatprep.subr.mxu0 0.0
    %2804 = vmatpush1.msra.mxu0 0.0
    %2805 = vmatprep.subr.mxu0 0.0
    %2806 = vmatpush1.msra.mxu0 0.0
    %2807 = vmatprep.subr.mxu0 0.0
    %2808 = vmatpush1.msra.mxu0 0.0
    %2809 = vmatprep.subr.mxu0 0.0
    %2810 = vmatpush1.msra.mxu0 0.0
    %2811 = vmatprep.subr.mxu0 0.0
    %2812 = vmatpush1.msra.mxu0 0.0
    %2813 = vmatprep.subr.mxu0 0.0
    %2814 = vmatpush1.msra.mxu0 0.0
    %2815 = vmatprep.subr.mxu0 0.0
    %2816 = vmatpush1.msra.mxu0 0.0
    %2817 = vmatprep.subr.mxu0 0.0
    %2818 = vmatpush1.msra.mxu0 0.0
    %2819 = vmatprep.subr.mxu0 0.0
    %2820 = vmatpush1.msra.mxu0 0.0
    %2821 = vmatprep.subr.mxu0 0.0
    %2822 = vmatpush1.msra.mxu0 0.0
    %2823 = vmatprep.subr.mxu0 0.0
    %2824 = vmatpush1.msra.mxu0 0.0
    %2825 = vmatprep.subr.mxu0 0.0
    %2826 = vmatpush1.msra.mxu0 0.0
    %2827 = vmatprep.subr.mxu0 0.0
    %2828 = vmatpush1.msra.mxu0 0.0
    %2829 = vmatprep.subr.mxu0 0.0
    %2830 = vmatpush1.msra.mxu0 0.0
    %2831 = vmatprep.subr.mxu0 0.0
    %2832 = vmatpush1.msra.mxu0 0.0
    %2833 = vmatprep.subr.mxu0 0.0
    %2834 = vmatpush1.msra.mxu0 0.0
    %2835 = vmatprep.subr.mxu0 0.0
    %2836 = vmatpush1.msra.mxu0 0.0
    %2837 = vmatprep.subr.mxu0 0.0
    %2838 = vmatpush1.msra.mxu0 0.0
    %2839 = vmatprep.subr.mxu0 0.0
    %2840 = vmatpush1.msra.mxu0 0.0
    %2841 = vmatprep.subr.mxu0 0.0
    %2842 = vmatpush1.msra.mxu0 0.0
    %2843 = vmatprep.subr.mxu0 0.0
    %2844 = vmatpush1.msra.mxu0 0.0
    %2845 = vmatprep.subr.mxu0 0.0
    %2846 = vmatpush1.msra.mxu0 0.0
    %2847 = vmatprep.subr.mxu0 0.0
    %2848 = vmatpush1.msra.mxu0 0.0
    %2849 = vmatprep.subr.mxu0 0.0
    %2850 = vmatpush1.msra.mxu0 0.0
    %2851 = vmatprep.mubr.f32.mxu0 0.0
    %2852 = vmatmul.mubr.f32.gmra.mrb[0].mxu0 %v2785
    %v2853 = vpop.f32.mrb[0].mxu0
    %v2854 = vadd.f32 %v2781, %v2853
    %v2855 = vpop.f32.mrb[0].mxu0
    %2856 = vdwg.mxu0
    %s2857 = scalar_lea.vmem %s13, 4
    %v2858 = vld [vmem:[%s2857] sm:$0x3]
    %v2860 = vsel %vm2541, %v2858, 0
    %2862 = vmatprep.subr.mxu0 0.0
    %2863 = vmatpush1.msra.mxu0 %v2547
    %2864 = vmatprep.subr.mxu0 0.0
    %2865 = vmatpush1.msra.mxu0 0.0
    %2866 = vmatprep.subr.mxu0 0.0
    %2867 = vmatpush1.msra.mxu0 0.0
    %2868 = vmatprep.subr.mxu0 0.0
    %2869 = vmatpush1.msra.mxu0 0.0
    %2870 = vmatprep.subr.mxu0 0.0
    %2871 = vmatpush1.msra.mxu0 0.0
    %2872 = vmatprep.subr.mxu0 0.0
    %2873 = vmatpush1.msra.mxu0 0.0
    %2874 = vmatprep.subr.mxu0 0.0
    %2875 = vmatpush1.msra.mxu0 0.0
    %2876 = vmatprep.subr.mxu0 0.0
    %2877 = vmatpush1.msra.mxu0 0.0
    %2878 = vmatprep.subr.mxu0 0.0
    %2879 = vmatpush1.msra.mxu0 0.0
    %2880 = vmatprep.subr.mxu0 0.0
    %2881 = vmatpush1.msra.mxu0 0.0
    %2882 = vmatprep.subr.mxu0 0.0
    %2883 = vmatpush1.msra.mxu0 0.0
    %2884 = vmatprep.subr.mxu0 0.0
    %2885 = vmatpush1.msra.mxu0 0.0
    %2886 = vmatprep.subr.mxu0 0.0
    %2887 = vmatpush1.msra.mxu0 0.0
    %2888 = vmatprep.subr.mxu0 0.0
    %2889 = vmatpush1.msra.mxu0 0.0
    %2890 = vmatprep.subr.mxu0 0.0
    %2891 = vmatpush1.msra.mxu0 0.0
    %2892 = vmatprep.subr.mxu0 0.0
    %2893 = vmatpush1.msra.mxu0 0.0
    %2894 = vmatprep.subr.mxu0 0.0
    %2895 = vmatpush1.msra.mxu0 0.0
    %2896 = vmatprep.subr.mxu0 0.0
    %2897 = vmatpush1.msra.mxu0 0.0
    %2898 = vmatprep.subr.mxu0 0.0
    %2899 = vmatpush1.msra.mxu0 0.0
    %2900 = vmatprep.subr.mxu0 0.0
    %2901 = vmatpush1.msra.mxu0 0.0
    %2902 = vmatprep.subr.mxu0 0.0
    %2903 = vmatpush1.msra.mxu0 0.0
    %2904 = vmatprep.subr.mxu0 0.0
    %2905 = vmatpush1.msra.mxu0 0.0
    %2906 = vmatprep.subr.mxu0 0.0
    %2907 = vmatpush1.msra.mxu0 0.0
    %2908 = vmatprep.subr.mxu0 0.0
    %2909 = vmatpush1.msra.mxu0 0.0
    %2910 = vmatprep.subr.mxu0 0.0
    %2911 = vmatpush1.msra.mxu0 0.0
    %2912 = vmatprep.subr.mxu0 0.0
    %2913 = vmatpush1.msra.mxu0 0.0
    %2914 = vmatprep.subr.mxu0 0.0
    %2915 = vmatpush1.msra.mxu0 0.0
    %2916 = vmatprep.subr.mxu0 0.0
    %2917 = vmatpush1.msra.mxu0 0.0
    %2918 = vmatprep.subr.mxu0 0.0
    %2919 = vmatpush1.msra.mxu0 0.0
    %2920 = vmatprep.subr.mxu0 0.0
    %2921 = vmatpush1.msra.mxu0 0.0
    %2922 = vmatprep.subr.mxu0 0.0
    %2923 = vmatpush1.msra.mxu0 0.0
    %2924 = vmatprep.subr.mxu0 0.0
    %2925 = vmatpush1.msra.mxu0 0.0
    %2926 = vmatprep.mubr.f32.mxu0 0.0
    %2927 = vmatmul.mubr.f32.gmra.mrb[0].mxu0 %v2860
    %v2928 = vpop.f32.mrb[0].mxu0
    %v2929 = vadd.f32 0.0, %v2928
    %v2930 = vpop.f32.mrb[0].mxu0
    %2931 = vdwg.mxu0
    %s2932 = scalar_lea.vmem [#allocation18], 128
    %v2933 = vld [vmem:[%s2932] sm:$0xff]
    %v2934 = vld [vmem:[%s2932 + $0x8] sm:$0xff]
    %v2935 = vld [vmem:[%s2932 + $0x10] sm:$0xff]
    %v2936 = vld [vmem:[%s2932 + $0x18] sm:$0xff]
    %v2937 = vld [vmem:[%s2932 + $0x20] sm:$0xff]
    %v2938 = vld [vmem:[%s2932 + $0x28] sm:$0xff]
    %v2939 = vld [vmem:[%s2932 + $0x30] sm:$0xff]
    %v2940 = vld [vmem:[%s2932 + $0x38] sm:$0xff]
    %v2942 = vsel %vm301, %v2929, 0
    %2944 = vmatprep.subr.mxu0 0.0
    %2945 = vmatpush1.msra.mxu0 %v2933
    %2946 = vmatprep.subr.mxu0 0.0
    %2947 = vmatpush1.msra.mxu0 %v2934
    %2948 = vmatprep.subr.mxu0 0.0
    %2949 = vmatpush1.msra.mxu0 %v2935
    %2950 = vmatprep.subr.mxu0 0.0
    %2951 = vmatpush1.msra.mxu0 %v2936
    %2952 = vmatprep.subr.mxu0 0.0
    %2953 = vmatpush1.msra.mxu0 %v2937
    %2954 = vmatprep.subr.mxu0 0.0
    %2955 = vmatpush1.msra.mxu0 %v2938
    %2956 = vmatprep.subr.mxu0 0.0
    %2957 = vmatpush1.msra.mxu0 %v2939
    %2958 = vmatprep.subr.mxu0 0.0
    %2959 = vmatpush1.msra.mxu0 %v2940
    %2960 = vmatprep.subr.mxu0 0.0
    %2961 = vmatpush1.msra.mxu0 0.0
    %2962 = vmatprep.subr.mxu0 0.0
    %2963 = vmatpush1.msra.mxu0 0.0
    %2964 = vmatprep.subr.mxu0 0.0
    %2965 = vmatpush1.msra.mxu0 0.0
    %2966 = vmatprep.subr.mxu0 0.0
    %2967 = vmatpush1.msra.mxu0 0.0
    %2968 = vmatprep.subr.mxu0 0.0
    %2969 = vmatpush1.msra.mxu0 0.0
    %2970 = vmatprep.subr.mxu0 0.0
    %2971 = vmatpush1.msra.mxu0 0.0
    %2972 = vmatprep.subr.mxu0 0.0
    %2973 = vmatpush1.msra.mxu0 0.0
    %2974 = vmatprep.subr.mxu0 0.0
    %2975 = vmatpush1.msra.mxu0 0.0
    %2976 = vmatprep.subr.mxu0 0.0
    %2977 = vmatpush1.msra.mxu0 0.0
    %2978 = vmatprep.subr.mxu0 0.0
    %2979 = vmatpush1.msra.mxu0 0.0
    %2980 = vmatprep.subr.mxu0 0.0
    %2981 = vmatpush1.msra.mxu0 0.0
    %2982 = vmatprep.subr.mxu0 0.0
    %2983 = vmatpush1.msra.mxu0 0.0
    %2984 = vmatprep.subr.mxu0 0.0
    %2985 = vmatpush1.msra.mxu0 0.0
    %2986 = vmatprep.subr.mxu0 0.0
    %2987 = vmatpush1.msra.mxu0 0.0
    %2988 = vmatprep.subr.mxu0 0.0
    %2989 = vmatpush1.msra.mxu0 0.0
    %2990 = vmatprep.subr.mxu0 0.0
    %2991 = vmatpush1.msra.mxu0 0.0
    %2992 = vmatprep.subr.mxu0 0.0
    %2993 = vmatpush1.msra.mxu0 0.0
    %2994 = vmatprep.subr.mxu0 0.0
    %2995 = vmatpush1.msra.mxu0 0.0
    %2996 = vmatprep.subr.mxu0 0.0
    %2997 = vmatpush1.msra.mxu0 0.0
    %2998 = vmatprep.subr.mxu0 0.0
    %2999 = vmatpush1.msra.mxu0 0.0
    %3000 = vmatprep.subr.mxu0 0.0
    %3001 = vmatpush1.msra.mxu0 0.0
    %3002 = vmatprep.subr.mxu0 0.0
    %3003 = vmatpush1.msra.mxu0 0.0
    %3004 = vmatprep.subr.mxu0 0.0
    %3005 = vmatpush1.msra.mxu0 0.0
    %3006 = vmatprep.subr.mxu0 0.0
    %3007 = vmatpush1.msra.mxu0 0.0
    %3008 = vmatprep.mubr.f32.mxu0 0.0
    %3009 = vmatmul.mubr.f32.gmra.mrb[0].mxu0 %v2942
    %v3010 = vpop.f32.mrb[0].mxu0
    %v3011 = vadd.f32 0.0, %v3010
    %v3012 = vpop.f32.mrb[0].mxu0
    %3013 = vdwg.mxu0
    %v3014 = vadd.f32 %v2854, %v3011
    %v3016 = vlaneseq
    %v3017 = vshrl.u32 %v3016, 7
    %v3018 = vsub.s32 0, %v3017
    %v3019 = vrot.slane %v2539, %v3018
    %v3021 = vadd.f32 %v3014, %v3019
    %v3022 = vmax.f32 %v3021, 0.0
    %v3023 = vld [vmem:[#allocation22] sm:$0x1]
    %v3024 = vld [vmem:[%s16] sm:$0x3]
    %vm3025 = vcmask 15360
    %v3027 = vsel %vm3025, %v3024, 0
    %vm3029 = vcmask 1041408
    %v3031 = vsel %vm3029, %v3022, 0
    %3033 = vmatprep.subr.mxu0 0.0
    %3034 = vmatpush1.msra.mxu0 %v3031
    %3035 = vmatprep.subr.mxu0 0.0
    %3036 = vmatpush1.msra.mxu0 0.0
    %3037 = vmatprep.subr.mxu0 0.0
    %3038 = vmatpush1.msra.mxu0 0.0
    %3039 = vmatprep.subr.mxu0 0.0
    %3040 = vmatpush1.msra.mxu0 0.0
    %3041 = vmatprep.subr.mxu0 0.0
    %3042 = vmatpush1.msra.mxu0 0.0
    %3043 = vmatprep.subr.mxu0 0.0
    %3044 = vmatpush1.msra.mxu0 0.0
    %3045 = vmatprep.subr.mxu0 0.0
    %3046 = vmatpush1.msra.mxu0 0.0
    %3047 = vmatprep.subr.mxu0 0.0
    %3048 = vmatpush1.msra.mxu0 0.0
    %3049 = vmatprep.subr.mxu0 0.0
    %3050 = vmatpush1.msra.mxu0 0.0
    %3051 = vmatprep.subr.mxu0 0.0
    %3052 = vmatpush1.msra.mxu0 0.0
    %3053 = vmatprep.subr.mxu0 0.0
    %3054 = vmatpush1.msra.mxu0 0.0
    %3055 = vmatprep.subr.mxu0 0.0
    %3056 = vmatpush1.msra.mxu0 0.0
    %3057 = vmatprep.subr.mxu0 0.0
    %3058 = vmatpush1.msra.mxu0 0.0
    %3059 = vmatprep.subr.mxu0 0.0
    %3060 = vmatpush1.msra.mxu0 0.0
    %3061 = vmatprep.subr.mxu0 0.0
    %3062 = vmatpush1.msra.mxu0 0.0
    %3063 = vmatprep.subr.mxu0 0.0
    %3064 = vmatpush1.msra.mxu0 0.0
    %3065 = vmatprep.subr.mxu0 0.0
    %3066 = vmatpush1.msra.mxu0 0.0
    %3067 = vmatprep.subr.mxu0 0.0
    %3068 = vmatpush1.msra.mxu0 0.0
    %3069 = vmatprep.subr.mxu0 0.0
    %3070 = vmatpush1.msra.mxu0 0.0
    %3071 = vmatprep.subr.mxu0 0.0
    %3072 = vmatpush1.msra.mxu0 0.0
    %3073 = vmatprep.subr.mxu0 0.0
    %3074 = vmatpush1.msra.mxu0 0.0
    %3075 = vmatprep.subr.mxu0 0.0
    %3076 = vmatpush1.msra.mxu0 0.0
    %3077 = vmatprep.subr.mxu0 0.0
    %3078 = vmatpush1.msra.mxu0 0.0
    %3079 = vmatprep.subr.mxu0 0.0
    %3080 = vmatpush1.msra.mxu0 0.0
    %3081 = vmatprep.subr.mxu0 0.0
    %3082 = vmatpush1.msra.mxu0 0.0
    %3083 = vmatprep.subr.mxu0 0.0
    %3084 = vmatpush1.msra.mxu0 0.0
    %3085 = vmatprep.subr.mxu0 0.0
    %3086 = vmatpush1.msra.mxu0 0.0
    %3087 = vmatprep.subr.mxu0 0.0
    %3088 = vmatpush1.msra.mxu0 0.0
    %3089 = vmatprep.subr.mxu0 0.0
    %3090 = vmatpush1.msra.mxu0 0.0
    %3091 = vmatprep.subr.mxu0 0.0
    %3092 = vmatpush1.msra.mxu0 0.0
    %3093 = vmatprep.subr.mxu0 0.0
    %3094 = vmatpush1.msra.mxu0 0.0
    %3095 = vmatprep.subr.mxu0 0.0
    %3096 = vmatpush1.msra.mxu0 0.0
    %3097 = vmatprep.mubr.f32.mxu0 0.0
    %3098 = vmatmul.mubr.f32.gmra.mrb[0].mxu0 %v3027
    %v3099 = vpop.f32.mrb[0].mxu0
    %v3100 = vadd.f32 0.0, %v3099
    %v3101 = vpop.f32.mrb[0].mxu0
    %3102 = vdwg.mxu0
    %v3103 = vld [vmem:[#allocation21] sm:$0xff]
    %v3104 = vld [vmem:[#allocation21 + $0x8] sm:$0xff]
    %v3105 = vld [vmem:[#allocation21 + $0x10] sm:$0xff]
    %v3106 = vld [vmem:[#allocation21 + $0x18] sm:$0xff]
    %v3107 = vld [vmem:[#allocation21 + $0x20] sm:$0xff]
    %v3108 = vld [vmem:[#allocation21 + $0x28] sm:$0xff]
    %v3109 = vld [vmem:[#allocation21 + $0x30] sm:$0xff]
    %v3110 = vld [vmem:[#allocation21 + $0x38] sm:$0xff]
    %v3111 = vld [vmem:[#allocation21 + $0x40] sm:$0xff]
    %v3112 = vld [vmem:[#allocation21 + $0x48] sm:$0xff]
    %v3113 = vld [vmem:[#allocation21 + $0x50] sm:$0xff]
    %v3114 = vld [vmem:[#allocation21 + $0x58] sm:$0xff]
    %v3115 = vld [vmem:[#allocation21 + $0x60] sm:$0xff]
    %v3116 = vld [vmem:[#allocation21 + $0x68] sm:$0xff]
    %v3117 = vld [vmem:[#allocation21 + $0x70] sm:$0xff]
    %v3118 = vld [vmem:[#allocation21 + $0x78] sm:$0xff]
    %s3119 = scalar_lea.vmem %s16, 2
    %v3120 = vld [vmem:[%s3119] sm:$0x3]
    %v3122 = vsel %vm3025, %v3120, 0
    %3124 = vmatprep.subr.mxu0 0.0
    %3125 = vmatpush1.msra.mxu0 %v3031
    %3126 = vmatprep.subr.mxu0 0.0
    %3127 = vmatpush1.msra.mxu0 0.0
    %3128 = vmatprep.subr.mxu0 0.0
    %3129 = vmatpush1.msra.mxu0 0.0
    %3130 = vmatprep.subr.mxu0 0.0
    %3131 = vmatpush1.msra.mxu0 0.0
    %3132 = vmatprep.subr.mxu0 0.0
    %3133 = vmatpush1.msra.mxu0 0.0
    %3134 = vmatprep.subr.mxu0 0.0
    %3135 = vmatpush1.msra.mxu0 0.0
    %3136 = vmatprep.subr.mxu0 0.0
    %3137 = vmatpush1.msra.mxu0 0.0
    %3138 = vmatprep.subr.mxu0 0.0
    %3139 = vmatpush1.msra.mxu0 0.0
    %3140 = vmatprep.subr.mxu0 0.0
    %3141 = vmatpush1.msra.mxu0 0.0
    %3142 = vmatprep.subr.mxu0 0.0
    %3143 = vmatpush1.msra.mxu0 0.0
    %3144 = vmatprep.subr.mxu0 0.0
    %3145 = vmatpush1.msra.mxu0 0.0
    %3146 = vmatprep.subr.mxu0 0.0
    %3147 = vmatpush1.msra.mxu0 0.0
    %3148 = vmatprep.subr.mxu0 0.0
    %3149 = vmatpush1.msra.mxu0 0.0
    %3150 = vmatprep.subr.mxu0 0.0
    %3151 = vmatpush1.msra.mxu0 0.0
    %3152 = vmatprep.subr.mxu0 0.0
    %3153 = vmatpush1.msra.mxu0 0.0
    %3154 = vmatprep.subr.mxu0 0.0
    %3155 = vmatpush1.msra.mxu0 0.0
    %3156 = vmatprep.subr.mxu0 0.0
    %3157 = vmatpush1.msra.mxu0 0.0
    %3158 = vmatprep.subr.mxu0 0.0
    %3159 = vmatpush1.msra.mxu0 0.0
    %3160 = vmatprep.subr.mxu0 0.0
    %3161 = vmatpush1.msra.mxu0 0.0
    %3162 = vmatprep.subr.mxu0 0.0
    %3163 = vmatpush1.msra.mxu0 0.0
    %3164 = vmatprep.subr.mxu0 0.0
    %3165 = vmatpush1.msra.mxu0 0.0
    %3166 = vmatprep.subr.mxu0 0.0
    %3167 = vmatpush1.msra.mxu0 0.0
    %3168 = vmatprep.subr.mxu0 0.0
    %3169 = vmatpush1.msra.mxu0 0.0
    %3170 = vmatprep.subr.mxu0 0.0
    %3171 = vmatpush1.msra.mxu0 0.0
    %3172 = vmatprep.subr.mxu0 0.0
    %3173 = vmatpush1.msra.mxu0 0.0
    %3174 = vmatprep.subr.mxu0 0.0
    %3175 = vmatpush1.msra.mxu0 0.0
    %3176 = vmatprep.subr.mxu0 0.0
    %3177 = vmatpush1.msra.mxu0 0.0
    %3178 = vmatprep.subr.mxu0 0.0
    %3179 = vmatpush1.msra.mxu0 0.0
    %3180 = vmatprep.subr.mxu0 0.0
    %3181 = vmatpush1.msra.mxu0 0.0
    %3182 = vmatprep.subr.mxu0 0.0
    %3183 = vmatpush1.msra.mxu0 0.0
    %3184 = vmatprep.subr.mxu0 0.0
    %3185 = vmatpush1.msra.mxu0 0.0
    %3186 = vmatprep.subr.mxu0 0.0
    %3187 = vmatpush1.msra.mxu0 0.0
    %3188 = vmatprep.mubr.f32.mxu0 0.0
    %3189 = vmatmul.mubr.f32.gmra.mrb[0].mxu0 %v3122
    %v3190 = vpop.f32.mrb[0].mxu0
    %v3191 = vadd.f32 0.0, %v3190
    %v3192 = vpop.f32.mrb[0].mxu0
    %3193 = vdwg.mxu0
    %s3194 = scalar_lea.vmem [#allocation21], 128
    %v3195 = vld [vmem:[%s3194] sm:$0xff]
    %v3196 = vld [vmem:[%s3194 + $0x8] sm:$0xff]
    %v3197 = vld [vmem:[%s3194 + $0x10] sm:$0xff]
    %v3198 = vld [vmem:[%s3194 + $0x18] sm:$0xff]
    %v3199 = vld [vmem:[%s3194 + $0x20] sm:$0xff]
    %v3200 = vld [vmem:[%s3194 + $0x28] sm:$0xff]
    %v3201 = vld [vmem:[%s3194 + $0x30] sm:$0xff]
    %v3202 = vld [vmem:[%s3194 + $0x38] sm:$0xff]
    %v3203 = vld [vmem:[%s3194 + $0x40] sm:$0xff]
    %v3204 = vld [vmem:[%s3194 + $0x48] sm:$0xff]
    %v3205 = vld [vmem:[%s3194 + $0x50] sm:$0xff]
    %v3206 = vld [vmem:[%s3194 + $0x58] sm:$0xff]
    %v3207 = vld [vmem:[%s3194 + $0x60] sm:$0xff]
    %v3208 = vld [vmem:[%s3194 + $0x68] sm:$0xff]
    %v3209 = vld [vmem:[%s3194 + $0x70] sm:$0xff]
    %v3210 = vld [vmem:[%s3194 + $0x78] sm:$0xff]
    %3211 = vmatprep.subr.mxu0 0.0
    %3212 = vmatpush1.msra.mxu0 %v3195
    %3213 = vmatprep.subr.mxu0 0.0
    %3214 = vmatpush1.msra.mxu0 %v3196
    %3215 = vmatprep.subr.mxu0 0.0
    %3216 = vmatpush1.msra.mxu0 %v3197
    %3217 = vmatprep.subr.mxu0 0.0
    %3218 = vmatpush1.msra.mxu0 %v3198
    %3219 = vmatprep.subr.mxu0 0.0
    %3220 = vmatpush1.msra.mxu0 %v3199
    %3221 = vmatprep.subr.mxu0 0.0
    %3222 = vmatpush1.msra.mxu0 %v3200
    %3223 = vmatprep.subr.mxu0 0.0
    %3224 = vmatpush1.msra.mxu0 %v3201
    %3225 = vmatprep.subr.mxu0 0.0
    %3226 = vmatpush1.msra.mxu0 %v3202
    %3227 = vmatprep.subr.mxu0 0.0
    %3228 = vmatpush1.msra.mxu0 %v3203
    %3229 = vmatprep.subr.mxu0 0.0
    %3230 = vmatpush1.msra.mxu0 %v3204
    %3231 = vmatprep.subr.mxu0 0.0
    %3232 = vmatpush1.msra.mxu0 %v3205
    %3233 = vmatprep.subr.mxu0 0.0
    %3234 = vmatpush1.msra.mxu0 %v3206
    %3235 = vmatprep.subr.mxu0 0.0
    %3236 = vmatpush1.msra.mxu0 %v3207
    %3237 = vmatprep.subr.mxu0 0.0
    %3238 = vmatpush1.msra.mxu0 %v3208
    %3239 = vmatprep.subr.mxu0 0.0
    %3240 = vmatpush1.msra.mxu0 %v3209
    %3241 = vmatprep.subr.mxu0 0.0
    %3242 = vmatpush1.msra.mxu0 %v3210
    %3243 = vmatprep.subr.mxu0 0.0
    %3244 = vmatpush1.msra.mxu0 0.0
    %3245 = vmatprep.subr.mxu0 0.0
    %3246 = vmatpush1.msra.mxu0 0.0
    %3247 = vmatprep.subr.mxu0 0.0
    %3248 = vmatpush1.msra.mxu0 0.0
    %3249 = vmatprep.subr.mxu0 0.0
    %3250 = vmatpush1.msra.mxu0 0.0
    %3251 = vmatprep.subr.mxu0 0.0
    %3252 = vmatpush1.msra.mxu0 0.0
    %3253 = vmatprep.subr.mxu0 0.0
    %3254 = vmatpush1.msra.mxu0 0.0
    %3255 = vmatprep.subr.mxu0 0.0
    %3256 = vmatpush1.msra.mxu0 0.0
    %3257 = vmatprep.subr.mxu0 0.0
    %3258 = vmatpush1.msra.mxu0 0.0
    %3259 = vmatprep.subr.mxu0 0.0
    %3260 = vmatpush1.msra.mxu0 0.0
    %3261 = vmatprep.subr.mxu0 0.0
    %3262 = vmatpush1.msra.mxu0 0.0
    %3263 = vmatprep.subr.mxu0 0.0
    %3264 = vmatpush1.msra.mxu0 0.0
    %3265 = vmatprep.subr.mxu0 0.0
    %3266 = vmatpush1.msra.mxu0 0.0
    %3267 = vmatprep.subr.mxu0 0.0
    %3268 = vmatpush1.msra.mxu0 0.0
    %3269 = vmatprep.subr.mxu0 0.0
    %3270 = vmatpush1.msra.mxu0 0.0
    %3271 = vmatprep.subr.mxu0 0.0
    %3272 = vmatpush1.msra.mxu0 0.0
    %3273 = vmatprep.subr.mxu0 0.0
    %3274 = vmatpush1.msra.mxu0 0.0
    %3275 = vmatprep.mubr.f32.mxu0 0.0
    %3276 = vmatmul.mubr.f32.gmra.mrb[0].mxu0 %v3191
    %v3277 = vpop.f32.mrb[0].mxu0
    %v3278 = vadd.f32 0.0, %v3277
    %v3279 = vpop.f32.mrb[0].mxu0
    %3280 = vdwg.mxu0
    %3281 = vmatprep.subr.mxu0 0.0
    %3282 = vmatpush1.msra.mxu0 %v3103
    %3283 = vmatprep.subr.mxu0 0.0
    %3284 = vmatpush1.msra.mxu0 %v3104
    %3285 = vmatprep.subr.mxu0 0.0
    %3286 = vmatpush1.msra.mxu0 %v3105
    %3287 = vmatprep.subr.mxu0 0.0
    %3288 = vmatpush1.msra.mxu0 %v3106
    %3289 = vmatprep.subr.mxu0 0.0
    %3290 = vmatpush1.msra.mxu0 %v3107
    %3291 = vmatprep.subr.mxu0 0.0
    %3292 = vmatpush1.msra.mxu0 %v3108
    %3293 = vmatprep.subr.mxu0 0.0
    %3294 = vmatpush1.msra.mxu0 %v3109
    %3295 = vmatprep.subr.mxu0 0.0
    %3296 = vmatpush1.msra.mxu0 %v3110
    %3297 = vmatprep.subr.mxu0 0.0
    %3298 = vmatpush1.msra.mxu0 %v3111
    %3299 = vmatprep.subr.mxu0 0.0
    %3300 = vmatpush1.msra.mxu0 %v3112
    %3301 = vmatprep.subr.mxu0 0.0
    %3302 = vmatpush1.msra.mxu0 %v3113
    %3303 = vmatprep.subr.mxu0 0.0
    %3304 = vmatpush1.msra.mxu0 %v3114
    %3305 = vmatprep.subr.mxu0 0.0
    %3306 = vmatpush1.msra.mxu0 %v3115
    %3307 = vmatprep.subr.mxu0 0.0
    %3308 = vmatpush1.msra.mxu0 %v3116
    %3309 = vmatprep.subr.mxu0 0.0
    %3310 = vmatpush1.msra.mxu0 %v3117
    %3311 = vmatprep.subr.mxu0 0.0
    %3312 = vmatpush1.msra.mxu0 %v3118
    %3313 = vmatprep.subr.mxu0 0.0
    %3314 = vmatpush1.msra.mxu0 0.0
    %3315 = vmatprep.subr.mxu0 0.0
    %3316 = vmatpush1.msra.mxu0 0.0
    %3317 = vmatprep.subr.mxu0 0.0
    %3318 = vmatpush1.msra.mxu0 0.0
    %3319 = vmatprep.subr.mxu0 0.0
    %3320 = vmatpush1.msra.mxu0 0.0
    %3321 = vmatprep.subr.mxu0 0.0
    %3322 = vmatpush1.msra.mxu0 0.0
    %3323 = vmatprep.subr.mxu0 0.0
    %3324 = vmatpush1.msra.mxu0 0.0
    %3325 = vmatprep.subr.mxu0 0.0
    %3326 = vmatpush1.msra.mxu0 0.0
    %3327 = vmatprep.subr.mxu0 0.0
    %3328 = vmatpush1.msra.mxu0 0.0
    %3329 = vmatprep.subr.mxu0 0.0
    %3330 = vmatpush1.msra.mxu0 0.0
    %3331 = vmatprep.subr.mxu0 0.0
    %3332 = vmatpush1.msra.mxu0 0.0
    %3333 = vmatprep.subr.mxu0 0.0
    %3334 = vmatpush1.msra.mxu0 0.0
    %3335 = vmatprep.subr.mxu0 0.0
    %3336 = vmatpush1.msra.mxu0 0.0
    %3337 = vmatprep.subr.mxu0 0.0
    %3338 = vmatpush1.msra.mxu0 0.0
    %3339 = vmatprep.subr.mxu0 0.0
    %3340 = vmatpush1.msra.mxu0 0.0
    %3341 = vmatprep.subr.mxu0 0.0
    %3342 = vmatpush1.msra.mxu0 0.0
    %3343 = vmatprep.subr.mxu0 0.0
    %3344 = vmatpush1.msra.mxu0 0.0
    %3345 = vmatprep.mubr.f32.mxu0 0.0
    %3346 = vmatmul.mubr.f32.gmra.mrb[0].mxu0 %v3100
    %v3347 = vpop.f32.mrb[0].mxu0
    %v3348 = vadd.f32 %v3278, %v3347
    %v3349 = vpop.f32.mrb[0].mxu0
    %3350 = vdwg.mxu0
    %s3351 = scalar_lea.vmem %s16, 4
    %v3352 = vld [vmem:[%s3351] sm:$0x3]
    %v3354 = vsel %vm3025, %v3352, 0
    %3356 = vmatprep.subr.mxu0 0.0
    %3357 = vmatpush1.msra.mxu0 %v3031
    %3358 = vmatprep.subr.mxu0 0.0
    %3359 = vmatpush1.msra.mxu0 0.0
    %3360 = vmatprep.subr.mxu0 0.0
    %3361 = vmatpush1.msra.mxu0 0.0
    %3362 = vmatprep.subr.mxu0 0.0
    %3363 = vmatpush1.msra.mxu0 0.0
    %3364 = vmatprep.subr.mxu0 0.0
    %3365 = vmatpush1.msra.mxu0 0.0
    %3366 = vmatprep.subr.mxu0 0.0
    %3367 = vmatpush1.msra.mxu0 0.0
    %3368 = vmatprep.subr.mxu0 0.0
    %3369 = vmatpush1.msra.mxu0 0.0
    %3370 = vmatprep.subr.mxu0 0.0
    %3371 = vmatpush1.msra.mxu0 0.0
    %3372 = vmatprep.subr.mxu0 0.0
    %3373 = vmatpush1.msra.mxu0 0.0
    %3374 = vmatprep.subr.mxu0 0.0
    %3375 = vmatpush1.msra.mxu0 0.0
    %3376 = vmatprep.subr.mxu0 0.0
    %3377 = vmatpush1.msra.mxu0 0.0
    %3378 = vmatprep.subr.mxu0 0.0
    %3379 = vmatpush1.msra.mxu0 0.0
    %3380 = vmatprep.subr.mxu0 0.0
    %3381 = vmatpush1.msra.mxu0 0.0
    %3382 = vmatprep.subr.mxu0 0.0
    %3383 = vmatpush1.msra.mxu0 0.0
    %3384 = vmatprep.subr.mxu0 0.0
    %3385 = vmatpush1.msra.mxu0 0.0
    %3386 = vmatprep.subr.mxu0 0.0
    %3387 = vmatpush1.msra.mxu0 0.0
    %3388 = vmatprep.subr.mxu0 0.0
    %3389 = vmatpush1.msra.mxu0 0.0
    %3390 = vmatprep.subr.mxu0 0.0
    %3391 = vmatpush1.msra.mxu0 0.0
    %3392 = vmatprep.subr.mxu0 0.0
    %3393 = vmatpush1.msra.mxu0 0.0
    %3394 = vmatprep.subr.mxu0 0.0
    %3395 = vmatpush1.msra.mxu0 0.0
    %3396 = vmatprep.subr.mxu0 0.0
    %3397 = vmatpush1.msra.mxu0 0.0
    %3398 = vmatprep.subr.mxu0 0.0
    %3399 = vmatpush1.msra.mxu0 0.0
    %3400 = vmatprep.subr.mxu0 0.0
    %3401 = vmatpush1.msra.mxu0 0.0
    %3402 = vmatprep.subr.mxu0 0.0
    %3403 = vmatpush1.msra.mxu0 0.0
    %3404 = vmatprep.subr.mxu0 0.0
    %3405 = vmatpush1.msra.mxu0 0.0
    %3406 = vmatprep.subr.mxu0 0.0
    %3407 = vmatpush1.msra.mxu0 0.0
    %3408 = vmatprep.subr.mxu0 0.0
    %3409 = vmatpush1.msra.mxu0 0.0
    %3410 = vmatprep.subr.mxu0 0.0
    %3411 = vmatpush1.msra.mxu0 0.0
    %3412 = vmatprep.subr.mxu0 0.0
    %3413 = vmatpush1.msra.mxu0 0.0
    %3414 = vmatprep.subr.mxu0 0.0
    %3415 = vmatpush1.msra.mxu0 0.0
    %3416 = vmatprep.subr.mxu0 0.0
    %3417 = vmatpush1.msra.mxu0 0.0
    %3418 = vmatprep.subr.mxu0 0.0
    %3419 = vmatpush1.msra.mxu0 0.0
    %3420 = vmatprep.mubr.f32.mxu0 0.0
    %3421 = vmatmul.mubr.f32.gmra.mrb[0].mxu0 %v3354
    %v3422 = vpop.f32.mrb[0].mxu0
    %v3423 = vadd.f32 0.0, %v3422
    %v3424 = vpop.f32.mrb[0].mxu0
    %3425 = vdwg.mxu0
    %s3426 = scalar_lea.vmem [#allocation21], 256
    %v3427 = vld [vmem:[%s3426] sm:$0xff]
    %v3428 = vld [vmem:[%s3426 + $0x8] sm:$0xff]
    %v3429 = vld [vmem:[%s3426 + $0x10] sm:$0xff]
    %v3430 = vld [vmem:[%s3426 + $0x18] sm:$0xff]
    %v3431 = vld [vmem:[%s3426 + $0x20] sm:$0xff]
    %v3432 = vld [vmem:[%s3426 + $0x28] sm:$0xff]
    %v3433 = vld [vmem:[%s3426 + $0x30] sm:$0xff]
    %v3434 = vld [vmem:[%s3426 + $0x38] sm:$0xff]
    %v3435 = vld [vmem:[%s3426 + $0x40] sm:$0xff]
    %v3436 = vld [vmem:[%s3426 + $0x48] sm:$0xff]
    %v3437 = vld [vmem:[%s3426 + $0x50] sm:$0xff]
    %v3438 = vld [vmem:[%s3426 + $0x58] sm:$0xff]
    %v3439 = vld [vmem:[%s3426 + $0x60] sm:$0xff]
    %v3440 = vld [vmem:[%s3426 + $0x68] sm:$0xff]
    %v3441 = vld [vmem:[%s3426 + $0x70] sm:$0xff]
    %v3442 = vld [vmem:[%s3426 + $0x78] sm:$0xff]
    %3443 = vmatprep.subr.mxu0 0.0
    %3444 = vmatpush1.msra.mxu0 %v3427
    %3445 = vmatprep.subr.mxu0 0.0
    %3446 = vmatpush1.msra.mxu0 %v3428
    %3447 = vmatprep.subr.mxu0 0.0
    %3448 = vmatpush1.msra.mxu0 %v3429
    %3449 = vmatprep.subr.mxu0 0.0
    %3450 = vmatpush1.msra.mxu0 %v3430
    %3451 = vmatprep.subr.mxu0 0.0
    %3452 = vmatpush1.msra.mxu0 %v3431
    %3453 = vmatprep.subr.mxu0 0.0
    %3454 = vmatpush1.msra.mxu0 %v3432
    %3455 = vmatprep.subr.mxu0 0.0
    %3456 = vmatpush1.msra.mxu0 %v3433
    %3457 = vmatprep.subr.mxu0 0.0
    %3458 = vmatpush1.msra.mxu0 %v3434
    %3459 = vmatprep.subr.mxu0 0.0
    %3460 = vmatpush1.msra.mxu0 %v3435
    %3461 = vmatprep.subr.mxu0 0.0
    %3462 = vmatpush1.msra.mxu0 %v3436
    %3463 = vmatprep.subr.mxu0 0.0
    %3464 = vmatpush1.msra.mxu0 %v3437
    %3465 = vmatprep.subr.mxu0 0.0
    %3466 = vmatpush1.msra.mxu0 %v3438
    %3467 = vmatprep.subr.mxu0 0.0
    %3468 = vmatpush1.msra.mxu0 %v3439
    %3469 = vmatprep.subr.mxu0 0.0
    %3470 = vmatpush1.msra.mxu0 %v3440
    %3471 = vmatprep.subr.mxu0 0.0
    %3472 = vmatpush1.msra.mxu0 %v3441
    %3473 = vmatprep.subr.mxu0 0.0
    %3474 = vmatpush1.msra.mxu0 %v3442
    %3475 = vmatprep.subr.mxu0 0.0
    %3476 = vmatpush1.msra.mxu0 0.0
    %3477 = vmatprep.subr.mxu0 0.0
    %3478 = vmatpush1.msra.mxu0 0.0
    %3479 = vmatprep.subr.mxu0 0.0
    %3480 = vmatpush1.msra.mxu0 0.0
    %3481 = vmatprep.subr.mxu0 0.0
    %3482 = vmatpush1.msra.mxu0 0.0
    %3483 = vmatprep.subr.mxu0 0.0
    %3484 = vmatpush1.msra.mxu0 0.0
    %3485 = vmatprep.subr.mxu0 0.0
    %3486 = vmatpush1.msra.mxu0 0.0
    %3487 = vmatprep.subr.mxu0 0.0
    %3488 = vmatpush1.msra.mxu0 0.0
    %3489 = vmatprep.subr.mxu0 0.0
    %3490 = vmatpush1.msra.mxu0 0.0
    %3491 = vmatprep.subr.mxu0 0.0
    %3492 = vmatpush1.msra.mxu0 0.0
    %3493 = vmatprep.subr.mxu0 0.0
    %3494 = vmatpush1.msra.mxu0 0.0
    %3495 = vmatprep.subr.mxu0 0.0
    %3496 = vmatpush1.msra.mxu0 0.0
    %3497 = vmatprep.subr.mxu0 0.0
    %3498 = vmatpush1.msra.mxu0 0.0
    %3499 = vmatprep.subr.mxu0 0.0
    %3500 = vmatpush1.msra.mxu0 0.0
    %3501 = vmatprep.subr.mxu0 0.0
    %3502 = vmatpush1.msra.mxu0 0.0
    %3503 = vmatprep.subr.mxu0 0.0
    %3504 = vmatpush1.msra.mxu0 0.0
    %3505 = vmatprep.subr.mxu0 0.0
    %3506 = vmatpush1.msra.mxu0 0.0
    %3507 = vmatprep.mubr.f32.mxu0 0.0
    %3508 = vmatmul.mubr.f32.gmra.mrb[0].mxu0 %v3423
    %v3509 = vpop.f32.mrb[0].mxu0
    %v3510 = vadd.f32 0.0, %v3509
    %v3511 = vpop.f32.mrb[0].mxu0
    %3512 = vdwg.mxu0
    %v3513 = vadd.f32 %v3348, %v3510
    %v3515 = vlaneseq
    %v3516 = vshrl.u32 %v3515, 7
    %v3517 = vsub.s32 0, %v3516
    %v3518 = vrot.slane %v3023, %v3517
    %v3520 = vadd.f32 %v3513, %v3518
    %v3521 = vmax.f32 %v3520, 0.0
    %v3522 = vld [vmem:[#allocation24] sm:$0xff]
    %v3523 = vld [vmem:[#allocation24 + $0x8] sm:$0xff]
    %v3524 = vld [vmem:[#allocation24 + $0x10] sm:$0xff]
    %v3525 = vld [vmem:[#allocation24 + $0x18] sm:$0xff]
    %v3526 = vld [vmem:[#allocation24 + $0x20] sm:$0xff]
    %v3527 = vld [vmem:[#allocation24 + $0x28] sm:$0xff]
    %v3528 = vld [vmem:[#allocation24 + $0x30] sm:$0xff]
    %v3529 = vld [vmem:[#allocation24 + $0x38] sm:$0xff]
    %v3530 = vld [vmem:[#allocation24 + $0x40] sm:$0xff]
    %v3531 = vld [vmem:[#allocation24 + $0x48] sm:$0xff]
    %v3532 = vld [vmem:[#allocation24 + $0x50] sm:$0xff]
    %v3533 = vld [vmem:[#allocation24 + $0x58] sm:$0xff]
    %v3534 = vld [vmem:[#allocation24 + $0x60] sm:$0xff]
    %v3535 = vld [vmem:[#allocation24 + $0x68] sm:$0xff]
    %v3536 = vld [vmem:[#allocation24 + $0x70] sm:$0xff]
    %v3537 = vld [vmem:[#allocation24 + $0x78] sm:$0xff]
    %v3538 = vld [vmem:[#allocation25] sm:$0x1]
    %v3540 = vlaneseq
    %v3541 = vshrl.u32 %v3540, 7
    %v3542 = vsub.s32 0, %v3541
    %v3543 = vrot.slane %v3538, %v3542
    %3545 = vmatprep.subr.mxu0 0.0
    %3546 = vmatpush1.msra.mxu0 %v3522
    %3547 = vmatprep.subr.mxu0 0.0
    %3548 = vmatpush1.msra.mxu0 %v3523
    %3549 = vmatprep.subr.mxu0 0.0
    %3550 = vmatpush1.msra.mxu0 %v3524
    %3551 = vmatprep.subr.mxu0 0.0
    %3552 = vmatpush1.msra.mxu0 %v3525
    %3553 = vmatprep.subr.mxu0 0.0
    %3554 = vmatpush1.msra.mxu0 %v3526
    %3555 = vmatprep.subr.mxu0 0.0
    %3556 = vmatpush1.msra.mxu0 %v3527
    %3557 = vmatprep.subr.mxu0 0.0
    %3558 = vmatpush1.msra.mxu0 %v3528
    %3559 = vmatprep.subr.mxu0 0.0
    %3560 = vmatpush1.msra.mxu0 %v3529
    %3561 = vmatprep.subr.mxu0 0.0
    %3562 = vmatpush1.msra.mxu0 %v3530
    %3563 = vmatprep.subr.mxu0 0.0
    %3564 = vmatpush1.msra.mxu0 %v3531
    %3565 = vmatprep.subr.mxu0 0.0
    %3566 = vmatpush1.msra.mxu0 %v3532
    %3567 = vmatprep.subr.mxu0 0.0
    %3568 = vmatpush1.msra.mxu0 %v3533
    %3569 = vmatprep.subr.mxu0 0.0
    %3570 = vmatpush1.msra.mxu0 %v3534
    %3571 = vmatprep.subr.mxu0 0.0
    %3572 = vmatpush1.msra.mxu0 %v3535
    %3573 = vmatprep.subr.mxu0 0.0
    %3574 = vmatpush1.msra.mxu0 %v3536
    %3575 = vmatprep.subr.mxu0 0.0
    %3576 = vmatpush1.msra.mxu0 %v3537
    %3577 = vmatprep.subr.mxu0 0.0
    %3578 = vmatpush1.msra.mxu0 0.0
    %3579 = vmatprep.subr.mxu0 0.0
    %3580 = vmatpush1.msra.mxu0 0.0
    %3581 = vmatprep.subr.mxu0 0.0
    %3582 = vmatpush1.msra.mxu0 0.0
    %3583 = vmatprep.subr.mxu0 0.0
    %3584 = vmatpush1.msra.mxu0 0.0
    %3585 = vmatprep.subr.mxu0 0.0
    %3586 = vmatpush1.msra.mxu0 0.0
    %3587 = vmatprep.subr.mxu0 0.0
    %3588 = vmatpush1.msra.mxu0 0.0
    %3589 = vmatprep.subr.mxu0 0.0
    %3590 = vmatpush1.msra.mxu0 0.0
    %3591 = vmatprep.subr.mxu0 0.0
    %3592 = vmatpush1.msra.mxu0 0.0
    %3593 = vmatprep.subr.mxu0 0.0
    %3594 = vmatpush1.msra.mxu0 0.0
    %3595 = vmatprep.subr.mxu0 0.0
    %3596 = vmatpush1.msra.mxu0 0.0
    %3597 = vmatprep.subr.mxu0 0.0
    %3598 = vmatpush1.msra.mxu0 0.0
    %3599 = vmatprep.subr.mxu0 0.0
    %3600 = vmatpush1.msra.mxu0 0.0
    %3601 = vmatprep.subr.mxu0 0.0
    %3602 = vmatpush1.msra.mxu0 0.0
    %3603 = vmatprep.subr.mxu0 0.0
    %3604 = vmatpush1.msra.mxu0 0.0
    %3605 = vmatprep.subr.mxu0 0.0
    %3606 = vmatpush1.msra.mxu0 0.0
    %3607 = vmatprep.subr.mxu0 0.0
    %3608 = vmatpush1.msra.mxu0 0.0
    %3609 = vmatprep.mubr.f32.mxu0 0.0
    %3610 = vmatmul.mubr.f32.gmra.mrb[0].mxu0 %v3521
    %v3611 = vpop.f32.mrb[0].mxu0
    %v3612 = vadd.f32 %v3543, %v3611
    %v3613 = vpop.f32.mrb[0].mxu0
    %3614 = vdwg.mxu0
    %v3615 = vld [vmem:[%s21] sm:$0xff]
    %v3616 = vld [vmem:[%s21 + $0x8] sm:$0xff]
    %v3617 = vld [vmem:[%s21 + $0x10] sm:$0xff]
    %v3618 = vld [vmem:[%s21 + $0x18] sm:$0xff]
    %v3619 = vld [vmem:[#allocation27] sm:$0x1]
    %v3621 = vlaneseq
    %v3622 = vshrl.u32 %v3621, 7
    %v3623 = vsub.s32 0, %v3622
    %v3624 = vrot.slane %v3619, %v3623
    %v3627 = vsel %vm959, 0.0, 0
    %3629 = vmatprep.subr.mxu0 0.0
    %3630 = vmatpush1.msra.mxu0 %v3615
    %3631 = vmatprep.subr.mxu0 0.0
    %3632 = vmatpush1.msra.mxu0 %v3616
    %3633 = vmatprep.subr.mxu0 0.0
    %3634 = vmatpush1.msra.mxu0 %v3617
    %3635 = vmatprep.subr.mxu0 0.0
    %3636 = vmatpush1.msra.mxu0 %v3618
    %3637 = vmatprep.subr.mxu0 0.0
    %3638 = vmatpush1.msra.mxu0 0.0
    %3639 = vmatprep.subr.mxu0 0.0
    %3640 = vmatpush1.msra.mxu0 0.0
    %3641 = vmatprep.subr.mxu0 0.0
    %3642 = vmatpush1.msra.mxu0 0.0
    %3643 = vmatprep.subr.mxu0 0.0
    %3644 = vmatpush1.msra.mxu0 0.0
    %3645 = vmatprep.subr.mxu0 0.0
    %3646 = vmatpush1.msra.mxu0 0.0
    %3647 = vmatprep.subr.mxu0 0.0
    %3648 = vmatpush1.msra.mxu0 0.0
    %3649 = vmatprep.subr.mxu0 0.0
    %3650 = vmatpush1.msra.mxu0 0.0
    %3651 = vmatprep.subr.mxu0 0.0
    %3652 = vmatpush1.msra.mxu0 0.0
    %3653 = vmatprep.subr.mxu0 0.0
    %3654 = vmatpush1.msra.mxu0 0.0
    %3655 = vmatprep.subr.mxu0 0.0
    %3656 = vmatpush1.msra.mxu0 0.0
    %3657 = vmatprep.subr.mxu0 0.0
    %3658 = vmatpush1.msra.mxu0 0.0
    %3659 = vmatprep.subr.mxu0 0.0
    %3660 = vmatpush1.msra.mxu0 0.0
    %3661 = vmatprep.subr.mxu0 0.0
    %3662 = vmatpush1.msra.mxu0 0.0
    %3663 = vmatprep.subr.mxu0 0.0
    %3664 = vmatpush1.msra.mxu0 0.0
    %3665 = vmatprep.subr.mxu0 0.0
    %3666 = vmatpush1.msra.mxu0 0.0
    %3667 = vmatprep.subr.mxu0 0.0
    %3668 = vmatpush1.msra.mxu0 0.0
    %3669 = vmatprep.subr.mxu0 0.0
    %3670 = vmatpush1.msra.mxu0 0.0
    %3671 = vmatprep.subr.mxu0 0.0
    %3672 = vmatpush1.msra.mxu0 0.0
    %3673 = vmatprep.subr.mxu0 0.0
    %3674 = vmatpush1.msra.mxu0 0.0
    %3675 = vmatprep.subr.mxu0 0.0
    %3676 = vmatpush1.msra.mxu0 0.0
    %3677 = vmatprep.subr.mxu0 0.0
    %3678 = vmatpush1.msra.mxu0 0.0
    %3679 = vmatprep.subr.mxu0 0.0
    %3680 = vmatpush1.msra.mxu0 0.0
    %3681 = vmatprep.subr.mxu0 0.0
    %3682 = vmatpush1.msra.mxu0 0.0
    %3683 = vmatprep.subr.mxu0 0.0
    %3684 = vmatpush1.msra.mxu0 0.0
    %3685 = vmatprep.subr.mxu0 0.0
    %3686 = vmatpush1.msra.mxu0 0.0
    %3687 = vmatprep.subr.mxu0 0.0
    %3688 = vmatpush1.msra.mxu0 0.0
    %3689 = vmatprep.subr.mxu0 0.0
    %3690 = vmatpush1.msra.mxu0 0.0
    %3691 = vmatprep.subr.mxu0 0.0
    %3692 = vmatpush1.msra.mxu0 0.0
    %3693 = vmatprep.mubr.f32.mxu0 0.0
    %3694 = vmatmul.mubr.f32.gmra.mrb[0].mxu0 %v3627
    %v3695 = vpop.f32.mrb[0].mxu0
    %v3696 = vadd.f32 %v3624, %v3695
    %v3697 = vpop.f32.mrb[0].mxu0
    %3698 = vdwg.mxu0
    %v3699 = vadd.f32 %v3612, %v3696
    %v3700 = vxor.u32 %v3699, 2147483648
    %v3701 = vmul.f32 %v3700, 1.442695
    %v3702 = vpow.pop %v3701
    %v3703 = vadd.f32 %v3702, 1.0
    %v3704 = vrcp.pop %v3703
    %v3705 = vmul.f32 1.0, %v3704
    %3707 = vrot.lane.b32.xlu0 %v3696, 64
    %v3708 = vpop.permute.xlu0 %3707
    %v3710 = vmul.f32 %v3705, %v3708
    %3712 = vrot.lane.b32.xlu0 %v3710, 64
    %v3713 = vpop.permute.xlu0 %3712
    %v3715 = vadd.f32 %v3612, %v3713
    %v3716 = vtanh.pop %v3715
    %v3717 = vsub.f32 1.0, %v3705
    %3719 = vrot.lane.b32.xlu0 %v3716, 96
    %v3720 = vpop.permute.xlu0 %3719
    %v3722 = vmul.f32 %v3717, %v3720
    %v3723 = vmul.f32 %v3705, 0.0
    %v3724 = vadd.f32 %v3722, %v3723
    %3726 = vrot.lane.b32.xlu0 %v3724, 96
    %v3727 = vpop.permute.xlu0 %3726
    %vm3729 = vcmask 254976
    %3730 = vst.msk [vmem:[%s23] sm:$0x3] %vm3729, %v3727
    // Predicated region
    $region162: #{diff_style_forward.4} parent=1 // pred_check
      _
    $region163: #{diff_style_forward.4} parent=1 // pred_check_branch
      %3732 = sbr.rel (0) target = $region165
    $region164: #{diff_style_forward.4} parent=1 // pred_region
      _
    $region165: #{diff_style_forward.4} parent=1 // pred_fallthru
      _
    // Predicated region
    $region166: #{diff_style_forward.4} parent=1 // pred_check
      _
    $region167: #{diff_style_forward.4} parent=1 // pred_check_branch
      %3734 = sbr.rel (0) target = $region169
    $region168: #{diff_style_forward.4} parent=1 // pred_region
      _
    $region169: #{diff_style_forward.4} parent=1 // pred_fallthru
      _
    %3735 = vsyncpa [#allocation3], 1
    %3736 = vsyncpa [#allocation5], 1
    %3737 = vsyncpa [#allocation8], 1
    %3738 = vsyncpa [#allocation11], 1
    %3739 = vsyncpa [#allocation14], 1
    %3740 = vsyncpa [#allocation17], 1
    %3741 = vsyncpa [#allocation20], 1
    %3742 = vsyncpa [#allocation23], 1
    %3743 = vsyncpa [#allocation26], 1

// kernel: diff_style_forward.5
$region0: #{diff_style_forward.5}
  #allocation0 [shape = 'u32[]', space=smem, size = 0x4, offset = 0x4, fixed_abs, tag = 'smem constant byte address 0x4 - core index']
  #allocation1 [shape = 'u32[144,128]{1,0:T(1,128)}', space=vmem, size = 0x12000, scoped, tag = 'internal scratch']
  %s0 = inlined_call_operand.vmem [shape: f32[2,32], index: 0, kind: input, shape index: {}]
  %s1 = inlined_call_operand.vmem [shape: f32[2,32], index: 1, kind: input, shape index: {}]
  %s2 = inlined_call_operand.vmem [shape: f32[3,2,32], index: 2, kind: input, shape index: {}]
  %s3 = inlined_call_operand.vmem [shape: f32[4,16], index: 3, kind: input, shape index: {}]
  %s4 = inlined_call_operand.vmem [shape: f32[16,64], index: 4, kind: input, shape index: {}]
  %s5 = inlined_call_operand.vmem [shape: f32[1,64], index: 5, kind: input, shape index: {}]
  %s6 = inlined_call_operand.vmem [shape: f32[64,16], index: 6, kind: input, shape index: {}]
  %s7 = inlined_call_operand.vmem [shape: f32[1,16], index: 7, kind: input, shape index: {}]
  %s8 = inlined_call_operand.vmem [shape: f32[32,32], index: 8, kind: input, shape index: {}]
  %s9 = inlined_call_operand.vmem [shape: f32[16,32], index: 9, kind: input, shape index: {}]
  %s10 = inlined_call_operand.vmem [shape: f32[1,32], index: 10, kind: input, shape index: {}]
  %s11 = inlined_call_operand.vmem [shape: f32[1,9], index: 11, kind: input, shape index: {}]
  %s12 = inlined_call_operand.vmem [shape: f32[1,32], index: 12, kind: input, shape index: {}]
  %s13 = inlined_call_operand.vmem [shape: f32[1,32], index: 13, kind: input, shape index: {}]
  %s14 = inlined_call_operand.vmem [shape: f32[3,64], index: 14, kind: input, shape index: {}]
  %s15 = inlined_call_operand.vmem [shape: f32[1,64], index: 15, kind: input, shape index: {}]
  %s16 = inlined_call_operand.vmem [shape: f32[3,64], index: 16, kind: input, shape index: {}]
  %s17 = inlined_call_operand.vmem [shape: f32[1,32], index: 17, kind: input, shape index: {}]
  %s18 = inlined_call_operand.vmem [shape: f32[1,32], index: 18, kind: input, shape index: {}]
  %s19 = inlined_call_operand.hbm [shape: f32[2,32], index: 19, kind: output, shape index: {0}]
  %s20 = inlined_call_operand.hbm [shape: f32[2,32], index: 20, kind: output, shape index: {1}]
  %21 = xla_tuple %s19, %s20
  %s22 = sld [smem:[#allocation0]]
  $region98: #{diff_style_forward.5} parent=0
    _
  %s24 = ssub.s32 1, %s22
  %s25 = scalar_select 0, %s24, %s22
  $region1: #{diff_style_forward.5} parent=0
    #allocation2 [shape = 'u8[512]{0}', space=smem, size = 0x200, scoped, tag = 'input window, operand 11, single buffered']
    #allocation3 [shape = 's32[1]{0}', space=sflag, size = 0x4, scoped, tag = 'scoped memory for diff_style_forward.5']
    #allocation4 [shape = 's32[1]{0}', space=sflag, size = 0x4, scoped, tag = 'scoped memory for diff_style_forward.5']
    #allocation5 [shape = 'u8[1024]{0}', space=vmem, size = 0x400, scoped, tag = 'output window, operand 0, single buffered']
    #allocation6 [shape = 'u8[1024]{0}', space=vmem, size = 0x400, scoped, tag = 'output window, operand 1, single buffered']
    #allocation7 [shape = 's32[1]{0}', space=sflag, size = 0x4, scoped, tag = 'scoped memory for diff_style_forward.5']
    %26 = vsyncpa [#allocation4], 0
    %27 = vsyncpa [#allocation3], 0
    %28 = vsyncpa [#allocation7], 0
    // Predicated region
    $region2: #{diff_style_forward.5} parent=1 // pred_check
      _
    $region3: #{diff_style_forward.5} parent=1 // pred_check_branch
      %30 = sbr.rel (0) target = $region5
    $region4: #{diff_style_forward.5} parent=1 // pred_region
      _
    $region5: #{diff_style_forward.5} parent=1 // pred_fallthru
      _
    // Predicated region
    $region6: #{diff_style_forward.5} parent=1 // pred_check
      _
    $region7: #{diff_style_forward.5} parent=1 // pred_check_branch
      %32 = sbr.rel (0) target = $region9
    $region8: #{diff_style_forward.5} parent=1 // pred_region
      _
    $region9: #{diff_style_forward.5} parent=1 // pred_fallthru
      _
    // Predicated region
    $region10: #{diff_style_forward.5} parent=1 // pred_check
      _
    $region11: #{diff_style_forward.5} parent=1 // pred_check_branch
      %34 = sbr.rel (0) target = $region13
    $region12: #{diff_style_forward.5} parent=1 // pred_region
      _
    $region13: #{diff_style_forward.5} parent=1 // pred_fallthru
      _
    // Predicated region
    $region14: #{diff_style_forward.5} parent=1 // pred_check
      _
    $region15: #{diff_style_forward.5} parent=1 // pred_check_branch
      %36 = sbr.rel (0) target = $region17
    $region16: #{diff_style_forward.5} parent=1 // pred_region
      _
    $region17: #{diff_style_forward.5} parent=1 // pred_fallthru
      _
    // Predicated region
    $region18: #{diff_style_forward.5} parent=1 // pred_check
      _
    $region19: #{diff_style_forward.5} parent=1 // pred_check_branch
      %38 = sbr.rel (0) target = $region21
    $region20: #{diff_style_forward.5} parent=1 // pred_region
      _
    $region21: #{diff_style_forward.5} parent=1 // pred_fallthru
      _
    // Predicated region
    $region22: #{diff_style_forward.5} parent=1 // pred_check
      _
    $region23: #{diff_style_forward.5} parent=1 // pred_check_branch
      %40 = sbr.rel (0) target = $region25
    $region24: #{diff_style_forward.5} parent=1 // pred_region
      _
    $region25: #{diff_style_forward.5} parent=1 // pred_fallthru
      _
    // Predicated region
    $region26: #{diff_style_forward.5} parent=1 // pred_check
      _
    $region27: #{diff_style_forward.5} parent=1 // pred_check_branch
      %42 = sbr.rel (0) target = $region29
    $region28: #{diff_style_forward.5} parent=1 // pred_region
      _
    $region29: #{diff_style_forward.5} parent=1 // pred_fallthru
      _
    // Predicated region
    $region30: #{diff_style_forward.5} parent=1 // pred_check
      _
    $region31: #{diff_style_forward.5} parent=1 // pred_check_branch
      %44 = sbr.rel (0) target = $region33
    $region32: #{diff_style_forward.5} parent=1 // pred_region
      _
    $region33: #{diff_style_forward.5} parent=1 // pred_fallthru
      _
    // Predicated region
    $region34: #{diff_style_forward.5} parent=1 // pred_check
      _
    $region35: #{diff_style_forward.5} parent=1 // pred_check_branch
      %46 = sbr.rel (0) target = $region37
    $region36: #{diff_style_forward.5} parent=1 // pred_region
      _
    $region37: #{diff_style_forward.5} parent=1 // pred_fallthru
      _
    // Predicated region
    $region38: #{diff_style_forward.5} parent=1 // pred_check
      _
    $region39: #{diff_style_forward.5} parent=1 // pred_check_branch
      %48 = sbr.rel (0) target = $region41
    $region40: #{diff_style_forward.5} parent=1 // pred_region
      _
    $region41: #{diff_style_forward.5} parent=1 // pred_fallthru
      _
    // Predicated region
    $region42: #{diff_style_forward.5} parent=1 // pred_check
      _
    $region43: #{diff_style_forward.5} parent=1 // pred_check_branch
      %50 = sbr.rel (0) target = $region45
    $region44: #{diff_style_forward.5} parent=1 // pred_region
      _
    $region45: #{diff_style_forward.5} parent=1 // pred_fallthru
      _
    // Predicated region
    $region46: #{diff_style_forward.5} parent=1 // pred_check
      _
    $region47: #{diff_style_forward.5} parent=1 // pred_check_branch
      %52 = sbr.rel (0) target = $region49
    $region48: #{diff_style_forward.5} parent=1 // pred_region
      %s54 = ssub.s32 16, 16
      %55 = vsyncadd [#allocation4], %s54
      %s57 = sshll.u32 %s11, 4
      %s58 = int_to_ptr.vmem [resolvable:$true] %s57
      %60 = dma.vmem_to_smem %s58, 16, [#allocation2], [#allocation4]
    $region49: #{diff_style_forward.5} parent=1 // pred_fallthru
      _
    // Predicated region
    $region50: #{diff_style_forward.5} parent=1 // pred_check
      _
    $region51: #{diff_style_forward.5} parent=1 // pred_check_branch
      %62 = sbr.rel (0) target = $region53
    $region52: #{diff_style_forward.5} parent=1 // pred_region
      _
    $region53: #{diff_style_forward.5} parent=1 // pred_fallthru
      _
    // Predicated region
    $region54: #{diff_style_forward.5} parent=1 // pred_check
      _
    $region55: #{diff_style_forward.5} parent=1 // pred_check_branch
      %64 = sbr.rel (0) target = $region57
    $region56: #{diff_style_forward.5} parent=1 // pred_region
      _
    $region57: #{diff_style_forward.5} parent=1 // pred_fallthru
      _
    // Predicated region
    $region58: #{diff_style_forward.5} parent=1 // pred_check
      _
    $region59: #{diff_style_forward.5} parent=1 // pred_check_branch
      %66 = sbr.rel (0) target = $region61
    $region60: #{diff_style_forward.5} parent=1 // pred_region
      _
    $region61: #{diff_style_forward.5} parent=1 // pred_fallthru
      _
    // Predicated region
    $region62: #{diff_style_forward.5} parent=1 // pred_check
      _
    $region63: #{diff_style_forward.5} parent=1 // pred_check_branch
      %68 = sbr.rel (0) target = $region65
    $region64: #{diff_style_forward.5} parent=1 // pred_region
      _
    $region65: #{diff_style_forward.5} parent=1 // pred_fallthru
      _
    // Predicated region
    $region66: #{diff_style_forward.5} parent=1 // pred_check
      _
    $region67: #{diff_style_forward.5} parent=1 // pred_check_branch
      %70 = sbr.rel (0) target = $region69
    $region68: #{diff_style_forward.5} parent=1 // pred_region
      _
    $region69: #{diff_style_forward.5} parent=1 // pred_fallthru
      _
    // Predicated region
    $region70: #{diff_style_forward.5} parent=1 // pred_check
      _
    $region71: #{diff_style_forward.5} parent=1 // pred_check_branch
      %72 = sbr.rel (0) target = $region73
    $region72: #{diff_style_forward.5} parent=1 // pred_region
      _
    $region73: #{diff_style_forward.5} parent=1 // pred_fallthru
      _
    // Predicated region
    $region74: #{diff_style_forward.5} parent=1 // pred_check
      _
    $region75: #{diff_style_forward.5} parent=1 // pred_check_branch
      %74 = sbr.rel (0) target = $region77
    $region76: #{diff_style_forward.5} parent=1 // pred_region
      _
    $region77: #{diff_style_forward.5} parent=1 // pred_fallthru
      _
    // Predicated region
    $region78: #{diff_style_forward.5} parent=1 // pred_check
      _
    $region79: #{diff_style_forward.5} parent=1 // pred_check_branch
      %76 = sbr.rel (0) target = $region81
    $region80: #{diff_style_forward.5} parent=1 // pred_region
      %77 = dma.done [#allocation4], 16
    $region81: #{diff_style_forward.5} parent=1 // pred_fallthru
      _
    %78 = sfence
    %v79 = vld [vmem:[%s0] sm:$0x3]
    %v80 = vld [vmem:[%s1] sm:$0x3]
    %v81 = vmul.f32 %v79, 0.9899119
    %v82 = vmul.f32 %v80, 0.14168434
    %v83 = vadd.f32 %v81, %v82
    %v84 = vld [vmem:[%s3] sm:$0x1]
    %v85 = vld [vmem:[%s4] sm:$0xff]
    %v86 = vld [vmem:[%s4 + $0x8] sm:$0xff]
    %v87 = vld [vmem:[%s5] sm:$0x1]
    %vm88 = vcmask 130048
    %v90 = vsel %vm88, %v84, 0
    %92 = vmatprep.subr.mxu0 0.0
    %93 = vmatpush1.msra.mxu0 %v85
    %94 = vmatprep.subr.mxu0 0.0
    %95 = vmatpush1.msra.mxu0 %v86
    %96 = vmatprep.subr.mxu0 0.0
    %97 = vmatpush1.msra.mxu0 0.0
    %98 = vmatprep.subr.mxu0 0.0
    %99 = vmatpush1.msra.mxu0 0.0
    %100 = vmatprep.subr.mxu0 0.0
    %101 = vmatpush1.msra.mxu0 0.0
    %102 = vmatprep.subr.mxu0 0.0
    %103 = vmatpush1.msra.mxu0 0.0
    %104 = vmatprep.subr.mxu0 0.0
    %105 = vmatpush1.msra.mxu0 0.0
    %106 = vmatprep.subr.mxu0 0.0
    %107 = vmatpush1.msra.mxu0 0.0
    %108 = vmatprep.subr.mxu0 0.0
    %109 = vmatpush1.msra.mxu0 0.0
    %110 = vmatprep.subr.mxu0 0.0
    %111 = vmatpush1.msra.mxu0 0.0
    %112 = vmatprep.subr.mxu0 0.0
    %113 = vmatpush1.msra.mxu0 0.0
    %114 = vmatprep.subr.mxu0 0.0
    %115 = vmatpush1.msra.mxu0 0.0
    %116 = vmatprep.subr.mxu0 0.0
    %117 = vmatpush1.msra.mxu0 0.0
    %118 = vmatprep.subr.mxu0 0.0
    %119 = vmatpush1.msra.mxu0 0.0
    %120 = vmatprep.subr.mxu0 0.0
    %121 = vmatpush1.msra.mxu0 0.0
    %122 = vmatprep.subr.mxu0 0.0
    %123 = vmatpush1.msra.mxu0 0.0
    %124 = vmatprep.subr.mxu0 0.0
    %125 = vmatpush1.msra.mxu0 0.0
    %126 = vmatprep.subr.mxu0 0.0
    %127 = vmatpush1.msra.mxu0 0.0
    %128 = vmatprep.subr.mxu0 0.0
    %129 = vmatpush1.msra.mxu0 0.0
    %130 = vmatprep.subr.mxu0 0.0
    %131 = vmatpush1.msra.mxu0 0.0
    %132 = vmatprep.subr.mxu0 0.0
    %133 = vmatpush1.msra.mxu0 0.0
    %134 = vmatprep.subr.mxu0 0.0
    %135 = vmatpush1.msra.mxu0 0.0
    %136 = vmatprep.subr.mxu0 0.0
    %137 = vmatpush1.msra.mxu0 0.0
    %138 = vmatprep.subr.mxu0 0.0
    %139 = vmatpush1.msra.mxu0 0.0
    %140 = vmatprep.subr.mxu0 0.0
    %141 = vmatpush1.msra.mxu0 0.0
    %142 = vmatprep.subr.mxu0 0.0
    %143 = vmatpush1.msra.mxu0 0.0
    %144 = vmatprep.subr.mxu0 0.0
    %145 = vmatpush1.msra.mxu0 0.0
    %146 = vmatprep.subr.mxu0 0.0
    %147 = vmatpush1.msra.mxu0 0.0
    %148 = vmatprep.subr.mxu0 0.0
    %149 = vmatpush1.msra.mxu0 0.0
    %150 = vmatprep.subr.mxu0 0.0
    %151 = vmatpush1.msra.mxu0 0.0
    %152 = vmatprep.subr.mxu0 0.0
    %153 = vmatpush1.msra.mxu0 0.0
    %154 = vmatprep.subr.mxu0 0.0
    %155 = vmatpush1.msra.mxu0 0.0
    %156 = vmatprep.mubr.f32.mxu0 0.0
    %157 = vmatmul.mubr.f32.gmra.mrb[0].mxu0 %v90
    %v158 = vpop.f32.mrb[0].mxu0
    %v159 = vadd.f32 %v87, %v158
    %v160 = vpop.f32.mrb[0].mxu0
    %161 = vdwg.mxu0
    %vm162 = vcmp.gt.f32.partialorder %v159, 20.0
    %v163 = vmin.f32 %v159, 20.0
    %v164 = vmul.f32 %v163, 1.442695
    %v165 = vpow.pop %v164
    %v166 = vadd.f32 %v165, 1.0
    %v167 = vlog2.pop %v166
    %v168 = vmul.f32 %v167, 0.6931472
    %v169 = vmul.f32 -0.5, %v165
    %v170 = vadd.f32 %v169, 1.0
    %v171 = vmul.f32 %v170, %v165
    %v172 = vand.u32 2147483647, %v165
    %vm173 = vcmp.lt.f32.partialorder %v172, 0.0004427343
    %v174 = vsel %vm173, %v171, %v168
    %v175 = vsel %vm162, %v159, %v174
    %v176 = vtanh.pop %v175
    %v177 = vmul.f32 %v159, %v176
    %v178 = vld [vmem:[%s6] sm:$0xff]
    %v179 = vld [vmem:[%s6 + $0x8] sm:$0xff]
    %v180 = vld [vmem:[%s6 + $0x10] sm:$0xff]
    %v181 = vld [vmem:[%s6 + $0x18] sm:$0xff]
    %v182 = vld [vmem:[%s6 + $0x20] sm:$0xff]
    %v183 = vld [vmem:[%s6 + $0x28] sm:$0xff]
    %v184 = vld [vmem:[%s6 + $0x30] sm:$0xff]
    %v185 = vld [vmem:[%s6 + $0x38] sm:$0xff]
    %v186 = vld [vmem:[%s7] sm:$0x1]
    %vm187 = vcmask 523264
    %v189 = vsel %vm187, %v177, 0
    %191 = vmatprep.subr.mxu0 0.0
    %192 = vmatpush1.msra.mxu0 %v178
    %193 = vmatprep.subr.mxu0 0.0
    %194 = vmatpush1.msra.mxu0 %v179
    %195 = vmatprep.subr.mxu0 0.0
    %196 = vmatpush1.msra.mxu0 %v180
    %197 = vmatprep.subr.mxu0 0.0
    %198 = vmatpush1.msra.mxu0 %v181
    %199 = vmatprep.subr.mxu0 0.0
    %200 = vmatpush1.msra.mxu0 %v182
    %201 = vmatprep.subr.mxu0 0.0
    %202 = vmatpush1.msra.mxu0 %v183
    %203 = vmatprep.subr.mxu0 0.0
    %204 = vmatpush1.msra.mxu0 %v184
    %205 = vmatprep.subr.mxu0 0.0
    %206 = vmatpush1.msra.mxu0 %v185
    %207 = vmatprep.subr.mxu0 0.0
    %208 = vmatpush1.msra.mxu0 0.0
    %209 = vmatprep.subr.mxu0 0.0
    %210 = vmatpush1.msra.mxu0 0.0
    %211 = vmatprep.subr.mxu0 0.0
    %212 = vmatpush1.msra.mxu0 0.0
    %213 = vmatprep.subr.mxu0 0.0
    %214 = vmatpush1.msra.mxu0 0.0
    %215 = vmatprep.subr.mxu0 0.0
    %216 = vmatpush1.msra.mxu0 0.0
    %217 = vmatprep.subr.mxu0 0.0
    %218 = vmatpush1.msra.mxu0 0.0
    %219 = vmatprep.subr.mxu0 0.0
    %220 = vmatpush1.msra.mxu0 0.0
    %221 = vmatprep.subr.mxu0 0.0
    %222 = vmatpush1.msra.mxu0 0.0
    %223 = vmatprep.subr.mxu0 0.0
    %224 = vmatpush1.msra.mxu0 0.0
    %225 = vmatprep.subr.mxu0 0.0
    %226 = vmatpush1.msra.mxu0 0.0
    %227 = vmatprep.subr.mxu0 0.0
    %228 = vmatpush1.msra.mxu0 0.0
    %229 = vmatprep.subr.mxu0 0.0
    %230 = vmatpush1.msra.mxu0 0.0
    %231 = vmatprep.subr.mxu0 0.0
    %232 = vmatpush1.msra.mxu0 0.0
    %233 = vmatprep.subr.mxu0 0.0
    %234 = vmatpush1.msra.mxu0 0.0
    %235 = vmatprep.subr.mxu0 0.0
    %236 = vmatpush1.msra.mxu0 0.0
    %237 = vmatprep.subr.mxu0 0.0
    %238 = vmatpush1.msra.mxu0 0.0
    %239 = vmatprep.subr.mxu0 0.0
    %240 = vmatpush1.msra.mxu0 0.0
    %241 = vmatprep.subr.mxu0 0.0
    %242 = vmatpush1.msra.mxu0 0.0
    %243 = vmatprep.subr.mxu0 0.0
    %244 = vmatpush1.msra.mxu0 0.0
    %245 = vmatprep.subr.mxu0 0.0
    %246 = vmatpush1.msra.mxu0 0.0
    %247 = vmatprep.subr.mxu0 0.0
    %248 = vmatpush1.msra.mxu0 0.0
    %249 = vmatprep.subr.mxu0 0.0
    %250 = vmatpush1.msra.mxu0 0.0
    %251 = vmatprep.subr.mxu0 0.0
    %252 = vmatpush1.msra.mxu0 0.0
    %253 = vmatprep.subr.mxu0 0.0
    %254 = vmatpush1.msra.mxu0 0.0
    %255 = vmatprep.mubr.f32.mxu0 0.0
    %256 = vmatmul.mubr.f32.gmra.mrb[0].mxu0 %v189
    %v257 = vpop.f32.mrb[0].mxu0
    %v258 = vadd.f32 %v186, %v257
    %v259 = vpop.f32.mrb[0].mxu0
    %260 = vdwg.mxu0
    %v261 = vld [vmem:[%s8] sm:$0xff]
    %v262 = vld [vmem:[%s8 + $0x8] sm:$0xff]
    %v263 = vld [vmem:[%s8 + $0x10] sm:$0xff]
    %v264 = vld [vmem:[%s8 + $0x18] sm:$0xff]
    %v265 = vld [vmem:[%s9] sm:$0xff]
    %v266 = vld [vmem:[%s9 + $0x8] sm:$0xff]
    %v268 = vsel %vm88, %v258, 0
    %270 = vmatprep.subr.mxu0 0.0
    %271 = vmatpush1.msra.mxu0 %v265
    %272 = vmatprep.subr.mxu0 0.0
    %273 = vmatpush1.msra.mxu0 %v266
    %274 = vmatprep.subr.mxu0 0.0
    %275 = vmatpush1.msra.mxu0 0.0
    %276 = vmatprep.subr.mxu0 0.0
    %277 = vmatpush1.msra.mxu0 0.0
    %278 = vmatprep.subr.mxu0 0.0
    %279 = vmatpush1.msra.mxu0 0.0
    %280 = vmatprep.subr.mxu0 0.0
    %281 = vmatpush1.msra.mxu0 0.0
    %282 = vmatprep.subr.mxu0 0.0
    %283 = vmatpush1.msra.mxu0 0.0
    %284 = vmatprep.subr.mxu0 0.0
    %285 = vmatpush1.msra.mxu0 0.0
    %286 = vmatprep.subr.mxu0 0.0
    %287 = vmatpush1.msra.mxu0 0.0
    %288 = vmatprep.subr.mxu0 0.0
    %289 = vmatpush1.msra.mxu0 0.0
    %290 = vmatprep.subr.mxu0 0.0
    %291 = vmatpush1.msra.mxu0 0.0
    %292 = vmatprep.subr.mxu0 0.0
    %293 = vmatpush1.msra.mxu0 0.0
    %294 = vmatprep.subr.mxu0 0.0
    %295 = vmatpush1.msra.mxu0 0.0
    %296 = vmatprep.subr.mxu0 0.0
    %297 = vmatpush1.msra.mxu0 0.0
    %298 = vmatprep.subr.mxu0 0.0
    %299 = vmatpush1.msra.mxu0 0.0
    %300 = vmatprep.subr.mxu0 0.0
    %301 = vmatpush1.msra.mxu0 0.0
    %302 = vmatprep.subr.mxu0 0.0
    %303 = vmatpush1.msra.mxu0 0.0
    %304 = vmatprep.subr.mxu0 0.0
    %305 = vmatpush1.msra.mxu0 0.0
    %306 = vmatprep.subr.mxu0 0.0
    %307 = vmatpush1.msra.mxu0 0.0
    %308 = vmatprep.subr.mxu0 0.0
    %309 = vmatpush1.msra.mxu0 0.0
    %310 = vmatprep.subr.mxu0 0.0
    %311 = vmatpush1.msra.mxu0 0.0
    %312 = vmatprep.subr.mxu0 0.0
    %313 = vmatpush1.msra.mxu0 0.0
    %314 = vmatprep.subr.mxu0 0.0
    %315 = vmatpush1.msra.mxu0 0.0
    %316 = vmatprep.subr.mxu0 0.0
    %317 = vmatpush1.msra.mxu0 0.0
    %318 = vmatprep.subr.mxu0 0.0
    %319 = vmatpush1.msra.mxu0 0.0
    %320 = vmatprep.subr.mxu0 0.0
    %321 = vmatpush1.msra.mxu0 0.0
    %322 = vmatprep.subr.mxu0 0.0
    %323 = vmatpush1.msra.mxu0 0.0
    %324 = vmatprep.subr.mxu0 0.0
    %325 = vmatpush1.msra.mxu0 0.0
    %326 = vmatprep.subr.mxu0 0.0
    %327 = vmatpush1.msra.mxu0 0.0
    %328 = vmatprep.subr.mxu0 0.0
    %329 = vmatpush1.msra.mxu0 0.0
    %330 = vmatprep.subr.mxu0 0.0
    %331 = vmatpush1.msra.mxu0 0.0
    %332 = vmatprep.subr.mxu0 0.0
    %333 = vmatpush1.msra.mxu0 0.0
    %334 = vmatprep.mubr.f32.mxu0 0.0
    %335 = vmatmul.mubr.f32.gmra.mrb[0].mxu0 %v268
    %v336 = vpop.f32.mrb[0].mxu0
    %v337 = vadd.f32 0.0, %v336
    %v338 = vpop.f32.mrb[0].mxu0
    %339 = vdwg.mxu0
    %v340 = vlaneseq
    %v341 = vshrl.u32 %v340, 7
    %v342 = vsub.s32 0, %v341
    %v343 = vrot.slane %v337, %v342
    %vm344 = vcmask 261120
    %v346 = vsel %vm344, %v83, 0
    %348 = vmatprep.subr.mxu0 0.0
    %349 = vmatpush1.msra.mxu0 %v261
    %350 = vmatprep.subr.mxu0 0.0
    %351 = vmatpush1.msra.mxu0 %v262
    %352 = vmatprep.subr.mxu0 0.0
    %353 = vmatpush1.msra.mxu0 %v263
    %354 = vmatprep.subr.mxu0 0.0
    %355 = vmatpush1.msra.mxu0 %v264
    %356 = vmatprep.subr.mxu0 0.0
    %357 = vmatpush1.msra.mxu0 0.0
    %358 = vmatprep.subr.mxu0 0.0
    %359 = vmatpush1.msra.mxu0 0.0
    %360 = vmatprep.subr.mxu0 0.0
    %361 = vmatpush1.msra.mxu0 0.0
    %362 = vmatprep.subr.mxu0 0.0
    %363 = vmatpush1.msra.mxu0 0.0
    %364 = vmatprep.subr.mxu0 0.0
    %365 = vmatpush1.msra.mxu0 0.0
    %366 = vmatprep.subr.mxu0 0.0
    %367 = vmatpush1.msra.mxu0 0.0
    %368 = vmatprep.subr.mxu0 0.0
    %369 = vmatpush1.msra.mxu0 0.0
    %370 = vmatprep.subr.mxu0 0.0
    %371 = vmatpush1.msra.mxu0 0.0
    %372 = vmatprep.subr.mxu0 0.0
    %373 = vmatpush1.msra.mxu0 0.0
    %374 = vmatprep.subr.mxu0 0.0
    %375 = vmatpush1.msra.mxu0 0.0
    %376 = vmatprep.subr.mxu0 0.0
    %377 = vmatpush1.msra.mxu0 0.0
    %378 = vmatprep.subr.mxu0 0.0
    %379 = vmatpush1.msra.mxu0 0.0
    %380 = vmatprep.subr.mxu0 0.0
    %381 = vmatpush1.msra.mxu0 0.0
    %382 = vmatprep.subr.mxu0 0.0
    %383 = vmatpush1.msra.mxu0 0.0
    %384 = vmatprep.subr.mxu0 0.0
    %385 = vmatpush1.msra.mxu0 0.0
    %386 = vmatprep.subr.mxu0 0.0
    %387 = vmatpush1.msra.mxu0 0.0
    %388 = vmatprep.subr.mxu0 0.0
    %389 = vmatpush1.msra.mxu0 0.0
    %390 = vmatprep.subr.mxu0 0.0
    %391 = vmatpush1.msra.mxu0 0.0
    %392 = vmatprep.subr.mxu0 0.0
    %393 = vmatpush1.msra.mxu0 0.0
    %394 = vmatprep.subr.mxu0 0.0
    %395 = vmatpush1.msra.mxu0 0.0
    %396 = vmatprep.subr.mxu0 0.0
    %397 = vmatpush1.msra.mxu0 0.0
    %398 = vmatprep.subr.mxu0 0.0
    %399 = vmatpush1.msra.mxu0 0.0
    %400 = vmatprep.subr.mxu0 0.0
    %401 = vmatpush1.msra.mxu0 0.0
    %402 = vmatprep.subr.mxu0 0.0
    %403 = vmatpush1.msra.mxu0 0.0
    %404 = vmatprep.subr.mxu0 0.0
    %405 = vmatpush1.msra.mxu0 0.0
    %406 = vmatprep.subr.mxu0 0.0
    %407 = vmatpush1.msra.mxu0 0.0
    %408 = vmatprep.subr.mxu0 0.0
    %409 = vmatpush1.msra.mxu0 0.0
    %410 = vmatprep.subr.mxu0 0.0
    %411 = vmatpush1.msra.mxu0 0.0
    %412 = vmatprep.mubr.f32.mxu0 0.0
    %413 = vmatmul.mubr.f32.gmra.mrb[0].mxu0 %v346
    %v414 = vpop.f32.mrb[0].mxu0
    %v415 = vadd.f32 %v343, %v414
    %v416 = vpop.f32.mrb[0].mxu0
    %417 = vdwg.mxu0
    %v418 = vld [vmem:[%s10] sm:$0x1]
    %v420 = vlaneseq
    %v421 = vshrl.u32 %v420, 7
    %v422 = vsub.s32 0, %v421
    %v423 = vrot.slane %v418, %v422
    %v425 = vadd.f32 %v415, %v423
    %v426 = vld [vmem:[%s12] sm:$0x1]
    %v427 = vld [vmem:[%s13] sm:$0x1]
    %v428 = vld [vmem:[%s14] sm:$0x7]
    %v429 = vld [vmem:[%s15] sm:$0x1]
    %v430 = vld [vmem:[%s16] sm:$0x7]
    %v431 = vld [vmem:[%s17] sm:$0x1]
    %v432 = vld [vmem:[%s18] sm:$0x1]
    %s433 = sld [smem:[#allocation2]]
    %s434 = sld [smem:[#allocation2 + $0x1]]
    %s435 = sld [smem:[#allocation2 + $0x2]]
    %s436 = sld [smem:[#allocation2 + $0x3]]
    %s437 = sld [smem:[#allocation2 + $0x4]]
    %s438 = sld [smem:[#allocation2 + $0x5]]
    %s439 = sld [smem:[#allocation2 + $0x6]]
    %s440 = sld [smem:[#allocation2 + $0x7]]
    %s441 = sld [smem:[#allocation2 + $0x8]]
    %v442 = vstv %s433
    %v443 = vmul.f32 %v442, %v425
    %v444 = vstv %s436
    %v445 = vadd.f32 %v443, %v444
    %v446 = vstv %s434
    %v447 = vmul.f32 %v446, %v425
    %v448 = vstv %s437
    %v449 = vadd.f32 %v447, %v448
    %v450 = vstv %s435
    %v451 = vmul.f32 %v450, %v425
    %v452 = vstv %s438
    %v453 = vadd.f32 %v451, %v452
    %v454 = vlaneseq
    %v455 = vshrl.u32 %v454, 7
    %v456 = vsub.s32 0, %v455
    %v457 = vrot.slane %v445, %v456
    %459 = vbcast.lane.b32.xlu0 %v457, 256
    %v460 = vpop.permute.xlu0 %459
    %s462 = sor.u32 256, 8
    %463 = vbcast.lane.b32.xlu0 %v457, %s462
    %v464 = vpop.permute.xlu0 %463
    %s466 = sor.u32 256, 16
    %467 = vbcast.lane.b32.xlu0 %v457, %s466
    %v468 = vpop.permute.xlu0 %467
    %s470 = sor.u32 256, 24
    %471 = vbcast.lane.b32.xlu0 %v457, %s470
    %v472 = vpop.permute.xlu0 %471
    %v473 = vlaneseq
    %v474 = vshrl.u32 %v473, 7
    %v475 = vsub.s32 1, %v474
    %v476 = vrot.slane %v445, %v475
    %478 = vbcast.lane.b32.xlu0 %v476, 256
    %v479 = vpop.permute.xlu0 %478
    %s481 = sor.u32 256, 8
    %482 = vbcast.lane.b32.xlu0 %v476, %s481
    %v483 = vpop.permute.xlu0 %482
    %s485 = sor.u32 256, 16
    %486 = vbcast.lane.b32.xlu0 %v476, %s485
    %v487 = vpop.permute.xlu0 %486
    %s489 = sor.u32 256, 24
    %490 = vbcast.lane.b32.xlu0 %v476, %s489
    %v491 = vpop.permute.xlu0 %490
    %v494 = vunpack.c.l.s4 1966171168
    %v495 = vunpack.c.0.s8 %v494
    %v496 = vlaneseq
    %v497 = vshrl.u32 %v496, 7
    %v498 = vsub.s32 %v495, %v497
    %v499 = vrot.slane %v449, %v498
    %v500 = vcombine.high %v499, %v499
    %v502 = vunpack.c.l.s4 1966171168
    %v503 = vunpack.c.0.s8 %v502
    %v504 = vlaneseq
    %v505 = vshrl.u32 %v504, 7
    %v506 = vsub.s32 %v503, %v505
    %v507 = vrot.slane %v499, %v506
    %v509 = vunpack.c.l.s4 1966171168
    %v510 = vunpack.c.0.s8 %v509
    %v511 = vlaneseq
    %v512 = vshrl.u32 %v511, 7
    %v513 = vsub.s32 %v510, %v512
    %v514 = vrot.slane %v500, %v513
    %v515 = vlaneseq
    %v516 = vshrl.u32 %v515, 7
    %v517 = vsub.s32 0, %v516
    %v518 = vrot.slane %v507, %v517
    %v519 = vlaneseq
    %v520 = vshrl.u32 %v519, 7
    %v521 = vsub.s32 0, %v520
    %v522 = vrot.slane %v514, %v521
    %v525 = vmul.f32 %v460, %v518
    %v526 = vmul.f32 %v464, %v518
    %v527 = vmul.f32 %v468, %v518
    %v528 = vmul.f32 %v472, %v518
    %v529 = vmul.f32 %v479, %v522
    %v530 = vmul.f32 %v483, %v522
    %v531 = vmul.f32 %v487, %v522
    %v532 = vmul.f32 %v491, %v522
    %v533 = vsel %vm344, %v525, -inf
    %534 = vmax.xlane.f32.xlu0 %v533
    %v535 = vpop.xlane.xlu0 %534
    %v536 = vsel %vm344, %v526, -inf
    %537 = vmax.xlane.f32.xlu0 %v536
    %v538 = vpop.xlane.xlu0 %537
    %v539 = vsel %vm344, %v527, -inf
    %540 = vmax.xlane.f32.xlu0 %v539
    %v541 = vpop.xlane.xlu0 %540
    %v542 = vsel %vm344, %v528, -inf
    %543 = vmax.xlane.f32.xlu0 %v542
    %v544 = vpop.xlane.xlu0 %543
    %v545 = vsel %vm344, %v529, -inf
    %546 = vmax.xlane.f32.xlu0 %v545
    %v547 = vpop.xlane.xlu0 %546
    %v548 = vsel %vm344, %v530, -inf
    %549 = vmax.xlane.f32.xlu0 %v548
    %v550 = vpop.xlane.xlu0 %549
    %v551 = vsel %vm344, %v531, -inf
    %552 = vmax.xlane.f32.xlu0 %v551
    %v553 = vpop.xlane.xlu0 %552
    %v554 = vsel %vm344, %v532, -inf
    %555 = vmax.xlane.f32.xlu0 %v554
    %v556 = vpop.xlane.xlu0 %555
    %v557 = vsub.f32 %v525, %v535
    %v558 = vsub.f32 %v526, %v538
    %v559 = vsub.f32 %v527, %v541
    %v560 = vsub.f32 %v528, %v544
    %v561 = vsub.f32 %v529, %v547
    %v562 = vsub.f32 %v530, %v550
    %v563 = vsub.f32 %v531, %v553
    %v564 = vsub.f32 %v532, %v556
    %v565 = vmul.f32 %v557, 1.442695
    %v566 = vpow.pop %v565
    %v567 = vmul.f32 %v558, 1.442695
    %v568 = vpow.pop %v567
    %v569 = vmul.f32 %v559, 1.442695
    %v570 = vpow.pop %v569
    %v571 = vmul.f32 %v560, 1.442695
    %v572 = vpow.pop %v571
    %v573 = vmul.f32 %v561, 1.442695
    %v574 = vpow.pop %v573
    %v575 = vmul.f32 %v562, 1.442695
    %v576 = vpow.pop %v575
    %v577 = vmul.f32 %v563, 1.442695
    %v578 = vpow.pop %v577
    %v579 = vmul.f32 %v564, 1.442695
    %v580 = vpow.pop %v579
    %v581 = vsel %vm344, %v566, 0.0
    %582 = vadd.xlane.f32.xlu0 %v581
    %v583 = vpop.xlane.xlu0 %582
    %v584 = vsel %vm344, %v568, 0.0
    %585 = vadd.xlane.f32.xlu0 %v584
    %v586 = vpop.xlane.xlu0 %585
    %v587 = vsel %vm344, %v570, 0.0
    %588 = vadd.xlane.f32.xlu0 %v587
    %v589 = vpop.xlane.xlu0 %588
    %v590 = vsel %vm344, %v572, 0.0
    %591 = vadd.xlane.f32.xlu0 %v590
    %v592 = vpop.xlane.xlu0 %591
    %v593 = vsel %vm344, %v574, 0.0
    %594 = vadd.xlane.f32.xlu0 %v593
    %v595 = vpop.xlane.xlu0 %594
    %v596 = vsel %vm344, %v576, 0.0
    %597 = vadd.xlane.f32.xlu0 %v596
    %v598 = vpop.xlane.xlu0 %597
    %v599 = vsel %vm344, %v578, 0.0
    %600 = vadd.xlane.f32.xlu0 %v599
    %v601 = vpop.xlane.xlu0 %600
    %v602 = vsel %vm344, %v580, 0.0
    %603 = vadd.xlane.f32.xlu0 %v602
    %v604 = vpop.xlane.xlu0 %603
    %v605 = vrcp.pop %v583
    %v606 = vmul.f32 %v566, %v605
    %v607 = vrcp.pop %v586
    %v608 = vmul.f32 %v568, %v607
    %v609 = vrcp.pop %v589
    %v610 = vmul.f32 %v570, %v609
    %v611 = vrcp.pop %v592
    %v612 = vmul.f32 %v572, %v611
    %v613 = vrcp.pop %v595
    %v614 = vmul.f32 %v574, %v613
    %v615 = vrcp.pop %v598
    %v616 = vmul.f32 %v576, %v615
    %v617 = vrcp.pop %v601
    %v618 = vmul.f32 %v578, %v617
    %v619 = vrcp.pop %v604
    %v620 = vmul.f32 %v580, %v619
    %v623 = vunpack.c.l.s4 1966171168
    %v624 = vunpack.c.0.s8 %v623
    %v625 = vlaneseq
    %v626 = vshrl.u32 %v625, 7
    %v627 = vsub.s32 %v624, %v626
    %v628 = vrot.slane %v453, %v627
    %v629 = vcombine.high %v628, %v628
    %v631 = vunpack.c.l.s4 1966171168
    %v632 = vunpack.c.0.s8 %v631
    %v633 = vlaneseq
    %v634 = vshrl.u32 %v633, 7
    %v635 = vsub.s32 %v632, %v634
    %v636 = vrot.slane %v628, %v635
    %v638 = vunpack.c.l.s4 1966171168
    %v639 = vunpack.c.0.s8 %v638
    %v640 = vlaneseq
    %v641 = vshrl.u32 %v640, 7
    %v642 = vsub.s32 %v639, %v641
    %v643 = vrot.slane %v629, %v642
    %v644 = vlaneseq
    %v645 = vshrl.u32 %v644, 7
    %v646 = vsub.s32 0, %v645
    %v647 = vrot.slane %v636, %v646
    %v648 = vlaneseq
    %v649 = vshrl.u32 %v648, 7
    %v650 = vsub.s32 0, %v649
    %v651 = vrot.slane %v643, %v650
    %v654 = vmul.f32 %v606, %v647
    %v655 = vmul.f32 %v608, %v647
    %v656 = vmul.f32 %v610, %v647
    %v657 = vmul.f32 %v612, %v647
    %v658 = vmul.f32 %v614, %v651
    %v659 = vmul.f32 %v616, %v651
    %v660 = vmul.f32 %v618, %v651
    %v661 = vmul.f32 %v620, %v651
    %v662 = vsel %vm344, %v654, 0.0
    %663 = vadd.xlane.f32.xlu0 %v662
    %v664 = vpop.xlane.xlu0 %663
    %v665 = vsel %vm344, %v655, 0.0
    %666 = vadd.xlane.f32.xlu0 %v665
    %v667 = vpop.xlane.xlu0 %666
    %v668 = vsel %vm344, %v656, 0.0
    %669 = vadd.xlane.f32.xlu0 %v668
    %v670 = vpop.xlane.xlu0 %669
    %v671 = vsel %vm344, %v657, 0.0
    %672 = vadd.xlane.f32.xlu0 %v671
    %v673 = vpop.xlane.xlu0 %672
    %v674 = vsel %vm344, %v658, 0.0
    %675 = vadd.xlane.f32.xlu0 %v674
    %v676 = vpop.xlane.xlu0 %675
    %v677 = vsel %vm344, %v659, 0.0
    %678 = vadd.xlane.f32.xlu0 %v677
    %v679 = vpop.xlane.xlu0 %678
    %v680 = vsel %vm344, %v660, 0.0
    %681 = vadd.xlane.f32.xlu0 %v680
    %v682 = vpop.xlane.xlu0 %681
    %v683 = vsel %vm344, %v661, 0.0
    %684 = vadd.xlane.f32.xlu0 %v683
    %v685 = vpop.xlane.xlu0 %684
    %v686 = vstv %s439
    %v687 = vmul.f32 %v686, %v664
    %v688 = vmul.f32 %v686, %v667
    %v689 = vmul.f32 %v686, %v670
    %v690 = vmul.f32 %v686, %v673
    %v691 = vmul.f32 %v686, %v676
    %v692 = vmul.f32 %v686, %v679
    %v693 = vmul.f32 %v686, %v682
    %v694 = vmul.f32 %v686, %v685
    %v695 = vstv %s440
    %v696 = vadd.f32 %v687, %v695
    %v697 = vadd.f32 %v688, %v695
    %v698 = vadd.f32 %v689, %v695
    %v699 = vadd.f32 %v690, %v695
    %v700 = vadd.f32 %v691, %v695
    %v701 = vadd.f32 %v692, %v695
    %v702 = vadd.f32 %v693, %v695
    %v703 = vadd.f32 %v694, %v695
    %v704 = vmul.f32 %v696, 2.0
    %v705 = vmul.f32 %v697, 2.0
    %v706 = vmul.f32 %v698, 2.0
    %v707 = vmul.f32 %v699, 2.0
    %v708 = vmul.f32 %v700, 2.0
    %v709 = vmul.f32 %v701, 2.0
    %v710 = vmul.f32 %v702, 2.0
    %v711 = vmul.f32 %v703, 2.0
    %v720 = vlaneseq
    %v721 = vand.u32 %v720, 127
    %v722 = vlaneseq
    %v723 = vshrl.u32 %v722, 7
    %v724 = vsub.s32 %v721, %v723
    %v725 = vrot.slane %v704, %v724
    %v726 = vadd.s32 %v721, 4294967288
    %v727 = vlaneseq
    %v728 = vshrl.u32 %v727, 7
    %v729 = vsub.s32 %v726, %v728
    %v730 = vrot.slane %v705, %v729
    %vm731 = vcmask 130112
    %v732 = vsel %vm731, %v730, %v725
    %v733 = vadd.s32 %v721, 4294967280
    %v734 = vlaneseq
    %v735 = vshrl.u32 %v734, 7
    %v736 = vsub.s32 %v733, %v735
    %v737 = vrot.slane %v706, %v736
    %vm738 = vcmask 195712
    %v739 = vsel %vm738, %v737, %v732
    %v740 = vadd.s32 %v721, 4294967272
    %v741 = vlaneseq
    %v742 = vshrl.u32 %v741, 7
    %v743 = vsub.s32 %v740, %v742
    %v744 = vrot.slane %v707, %v743
    %vm745 = vcmask 261312
    %v746 = vsel %vm745, %v744, %v739
    %v747 = vlaneseq
    %v748 = vshrl.u32 %v747, 7
    %v749 = vsub.s32 %v721, %v748
    %v750 = vrot.slane %v708, %v749
    %v751 = vlaneseq
    %v752 = vshrl.u32 %v751, 7
    %v753 = vsub.s32 %v726, %v752
    %v754 = vrot.slane %v709, %v753
    %v755 = vsel %vm731, %v754, %v750
    %v756 = vlaneseq
    %v757 = vshrl.u32 %v756, 7
    %v758 = vsub.s32 %v733, %v757
    %v759 = vrot.slane %v710, %v758
    %v760 = vsel %vm738, %v759, %v755
    %v761 = vlaneseq
    %v762 = vshrl.u32 %v761, 7
    %v763 = vsub.s32 %v740, %v762
    %v764 = vrot.slane %v711, %v763
    %v765 = vsel %vm745, %v764, %v760
    %vm766 = vcmask 1041409
    %v767 = vsel %vm766, %v765, %v746
    %v769 = vadd.f32 %v425, %v767
    %vm770 = vcmask 254976
    %v771 = vsel %vm770, %v769, 0.0
    %772 = vadd.xlane.f32.xlu0 %v771
    %v773 = vpop.xlane.xlu0 %772
    %v774 = vrcp.pop 32.0
    %v775 = vmul.f32 %v773, %v774
    %v776 = vsub.f32 %v769, %v775
    %v777 = vmul.f32 %v776, %v776
    %v778 = vsel %vm770, %v777, 0.0
    %779 = vadd.xlane.f32.xlu0 %v778
    %v780 = vpop.xlane.xlu0 %779
    %v781 = vmul.f32 %v780, %v774
    %v782 = vadd.f32 %v781, 1e-05
    %v783 = vrsqrt.pop %v782
    %v784 = vmul.f32 %v776, %v783
    %v786 = vlaneseq
    %v787 = vshrl.u32 %v786, 7
    %v788 = vsub.s32 0, %v787
    %v789 = vrot.slane %v426, %v788
    %v791 = vmul.f32 %v784, %v789
    %v793 = vlaneseq
    %v794 = vshrl.u32 %v793, 7
    %v795 = vsub.s32 0, %v794
    %v796 = vrot.slane %v427, %v795
    %v798 = vadd.f32 %v791, %v796
    %vm799 = vcmp.eq.s32.totalorder %v721, 0
    %vm800 = vcmask 1047808
    %801 = vrot.lane.b32.xlu0 %v798, 32
    %v802 = vpop.permute.xlu0 %801
    %v803 = vsel %vm800, %v802, %v798
    %804 = vrot.lane.b32.xlu0 %v803, 32
    %v805 = vpop.permute.xlu0 %804
    %v806 = vsel %vm800, %v805, %v798
    %808 = vrot.lane.b32.xlu0 %v806, 97
    %v809 = vpop.permute.xlu0 %808
    %v811 = vsel %vm799, 0.0, %v809
    %vm812 = vcmp.eq.s32.totalorder %v721, 31
    %813 = vrot.lane.b32.xlu0 %v806, 127
    %v814 = vpop.permute.xlu0 %813
    %v816 = vsel %vm812, 0.0, %v814
    %v817 = vlaneseq
    %v818 = vshrl.u32 %v817, 7
    %v819 = vsub.s32 0, %v818
    %v820 = vrot.slane %v428, %v819
    %822 = vbcast.lane.b32.xlu0 %v820, 256
    %v823 = vpop.permute.xlu0 %822
    %s825 = sor.u32 256, 8
    %826 = vbcast.lane.b32.xlu0 %v820, %s825
    %v827 = vpop.permute.xlu0 %826
    %s829 = sor.u32 256, 16
    %830 = vbcast.lane.b32.xlu0 %v820, %s829
    %v831 = vpop.permute.xlu0 %830
    %s833 = sor.u32 256, 24
    %834 = vbcast.lane.b32.xlu0 %v820, %s833
    %v835 = vpop.permute.xlu0 %834
    %s837 = sor.u32 256, 32
    %838 = vbcast.lane.b32.xlu0 %v820, %s837
    %v839 = vpop.permute.xlu0 %838
    %s841 = sor.u32 256, 40
    %842 = vbcast.lane.b32.xlu0 %v820, %s841
    %v843 = vpop.permute.xlu0 %842
    %s845 = sor.u32 256, 48
    %846 = vbcast.lane.b32.xlu0 %v820, %s845
    %v847 = vpop.permute.xlu0 %846
    %s849 = sor.u32 256, 56
    %850 = vbcast.lane.b32.xlu0 %v820, %s849
    %v851 = vpop.permute.xlu0 %850
    %v852 = vlaneseq
    %v853 = vshrl.u32 %v852, 7
    %v854 = vsub.s32 1, %v853
    %v855 = vrot.slane %v428, %v854
    %857 = vbcast.lane.b32.xlu0 %v855, 256
    %v858 = vpop.permute.xlu0 %857
    %s860 = sor.u32 256, 8
    %861 = vbcast.lane.b32.xlu0 %v855, %s860
    %v862 = vpop.permute.xlu0 %861
    %s864 = sor.u32 256, 16
    %865 = vbcast.lane.b32.xlu0 %v855, %s864
    %v866 = vpop.permute.xlu0 %865
    %s868 = sor.u32 256, 24
    %869 = vbcast.lane.b32.xlu0 %v855, %s868
    %v870 = vpop.permute.xlu0 %869
    %s872 = sor.u32 256, 32
    %873 = vbcast.lane.b32.xlu0 %v855, %s872
    %v874 = vpop.permute.xlu0 %873
    %s876 = sor.u32 256, 40
    %877 = vbcast.lane.b32.xlu0 %v855, %s876
    %v878 = vpop.permute.xlu0 %877
    %s880 = sor.u32 256, 48
    %881 = vbcast.lane.b32.xlu0 %v855, %s880
    %v882 = vpop.permute.xlu0 %881
    %s884 = sor.u32 256, 56
    %885 = vbcast.lane.b32.xlu0 %v855, %s884
    %v886 = vpop.permute.xlu0 %885
    %v887 = vlaneseq
    %v888 = vshrl.u32 %v887, 7
    %v889 = vsub.s32 2, %v888
    %v890 = vrot.slane %v428, %v889
    %892 = vbcast.lane.b32.xlu0 %v890, 256
    %v893 = vpop.permute.xlu0 %892
    %s895 = sor.u32 256, 8
    %896 = vbcast.lane.b32.xlu0 %v890, %s895
    %v897 = vpop.permute.xlu0 %896
    %s899 = sor.u32 256, 16
    %900 = vbcast.lane.b32.xlu0 %v890, %s899
    %v901 = vpop.permute.xlu0 %900
    %s903 = sor.u32 256, 24
    %904 = vbcast.lane.b32.xlu0 %v890, %s903
    %v905 = vpop.permute.xlu0 %904
    %s907 = sor.u32 256, 32
    %908 = vbcast.lane.b32.xlu0 %v890, %s907
    %v909 = vpop.permute.xlu0 %908
    %s911 = sor.u32 256, 40
    %912 = vbcast.lane.b32.xlu0 %v890, %s911
    %v913 = vpop.permute.xlu0 %912
    %s915 = sor.u32 256, 48
    %916 = vbcast.lane.b32.xlu0 %v890, %s915
    %v917 = vpop.permute.xlu0 %916
    %s919 = sor.u32 256, 56
    %920 = vbcast.lane.b32.xlu0 %v890, %s919
    %v921 = vpop.permute.xlu0 %920
    %v924 = vunpack.c.l.s4 1966171168
    %v925 = vunpack.c.0.s8 %v924
    %v926 = vlaneseq
    %v927 = vshrl.u32 %v926, 7
    %v928 = vsub.s32 %v925, %v927
    %v929 = vrot.slane %v811, %v928
    %v930 = vcombine.high %v929, %v929
    %v932 = vunpack.c.l.s4 1966171168
    %v933 = vunpack.c.0.s8 %v932
    %v934 = vlaneseq
    %v935 = vshrl.u32 %v934, 7
    %v936 = vsub.s32 %v933, %v935
    %v937 = vrot.slane %v929, %v936
    %v939 = vunpack.c.l.s4 1966171168
    %v940 = vunpack.c.0.s8 %v939
    %v941 = vlaneseq
    %v942 = vshrl.u32 %v941, 7
    %v943 = vsub.s32 %v940, %v942
    %v944 = vrot.slane %v930, %v943
    %v945 = vlaneseq
    %v946 = vshrl.u32 %v945, 7
    %v947 = vsub.s32 0, %v946
    %v948 = vrot.slane %v937, %v947
    %v949 = vlaneseq
    %v950 = vshrl.u32 %v949, 7
    %v951 = vsub.s32 0, %v950
    %v952 = vrot.slane %v944, %v951
    %v955 = vmul.f32 %v948, %v823
    %v956 = vmul.f32 %v948, %v827
    %v957 = vmul.f32 %v948, %v831
    %v958 = vmul.f32 %v948, %v835
    %v959 = vmul.f32 %v948, %v839
    %v960 = vmul.f32 %v948, %v843
    %v961 = vmul.f32 %v948, %v847
    %v962 = vmul.f32 %v948, %v851
    %v963 = vmul.f32 %v952, %v823
    %v964 = vmul.f32 %v952, %v827
    %v965 = vmul.f32 %v952, %v831
    %v966 = vmul.f32 %v952, %v835
    %v967 = vmul.f32 %v952, %v839
    %v968 = vmul.f32 %v952, %v843
    %v969 = vmul.f32 %v952, %v847
    %v970 = vmul.f32 %v952, %v851
    %v973 = vunpack.c.l.s4 1966171168
    %v974 = vunpack.c.0.s8 %v973
    %v975 = vlaneseq
    %v976 = vshrl.u32 %v975, 7
    %v977 = vsub.s32 %v974, %v976
    %v978 = vrot.slane %v798, %v977
    %v979 = vcombine.high %v978, %v978
    %v981 = vunpack.c.l.s4 1966171168
    %v982 = vunpack.c.0.s8 %v981
    %v983 = vlaneseq
    %v984 = vshrl.u32 %v983, 7
    %v985 = vsub.s32 %v982, %v984
    %v986 = vrot.slane %v978, %v985
    %v988 = vunpack.c.l.s4 1966171168
    %v989 = vunpack.c.0.s8 %v988
    %v990 = vlaneseq
    %v991 = vshrl.u32 %v990, 7
    %v992 = vsub.s32 %v989, %v991
    %v993 = vrot.slane %v979, %v992
    %v994 = vlaneseq
    %v995 = vshrl.u32 %v994, 7
    %v996 = vsub.s32 0, %v995
    %v997 = vrot.slane %v986, %v996
    %v998 = vlaneseq
    %v999 = vshrl.u32 %v998, 7
    %v1000 = vsub.s32 0, %v999
    %v1001 = vrot.slane %v993, %v1000
    %v1004 = vmul.f32 %v997, %v858
    %v1005 = vmul.f32 %v997, %v862
    %v1006 = vmul.f32 %v997, %v866
    %v1007 = vmul.f32 %v997, %v870
    %v1008 = vmul.f32 %v997, %v874
    %v1009 = vmul.f32 %v997, %v878
    %v1010 = vmul.f32 %v997, %v882
    %v1011 = vmul.f32 %v997, %v886
    %v1012 = vmul.f32 %v1001, %v858
    %v1013 = vmul.f32 %v1001, %v862
    %v1014 = vmul.f32 %v1001, %v866
    %v1015 = vmul.f32 %v1001, %v870
    %v1016 = vmul.f32 %v1001, %v874
    %v1017 = vmul.f32 %v1001, %v878
    %v1018 = vmul.f32 %v1001, %v882
    %v1019 = vmul.f32 %v1001, %v886
    %v1020 = vadd.f32 %v955, %v1004
    %v1021 = vadd.f32 %v956, %v1005
    %v1022 = vadd.f32 %v957, %v1006
    %v1023 = vadd.f32 %v958, %v1007
    %v1024 = vadd.f32 %v959, %v1008
    %v1025 = vadd.f32 %v960, %v1009
    %v1026 = vadd.f32 %v961, %v1010
    %v1027 = vadd.f32 %v962, %v1011
    %v1028 = vadd.f32 %v963, %v1012
    %v1029 = vadd.f32 %v964, %v1013
    %v1030 = vadd.f32 %v965, %v1014
    %v1031 = vadd.f32 %v966, %v1015
    %v1032 = vadd.f32 %v967, %v1016
    %v1033 = vadd.f32 %v968, %v1017
    %v1034 = vadd.f32 %v969, %v1018
    %v1035 = vadd.f32 %v970, %v1019
    %v1038 = vunpack.c.l.s4 1966171168
    %v1039 = vunpack.c.0.s8 %v1038
    %v1040 = vlaneseq
    %v1041 = vshrl.u32 %v1040, 7
    %v1042 = vsub.s32 %v1039, %v1041
    %v1043 = vrot.slane %v816, %v1042
    %v1044 = vcombine.high %v1043, %v1043
    %v1046 = vunpack.c.l.s4 1966171168
    %v1047 = vunpack.c.0.s8 %v1046
    %v1048 = vlaneseq
    %v1049 = vshrl.u32 %v1048, 7
    %v1050 = vsub.s32 %v1047, %v1049
    %v1051 = vrot.slane %v1043, %v1050
    %v1053 = vunpack.c.l.s4 1966171168
    %v1054 = vunpack.c.0.s8 %v1053
    %v1055 = vlaneseq
    %v1056 = vshrl.u32 %v1055, 7
    %v1057 = vsub.s32 %v1054, %v1056
    %v1058 = vrot.slane %v1044, %v1057
    %v1059 = vlaneseq
    %v1060 = vshrl.u32 %v1059, 7
    %v1061 = vsub.s32 0, %v1060
    %v1062 = vrot.slane %v1051, %v1061
    %v1063 = vlaneseq
    %v1064 = vshrl.u32 %v1063, 7
    %v1065 = vsub.s32 0, %v1064
    %v1066 = vrot.slane %v1058, %v1065
    %v1069 = vmul.f32 %v1062, %v893
    %v1070 = vmul.f32 %v1062, %v897
    %v1071 = vmul.f32 %v1062, %v901
    %v1072 = vmul.f32 %v1062, %v905
    %v1073 = vmul.f32 %v1062, %v909
    %v1074 = vmul.f32 %v1062, %v913
    %v1075 = vmul.f32 %v1062, %v917
    %v1076 = vmul.f32 %v1062, %v921
    %v1077 = vmul.f32 %v1066, %v893
    %v1078 = vmul.f32 %v1066, %v897
    %v1079 = vmul.f32 %v1066, %v901
    %v1080 = vmul.f32 %v1066, %v905
    %v1081 = vmul.f32 %v1066, %v909
    %v1082 = vmul.f32 %v1066, %v913
    %v1083 = vmul.f32 %v1066, %v917
    %v1084 = vmul.f32 %v1066, %v921
    %v1085 = vadd.f32 %v1020, %v1069
    %v1086 = vadd.f32 %v1021, %v1070
    %v1087 = vadd.f32 %v1022, %v1071
    %v1088 = vadd.f32 %v1023, %v1072
    %v1089 = vadd.f32 %v1024, %v1073
    %v1090 = vadd.f32 %v1025, %v1074
    %v1091 = vadd.f32 %v1026, %v1075
    %v1092 = vadd.f32 %v1027, %v1076
    %v1093 = vadd.f32 %v1028, %v1077
    %v1094 = vadd.f32 %v1029, %v1078
    %v1095 = vadd.f32 %v1030, %v1079
    %v1096 = vadd.f32 %v1031, %v1080
    %v1097 = vadd.f32 %v1032, %v1081
    %v1098 = vadd.f32 %v1033, %v1082
    %v1099 = vadd.f32 %v1034, %v1083
    %v1100 = vadd.f32 %v1035, %v1084
    %v1101 = vlaneseq
    %v1102 = vshrl.u32 %v1101, 7
    %v1103 = vsub.s32 0, %v1102
    %v1104 = vrot.slane %v429, %v1103
    %1106 = vbcast.lane.b32.xlu0 %v1104, 256
    %v1107 = vpop.permute.xlu0 %1106
    %s1109 = sor.u32 256, 8
    %1110 = vbcast.lane.b32.xlu0 %v1104, %s1109
    %v1111 = vpop.permute.xlu0 %1110
    %s1113 = sor.u32 256, 16
    %1114 = vbcast.lane.b32.xlu0 %v1104, %s1113
    %v1115 = vpop.permute.xlu0 %1114
    %s1117 = sor.u32 256, 24
    %1118 = vbcast.lane.b32.xlu0 %v1104, %s1117
    %v1119 = vpop.permute.xlu0 %1118
    %s1121 = sor.u32 256, 32
    %1122 = vbcast.lane.b32.xlu0 %v1104, %s1121
    %v1123 = vpop.permute.xlu0 %1122
    %s1125 = sor.u32 256, 40
    %1126 = vbcast.lane.b32.xlu0 %v1104, %s1125
    %v1127 = vpop.permute.xlu0 %1126
    %s1129 = sor.u32 256, 48
    %1130 = vbcast.lane.b32.xlu0 %v1104, %s1129
    %v1131 = vpop.permute.xlu0 %1130
    %s1133 = sor.u32 256, 56
    %1134 = vbcast.lane.b32.xlu0 %v1104, %s1133
    %v1135 = vpop.permute.xlu0 %1134
    %v1136 = vadd.f32 %v1085, %v1107
    %v1137 = vadd.f32 %v1086, %v1111
    %v1138 = vadd.f32 %v1087, %v1115
    %v1139 = vadd.f32 %v1088, %v1119
    %v1140 = vadd.f32 %v1089, %v1123
    %v1141 = vadd.f32 %v1090, %v1127
    %v1142 = vadd.f32 %v1091, %v1131
    %v1143 = vadd.f32 %v1092, %v1135
    %v1144 = vadd.f32 %v1093, %v1107
    %v1145 = vadd.f32 %v1094, %v1111
    %v1146 = vadd.f32 %v1095, %v1115
    %v1147 = vadd.f32 %v1096, %v1119
    %v1148 = vadd.f32 %v1097, %v1123
    %v1149 = vadd.f32 %v1098, %v1127
    %v1150 = vadd.f32 %v1099, %v1131
    %v1151 = vadd.f32 %v1100, %v1135
    %v1152 = vmax.f32 %v1136, 0.0
    %v1153 = vmax.f32 %v1137, 0.0
    %v1154 = vmax.f32 %v1138, 0.0
    %v1155 = vmax.f32 %v1139, 0.0
    %v1156 = vmax.f32 %v1140, 0.0
    %v1157 = vmax.f32 %v1141, 0.0
    %v1158 = vmax.f32 %v1142, 0.0
    %v1159 = vmax.f32 %v1143, 0.0
    %v1160 = vmax.f32 %v1144, 0.0
    %v1161 = vmax.f32 %v1145, 0.0
    %v1162 = vmax.f32 %v1146, 0.0
    %v1163 = vmax.f32 %v1147, 0.0
    %v1164 = vmax.f32 %v1148, 0.0
    %v1165 = vmax.f32 %v1149, 0.0
    %v1166 = vmax.f32 %v1150, 0.0
    %v1167 = vmax.f32 %v1151, 0.0
    %1168 = vrot.lane.b32.xlu0 %v1152, 32
    %v1169 = vpop.permute.xlu0 %1168
    %v1170 = vsel %vm800, %v1169, %v1152
    %1171 = vrot.lane.b32.xlu0 %v1153, 32
    %v1172 = vpop.permute.xlu0 %1171
    %v1173 = vsel %vm800, %v1172, %v1153
    %1174 = vrot.lane.b32.xlu0 %v1154, 32
    %v1175 = vpop.permute.xlu0 %1174
    %v1176 = vsel %vm800, %v1175, %v1154
    %1177 = vrot.lane.b32.xlu0 %v1155, 32
    %v1178 = vpop.permute.xlu0 %1177
    %v1179 = vsel %vm800, %v1178, %v1155
    %1180 = vrot.lane.b32.xlu0 %v1156, 32
    %v1181 = vpop.permute.xlu0 %1180
    %v1182 = vsel %vm800, %v1181, %v1156
    %1183 = vrot.lane.b32.xlu0 %v1157, 32
    %v1184 = vpop.permute.xlu0 %1183
    %v1185 = vsel %vm800, %v1184, %v1157
    %1186 = vrot.lane.b32.xlu0 %v1158, 32
    %v1187 = vpop.permute.xlu0 %1186
    %v1188 = vsel %vm800, %v1187, %v1158
    %1189 = vrot.lane.b32.xlu0 %v1159, 32
    %v1190 = vpop.permute.xlu0 %1189
    %v1191 = vsel %vm800, %v1190, %v1159
    %1192 = vrot.lane.b32.xlu0 %v1160, 32
    %v1193 = vpop.permute.xlu0 %1192
    %v1194 = vsel %vm800, %v1193, %v1160
    %1195 = vrot.lane.b32.xlu0 %v1161, 32
    %v1196 = vpop.permute.xlu0 %1195
    %v1197 = vsel %vm800, %v1196, %v1161
    %1198 = vrot.lane.b32.xlu0 %v1162, 32
    %v1199 = vpop.permute.xlu0 %1198
    %v1200 = vsel %vm800, %v1199, %v1162
    %1201 = vrot.lane.b32.xlu0 %v1163, 32
    %v1202 = vpop.permute.xlu0 %1201
    %v1203 = vsel %vm800, %v1202, %v1163
    %1204 = vrot.lane.b32.xlu0 %v1164, 32
    %v1205 = vpop.permute.xlu0 %1204
    %v1206 = vsel %vm800, %v1205, %v1164
    %1207 = vrot.lane.b32.xlu0 %v1165, 32
    %v1208 = vpop.permute.xlu0 %1207
    %v1209 = vsel %vm800, %v1208, %v1165
    %1210 = vrot.lane.b32.xlu0 %v1166, 32
    %v1211 = vpop.permute.xlu0 %1210
    %v1212 = vsel %vm800, %v1211, %v1166
    %1213 = vrot.lane.b32.xlu0 %v1167, 32
    %v1214 = vpop.permute.xlu0 %1213
    %v1215 = vsel %vm800, %v1214, %v1167
    %1216 = vrot.lane.b32.xlu0 %v1170, 32
    %v1217 = vpop.permute.xlu0 %1216
    %1218 = vrot.lane.b32.xlu0 %v1173, 32
    %v1219 = vpop.permute.xlu0 %1218
    %1220 = vrot.lane.b32.xlu0 %v1176, 32
    %v1221 = vpop.permute.xlu0 %1220
    %1222 = vrot.lane.b32.xlu0 %v1179, 32
    %v1223 = vpop.permute.xlu0 %1222
    %1224 = vrot.lane.b32.xlu0 %v1182, 32
    %v1225 = vpop.permute.xlu0 %1224
    %1226 = vrot.lane.b32.xlu0 %v1185, 32
    %v1227 = vpop.permute.xlu0 %1226
    %1228 = vrot.lane.b32.xlu0 %v1188, 32
    %v1229 = vpop.permute.xlu0 %1228
    %1230 = vrot.lane.b32.xlu0 %v1191, 32
    %v1231 = vpop.permute.xlu0 %1230
    %1232 = vrot.lane.b32.xlu0 %v1194, 32
    %v1233 = vpop.permute.xlu0 %1232
    %1234 = vrot.lane.b32.xlu0 %v1197, 32
    %v1235 = vpop.permute.xlu0 %1234
    %1236 = vrot.lane.b32.xlu0 %v1200, 32
    %v1237 = vpop.permute.xlu0 %1236
    %1238 = vrot.lane.b32.xlu0 %v1203, 32
    %v1239 = vpop.permute.xlu0 %1238
    %1240 = vrot.lane.b32.xlu0 %v1206, 32
    %v1241 = vpop.permute.xlu0 %1240
    %1242 = vrot.lane.b32.xlu0 %v1209, 32
    %v1243 = vpop.permute.xlu0 %1242
    %1244 = vrot.lane.b32.xlu0 %v1212, 32
    %v1245 = vpop.permute.xlu0 %1244
    %1246 = vrot.lane.b32.xlu0 %v1215, 32
    %v1247 = vpop.permute.xlu0 %1246
    %v1248 = vsel %vm800, %v1217, %v1152
    %v1249 = vsel %vm800, %v1219, %v1153
    %v1250 = vsel %vm800, %v1221, %v1154
    %v1251 = vsel %vm800, %v1223, %v1155
    %v1252 = vsel %vm800, %v1225, %v1156
    %v1253 = vsel %vm800, %v1227, %v1157
    %v1254 = vsel %vm800, %v1229, %v1158
    %v1255 = vsel %vm800, %v1231, %v1159
    %v1256 = vsel %vm800, %v1233, %v1160
    %v1257 = vsel %vm800, %v1235, %v1161
    %v1258 = vsel %vm800, %v1237, %v1162
    %v1259 = vsel %vm800, %v1239, %v1163
    %v1260 = vsel %vm800, %v1241, %v1164
    %v1261 = vsel %vm800, %v1243, %v1165
    %v1262 = vsel %vm800, %v1245, %v1166
    %v1263 = vsel %vm800, %v1247, %v1167
    %1280 = vrot.lane.b32.xlu0 %v1248, 97
    %v1281 = vpop.permute.xlu0 %1280
    %1282 = vrot.lane.b32.xlu0 %v1249, 97
    %v1283 = vpop.permute.xlu0 %1282
    %1284 = vrot.lane.b32.xlu0 %v1250, 97
    %v1285 = vpop.permute.xlu0 %1284
    %1286 = vrot.lane.b32.xlu0 %v1251, 97
    %v1287 = vpop.permute.xlu0 %1286
    %1288 = vrot.lane.b32.xlu0 %v1252, 97
    %v1289 = vpop.permute.xlu0 %1288
    %1290 = vrot.lane.b32.xlu0 %v1253, 97
    %v1291 = vpop.permute.xlu0 %1290
    %1292 = vrot.lane.b32.xlu0 %v1254, 97
    %v1293 = vpop.permute.xlu0 %1292
    %1294 = vrot.lane.b32.xlu0 %v1255, 97
    %v1295 = vpop.permute.xlu0 %1294
    %1296 = vrot.lane.b32.xlu0 %v1256, 97
    %v1297 = vpop.permute.xlu0 %1296
    %1298 = vrot.lane.b32.xlu0 %v1257, 97
    %v1299 = vpop.permute.xlu0 %1298
    %1300 = vrot.lane.b32.xlu0 %v1258, 97
    %v1301 = vpop.permute.xlu0 %1300
    %1302 = vrot.lane.b32.xlu0 %v1259, 97
    %v1303 = vpop.permute.xlu0 %1302
    %1304 = vrot.lane.b32.xlu0 %v1260, 97
    %v1305 = vpop.permute.xlu0 %1304
    %1306 = vrot.lane.b32.xlu0 %v1261, 97
    %v1307 = vpop.permute.xlu0 %1306
    %1308 = vrot.lane.b32.xlu0 %v1262, 97
    %v1309 = vpop.permute.xlu0 %1308
    %1310 = vrot.lane.b32.xlu0 %v1263, 97
    %v1311 = vpop.permute.xlu0 %1310
    %v1328 = vsel %vm799, 0.0, %v1281
    %v1329 = vsel %vm799, 0.0, %v1283
    %v1330 = vsel %vm799, 0.0, %v1285
    %v1331 = vsel %vm799, 0.0, %v1287
    %v1332 = vsel %vm799, 0.0, %v1289
    %v1333 = vsel %vm799, 0.0, %v1291
    %v1334 = vsel %vm799, 0.0, %v1293
    %v1335 = vsel %vm799, 0.0, %v1295
    %v1336 = vsel %vm799, 0.0, %v1297
    %v1337 = vsel %vm799, 0.0, %v1299
    %v1338 = vsel %vm799, 0.0, %v1301
    %v1339 = vsel %vm799, 0.0, %v1303
    %v1340 = vsel %vm799, 0.0, %v1305
    %v1341 = vsel %vm799, 0.0, %v1307
    %v1342 = vsel %vm799, 0.0, %v1309
    %v1343 = vsel %vm799, 0.0, %v1311
    %1344 = vrot.lane.b32.xlu0 %v1248, 127
    %v1345 = vpop.permute.xlu0 %1344
    %1346 = vrot.lane.b32.xlu0 %v1249, 127
    %v1347 = vpop.permute.xlu0 %1346
    %1348 = vrot.lane.b32.xlu0 %v1250, 127
    %v1349 = vpop.permute.xlu0 %1348
    %1350 = vrot.lane.b32.xlu0 %v1251, 127
    %v1351 = vpop.permute.xlu0 %1350
    %1352 = vrot.lane.b32.xlu0 %v1252, 127
    %v1353 = vpop.permute.xlu0 %1352
    %1354 = vrot.lane.b32.xlu0 %v1253, 127
    %v1355 = vpop.permute.xlu0 %1354
    %1356 = vrot.lane.b32.xlu0 %v1254, 127
    %v1357 = vpop.permute.xlu0 %1356
    %1358 = vrot.lane.b32.xlu0 %v1255, 127
    %v1359 = vpop.permute.xlu0 %1358
    %1360 = vrot.lane.b32.xlu0 %v1256, 127
    %v1361 = vpop.permute.xlu0 %1360
    %1362 = vrot.lane.b32.xlu0 %v1257, 127
    %v1363 = vpop.permute.xlu0 %1362
    %1364 = vrot.lane.b32.xlu0 %v1258, 127
    %v1365 = vpop.permute.xlu0 %1364
    %1366 = vrot.lane.b32.xlu0 %v1259, 127
    %v1367 = vpop.permute.xlu0 %1366
    %1368 = vrot.lane.b32.xlu0 %v1260, 127
    %v1369 = vpop.permute.xlu0 %1368
    %1370 = vrot.lane.b32.xlu0 %v1261, 127
    %v1371 = vpop.permute.xlu0 %1370
    %1372 = vrot.lane.b32.xlu0 %v1262, 127
    %v1373 = vpop.permute.xlu0 %1372
    %1374 = vrot.lane.b32.xlu0 %v1263, 127
    %v1375 = vpop.permute.xlu0 %1374
    %v1392 = vsel %vm812, 0.0, %v1345
    %v1393 = vsel %vm812, 0.0, %v1347
    %v1394 = vsel %vm812, 0.0, %v1349
    %v1395 = vsel %vm812, 0.0, %v1351
    %v1396 = vsel %vm812, 0.0, %v1353
    %v1397 = vsel %vm812, 0.0, %v1355
    %v1398 = vsel %vm812, 0.0, %v1357
    %v1399 = vsel %vm812, 0.0, %v1359
    %v1400 = vsel %vm812, 0.0, %v1361
    %v1401 = vsel %vm812, 0.0, %v1363
    %v1402 = vsel %vm812, 0.0, %v1365
    %v1403 = vsel %vm812, 0.0, %v1367
    %v1404 = vsel %vm812, 0.0, %v1369
    %v1405 = vsel %vm812, 0.0, %v1371
    %v1406 = vsel %vm812, 0.0, %v1373
    %v1407 = vsel %vm812, 0.0, %v1375
    %v1408 = vlaneseq
    %v1409 = vshrl.u32 %v1408, 7
    %v1410 = vsub.s32 0, %v1409
    %v1411 = vrot.slane %v430, %v1410
    %1413 = vbcast.lane.b32.xlu0 %v1411, 256
    %v1414 = vpop.permute.xlu0 %1413
    %s1416 = sor.u32 256, 8
    %1417 = vbcast.lane.b32.xlu0 %v1411, %s1416
    %v1418 = vpop.permute.xlu0 %1417
    %s1420 = sor.u32 256, 16
    %1421 = vbcast.lane.b32.xlu0 %v1411, %s1420
    %v1422 = vpop.permute.xlu0 %1421
    %s1424 = sor.u32 256, 24
    %1425 = vbcast.lane.b32.xlu0 %v1411, %s1424
    %v1426 = vpop.permute.xlu0 %1425
    %s1428 = sor.u32 256, 32
    %1429 = vbcast.lane.b32.xlu0 %v1411, %s1428
    %v1430 = vpop.permute.xlu0 %1429
    %s1432 = sor.u32 256, 40
    %1433 = vbcast.lane.b32.xlu0 %v1411, %s1432
    %v1434 = vpop.permute.xlu0 %1433
    %s1436 = sor.u32 256, 48
    %1437 = vbcast.lane.b32.xlu0 %v1411, %s1436
    %v1438 = vpop.permute.xlu0 %1437
    %s1440 = sor.u32 256, 56
    %1441 = vbcast.lane.b32.xlu0 %v1411, %s1440
    %v1442 = vpop.permute.xlu0 %1441
    %v1443 = vlaneseq
    %v1444 = vshrl.u32 %v1443, 7
    %v1445 = vsub.s32 1, %v1444
    %v1446 = vrot.slane %v430, %v1445
    %1448 = vbcast.lane.b32.xlu0 %v1446, 256
    %v1449 = vpop.permute.xlu0 %1448
    %s1451 = sor.u32 256, 8
    %1452 = vbcast.lane.b32.xlu0 %v1446, %s1451
    %v1453 = vpop.permute.xlu0 %1452
    %s1455 = sor.u32 256, 16
    %1456 = vbcast.lane.b32.xlu0 %v1446, %s1455
    %v1457 = vpop.permute.xlu0 %1456
    %s1459 = sor.u32 256, 24
    %1460 = vbcast.lane.b32.xlu0 %v1446, %s1459
    %v1461 = vpop.permute.xlu0 %1460
    %s1463 = sor.u32 256, 32
    %1464 = vbcast.lane.b32.xlu0 %v1446, %s1463
    %v1465 = vpop.permute.xlu0 %1464
    %s1467 = sor.u32 256, 40
    %1468 = vbcast.lane.b32.xlu0 %v1446, %s1467
    %v1469 = vpop.permute.xlu0 %1468
    %s1471 = sor.u32 256, 48
    %1472 = vbcast.lane.b32.xlu0 %v1446, %s1471
    %v1473 = vpop.permute.xlu0 %1472
    %s1475 = sor.u32 256, 56
    %1476 = vbcast.lane.b32.xlu0 %v1446, %s1475
    %v1477 = vpop.permute.xlu0 %1476
    %v1478 = vlaneseq
    %v1479 = vshrl.u32 %v1478, 7
    %v1480 = vsub.s32 2, %v1479
    %v1481 = vrot.slane %v430, %v1480
    %1483 = vbcast.lane.b32.xlu0 %v1481, 256
    %v1484 = vpop.permute.xlu0 %1483
    %s1486 = sor.u32 256, 8
    %1487 = vbcast.lane.b32.xlu0 %v1481, %s1486
    %v1488 = vpop.permute.xlu0 %1487
    %s1490 = sor.u32 256, 16
    %1491 = vbcast.lane.b32.xlu0 %v1481, %s1490
    %v1492 = vpop.permute.xlu0 %1491
    %s1494 = sor.u32 256, 24
    %1495 = vbcast.lane.b32.xlu0 %v1481, %s1494
    %v1496 = vpop.permute.xlu0 %1495
    %s1498 = sor.u32 256, 32
    %1499 = vbcast.lane.b32.xlu0 %v1481, %s1498
    %v1500 = vpop.permute.xlu0 %1499
    %s1502 = sor.u32 256, 40
    %1503 = vbcast.lane.b32.xlu0 %v1481, %s1502
    %v1504 = vpop.permute.xlu0 %1503
    %s1506 = sor.u32 256, 48
    %1507 = vbcast.lane.b32.xlu0 %v1481, %s1506
    %v1508 = vpop.permute.xlu0 %1507
    %s1510 = sor.u32 256, 56
    %1511 = vbcast.lane.b32.xlu0 %v1481, %s1510
    %v1512 = vpop.permute.xlu0 %1511
    %v1513 = vmul.f32 %v1328, %v1414
    %v1514 = vmul.f32 %v1329, %v1418
    %v1515 = vmul.f32 %v1330, %v1422
    %v1516 = vmul.f32 %v1331, %v1426
    %v1517 = vmul.f32 %v1332, %v1430
    %v1518 = vmul.f32 %v1333, %v1434
    %v1519 = vmul.f32 %v1334, %v1438
    %v1520 = vmul.f32 %v1335, %v1442
    %v1521 = vmul.f32 %v1336, %v1414
    %v1522 = vmul.f32 %v1337, %v1418
    %v1523 = vmul.f32 %v1338, %v1422
    %v1524 = vmul.f32 %v1339, %v1426
    %v1525 = vmul.f32 %v1340, %v1430
    %v1526 = vmul.f32 %v1341, %v1434
    %v1527 = vmul.f32 %v1342, %v1438
    %v1528 = vmul.f32 %v1343, %v1442
    %v1529 = vsel %vm344, %v1513, 0.0
    %v1530 = vsel %vm344, %v1514, 0.0
    %v1531 = vadd.f32 %v1529, %v1530
    %v1532 = vsel %vm344, %v1515, 0.0
    %v1533 = vadd.f32 %v1531, %v1532
    %v1534 = vsel %vm344, %v1516, 0.0
    %v1535 = vadd.f32 %v1533, %v1534
    %v1536 = vsel %vm344, %v1517, 0.0
    %v1537 = vadd.f32 %v1535, %v1536
    %v1538 = vsel %vm344, %v1518, 0.0
    %v1539 = vadd.f32 %v1537, %v1538
    %v1540 = vsel %vm344, %v1519, 0.0
    %v1541 = vadd.f32 %v1539, %v1540
    %v1542 = vsel %vm344, %v1520, 0.0
    %v1543 = vadd.f32 %v1541, %v1542
    %v1544 = vrot.slane %v1543, 4
    %v1545 = vadd.f32 %v1543, %v1544
    %v1546 = vrot.slane %v1545, 2
    %v1547 = vadd.f32 %v1545, %v1546
    %v1548 = vrot.slane %v1547, 1
    %v1549 = vadd.f32 %v1547, %v1548
    %v1550 = vsel %vm344, %v1521, 0.0
    %v1551 = vsel %vm344, %v1522, 0.0
    %v1552 = vadd.f32 %v1550, %v1551
    %v1553 = vsel %vm344, %v1523, 0.0
    %v1554 = vadd.f32 %v1552, %v1553
    %v1555 = vsel %vm344, %v1524, 0.0
    %v1556 = vadd.f32 %v1554, %v1555
    %v1557 = vsel %vm344, %v1525, 0.0
    %v1558 = vadd.f32 %v1556, %v1557
    %v1559 = vsel %vm344, %v1526, 0.0
    %v1560 = vadd.f32 %v1558, %v1559
    %v1561 = vsel %vm344, %v1527, 0.0
    %v1562 = vadd.f32 %v1560, %v1561
    %v1563 = vsel %vm344, %v1528, 0.0
    %v1564 = vadd.f32 %v1562, %v1563
    %v1565 = vrot.slane %v1564, 4
    %v1566 = vadd.f32 %v1564, %v1565
    %v1567 = vrot.slane %v1566, 2
    %v1568 = vadd.f32 %v1566, %v1567
    %v1569 = vrot.slane %v1568, 1
    %v1570 = vadd.f32 %v1568, %v1569
    %v1571 = vmul.f32 %v1152, %v1449
    %v1572 = vmul.f32 %v1153, %v1453
    %v1573 = vmul.f32 %v1154, %v1457
    %v1574 = vmul.f32 %v1155, %v1461
    %v1575 = vmul.f32 %v1156, %v1465
    %v1576 = vmul.f32 %v1157, %v1469
    %v1577 = vmul.f32 %v1158, %v1473
    %v1578 = vmul.f32 %v1159, %v1477
    %v1579 = vmul.f32 %v1160, %v1449
    %v1580 = vmul.f32 %v1161, %v1453
    %v1581 = vmul.f32 %v1162, %v1457
    %v1582 = vmul.f32 %v1163, %v1461
    %v1583 = vmul.f32 %v1164, %v1465
    %v1584 = vmul.f32 %v1165, %v1469
    %v1585 = vmul.f32 %v1166, %v1473
    %v1586 = vmul.f32 %v1167, %v1477
    %v1587 = vsel %vm344, %v1571, 0.0
    %v1588 = vsel %vm344, %v1572, 0.0
    %v1589 = vadd.f32 %v1587, %v1588
    %v1590 = vsel %vm344, %v1573, 0.0
    %v1591 = vadd.f32 %v1589, %v1590
    %v1592 = vsel %vm344, %v1574, 0.0
    %v1593 = vadd.f32 %v1591, %v1592
    %v1594 = vsel %vm344, %v1575, 0.0
    %v1595 = vadd.f32 %v1593, %v1594
    %v1596 = vsel %vm344, %v1576, 0.0
    %v1597 = vadd.f32 %v1595, %v1596
    %v1598 = vsel %vm344, %v1577, 0.0
    %v1599 = vadd.f32 %v1597, %v1598
    %v1600 = vsel %vm344, %v1578, 0.0
    %v1601 = vadd.f32 %v1599, %v1600
    %v1602 = vrot.slane %v1601, 4
    %v1603 = vadd.f32 %v1601, %v1602
    %v1604 = vrot.slane %v1603, 2
    %v1605 = vadd.f32 %v1603, %v1604
    %v1606 = vrot.slane %v1605, 1
    %v1607 = vadd.f32 %v1605, %v1606
    %v1608 = vsel %vm344, %v1579, 0.0
    %v1609 = vsel %vm344, %v1580, 0.0
    %v1610 = vadd.f32 %v1608, %v1609
    %v1611 = vsel %vm344, %v1581, 0.0
    %v1612 = vadd.f32 %v1610, %v1611
    %v1613 = vsel %vm344, %v1582, 0.0
    %v1614 = vadd.f32 %v1612, %v1613
    %v1615 = vsel %vm344, %v1583, 0.0
    %v1616 = vadd.f32 %v1614, %v1615
    %v1617 = vsel %vm344, %v1584, 0.0
    %v1618 = vadd.f32 %v1616, %v1617
    %v1619 = vsel %vm344, %v1585, 0.0
    %v1620 = vadd.f32 %v1618, %v1619
    %v1621 = vsel %vm344, %v1586, 0.0
    %v1622 = vadd.f32 %v1620, %v1621
    %v1623 = vrot.slane %v1622, 4
    %v1624 = vadd.f32 %v1622, %v1623
    %v1625 = vrot.slane %v1624, 2
    %v1626 = vadd.f32 %v1624, %v1625
    %v1627 = vrot.slane %v1626, 1
    %v1628 = vadd.f32 %v1626, %v1627
    %v1629 = vadd.f32 %v1549, %v1607
    %v1630 = vadd.f32 %v1570, %v1628
    %v1631 = vmul.f32 %v1392, %v1484
    %v1632 = vmul.f32 %v1393, %v1488
    %v1633 = vmul.f32 %v1394, %v1492
    %v1634 = vmul.f32 %v1395, %v1496
    %v1635 = vmul.f32 %v1396, %v1500
    %v1636 = vmul.f32 %v1397, %v1504
    %v1637 = vmul.f32 %v1398, %v1508
    %v1638 = vmul.f32 %v1399, %v1512
    %v1639 = vmul.f32 %v1400, %v1484
    %v1640 = vmul.f32 %v1401, %v1488
    %v1641 = vmul.f32 %v1402, %v1492
    %v1642 = vmul.f32 %v1403, %v1496
    %v1643 = vmul.f32 %v1404, %v1500
    %v1644 = vmul.f32 %v1405, %v1504
    %v1645 = vmul.f32 %v1406, %v1508
    %v1646 = vmul.f32 %v1407, %v1512
    %v1647 = vsel %vm344, %v1631, 0.0
    %v1648 = vsel %vm344, %v1632, 0.0
    %v1649 = vadd.f32 %v1647, %v1648
    %v1650 = vsel %vm344, %v1633, 0.0
    %v1651 = vadd.f32 %v1649, %v1650
    %v1652 = vsel %vm344, %v1634, 0.0
    %v1653 = vadd.f32 %v1651, %v1652
    %v1654 = vsel %vm344, %v1635, 0.0
    %v1655 = vadd.f32 %v1653, %v1654
    %v1656 = vsel %vm344, %v1636, 0.0
    %v1657 = vadd.f32 %v1655, %v1656
    %v1658 = vsel %vm344, %v1637, 0.0
    %v1659 = vadd.f32 %v1657, %v1658
    %v1660 = vsel %vm344, %v1638, 0.0
    %v1661 = vadd.f32 %v1659, %v1660
    %v1662 = vrot.slane %v1661, 4
    %v1663 = vadd.f32 %v1661, %v1662
    %v1664 = vrot.slane %v1663, 2
    %v1665 = vadd.f32 %v1663, %v1664
    %v1666 = vrot.slane %v1665, 1
    %v1667 = vadd.f32 %v1665, %v1666
    %v1668 = vsel %vm344, %v1639, 0.0
    %v1669 = vsel %vm344, %v1640, 0.0
    %v1670 = vadd.f32 %v1668, %v1669
    %v1671 = vsel %vm344, %v1641, 0.0
    %v1672 = vadd.f32 %v1670, %v1671
    %v1673 = vsel %vm344, %v1642, 0.0
    %v1674 = vadd.f32 %v1672, %v1673
    %v1675 = vsel %vm344, %v1643, 0.0
    %v1676 = vadd.f32 %v1674, %v1675
    %v1677 = vsel %vm344, %v1644, 0.0
    %v1678 = vadd.f32 %v1676, %v1677
    %v1679 = vsel %vm344, %v1645, 0.0
    %v1680 = vadd.f32 %v1678, %v1679
    %v1681 = vsel %vm344, %v1646, 0.0
    %v1682 = vadd.f32 %v1680, %v1681
    %v1683 = vrot.slane %v1682, 4
    %v1684 = vadd.f32 %v1682, %v1683
    %v1685 = vrot.slane %v1684, 2
    %v1686 = vadd.f32 %v1684, %v1685
    %v1687 = vrot.slane %v1686, 1
    %v1688 = vadd.f32 %v1686, %v1687
    %v1689 = vadd.f32 %v1629, %v1667
    %v1690 = vadd.f32 %v1630, %v1688
    %v1691 = vstv %s441
    %v1692 = vadd.f32 %v1689, %v1691
    %v1693 = vadd.f32 %v1690, %v1691
    %v1696 = vsel %vm766, %v1693, %v1692
    %v1698 = vadd.f32 %v798, %v1696
    %v1699 = vsel %vm770, %v1698, 0.0
    %1700 = vadd.xlane.f32.xlu0 %v1699
    %v1701 = vpop.xlane.xlu0 %1700
    %v1702 = vmul.f32 %v1701, %v774
    %v1703 = vsub.f32 %v1698, %v1702
    %v1704 = vmul.f32 %v1703, %v1703
    %v1705 = vsel %vm770, %v1704, 0.0
    %1706 = vadd.xlane.f32.xlu0 %v1705
    %v1707 = vpop.xlane.xlu0 %1706
    %v1708 = vmul.f32 %v1707, %v774
    %v1709 = vadd.f32 %v1708, 1e-05
    %v1710 = vrsqrt.pop %v1709
    %v1711 = vmul.f32 %v1703, %v1710
    %v1713 = vlaneseq
    %v1714 = vshrl.u32 %v1713, 7
    %v1715 = vsub.s32 0, %v1714
    %v1716 = vrot.slane %v431, %v1715
    %v1718 = vmul.f32 %v1711, %v1716
    %v1720 = vlaneseq
    %v1721 = vshrl.u32 %v1720, 7
    %v1722 = vsub.s32 0, %v1721
    %v1723 = vrot.slane %v432, %v1722
    %v1725 = vadd.f32 %v1718, %v1723
    %1726 = vst.msk [vmem:[#allocation5] sm:$0x3] %vm770, %v1725
    %v1727 = vld [vmem:[%s3 + $0x1] sm:$0x1]
    %v1728 = vld [vmem:[%s4] sm:$0xff]
    %v1729 = vld [vmem:[%s4 + $0x8] sm:$0xff]
    %v1730 = vld [vmem:[%s5] sm:$0x1]
    %v1732 = vsel %vm88, %v1727, 0
    %1734 = vmatprep.subr.mxu0 0.0
    %1735 = vmatpush1.msra.mxu0 %v1728
    %1736 = vmatprep.subr.mxu0 0.0
    %1737 = vmatpush1.msra.mxu0 %v1729
    %1738 = vmatprep.subr.mxu0 0.0
    %1739 = vmatpush1.msra.mxu0 0.0
    %1740 = vmatprep.subr.mxu0 0.0
    %1741 = vmatpush1.msra.mxu0 0.0
    %1742 = vmatprep.subr.mxu0 0.0
    %1743 = vmatpush1.msra.mxu0 0.0
    %1744 = vmatprep.subr.mxu0 0.0
    %1745 = vmatpush1.msra.mxu0 0.0
    %1746 = vmatprep.subr.mxu0 0.0
    %1747 = vmatpush1.msra.mxu0 0.0
    %1748 = vmatprep.subr.mxu0 0.0
    %1749 = vmatpush1.msra.mxu0 0.0
    %1750 = vmatprep.subr.mxu0 0.0
    %1751 = vmatpush1.msra.mxu0 0.0
    %1752 = vmatprep.subr.mxu0 0.0
    %1753 = vmatpush1.msra.mxu0 0.0
    %1754 = vmatprep.subr.mxu0 0.0
    %1755 = vmatpush1.msra.mxu0 0.0
    %1756 = vmatprep.subr.mxu0 0.0
    %1757 = vmatpush1.msra.mxu0 0.0
    %1758 = vmatprep.subr.mxu0 0.0
    %1759 = vmatpush1.msra.mxu0 0.0
    %1760 = vmatprep.subr.mxu0 0.0
    %1761 = vmatpush1.msra.mxu0 0.0
    %1762 = vmatprep.subr.mxu0 0.0
    %1763 = vmatpush1.msra.mxu0 0.0
    %1764 = vmatprep.subr.mxu0 0.0
    %1765 = vmatpush1.msra.mxu0 0.0
    %1766 = vmatprep.subr.mxu0 0.0
    %1767 = vmatpush1.msra.mxu0 0.0
    %1768 = vmatprep.subr.mxu0 0.0
    %1769 = vmatpush1.msra.mxu0 0.0
    %1770 = vmatprep.subr.mxu0 0.0
    %1771 = vmatpush1.msra.mxu0 0.0
    %1772 = vmatprep.subr.mxu0 0.0
    %1773 = vmatpush1.msra.mxu0 0.0
    %1774 = vmatprep.subr.mxu0 0.0
    %1775 = vmatpush1.msra.mxu0 0.0
    %1776 = vmatprep.subr.mxu0 0.0
    %1777 = vmatpush1.msra.mxu0 0.0
    %1778 = vmatprep.subr.mxu0 0.0
    %1779 = vmatpush1.msra.mxu0 0.0
    %1780 = vmatprep.subr.mxu0 0.0
    %1781 = vmatpush1.msra.mxu0 0.0
    %1782 = vmatprep.subr.mxu0 0.0
    %1783 = vmatpush1.msra.mxu0 0.0
    %1784 = vmatprep.subr.mxu0 0.0
    %1785 = vmatpush1.msra.mxu0 0.0
    %1786 = vmatprep.subr.mxu0 0.0
    %1787 = vmatpush1.msra.mxu0 0.0
    %1788 = vmatprep.subr.mxu0 0.0
    %1789 = vmatpush1.msra.mxu0 0.0
    %1790 = vmatprep.subr.mxu0 0.0
    %1791 = vmatpush1.msra.mxu0 0.0
    %1792 = vmatprep.subr.mxu0 0.0
    %1793 = vmatpush1.msra.mxu0 0.0
    %1794 = vmatprep.subr.mxu0 0.0
    %1795 = vmatpush1.msra.mxu0 0.0
    %1796 = vmatprep.subr.mxu0 0.0
    %1797 = vmatpush1.msra.mxu0 0.0
    %1798 = vmatprep.mubr.f32.mxu0 0.0
    %1799 = vmatmul.mubr.f32.gmra.mrb[0].mxu0 %v1732
    %v1800 = vpop.f32.mrb[0].mxu0
    %v1801 = vadd.f32 %v1730, %v1800
    %v1802 = vpop.f32.mrb[0].mxu0
    %1803 = vdwg.mxu0
    %vm1804 = vcmp.gt.f32.partialorder %v1801, 20.0
    %v1805 = vmin.f32 %v1801, 20.0
    %v1806 = vmul.f32 %v1805, 1.442695
    %v1807 = vpow.pop %v1806
    %v1808 = vadd.f32 %v1807, 1.0
    %v1809 = vlog2.pop %v1808
    %v1810 = vmul.f32 %v1809, 0.6931472
    %v1811 = vmul.f32 -0.5, %v1807
    %v1812 = vadd.f32 %v1811, 1.0
    %v1813 = vmul.f32 %v1812, %v1807
    %v1814 = vand.u32 2147483647, %v1807
    %vm1815 = vcmp.lt.f32.partialorder %v1814, 0.0004427343
    %v1816 = vsel %vm1815, %v1813, %v1810
    %v1817 = vsel %vm1804, %v1801, %v1816
    %v1818 = vtanh.pop %v1817
    %v1819 = vmul.f32 %v1801, %v1818
    %v1820 = vld [vmem:[%s6] sm:$0xff]
    %v1821 = vld [vmem:[%s6 + $0x8] sm:$0xff]
    %v1822 = vld [vmem:[%s6 + $0x10] sm:$0xff]
    %v1823 = vld [vmem:[%s6 + $0x18] sm:$0xff]
    %v1824 = vld [vmem:[%s6 + $0x20] sm:$0xff]
    %v1825 = vld [vmem:[%s6 + $0x28] sm:$0xff]
    %v1826 = vld [vmem:[%s6 + $0x30] sm:$0xff]
    %v1827 = vld [vmem:[%s6 + $0x38] sm:$0xff]
    %v1828 = vld [vmem:[%s7] sm:$0x1]
    %v1830 = vsel %vm187, %v1819, 0
    %1832 = vmatprep.subr.mxu0 0.0
    %1833 = vmatpush1.msra.mxu0 %v1820
    %1834 = vmatprep.subr.mxu0 0.0
    %1835 = vmatpush1.msra.mxu0 %v1821
    %1836 = vmatprep.subr.mxu0 0.0
    %1837 = vmatpush1.msra.mxu0 %v1822
    %1838 = vmatprep.subr.mxu0 0.0
    %1839 = vmatpush1.msra.mxu0 %v1823
    %1840 = vmatprep.subr.mxu0 0.0
    %1841 = vmatpush1.msra.mxu0 %v1824
    %1842 = vmatprep.subr.mxu0 0.0
    %1843 = vmatpush1.msra.mxu0 %v1825
    %1844 = vmatprep.subr.mxu0 0.0
    %1845 = vmatpush1.msra.mxu0 %v1826
    %1846 = vmatprep.subr.mxu0 0.0
    %1847 = vmatpush1.msra.mxu0 %v1827
    %1848 = vmatprep.subr.mxu0 0.0
    %1849 = vmatpush1.msra.mxu0 0.0
    %1850 = vmatprep.subr.mxu0 0.0
    %1851 = vmatpush1.msra.mxu0 0.0
    %1852 = vmatprep.subr.mxu0 0.0
    %1853 = vmatpush1.msra.mxu0 0.0
    %1854 = vmatprep.subr.mxu0 0.0
    %1855 = vmatpush1.msra.mxu0 0.0
    %1856 = vmatprep.subr.mxu0 0.0
    %1857 = vmatpush1.msra.mxu0 0.0
    %1858 = vmatprep.subr.mxu0 0.0
    %1859 = vmatpush1.msra.mxu0 0.0
    %1860 = vmatprep.subr.mxu0 0.0
    %1861 = vmatpush1.msra.mxu0 0.0
    %1862 = vmatprep.subr.mxu0 0.0
    %1863 = vmatpush1.msra.mxu0 0.0
    %1864 = vmatprep.subr.mxu0 0.0
    %1865 = vmatpush1.msra.mxu0 0.0
    %1866 = vmatprep.subr.mxu0 0.0
    %1867 = vmatpush1.msra.mxu0 0.0
    %1868 = vmatprep.subr.mxu0 0.0
    %1869 = vmatpush1.msra.mxu0 0.0
    %1870 = vmatprep.subr.mxu0 0.0
    %1871 = vmatpush1.msra.mxu0 0.0
    %1872 = vmatprep.subr.mxu0 0.0
    %1873 = vmatpush1.msra.mxu0 0.0
    %1874 = vmatprep.subr.mxu0 0.0
    %1875 = vmatpush1.msra.mxu0 0.0
    %1876 = vmatprep.subr.mxu0 0.0
    %1877 = vmatpush1.msra.mxu0 0.0
    %1878 = vmatprep.subr.mxu0 0.0
    %1879 = vmatpush1.msra.mxu0 0.0
    %1880 = vmatprep.subr.mxu0 0.0
    %1881 = vmatpush1.msra.mxu0 0.0
    %1882 = vmatprep.subr.mxu0 0.0
    %1883 = vmatpush1.msra.mxu0 0.0
    %1884 = vmatprep.subr.mxu0 0.0
    %1885 = vmatpush1.msra.mxu0 0.0
    %1886 = vmatprep.subr.mxu0 0.0
    %1887 = vmatpush1.msra.mxu0 0.0
    %1888 = vmatprep.subr.mxu0 0.0
    %1889 = vmatpush1.msra.mxu0 0.0
    %1890 = vmatprep.subr.mxu0 0.0
    %1891 = vmatpush1.msra.mxu0 0.0
    %1892 = vmatprep.subr.mxu0 0.0
    %1893 = vmatpush1.msra.mxu0 0.0
    %1894 = vmatprep.subr.mxu0 0.0
    %1895 = vmatpush1.msra.mxu0 0.0
    %1896 = vmatprep.mubr.f32.mxu0 0.0
    %1897 = vmatmul.mubr.f32.gmra.mrb[0].mxu0 %v1830
    %v1898 = vpop.f32.mrb[0].mxu0
    %v1899 = vadd.f32 %v1828, %v1898
    %v1900 = vpop.f32.mrb[0].mxu0
    %1901 = vdwg.mxu0
    %v1902 = vld [vmem:[%s8] sm:$0xff]
    %v1903 = vld [vmem:[%s8 + $0x8] sm:$0xff]
    %v1904 = vld [vmem:[%s8 + $0x10] sm:$0xff]
    %v1905 = vld [vmem:[%s8 + $0x18] sm:$0xff]
    %v1906 = vld [vmem:[%s9] sm:$0xff]
    %v1907 = vld [vmem:[%s9 + $0x8] sm:$0xff]
    %v1909 = vsel %vm88, %v1899, 0
    %1911 = vmatprep.subr.mxu0 0.0
    %1912 = vmatpush1.msra.mxu0 %v1906
    %1913 = vmatprep.subr.mxu0 0.0
    %1914 = vmatpush1.msra.mxu0 %v1907
    %1915 = vmatprep.subr.mxu0 0.0
    %1916 = vmatpush1.msra.mxu0 0.0
    %1917 = vmatprep.subr.mxu0 0.0
    %1918 = vmatpush1.msra.mxu0 0.0
    %1919 = vmatprep.subr.mxu0 0.0
    %1920 = vmatpush1.msra.mxu0 0.0
    %1921 = vmatprep.subr.mxu0 0.0
    %1922 = vmatpush1.msra.mxu0 0.0
    %1923 = vmatprep.subr.mxu0 0.0
    %1924 = vmatpush1.msra.mxu0 0.0
    %1925 = vmatprep.subr.mxu0 0.0
    %1926 = vmatpush1.msra.mxu0 0.0
    %1927 = vmatprep.subr.mxu0 0.0
    %1928 = vmatpush1.msra.mxu0 0.0
    %1929 = vmatprep.subr.mxu0 0.0
    %1930 = vmatpush1.msra.mxu0 0.0
    %1931 = vmatprep.subr.mxu0 0.0
    %1932 = vmatpush1.msra.mxu0 0.0
    %1933 = vmatprep.subr.mxu0 0.0
    %1934 = vmatpush1.msra.mxu0 0.0
    %1935 = vmatprep.subr.mxu0 0.0
    %1936 = vmatpush1.msra.mxu0 0.0
    %1937 = vmatprep.subr.mxu0 0.0
    %1938 = vmatpush1.msra.mxu0 0.0
    %1939 = vmatprep.subr.mxu0 0.0
    %1940 = vmatpush1.msra.mxu0 0.0
    %1941 = vmatprep.subr.mxu0 0.0
    %1942 = vmatpush1.msra.mxu0 0.0
    %1943 = vmatprep.subr.mxu0 0.0
    %1944 = vmatpush1.msra.mxu0 0.0
    %1945 = vmatprep.subr.mxu0 0.0
    %1946 = vmatpush1.msra.mxu0 0.0
    %1947 = vmatprep.subr.mxu0 0.0
    %1948 = vmatpush1.msra.mxu0 0.0
    %1949 = vmatprep.subr.mxu0 0.0
    %1950 = vmatpush1.msra.mxu0 0.0
    %1951 = vmatprep.subr.mxu0 0.0
    %1952 = vmatpush1.msra.mxu0 0.0
    %1953 = vmatprep.subr.mxu0 0.0
    %1954 = vmatpush1.msra.mxu0 0.0
    %1955 = vmatprep.subr.mxu0 0.0
    %1956 = vmatpush1.msra.mxu0 0.0
    %1957 = vmatprep.subr.mxu0 0.0
    %1958 = vmatpush1.msra.mxu0 0.0
    %1959 = vmatprep.subr.mxu0 0.0
    %1960 = vmatpush1.msra.mxu0 0.0
    %1961 = vmatprep.subr.mxu0 0.0
    %1962 = vmatpush1.msra.mxu0 0.0
    %1963 = vmatprep.subr.mxu0 0.0
    %1964 = vmatpush1.msra.mxu0 0.0
    %1965 = vmatprep.subr.mxu0 0.0
    %1966 = vmatpush1.msra.mxu0 0.0
    %1967 = vmatprep.subr.mxu0 0.0
    %1968 = vmatpush1.msra.mxu0 0.0
    %1969 = vmatprep.subr.mxu0 0.0
    %1970 = vmatpush1.msra.mxu0 0.0
    %1971 = vmatprep.subr.mxu0 0.0
    %1972 = vmatpush1.msra.mxu0 0.0
    %1973 = vmatprep.subr.mxu0 0.0
    %1974 = vmatpush1.msra.mxu0 0.0
    %1975 = vmatprep.mubr.f32.mxu0 0.0
    %1976 = vmatmul.mubr.f32.gmra.mrb[0].mxu0 %v1909
    %v1977 = vpop.f32.mrb[0].mxu0
    %v1978 = vadd.f32 0.0, %v1977
    %v1979 = vpop.f32.mrb[0].mxu0
    %1980 = vdwg.mxu0
    %v1981 = vlaneseq
    %v1982 = vshrl.u32 %v1981, 7
    %v1983 = vsub.s32 0, %v1982
    %v1984 = vrot.slane %v1978, %v1983
    %1985 = vmatprep.subr.mxu0 0.0
    %1986 = vmatpush1.msra.mxu0 %v1902
    %1987 = vmatprep.subr.mxu0 0.0
    %1988 = vmatpush1.msra.mxu0 %v1903
    %1989 = vmatprep.subr.mxu0 0.0
    %1990 = vmatpush1.msra.mxu0 %v1904
    %1991 = vmatprep.subr.mxu0 0.0
    %1992 = vmatpush1.msra.mxu0 %v1905
    %1993 = vmatprep.subr.mxu0 0.0
    %1994 = vmatpush1.msra.mxu0 0.0
    %1995 = vmatprep.subr.mxu0 0.0
    %1996 = vmatpush1.msra.mxu0 0.0
    %1997 = vmatprep.subr.mxu0 0.0
    %1998 = vmatpush1.msra.mxu0 0.0
    %1999 = vmatprep.subr.mxu0 0.0
    %2000 = vmatpush1.msra.mxu0 0.0
    %2001 = vmatprep.subr.mxu0 0.0
    %2002 = vmatpush1.msra.mxu0 0.0
    %2003 = vmatprep.subr.mxu0 0.0
    %2004 = vmatpush1.msra.mxu0 0.0
    %2005 = vmatprep.subr.mxu0 0.0
    %2006 = vmatpush1.msra.mxu0 0.0
    %2007 = vmatprep.subr.mxu0 0.0
    %2008 = vmatpush1.msra.mxu0 0.0
    %2009 = vmatprep.subr.mxu0 0.0
    %2010 = vmatpush1.msra.mxu0 0.0
    %2011 = vmatprep.subr.mxu0 0.0
    %2012 = vmatpush1.msra.mxu0 0.0
    %2013 = vmatprep.subr.mxu0 0.0
    %2014 = vmatpush1.msra.mxu0 0.0
    %2015 = vmatprep.subr.mxu0 0.0
    %2016 = vmatpush1.msra.mxu0 0.0
    %2017 = vmatprep.subr.mxu0 0.0
    %2018 = vmatpush1.msra.mxu0 0.0
    %2019 = vmatprep.subr.mxu0 0.0
    %2020 = vmatpush1.msra.mxu0 0.0
    %2021 = vmatprep.subr.mxu0 0.0
    %2022 = vmatpush1.msra.mxu0 0.0
    %2023 = vmatprep.subr.mxu0 0.0
    %2024 = vmatpush1.msra.mxu0 0.0
    %2025 = vmatprep.subr.mxu0 0.0
    %2026 = vmatpush1.msra.mxu0 0.0
    %2027 = vmatprep.subr.mxu0 0.0
    %2028 = vmatpush1.msra.mxu0 0.0
    %2029 = vmatprep.subr.mxu0 0.0
    %2030 = vmatpush1.msra.mxu0 0.0
    %2031 = vmatprep.subr.mxu0 0.0
    %2032 = vmatpush1.msra.mxu0 0.0
    %2033 = vmatprep.subr.mxu0 0.0
    %2034 = vmatpush1.msra.mxu0 0.0
    %2035 = vmatprep.subr.mxu0 0.0
    %2036 = vmatpush1.msra.mxu0 0.0
    %2037 = vmatprep.subr.mxu0 0.0
    %2038 = vmatpush1.msra.mxu0 0.0
    %2039 = vmatprep.subr.mxu0 0.0
    %2040 = vmatpush1.msra.mxu0 0.0
    %2041 = vmatprep.subr.mxu0 0.0
    %2042 = vmatpush1.msra.mxu0 0.0
    %2043 = vmatprep.subr.mxu0 0.0
    %2044 = vmatpush1.msra.mxu0 0.0
    %2045 = vmatprep.subr.mxu0 0.0
    %2046 = vmatpush1.msra.mxu0 0.0
    %2047 = vmatprep.subr.mxu0 0.0
    %2048 = vmatpush1.msra.mxu0 0.0
    %2049 = vmatprep.mubr.f32.mxu0 0.0
    %2050 = vmatmul.mubr.f32.gmra.mrb[0].mxu0 %v346
    %v2051 = vpop.f32.mrb[0].mxu0
    %v2052 = vadd.f32 %v1984, %v2051
    %v2053 = vpop.f32.mrb[0].mxu0
    %2054 = vdwg.mxu0
    %v2055 = vld [vmem:[%s10] sm:$0x1]
    %v2057 = vlaneseq
    %v2058 = vshrl.u32 %v2057, 7
    %v2059 = vsub.s32 0, %v2058
    %v2060 = vrot.slane %v2055, %v2059
    %v2062 = vadd.f32 %v2052, %v2060
    %v2063 = vld [vmem:[%s12] sm:$0x1]
    %v2064 = vld [vmem:[%s13] sm:$0x1]
    %v2065 = vld [vmem:[%s14] sm:$0x7]
    %v2066 = vld [vmem:[%s15] sm:$0x1]
    %v2067 = vld [vmem:[%s16] sm:$0x7]
    %v2068 = vld [vmem:[%s17] sm:$0x1]
    %v2069 = vld [vmem:[%s18] sm:$0x1]
    %s2070 = sld [smem:[#allocation2]]
    %s2071 = sld [smem:[#allocation2 + $0x1]]
    %s2072 = sld [smem:[#allocation2 + $0x2]]
    %s2073 = sld [smem:[#allocation2 + $0x3]]
    %s2074 = sld [smem:[#allocation2 + $0x4]]
    %s2075 = sld [smem:[#allocation2 + $0x5]]
    %s2076 = sld [smem:[#allocation2 + $0x6]]
    %s2077 = sld [smem:[#allocation2 + $0x7]]
    %s2078 = sld [smem:[#allocation2 + $0x8]]
    %v2079 = vstv %s2070
    %v2080 = vmul.f32 %v2079, %v2062
    %v2081 = vstv %s2073
    %v2082 = vadd.f32 %v2080, %v2081
    %v2083 = vstv %s2071
    %v2084 = vmul.f32 %v2083, %v2062
    %v2085 = vstv %s2074
    %v2086 = vadd.f32 %v2084, %v2085
    %v2087 = vstv %s2072
    %v2088 = vmul.f32 %v2087, %v2062
    %v2089 = vstv %s2075
    %v2090 = vadd.f32 %v2088, %v2089
    %v2091 = vlaneseq
    %v2092 = vshrl.u32 %v2091, 7
    %v2093 = vsub.s32 0, %v2092
    %v2094 = vrot.slane %v2082, %v2093
    %2096 = vbcast.lane.b32.xlu0 %v2094, 256
    %v2097 = vpop.permute.xlu0 %2096
    %s2099 = sor.u32 256, 8
    %2100 = vbcast.lane.b32.xlu0 %v2094, %s2099
    %v2101 = vpop.permute.xlu0 %2100
    %s2103 = sor.u32 256, 16
    %2104 = vbcast.lane.b32.xlu0 %v2094, %s2103
    %v2105 = vpop.permute.xlu0 %2104
    %s2107 = sor.u32 256, 24
    %2108 = vbcast.lane.b32.xlu0 %v2094, %s2107
    %v2109 = vpop.permute.xlu0 %2108
    %v2110 = vlaneseq
    %v2111 = vshrl.u32 %v2110, 7
    %v2112 = vsub.s32 1, %v2111
    %v2113 = vrot.slane %v2082, %v2112
    %2115 = vbcast.lane.b32.xlu0 %v2113, 256
    %v2116 = vpop.permute.xlu0 %2115
    %s2118 = sor.u32 256, 8
    %2119 = vbcast.lane.b32.xlu0 %v2113, %s2118
    %v2120 = vpop.permute.xlu0 %2119
    %s2122 = sor.u32 256, 16
    %2123 = vbcast.lane.b32.xlu0 %v2113, %s2122
    %v2124 = vpop.permute.xlu0 %2123
    %s2126 = sor.u32 256, 24
    %2127 = vbcast.lane.b32.xlu0 %v2113, %s2126
    %v2128 = vpop.permute.xlu0 %2127
    %v2131 = vunpack.c.l.s4 1966171168
    %v2132 = vunpack.c.0.s8 %v2131
    %v2133 = vlaneseq
    %v2134 = vshrl.u32 %v2133, 7
    %v2135 = vsub.s32 %v2132, %v2134
    %v2136 = vrot.slane %v2086, %v2135
    %v2137 = vcombine.high %v2136, %v2136
    %v2139 = vunpack.c.l.s4 1966171168
    %v2140 = vunpack.c.0.s8 %v2139
    %v2141 = vlaneseq
    %v2142 = vshrl.u32 %v2141, 7
    %v2143 = vsub.s32 %v2140, %v2142
    %v2144 = vrot.slane %v2136, %v2143
    %v2146 = vunpack.c.l.s4 1966171168
    %v2147 = vunpack.c.0.s8 %v2146
    %v2148 = vlaneseq
    %v2149 = vshrl.u32 %v2148, 7
    %v2150 = vsub.s32 %v2147, %v2149
    %v2151 = vrot.slane %v2137, %v2150
    %v2152 = vlaneseq
    %v2153 = vshrl.u32 %v2152, 7
    %v2154 = vsub.s32 0, %v2153
    %v2155 = vrot.slane %v2144, %v2154
    %v2156 = vlaneseq
    %v2157 = vshrl.u32 %v2156, 7
    %v2158 = vsub.s32 0, %v2157
    %v2159 = vrot.slane %v2151, %v2158
    %v2162 = vmul.f32 %v2097, %v2155
    %v2163 = vmul.f32 %v2101, %v2155
    %v2164 = vmul.f32 %v2105, %v2155
    %v2165 = vmul.f32 %v2109, %v2155
    %v2166 = vmul.f32 %v2116, %v2159
    %v2167 = vmul.f32 %v2120, %v2159
    %v2168 = vmul.f32 %v2124, %v2159
    %v2169 = vmul.f32 %v2128, %v2159
    %v2170 = vsel %vm344, %v2162, -inf
    %2171 = vmax.xlane.f32.xlu0 %v2170
    %v2172 = vpop.xlane.xlu0 %2171
    %v2173 = vsel %vm344, %v2163, -inf
    %2174 = vmax.xlane.f32.xlu0 %v2173
    %v2175 = vpop.xlane.xlu0 %2174
    %v2176 = vsel %vm344, %v2164, -inf
    %2177 = vmax.xlane.f32.xlu0 %v2176
    %v2178 = vpop.xlane.xlu0 %2177
    %v2179 = vsel %vm344, %v2165, -inf
    %2180 = vmax.xlane.f32.xlu0 %v2179
    %v2181 = vpop.xlane.xlu0 %2180
    %v2182 = vsel %vm344, %v2166, -inf
    %2183 = vmax.xlane.f32.xlu0 %v2182
    %v2184 = vpop.xlane.xlu0 %2183
    %v2185 = vsel %vm344, %v2167, -inf
    %2186 = vmax.xlane.f32.xlu0 %v2185
    %v2187 = vpop.xlane.xlu0 %2186
    %v2188 = vsel %vm344, %v2168, -inf
    %2189 = vmax.xlane.f32.xlu0 %v2188
    %v2190 = vpop.xlane.xlu0 %2189
    %v2191 = vsel %vm344, %v2169, -inf
    %2192 = vmax.xlane.f32.xlu0 %v2191
    %v2193 = vpop.xlane.xlu0 %2192
    %v2194 = vsub.f32 %v2162, %v2172
    %v2195 = vsub.f32 %v2163, %v2175
    %v2196 = vsub.f32 %v2164, %v2178
    %v2197 = vsub.f32 %v2165, %v2181
    %v2198 = vsub.f32 %v2166, %v2184
    %v2199 = vsub.f32 %v2167, %v2187
    %v2200 = vsub.f32 %v2168, %v2190
    %v2201 = vsub.f32 %v2169, %v2193
    %v2202 = vmul.f32 %v2194, 1.442695
    %v2203 = vpow.pop %v2202
    %v2204 = vmul.f32 %v2195, 1.442695
    %v2205 = vpow.pop %v2204
    %v2206 = vmul.f32 %v2196, 1.442695
    %v2207 = vpow.pop %v2206
    %v2208 = vmul.f32 %v2197, 1.442695
    %v2209 = vpow.pop %v2208
    %v2210 = vmul.f32 %v2198, 1.442695
    %v2211 = vpow.pop %v2210
    %v2212 = vmul.f32 %v2199, 1.442695
    %v2213 = vpow.pop %v2212
    %v2214 = vmul.f32 %v2200, 1.442695
    %v2215 = vpow.pop %v2214
    %v2216 = vmul.f32 %v2201, 1.442695
    %v2217 = vpow.pop %v2216
    %v2218 = vsel %vm344, %v2203, 0.0
    %2219 = vadd.xlane.f32.xlu0 %v2218
    %v2220 = vpop.xlane.xlu0 %2219
    %v2221 = vsel %vm344, %v2205, 0.0
    %2222 = vadd.xlane.f32.xlu0 %v2221
    %v2223 = vpop.xlane.xlu0 %2222
    %v2224 = vsel %vm344, %v2207, 0.0
    %2225 = vadd.xlane.f32.xlu0 %v2224
    %v2226 = vpop.xlane.xlu0 %2225
    %v2227 = vsel %vm344, %v2209, 0.0
    %2228 = vadd.xlane.f32.xlu0 %v2227
    %v2229 = vpop.xlane.xlu0 %2228
    %v2230 = vsel %vm344, %v2211, 0.0
    %2231 = vadd.xlane.f32.xlu0 %v2230
    %v2232 = vpop.xlane.xlu0 %2231
    %v2233 = vsel %vm344, %v2213, 0.0
    %2234 = vadd.xlane.f32.xlu0 %v2233
    %v2235 = vpop.xlane.xlu0 %2234
    %v2236 = vsel %vm344, %v2215, 0.0
    %2237 = vadd.xlane.f32.xlu0 %v2236
    %v2238 = vpop.xlane.xlu0 %2237
    %v2239 = vsel %vm344, %v2217, 0.0
    %2240 = vadd.xlane.f32.xlu0 %v2239
    %v2241 = vpop.xlane.xlu0 %2240
    %v2242 = vrcp.pop %v2220
    %v2243 = vmul.f32 %v2203, %v2242
    %v2244 = vrcp.pop %v2223
    %v2245 = vmul.f32 %v2205, %v2244
    %v2246 = vrcp.pop %v2226
    %v2247 = vmul.f32 %v2207, %v2246
    %v2248 = vrcp.pop %v2229
    %v2249 = vmul.f32 %v2209, %v2248
    %v2250 = vrcp.pop %v2232
    %v2251 = vmul.f32 %v2211, %v2250
    %v2252 = vrcp.pop %v2235
    %v2253 = vmul.f32 %v2213, %v2252
    %v2254 = vrcp.pop %v2238
    %v2255 = vmul.f32 %v2215, %v2254
    %v2256 = vrcp.pop %v2241
    %v2257 = vmul.f32 %v2217, %v2256
    %v2260 = vunpack.c.l.s4 1966171168
    %v2261 = vunpack.c.0.s8 %v2260
    %v2262 = vlaneseq
    %v2263 = vshrl.u32 %v2262, 7
    %v2264 = vsub.s32 %v2261, %v2263
    %v2265 = vrot.slane %v2090, %v2264
    %v2266 = vcombine.high %v2265, %v2265
    %v2268 = vunpack.c.l.s4 1966171168
    %v2269 = vunpack.c.0.s8 %v2268
    %v2270 = vlaneseq
    %v2271 = vshrl.u32 %v2270, 7
    %v2272 = vsub.s32 %v2269, %v2271
    %v2273 = vrot.slane %v2265, %v2272
    %v2275 = vunpack.c.l.s4 1966171168
    %v2276 = vunpack.c.0.s8 %v2275
    %v2277 = vlaneseq
    %v2278 = vshrl.u32 %v2277, 7
    %v2279 = vsub.s32 %v2276, %v2278
    %v2280 = vrot.slane %v2266, %v2279
    %v2281 = vlaneseq
    %v2282 = vshrl.u32 %v2281, 7
    %v2283 = vsub.s32 0, %v2282
    %v2284 = vrot.slane %v2273, %v2283
    %v2285 = vlaneseq
    %v2286 = vshrl.u32 %v2285, 7
    %v2287 = vsub.s32 0, %v2286
    %v2288 = vrot.slane %v2280, %v2287
    %v2291 = vmul.f32 %v2243, %v2284
    %v2292 = vmul.f32 %v2245, %v2284
    %v2293 = vmul.f32 %v2247, %v2284
    %v2294 = vmul.f32 %v2249, %v2284
    %v2295 = vmul.f32 %v2251, %v2288
    %v2296 = vmul.f32 %v2253, %v2288
    %v2297 = vmul.f32 %v2255, %v2288
    %v2298 = vmul.f32 %v2257, %v2288
    %v2299 = vsel %vm344, %v2291, 0.0
    %2300 = vadd.xlane.f32.xlu0 %v2299
    %v2301 = vpop.xlane.xlu0 %2300
    %v2302 = vsel %vm344, %v2292, 0.0
    %2303 = vadd.xlane.f32.xlu0 %v2302
    %v2304 = vpop.xlane.xlu0 %2303
    %v2305 = vsel %vm344, %v2293, 0.0
    %2306 = vadd.xlane.f32.xlu0 %v2305
    %v2307 = vpop.xlane.xlu0 %2306
    %v2308 = vsel %vm344, %v2294, 0.0
    %2309 = vadd.xlane.f32.xlu0 %v2308
    %v2310 = vpop.xlane.xlu0 %2309
    %v2311 = vsel %vm344, %v2295, 0.0
    %2312 = vadd.xlane.f32.xlu0 %v2311
    %v2313 = vpop.xlane.xlu0 %2312
    %v2314 = vsel %vm344, %v2296, 0.0
    %2315 = vadd.xlane.f32.xlu0 %v2314
    %v2316 = vpop.xlane.xlu0 %2315
    %v2317 = vsel %vm344, %v2297, 0.0
    %2318 = vadd.xlane.f32.xlu0 %v2317
    %v2319 = vpop.xlane.xlu0 %2318
    %v2320 = vsel %vm344, %v2298, 0.0
    %2321 = vadd.xlane.f32.xlu0 %v2320
    %v2322 = vpop.xlane.xlu0 %2321
    %v2323 = vstv %s2076
    %v2324 = vmul.f32 %v2323, %v2301
    %v2325 = vmul.f32 %v2323, %v2304
    %v2326 = vmul.f32 %v2323, %v2307
    %v2327 = vmul.f32 %v2323, %v2310
    %v2328 = vmul.f32 %v2323, %v2313
    %v2329 = vmul.f32 %v2323, %v2316
    %v2330 = vmul.f32 %v2323, %v2319
    %v2331 = vmul.f32 %v2323, %v2322
    %v2332 = vstv %s2077
    %v2333 = vadd.f32 %v2324, %v2332
    %v2334 = vadd.f32 %v2325, %v2332
    %v2335 = vadd.f32 %v2326, %v2332
    %v2336 = vadd.f32 %v2327, %v2332
    %v2337 = vadd.f32 %v2328, %v2332
    %v2338 = vadd.f32 %v2329, %v2332
    %v2339 = vadd.f32 %v2330, %v2332
    %v2340 = vadd.f32 %v2331, %v2332
    %v2341 = vmul.f32 %v2333, 2.0
    %v2342 = vmul.f32 %v2334, 2.0
    %v2343 = vmul.f32 %v2335, 2.0
    %v2344 = vmul.f32 %v2336, 2.0
    %v2345 = vmul.f32 %v2337, 2.0
    %v2346 = vmul.f32 %v2338, 2.0
    %v2347 = vmul.f32 %v2339, 2.0
    %v2348 = vmul.f32 %v2340, 2.0
    %v2357 = vlaneseq
    %v2358 = vshrl.u32 %v2357, 7
    %v2359 = vsub.s32 %v721, %v2358
    %v2360 = vrot.slane %v2341, %v2359
    %v2361 = vlaneseq
    %v2362 = vshrl.u32 %v2361, 7
    %v2363 = vsub.s32 %v726, %v2362
    %v2364 = vrot.slane %v2342, %v2363
    %v2365 = vsel %vm731, %v2364, %v2360
    %v2366 = vlaneseq
    %v2367 = vshrl.u32 %v2366, 7
    %v2368 = vsub.s32 %v733, %v2367
    %v2369 = vrot.slane %v2343, %v2368
    %v2370 = vsel %vm738, %v2369, %v2365
    %v2371 = vlaneseq
    %v2372 = vshrl.u32 %v2371, 7
    %v2373 = vsub.s32 %v740, %v2372
    %v2374 = vrot.slane %v2344, %v2373
    %v2375 = vsel %vm745, %v2374, %v2370
    %v2376 = vlaneseq
    %v2377 = vshrl.u32 %v2376, 7
    %v2378 = vsub.s32 %v721, %v2377
    %v2379 = vrot.slane %v2345, %v2378
    %v2380 = vlaneseq
    %v2381 = vshrl.u32 %v2380, 7
    %v2382 = vsub.s32 %v726, %v2381
    %v2383 = vrot.slane %v2346, %v2382
    %v2384 = vsel %vm731, %v2383, %v2379
    %v2385 = vlaneseq
    %v2386 = vshrl.u32 %v2385, 7
    %v2387 = vsub.s32 %v733, %v2386
    %v2388 = vrot.slane %v2347, %v2387
    %v2389 = vsel %vm738, %v2388, %v2384
    %v2390 = vlaneseq
    %v2391 = vshrl.u32 %v2390, 7
    %v2392 = vsub.s32 %v740, %v2391
    %v2393 = vrot.slane %v2348, %v2392
    %v2394 = vsel %vm745, %v2393, %v2389
    %v2395 = vsel %vm766, %v2394, %v2375
    %v2397 = vadd.f32 %v2062, %v2395
    %v2398 = vsel %vm770, %v2397, 0.0
    %2399 = vadd.xlane.f32.xlu0 %v2398
    %v2400 = vpop.xlane.xlu0 %2399
    %v2401 = vmul.f32 %v2400, %v774
    %v2402 = vsub.f32 %v2397, %v2401
    %v2403 = vmul.f32 %v2402, %v2402
    %v2404 = vsel %vm770, %v2403, 0.0
    %2405 = vadd.xlane.f32.xlu0 %v2404
    %v2406 = vpop.xlane.xlu0 %2405
    %v2407 = vmul.f32 %v2406, %v774
    %v2408 = vadd.f32 %v2407, 1e-05
    %v2409 = vrsqrt.pop %v2408
    %v2410 = vmul.f32 %v2402, %v2409
    %v2412 = vlaneseq
    %v2413 = vshrl.u32 %v2412, 7
    %v2414 = vsub.s32 0, %v2413
    %v2415 = vrot.slane %v2063, %v2414
    %v2417 = vmul.f32 %v2410, %v2415
    %v2419 = vlaneseq
    %v2420 = vshrl.u32 %v2419, 7
    %v2421 = vsub.s32 0, %v2420
    %v2422 = vrot.slane %v2064, %v2421
    %v2424 = vadd.f32 %v2417, %v2422
    %2425 = vrot.lane.b32.xlu0 %v2424, 32
    %v2426 = vpop.permute.xlu0 %2425
    %v2427 = vsel %vm800, %v2426, %v2424
    %2428 = vrot.lane.b32.xlu0 %v2427, 32
    %v2429 = vpop.permute.xlu0 %2428
    %v2430 = vsel %vm800, %v2429, %v2424
    %2432 = vrot.lane.b32.xlu0 %v2430, 97
    %v2433 = vpop.permute.xlu0 %2432
    %v2435 = vsel %vm799, 0.0, %v2433
    %2436 = vrot.lane.b32.xlu0 %v2430, 127
    %v2437 = vpop.permute.xlu0 %2436
    %v2439 = vsel %vm812, 0.0, %v2437
    %v2440 = vlaneseq
    %v2441 = vshrl.u32 %v2440, 7
    %v2442 = vsub.s32 0, %v2441
    %v2443 = vrot.slane %v2065, %v2442
    %2445 = vbcast.lane.b32.xlu0 %v2443, 256
    %v2446 = vpop.permute.xlu0 %2445
    %s2448 = sor.u32 256, 8
    %2449 = vbcast.lane.b32.xlu0 %v2443, %s2448
    %v2450 = vpop.permute.xlu0 %2449
    %s2452 = sor.u32 256, 16
    %2453 = vbcast.lane.b32.xlu0 %v2443, %s2452
    %v2454 = vpop.permute.xlu0 %2453
    %s2456 = sor.u32 256, 24
    %2457 = vbcast.lane.b32.xlu0 %v2443, %s2456
    %v2458 = vpop.permute.xlu0 %2457
    %s2460 = sor.u32 256, 32
    %2461 = vbcast.lane.b32.xlu0 %v2443, %s2460
    %v2462 = vpop.permute.xlu0 %2461
    %s2464 = sor.u32 256, 40
    %2465 = vbcast.lane.b32.xlu0 %v2443, %s2464
    %v2466 = vpop.permute.xlu0 %2465
    %s2468 = sor.u32 256, 48
    %2469 = vbcast.lane.b32.xlu0 %v2443, %s2468
    %v2470 = vpop.permute.xlu0 %2469
    %s2472 = sor.u32 256, 56
    %2473 = vbcast.lane.b32.xlu0 %v2443, %s2472
    %v2474 = vpop.permute.xlu0 %2473
    %v2475 = vlaneseq
    %v2476 = vshrl.u32 %v2475, 7
    %v2477 = vsub.s32 1, %v2476
    %v2478 = vrot.slane %v2065, %v2477
    %2480 = vbcast.lane.b32.xlu0 %v2478, 256
    %v2481 = vpop.permute.xlu0 %2480
    %s2483 = sor.u32 256, 8
    %2484 = vbcast.lane.b32.xlu0 %v2478, %s2483
    %v2485 = vpop.permute.xlu0 %2484
    %s2487 = sor.u32 256, 16
    %2488 = vbcast.lane.b32.xlu0 %v2478, %s2487
    %v2489 = vpop.permute.xlu0 %2488
    %s2491 = sor.u32 256, 24
    %2492 = vbcast.lane.b32.xlu0 %v2478, %s2491
    %v2493 = vpop.permute.xlu0 %2492
    %s2495 = sor.u32 256, 32
    %2496 = vbcast.lane.b32.xlu0 %v2478, %s2495
    %v2497 = vpop.permute.xlu0 %2496
    %s2499 = sor.u32 256, 40
    %2500 = vbcast.lane.b32.xlu0 %v2478, %s2499
    %v2501 = vpop.permute.xlu0 %2500
    %s2503 = sor.u32 256, 48
    %2504 = vbcast.lane.b32.xlu0 %v2478, %s2503
    %v2505 = vpop.permute.xlu0 %2504
    %s2507 = sor.u32 256, 56
    %2508 = vbcast.lane.b32.xlu0 %v2478, %s2507
    %v2509 = vpop.permute.xlu0 %2508
    %v2510 = vlaneseq
    %v2511 = vshrl.u32 %v2510, 7
    %v2512 = vsub.s32 2, %v2511
    %v2513 = vrot.slane %v2065, %v2512
    %2515 = vbcast.lane.b32.xlu0 %v2513, 256
    %v2516 = vpop.permute.xlu0 %2515
    %s2518 = sor.u32 256, 8
    %2519 = vbcast.lane.b32.xlu0 %v2513, %s2518
    %v2520 = vpop.permute.xlu0 %2519
    %s2522 = sor.u32 256, 16
    %2523 = vbcast.lane.b32.xlu0 %v2513, %s2522
    %v2524 = vpop.permute.xlu0 %2523
    %s2526 = sor.u32 256, 24
    %2527 = vbcast.lane.b32.xlu0 %v2513, %s2526
    %v2528 = vpop.permute.xlu0 %2527
    %s2530 = sor.u32 256, 32
    %2531 = vbcast.lane.b32.xlu0 %v2513, %s2530
    %v2532 = vpop.permute.xlu0 %2531
    %s2534 = sor.u32 256, 40
    %2535 = vbcast.lane.b32.xlu0 %v2513, %s2534
    %v2536 = vpop.permute.xlu0 %2535
    %s2538 = sor.u32 256, 48
    %2539 = vbcast.lane.b32.xlu0 %v2513, %s2538
    %v2540 = vpop.permute.xlu0 %2539
    %s2542 = sor.u32 256, 56
    %2543 = vbcast.lane.b32.xlu0 %v2513, %s2542
    %v2544 = vpop.permute.xlu0 %2543
    %v2547 = vunpack.c.l.s4 1966171168
    %v2548 = vunpack.c.0.s8 %v2547
    %v2549 = vlaneseq
    %v2550 = vshrl.u32 %v2549, 7
    %v2551 = vsub.s32 %v2548, %v2550
    %v2552 = vrot.slane %v2435, %v2551
    %v2553 = vcombine.high %v2552, %v2552
    %v2555 = vunpack.c.l.s4 1966171168
    %v2556 = vunpack.c.0.s8 %v2555
    %v2557 = vlaneseq
    %v2558 = vshrl.u32 %v2557, 7
    %v2559 = vsub.s32 %v2556, %v2558
    %v2560 = vrot.slane %v2552, %v2559
    %v2562 = vunpack.c.l.s4 1966171168
    %v2563 = vunpack.c.0.s8 %v2562
    %v2564 = vlaneseq
    %v2565 = vshrl.u32 %v2564, 7
    %v2566 = vsub.s32 %v2563, %v2565
    %v2567 = vrot.slane %v2553, %v2566
    %v2568 = vlaneseq
    %v2569 = vshrl.u32 %v2568, 7
    %v2570 = vsub.s32 0, %v2569
    %v2571 = vrot.slane %v2560, %v2570
    %v2572 = vlaneseq
    %v2573 = vshrl.u32 %v2572, 7
    %v2574 = vsub.s32 0, %v2573
    %v2575 = vrot.slane %v2567, %v2574
    %v2578 = vmul.f32 %v2571, %v2446
    %v2579 = vmul.f32 %v2571, %v2450
    %v2580 = vmul.f32 %v2571, %v2454
    %v2581 = vmul.f32 %v2571, %v2458
    %v2582 = vmul.f32 %v2571, %v2462
    %v2583 = vmul.f32 %v2571, %v2466
    %v2584 = vmul.f32 %v2571, %v2470
    %v2585 = vmul.f32 %v2571, %v2474
    %v2586 = vmul.f32 %v2575, %v2446
    %v2587 = vmul.f32 %v2575, %v2450
    %v2588 = vmul.f32 %v2575, %v2454
    %v2589 = vmul.f32 %v2575, %v2458
    %v2590 = vmul.f32 %v2575, %v2462
    %v2591 = vmul.f32 %v2575, %v2466
    %v2592 = vmul.f32 %v2575, %v2470
    %v2593 = vmul.f32 %v2575, %v2474
    %v2596 = vunpack.c.l.s4 1966171168
    %v2597 = vunpack.c.0.s8 %v2596
    %v2598 = vlaneseq
    %v2599 = vshrl.u32 %v2598, 7
    %v2600 = vsub.s32 %v2597, %v2599
    %v2601 = vrot.slane %v2424, %v2600
    %v2602 = vcombine.high %v2601, %v2601
    %v2604 = vunpack.c.l.s4 1966171168
    %v2605 = vunpack.c.0.s8 %v2604
    %v2606 = vlaneseq
    %v2607 = vshrl.u32 %v2606, 7
    %v2608 = vsub.s32 %v2605, %v2607
    %v2609 = vrot.slane %v2601, %v2608
    %v2611 = vunpack.c.l.s4 1966171168
    %v2612 = vunpack.c.0.s8 %v2611
    %v2613 = vlaneseq
    %v2614 = vshrl.u32 %v2613, 7
    %v2615 = vsub.s32 %v2612, %v2614
    %v2616 = vrot.slane %v2602, %v2615
    %v2617 = vlaneseq
    %v2618 = vshrl.u32 %v2617, 7
    %v2619 = vsub.s32 0, %v2618
    %v2620 = vrot.slane %v2609, %v2619
    %v2621 = vlaneseq
    %v2622 = vshrl.u32 %v2621, 7
    %v2623 = vsub.s32 0, %v2622
    %v2624 = vrot.slane %v2616, %v2623
    %v2627 = vmul.f32 %v2620, %v2481
    %v2628 = vmul.f32 %v2620, %v2485
    %v2629 = vmul.f32 %v2620, %v2489
    %v2630 = vmul.f32 %v2620, %v2493
    %v2631 = vmul.f32 %v2620, %v2497
    %v2632 = vmul.f32 %v2620, %v2501
    %v2633 = vmul.f32 %v2620, %v2505
    %v2634 = vmul.f32 %v2620, %v2509
    %v2635 = vmul.f32 %v2624, %v2481
    %v2636 = vmul.f32 %v2624, %v2485
    %v2637 = vmul.f32 %v2624, %v2489
    %v2638 = vmul.f32 %v2624, %v2493
    %v2639 = vmul.f32 %v2624, %v2497
    %v2640 = vmul.f32 %v2624, %v2501
    %v2641 = vmul.f32 %v2624, %v2505
    %v2642 = vmul.f32 %v2624, %v2509
    %v2643 = vadd.f32 %v2578, %v2627
    %v2644 = vadd.f32 %v2579, %v2628
    %v2645 = vadd.f32 %v2580, %v2629
    %v2646 = vadd.f32 %v2581, %v2630
    %v2647 = vadd.f32 %v2582, %v2631
    %v2648 = vadd.f32 %v2583, %v2632
    %v2649 = vadd.f32 %v2584, %v2633
    %v2650 = vadd.f32 %v2585, %v2634
    %v2651 = vadd.f32 %v2586, %v2635
    %v2652 = vadd.f32 %v2587, %v2636
    %v2653 = vadd.f32 %v2588, %v2637
    %v2654 = vadd.f32 %v2589, %v2638
    %v2655 = vadd.f32 %v2590, %v2639
    %v2656 = vadd.f32 %v2591, %v2640
    %v2657 = vadd.f32 %v2592, %v2641
    %v2658 = vadd.f32 %v2593, %v2642
    %v2661 = vunpack.c.l.s4 1966171168
    %v2662 = vunpack.c.0.s8 %v2661
    %v2663 = vlaneseq
    %v2664 = vshrl.u32 %v2663, 7
    %v2665 = vsub.s32 %v2662, %v2664
    %v2666 = vrot.slane %v2439, %v2665
    %v2667 = vcombine.high %v2666, %v2666
    %v2669 = vunpack.c.l.s4 1966171168
    %v2670 = vunpack.c.0.s8 %v2669
    %v2671 = vlaneseq
    %v2672 = vshrl.u32 %v2671, 7
    %v2673 = vsub.s32 %v2670, %v2672
    %v2674 = vrot.slane %v2666, %v2673
    %v2676 = vunpack.c.l.s4 1966171168
    %v2677 = vunpack.c.0.s8 %v2676
    %v2678 = vlaneseq
    %v2679 = vshrl.u32 %v2678, 7
    %v2680 = vsub.s32 %v2677, %v2679
    %v2681 = vrot.slane %v2667, %v2680
    %v2682 = vlaneseq
    %v2683 = vshrl.u32 %v2682, 7
    %v2684 = vsub.s32 0, %v2683
    %v2685 = vrot.slane %v2674, %v2684
    %v2686 = vlaneseq
    %v2687 = vshrl.u32 %v2686, 7
    %v2688 = vsub.s32 0, %v2687
    %v2689 = vrot.slane %v2681, %v2688
    %v2692 = vmul.f32 %v2685, %v2516
    %v2693 = vmul.f32 %v2685, %v2520
    %v2694 = vmul.f32 %v2685, %v2524
    %v2695 = vmul.f32 %v2685, %v2528
    %v2696 = vmul.f32 %v2685, %v2532
    %v2697 = vmul.f32 %v2685, %v2536
    %v2698 = vmul.f32 %v2685, %v2540
    %v2699 = vmul.f32 %v2685, %v2544
    %v2700 = vmul.f32 %v2689, %v2516
    %v2701 = vmul.f32 %v2689, %v2520
    %v2702 = vmul.f32 %v2689, %v2524
    %v2703 = vmul.f32 %v2689, %v2528
    %v2704 = vmul.f32 %v2689, %v2532
    %v2705 = vmul.f32 %v2689, %v2536
    %v2706 = vmul.f32 %v2689, %v2540
    %v2707 = vmul.f32 %v2689, %v2544
    %v2708 = vadd.f32 %v2643, %v2692
    %v2709 = vadd.f32 %v2644, %v2693
    %v2710 = vadd.f32 %v2645, %v2694
    %v2711 = vadd.f32 %v2646, %v2695
    %v2712 = vadd.f32 %v2647, %v2696
    %v2713 = vadd.f32 %v2648, %v2697
    %v2714 = vadd.f32 %v2649, %v2698
    %v2715 = vadd.f32 %v2650, %v2699
    %v2716 = vadd.f32 %v2651, %v2700
    %v2717 = vadd.f32 %v2652, %v2701
    %v2718 = vadd.f32 %v2653, %v2702
    %v2719 = vadd.f32 %v2654, %v2703
    %v2720 = vadd.f32 %v2655, %v2704
    %v2721 = vadd.f32 %v2656, %v2705
    %v2722 = vadd.f32 %v2657, %v2706
    %v2723 = vadd.f32 %v2658, %v2707
    %v2724 = vlaneseq
    %v2725 = vshrl.u32 %v2724, 7
    %v2726 = vsub.s32 0, %v2725
    %v2727 = vrot.slane %v2066, %v2726
    %2729 = vbcast.lane.b32.xlu0 %v2727, 256
    %v2730 = vpop.permute.xlu0 %2729
    %s2732 = sor.u32 256, 8
    %2733 = vbcast.lane.b32.xlu0 %v2727, %s2732
    %v2734 = vpop.permute.xlu0 %2733
    %s2736 = sor.u32 256, 16
    %2737 = vbcast.lane.b32.xlu0 %v2727, %s2736
    %v2738 = vpop.permute.xlu0 %2737
    %s2740 = sor.u32 256, 24
    %2741 = vbcast.lane.b32.xlu0 %v2727, %s2740
    %v2742 = vpop.permute.xlu0 %2741
    %s2744 = sor.u32 256, 32
    %2745 = vbcast.lane.b32.xlu0 %v2727, %s2744
    %v2746 = vpop.permute.xlu0 %2745
    %s2748 = sor.u32 256, 40
    %2749 = vbcast.lane.b32.xlu0 %v2727, %s2748
    %v2750 = vpop.permute.xlu0 %2749
    %s2752 = sor.u32 256, 48
    %2753 = vbcast.lane.b32.xlu0 %v2727, %s2752
    %v2754 = vpop.permute.xlu0 %2753
    %s2756 = sor.u32 256, 56
    %2757 = vbcast.lane.b32.xlu0 %v2727, %s2756
    %v2758 = vpop.permute.xlu0 %2757
    %v2759 = vadd.f32 %v2708, %v2730
    %v2760 = vadd.f32 %v2709, %v2734
    %v2761 = vadd.f32 %v2710, %v2738
    %v2762 = vadd.f32 %v2711, %v2742
    %v2763 = vadd.f32 %v2712, %v2746
    %v2764 = vadd.f32 %v2713, %v2750
    %v2765 = vadd.f32 %v2714, %v2754
    %v2766 = vadd.f32 %v2715, %v2758
    %v2767 = vadd.f32 %v2716, %v2730
    %v2768 = vadd.f32 %v2717, %v2734
    %v2769 = vadd.f32 %v2718, %v2738
    %v2770 = vadd.f32 %v2719, %v2742
    %v2771 = vadd.f32 %v2720, %v2746
    %v2772 = vadd.f32 %v2721, %v2750
    %v2773 = vadd.f32 %v2722, %v2754
    %v2774 = vadd.f32 %v2723, %v2758
    %v2775 = vmax.f32 %v2759, 0.0
    %v2776 = vmax.f32 %v2760, 0.0
    %v2777 = vmax.f32 %v2761, 0.0
    %v2778 = vmax.f32 %v2762, 0.0
    %v2779 = vmax.f32 %v2763, 0.0
    %v2780 = vmax.f32 %v2764, 0.0
    %v2781 = vmax.f32 %v2765, 0.0
    %v2782 = vmax.f32 %v2766, 0.0
    %v2783 = vmax.f32 %v2767, 0.0
    %v2784 = vmax.f32 %v2768, 0.0
    %v2785 = vmax.f32 %v2769, 0.0
    %v2786 = vmax.f32 %v2770, 0.0
    %v2787 = vmax.f32 %v2771, 0.0
    %v2788 = vmax.f32 %v2772, 0.0
    %v2789 = vmax.f32 %v2773, 0.0
    %v2790 = vmax.f32 %v2774, 0.0
    %2791 = vrot.lane.b32.xlu0 %v2775, 32
    %v2792 = vpop.permute.xlu0 %2791
    %v2793 = vsel %vm800, %v2792, %v2775
    %2794 = vrot.lane.b32.xlu0 %v2776, 32
    %v2795 = vpop.permute.xlu0 %2794
    %v2796 = vsel %vm800, %v2795, %v2776
    %2797 = vrot.lane.b32.xlu0 %v2777, 32
    %v2798 = vpop.permute.xlu0 %2797
    %v2799 = vsel %vm800, %v2798, %v2777
    %2800 = vrot.lane.b32.xlu0 %v2778, 32
    %v2801 = vpop.permute.xlu0 %2800
    %v2802 = vsel %vm800, %v2801, %v2778
    %2803 = vrot.lane.b32.xlu0 %v2779, 32
    %v2804 = vpop.permute.xlu0 %2803
    %v2805 = vsel %vm800, %v2804, %v2779
    %2806 = vrot.lane.b32.xlu0 %v2780, 32
    %v2807 = vpop.permute.xlu0 %2806
    %v2808 = vsel %vm800, %v2807, %v2780
    %2809 = vrot.lane.b32.xlu0 %v2781, 32
    %v2810 = vpop.permute.xlu0 %2809
    %v2811 = vsel %vm800, %v2810, %v2781
    %2812 = vrot.lane.b32.xlu0 %v2782, 32
    %v2813 = vpop.permute.xlu0 %2812
    %v2814 = vsel %vm800, %v2813, %v2782
    %2815 = vrot.lane.b32.xlu0 %v2783, 32
    %v2816 = vpop.permute.xlu0 %2815
    %v2817 = vsel %vm800, %v2816, %v2783
    %2818 = vrot.lane.b32.xlu0 %v2784, 32
    %v2819 = vpop.permute.xlu0 %2818
    %v2820 = vsel %vm800, %v2819, %v2784
    %2821 = vrot.lane.b32.xlu0 %v2785, 32
    %v2822 = vpop.permute.xlu0 %2821
    %v2823 = vsel %vm800, %v2822, %v2785
    %2824 = vrot.lane.b32.xlu0 %v2786, 32
    %v2825 = vpop.permute.xlu0 %2824
    %v2826 = vsel %vm800, %v2825, %v2786
    %2827 = vrot.lane.b32.xlu0 %v2787, 32
    %v2828 = vpop.permute.xlu0 %2827
    %v2829 = vsel %vm800, %v2828, %v2787
    %2830 = vrot.lane.b32.xlu0 %v2788, 32
    %v2831 = vpop.permute.xlu0 %2830
    %v2832 = vsel %vm800, %v2831, %v2788
    %2833 = vrot.lane.b32.xlu0 %v2789, 32
    %v2834 = vpop.permute.xlu0 %2833
    %v2835 = vsel %vm800, %v2834, %v2789
    %2836 = vrot.lane.b32.xlu0 %v2790, 32
    %v2837 = vpop.permute.xlu0 %2836
    %v2838 = vsel %vm800, %v2837, %v2790
    %2839 = vrot.lane.b32.xlu0 %v2793, 32
    %v2840 = vpop.permute.xlu0 %2839
    %2841 = vrot.lane.b32.xlu0 %v2796, 32
    %v2842 = vpop.permute.xlu0 %2841
    %2843 = vrot.lane.b32.xlu0 %v2799, 32
    %v2844 = vpop.permute.xlu0 %2843
    %2845 = vrot.lane.b32.xlu0 %v2802, 32
    %v2846 = vpop.permute.xlu0 %2845
    %2847 = vrot.lane.b32.xlu0 %v2805, 32
    %v2848 = vpop.permute.xlu0 %2847
    %2849 = vrot.lane.b32.xlu0 %v2808, 32
    %v2850 = vpop.permute.xlu0 %2849
    %2851 = vrot.lane.b32.xlu0 %v2811, 32
    %v2852 = vpop.permute.xlu0 %2851
    %2853 = vrot.lane.b32.xlu0 %v2814, 32
    %v2854 = vpop.permute.xlu0 %2853
    %2855 = vrot.lane.b32.xlu0 %v2817, 32
    %v2856 = vpop.permute.xlu0 %2855
    %2857 = vrot.lane.b32.xlu0 %v2820, 32
    %v2858 = vpop.permute.xlu0 %2857
    %2859 = vrot.lane.b32.xlu0 %v2823, 32
    %v2860 = vpop.permute.xlu0 %2859
    %2861 = vrot.lane.b32.xlu0 %v2826, 32
    %v2862 = vpop.permute.xlu0 %2861
    %2863 = vrot.lane.b32.xlu0 %v2829, 32
    %v2864 = vpop.permute.xlu0 %2863
    %2865 = vrot.lane.b32.xlu0 %v2832, 32
    %v2866 = vpop.permute.xlu0 %2865
    %2867 = vrot.lane.b32.xlu0 %v2835, 32
    %v2868 = vpop.permute.xlu0 %2867
    %2869 = vrot.lane.b32.xlu0 %v2838, 32
    %v2870 = vpop.permute.xlu0 %2869
    %v2871 = vsel %vm800, %v2840, %v2775
    %v2872 = vsel %vm800, %v2842, %v2776
    %v2873 = vsel %vm800, %v2844, %v2777
    %v2874 = vsel %vm800, %v2846, %v2778
    %v2875 = vsel %vm800, %v2848, %v2779
    %v2876 = vsel %vm800, %v2850, %v2780
    %v2877 = vsel %vm800, %v2852, %v2781
    %v2878 = vsel %vm800, %v2854, %v2782
    %v2879 = vsel %vm800, %v2856, %v2783
    %v2880 = vsel %vm800, %v2858, %v2784
    %v2881 = vsel %vm800, %v2860, %v2785
    %v2882 = vsel %vm800, %v2862, %v2786
    %v2883 = vsel %vm800, %v2864, %v2787
    %v2884 = vsel %vm800, %v2866, %v2788
    %v2885 = vsel %vm800, %v2868, %v2789
    %v2886 = vsel %vm800, %v2870, %v2790
    %2903 = vrot.lane.b32.xlu0 %v2871, 97
    %v2904 = vpop.permute.xlu0 %2903
    %2905 = vrot.lane.b32.xlu0 %v2872, 97
    %v2906 = vpop.permute.xlu0 %2905
    %2907 = vrot.lane.b32.xlu0 %v2873, 97
    %v2908 = vpop.permute.xlu0 %2907
    %2909 = vrot.lane.b32.xlu0 %v2874, 97
    %v2910 = vpop.permute.xlu0 %2909
    %2911 = vrot.lane.b32.xlu0 %v2875, 97
    %v2912 = vpop.permute.xlu0 %2911
    %2913 = vrot.lane.b32.xlu0 %v2876, 97
    %v2914 = vpop.permute.xlu0 %2913
    %2915 = vrot.lane.b32.xlu0 %v2877, 97
    %v2916 = vpop.permute.xlu0 %2915
    %2917 = vrot.lane.b32.xlu0 %v2878, 97
    %v2918 = vpop.permute.xlu0 %2917
    %2919 = vrot.lane.b32.xlu0 %v2879, 97
    %v2920 = vpop.permute.xlu0 %2919
    %2921 = vrot.lane.b32.xlu0 %v2880, 97
    %v2922 = vpop.permute.xlu0 %2921
    %2923 = vrot.lane.b32.xlu0 %v2881, 97
    %v2924 = vpop.permute.xlu0 %2923
    %2925 = vrot.lane.b32.xlu0 %v2882, 97
    %v2926 = vpop.permute.xlu0 %2925
    %2927 = vrot.lane.b32.xlu0 %v2883, 97
    %v2928 = vpop.permute.xlu0 %2927
    %2929 = vrot.lane.b32.xlu0 %v2884, 97
    %v2930 = vpop.permute.xlu0 %2929
    %2931 = vrot.lane.b32.xlu0 %v2885, 97
    %v2932 = vpop.permute.xlu0 %2931
    %2933 = vrot.lane.b32.xlu0 %v2886, 97
    %v2934 = vpop.permute.xlu0 %2933
    %v2951 = vsel %vm799, 0.0, %v2904
    %v2952 = vsel %vm799, 0.0, %v2906
    %v2953 = vsel %vm799, 0.0, %v2908
    %v2954 = vsel %vm799, 0.0, %v2910
    %v2955 = vsel %vm799, 0.0, %v2912
    %v2956 = vsel %vm799, 0.0, %v2914
    %v2957 = vsel %vm799, 0.0, %v2916
    %v2958 = vsel %vm799, 0.0, %v2918
    %v2959 = vsel %vm799, 0.0, %v2920
    %v2960 = vsel %vm799, 0.0, %v2922
    %v2961 = vsel %vm799, 0.0, %v2924
    %v2962 = vsel %vm799, 0.0, %v2926
    %v2963 = vsel %vm799, 0.0, %v2928
    %v2964 = vsel %vm799, 0.0, %v2930
    %v2965 = vsel %vm799, 0.0, %v2932
    %v2966 = vsel %vm799, 0.0, %v2934
    %2967 = vrot.lane.b32.xlu0 %v2871, 127
    %v2968 = vpop.permute.xlu0 %2967
    %2969 = vrot.lane.b32.xlu0 %v2872, 127
    %v2970 = vpop.permute.xlu0 %2969
    %2971 = vrot.lane.b32.xlu0 %v2873, 127
    %v2972 = vpop.permute.xlu0 %2971
    %2973 = vrot.lane.b32.xlu0 %v2874, 127
    %v2974 = vpop.permute.xlu0 %2973
    %2975 = vrot.lane.b32.xlu0 %v2875, 127
    %v2976 = vpop.permute.xlu0 %2975
    %2977 = vrot.lane.b32.xlu0 %v2876, 127
    %v2978 = vpop.permute.xlu0 %2977
    %2979 = vrot.lane.b32.xlu0 %v2877, 127
    %v2980 = vpop.permute.xlu0 %2979
    %2981 = vrot.lane.b32.xlu0 %v2878, 127
    %v2982 = vpop.permute.xlu0 %2981
    %2983 = vrot.lane.b32.xlu0 %v2879, 127
    %v2984 = vpop.permute.xlu0 %2983
    %2985 = vrot.lane.b32.xlu0 %v2880, 127
    %v2986 = vpop.permute.xlu0 %2985
    %2987 = vrot.lane.b32.xlu0 %v2881, 127
    %v2988 = vpop.permute.xlu0 %2987
    %2989 = vrot.lane.b32.xlu0 %v2882, 127
    %v2990 = vpop.permute.xlu0 %2989
    %2991 = vrot.lane.b32.xlu0 %v2883, 127
    %v2992 = vpop.permute.xlu0 %2991
    %2993 = vrot.lane.b32.xlu0 %v2884, 127
    %v2994 = vpop.permute.xlu0 %2993
    %2995 = vrot.lane.b32.xlu0 %v2885, 127
    %v2996 = vpop.permute.xlu0 %2995
    %2997 = vrot.lane.b32.xlu0 %v2886, 127
    %v2998 = vpop.permute.xlu0 %2997
    %v3015 = vsel %vm812, 0.0, %v2968
    %v3016 = vsel %vm812, 0.0, %v2970
    %v3017 = vsel %vm812, 0.0, %v2972
    %v3018 = vsel %vm812, 0.0, %v2974
    %v3019 = vsel %vm812, 0.0, %v2976
    %v3020 = vsel %vm812, 0.0, %v2978
    %v3021 = vsel %vm812, 0.0, %v2980
    %v3022 = vsel %vm812, 0.0, %v2982
    %v3023 = vsel %vm812, 0.0, %v2984
    %v3024 = vsel %vm812, 0.0, %v2986
    %v3025 = vsel %vm812, 0.0, %v2988
    %v3026 = vsel %vm812, 0.0, %v2990
    %v3027 = vsel %vm812, 0.0, %v2992
    %v3028 = vsel %vm812, 0.0, %v2994
    %v3029 = vsel %vm812, 0.0, %v2996
    %v3030 = vsel %vm812, 0.0, %v2998
    %v3031 = vlaneseq
    %v3032 = vshrl.u32 %v3031, 7
    %v3033 = vsub.s32 0, %v3032
    %v3034 = vrot.slane %v2067, %v3033
    %3036 = vbcast.lane.b32.xlu0 %v3034, 256
    %v3037 = vpop.permute.xlu0 %3036
    %s3039 = sor.u32 256, 8
    %3040 = vbcast.lane.b32.xlu0 %v3034, %s3039
    %v3041 = vpop.permute.xlu0 %3040
    %s3043 = sor.u32 256, 16
    %3044 = vbcast.lane.b32.xlu0 %v3034, %s3043
    %v3045 = vpop.permute.xlu0 %3044
    %s3047 = sor.u32 256, 24
    %3048 = vbcast.lane.b32.xlu0 %v3034, %s3047
    %v3049 = vpop.permute.xlu0 %3048
    %s3051 = sor.u32 256, 32
    %3052 = vbcast.lane.b32.xlu0 %v3034, %s3051
    %v3053 = vpop.permute.xlu0 %3052
    %s3055 = sor.u32 256, 40
    %3056 = vbcast.lane.b32.xlu0 %v3034, %s3055
    %v3057 = vpop.permute.xlu0 %3056
    %s3059 = sor.u32 256, 48
    %3060 = vbcast.lane.b32.xlu0 %v3034, %s3059
    %v3061 = vpop.permute.xlu0 %3060
    %s3063 = sor.u32 256, 56
    %3064 = vbcast.lane.b32.xlu0 %v3034, %s3063
    %v3065 = vpop.permute.xlu0 %3064
    %v3066 = vlaneseq
    %v3067 = vshrl.u32 %v3066, 7
    %v3068 = vsub.s32 1, %v3067
    %v3069 = vrot.slane %v2067, %v3068
    %3071 = vbcast.lane.b32.xlu0 %v3069, 256
    %v3072 = vpop.permute.xlu0 %3071
    %s3074 = sor.u32 256, 8
    %3075 = vbcast.lane.b32.xlu0 %v3069, %s3074
    %v3076 = vpop.permute.xlu0 %3075
    %s3078 = sor.u32 256, 16
    %3079 = vbcast.lane.b32.xlu0 %v3069, %s3078
    %v3080 = vpop.permute.xlu0 %3079
    %s3082 = sor.u32 256, 24
    %3083 = vbcast.lane.b32.xlu0 %v3069, %s3082
    %v3084 = vpop.permute.xlu0 %3083
    %s3086 = sor.u32 256, 32
    %3087 = vbcast.lane.b32.xlu0 %v3069, %s3086
    %v3088 = vpop.permute.xlu0 %3087
    %s3090 = sor.u32 256, 40
    %3091 = vbcast.lane.b32.xlu0 %v3069, %s3090
    %v3092 = vpop.permute.xlu0 %3091
    %s3094 = sor.u32 256, 48
    %3095 = vbcast.lane.b32.xlu0 %v3069, %s3094
    %v3096 = vpop.permute.xlu0 %3095
    %s3098 = sor.u32 256, 56
    %3099 = vbcast.lane.b32.xlu0 %v3069, %s3098
    %v3100 = vpop.permute.xlu0 %3099
    %v3101 = vlaneseq
    %v3102 = vshrl.u32 %v3101, 7
    %v3103 = vsub.s32 2, %v3102
    %v3104 = vrot.slane %v2067, %v3103
    %3106 = vbcast.lane.b32.xlu0 %v3104, 256
    %v3107 = vpop.permute.xlu0 %3106
    %s3109 = sor.u32 256, 8
    %3110 = vbcast.lane.b32.xlu0 %v3104, %s3109
    %v3111 = vpop.permute.xlu0 %3110
    %s3113 = sor.u32 256, 16
    %3114 = vbcast.lane.b32.xlu0 %v3104, %s3113
    %v3115 = vpop.permute.xlu0 %3114
    %s3117 = sor.u32 256, 24
    %3118 = vbcast.lane.b32.xlu0 %v3104, %s3117
    %v3119 = vpop.permute.xlu0 %3118
    %s3121 = sor.u32 256, 32
    %3122 = vbcast.lane.b32.xlu0 %v3104, %s3121
    %v3123 = vpop.permute.xlu0 %3122
    %s3125 = sor.u32 256, 40
    %3126 = vbcast.lane.b32.xlu0 %v3104, %s3125
    %v3127 = vpop.permute.xlu0 %3126
    %s3129 = sor.u32 256, 48
    %3130 = vbcast.lane.b32.xlu0 %v3104, %s3129
    %v3131 = vpop.permute.xlu0 %3130
    %s3133 = sor.u32 256, 56
    %3134 = vbcast.lane.b32.xlu0 %v3104, %s3133
    %v3135 = vpop.permute.xlu0 %3134
    %v3136 = vmul.f32 %v2951, %v3037
    %v3137 = vmul.f32 %v2952, %v3041
    %v3138 = vmul.f32 %v2953, %v3045
    %v3139 = vmul.f32 %v2954, %v3049
    %v3140 = vmul.f32 %v2955, %v3053
    %v3141 = vmul.f32 %v2956, %v3057
    %v3142 = vmul.f32 %v2957, %v3061
    %v3143 = vmul.f32 %v2958, %v3065
    %v3144 = vmul.f32 %v2959, %v3037
    %v3145 = vmul.f32 %v2960, %v3041
    %v3146 = vmul.f32 %v2961, %v3045
    %v3147 = vmul.f32 %v2962, %v3049
    %v3148 = vmul.f32 %v2963, %v3053
    %v3149 = vmul.f32 %v2964, %v3057
    %v3150 = vmul.f32 %v2965, %v3061
    %v3151 = vmul.f32 %v2966, %v3065
    %v3152 = vsel %vm344, %v3136, 0.0
    %v3153 = vsel %vm344, %v3137, 0.0
    %v3154 = vadd.f32 %v3152, %v3153
    %v3155 = vsel %vm344, %v3138, 0.0
    %v3156 = vadd.f32 %v3154, %v3155
    %v3157 = vsel %vm344, %v3139, 0.0
    %v3158 = vadd.f32 %v3156, %v3157
    %v3159 = vsel %vm344, %v3140, 0.0
    %v3160 = vadd.f32 %v3158, %v3159
    %v3161 = vsel %vm344, %v3141, 0.0
    %v3162 = vadd.f32 %v3160, %v3161
    %v3163 = vsel %vm344, %v3142, 0.0
    %v3164 = vadd.f32 %v3162, %v3163
    %v3165 = vsel %vm344, %v3143, 0.0
    %v3166 = vadd.f32 %v3164, %v3165
    %v3167 = vrot.slane %v3166, 4
    %v3168 = vadd.f32 %v3166, %v3167
    %v3169 = vrot.slane %v3168, 2
    %v3170 = vadd.f32 %v3168, %v3169
    %v3171 = vrot.slane %v3170, 1
    %v3172 = vadd.f32 %v3170, %v3171
    %v3173 = vsel %vm344, %v3144, 0.0
    %v3174 = vsel %vm344, %v3145, 0.0
    %v3175 = vadd.f32 %v3173, %v3174
    %v3176 = vsel %vm344, %v3146, 0.0
    %v3177 = vadd.f32 %v3175, %v3176
    %v3178 = vsel %vm344, %v3147, 0.0
    %v3179 = vadd.f32 %v3177, %v3178
    %v3180 = vsel %vm344, %v3148, 0.0
    %v3181 = vadd.f32 %v3179, %v3180
    %v3182 = vsel %vm344, %v3149, 0.0
    %v3183 = vadd.f32 %v3181, %v3182
    %v3184 = vsel %vm344, %v3150, 0.0
    %v3185 = vadd.f32 %v3183, %v3184
    %v3186 = vsel %vm344, %v3151, 0.0
    %v3187 = vadd.f32 %v3185, %v3186
    %v3188 = vrot.slane %v3187, 4
    %v3189 = vadd.f32 %v3187, %v3188
    %v3190 = vrot.slane %v3189, 2
    %v3191 = vadd.f32 %v3189, %v3190
    %v3192 = vrot.slane %v3191, 1
    %v3193 = vadd.f32 %v3191, %v3192
    %v3194 = vmul.f32 %v2775, %v3072
    %v3195 = vmul.f32 %v2776, %v3076
    %v3196 = vmul.f32 %v2777, %v3080
    %v3197 = vmul.f32 %v2778, %v3084
    %v3198 = vmul.f32 %v2779, %v3088
    %v3199 = vmul.f32 %v2780, %v3092
    %v3200 = vmul.f32 %v2781, %v3096
    %v3201 = vmul.f32 %v2782, %v3100
    %v3202 = vmul.f32 %v2783, %v3072
    %v3203 = vmul.f32 %v2784, %v3076
    %v3204 = vmul.f32 %v2785, %v3080
    %v3205 = vmul.f32 %v2786, %v3084
    %v3206 = vmul.f32 %v2787, %v3088
    %v3207 = vmul.f32 %v2788, %v3092
    %v3208 = vmul.f32 %v2789, %v3096
    %v3209 = vmul.f32 %v2790, %v3100
    %v3210 = vsel %vm344, %v3194, 0.0
    %v3211 = vsel %vm344, %v3195, 0.0
    %v3212 = vadd.f32 %v3210, %v3211
    %v3213 = vsel %vm344, %v3196, 0.0
    %v3214 = vadd.f32 %v3212, %v3213
    %v3215 = vsel %vm344, %v3197, 0.0
    %v3216 = vadd.f32 %v3214, %v3215
    %v3217 = vsel %vm344, %v3198, 0.0
    %v3218 = vadd.f32 %v3216, %v3217
    %v3219 = vsel %vm344, %v3199, 0.0
    %v3220 = vadd.f32 %v3218, %v3219
    %v3221 = vsel %vm344, %v3200, 0.0
    %v3222 = vadd.f32 %v3220, %v3221
    %v3223 = vsel %vm344, %v3201, 0.0
    %v3224 = vadd.f32 %v3222, %v3223
    %v3225 = vrot.slane %v3224, 4
    %v3226 = vadd.f32 %v3224, %v3225
    %v3227 = vrot.slane %v3226, 2
    %v3228 = vadd.f32 %v3226, %v3227
    %v3229 = vrot.slane %v3228, 1
    %v3230 = vadd.f32 %v3228, %v3229
    %v3231 = vsel %vm344, %v3202, 0.0
    %v3232 = vsel %vm344, %v3203, 0.0
    %v3233 = vadd.f32 %v3231, %v3232
    %v3234 = vsel %vm344, %v3204, 0.0
    %v3235 = vadd.f32 %v3233, %v3234
    %v3236 = vsel %vm344, %v3205, 0.0
    %v3237 = vadd.f32 %v3235, %v3236
    %v3238 = vsel %vm344, %v3206, 0.0
    %v3239 = vadd.f32 %v3237, %v3238
    %v3240 = vsel %vm344, %v3207, 0.0
    %v3241 = vadd.f32 %v3239, %v3240
    %v3242 = vsel %vm344, %v3208, 0.0
    %v3243 = vadd.f32 %v3241, %v3242
    %v3244 = vsel %vm344, %v3209, 0.0
    %v3245 = vadd.f32 %v3243, %v3244
    %v3246 = vrot.slane %v3245, 4
    %v3247 = vadd.f32 %v3245, %v3246
    %v3248 = vrot.slane %v3247, 2
    %v3249 = vadd.f32 %v3247, %v3248
    %v3250 = vrot.slane %v3249, 1
    %v3251 = vadd.f32 %v3249, %v3250
    %v3252 = vadd.f32 %v3172, %v3230
    %v3253 = vadd.f32 %v3193, %v3251
    %v3254 = vmul.f32 %v3015, %v3107
    %v3255 = vmul.f32 %v3016, %v3111
    %v3256 = vmul.f32 %v3017, %v3115
    %v3257 = vmul.f32 %v3018, %v3119
    %v3258 = vmul.f32 %v3019, %v3123
    %v3259 = vmul.f32 %v3020, %v3127
    %v3260 = vmul.f32 %v3021, %v3131
    %v3261 = vmul.f32 %v3022, %v3135
    %v3262 = vmul.f32 %v3023, %v3107
    %v3263 = vmul.f32 %v3024, %v3111
    %v3264 = vmul.f32 %v3025, %v3115
    %v3265 = vmul.f32 %v3026, %v3119
    %v3266 = vmul.f32 %v3027, %v3123
    %v3267 = vmul.f32 %v3028, %v3127
    %v3268 = vmul.f32 %v3029, %v3131
    %v3269 = vmul.f32 %v3030, %v3135
    %v3270 = vsel %vm344, %v3254, 0.0
    %v3271 = vsel %vm344, %v3255, 0.0
    %v3272 = vadd.f32 %v3270, %v3271
    %v3273 = vsel %vm344, %v3256, 0.0
    %v3274 = vadd.f32 %v3272, %v3273
    %v3275 = vsel %vm344, %v3257, 0.0
    %v3276 = vadd.f32 %v3274, %v3275
    %v3277 = vsel %vm344, %v3258, 0.0
    %v3278 = vadd.f32 %v3276, %v3277
    %v3279 = vsel %vm344, %v3259, 0.0
    %v3280 = vadd.f32 %v3278, %v3279
    %v3281 = vsel %vm344, %v3260, 0.0
    %v3282 = vadd.f32 %v3280, %v3281
    %v3283 = vsel %vm344, %v3261, 0.0
    %v3284 = vadd.f32 %v3282, %v3283
    %v3285 = vrot.slane %v3284, 4
    %v3286 = vadd.f32 %v3284, %v3285
    %v3287 = vrot.slane %v3286, 2
    %v3288 = vadd.f32 %v3286, %v3287
    %v3289 = vrot.slane %v3288, 1
    %v3290 = vadd.f32 %v3288, %v3289
    %v3291 = vsel %vm344, %v3262, 0.0
    %v3292 = vsel %vm344, %v3263, 0.0
    %v3293 = vadd.f32 %v3291, %v3292
    %v3294 = vsel %vm344, %v3264, 0.0
    %v3295 = vadd.f32 %v3293, %v3294
    %v3296 = vsel %vm344, %v3265, 0.0
    %v3297 = vadd.f32 %v3295, %v3296
    %v3298 = vsel %vm344, %v3266, 0.0
    %v3299 = vadd.f32 %v3297, %v3298
    %v3300 = vsel %vm344, %v3267, 0.0
    %v3301 = vadd.f32 %v3299, %v3300
    %v3302 = vsel %vm344, %v3268, 0.0
    %v3303 = vadd.f32 %v3301, %v3302
    %v3304 = vsel %vm344, %v3269, 0.0
    %v3305 = vadd.f32 %v3303, %v3304
    %v3306 = vrot.slane %v3305, 4
    %v3307 = vadd.f32 %v3305, %v3306
    %v3308 = vrot.slane %v3307, 2
    %v3309 = vadd.f32 %v3307, %v3308
    %v3310 = vrot.slane %v3309, 1
    %v3311 = vadd.f32 %v3309, %v3310
    %v3312 = vadd.f32 %v3252, %v3290
    %v3313 = vadd.f32 %v3253, %v3311
    %v3314 = vstv %s2078
    %v3315 = vadd.f32 %v3312, %v3314
    %v3316 = vadd.f32 %v3313, %v3314
    %v3319 = vsel %vm766, %v3316, %v3315
    %v3321 = vadd.f32 %v2424, %v3319
    %v3322 = vsel %vm770, %v3321, 0.0
    %3323 = vadd.xlane.f32.xlu0 %v3322
    %v3324 = vpop.xlane.xlu0 %3323
    %v3325 = vmul.f32 %v3324, %v774
    %v3326 = vsub.f32 %v3321, %v3325
    %v3327 = vmul.f32 %v3326, %v3326
    %v3328 = vsel %vm770, %v3327, 0.0
    %3329 = vadd.xlane.f32.xlu0 %v3328
    %v3330 = vpop.xlane.xlu0 %3329
    %v3331 = vmul.f32 %v3330, %v774
    %v3332 = vadd.f32 %v3331, 1e-05
    %v3333 = vrsqrt.pop %v3332
    %v3334 = vmul.f32 %v3326, %v3333
    %v3336 = vlaneseq
    %v3337 = vshrl.u32 %v3336, 7
    %v3338 = vsub.s32 0, %v3337
    %v3339 = vrot.slane %v2068, %v3338
    %v3341 = vmul.f32 %v3334, %v3339
    %v3343 = vlaneseq
    %v3344 = vshrl.u32 %v3343, 7
    %v3345 = vsub.s32 0, %v3344
    %v3346 = vrot.slane %v2069, %v3345
    %v3348 = vadd.f32 %v3341, %v3346
    %v3349 = vmul.f32 %v83, 1.0051273
    %v3350 = vmul.f32 %v3348, 0.10139444
    %v3351 = vsub.f32 %v3349, %v3350
    %v3352 = vmul.f32 %v3351, 0.6572451
    %v3353 = vmul.f32 %v83, 0.34275192
    %v3354 = vadd.f32 %v3352, %v3353
    %s3355 = scalar_lea.vmem %s2, 4
    %v3356 = vld [vmem:[%s3355] sm:$0x3]
    %v3357 = vmul.f32 %v3356, 0.04800177
    %v3358 = vadd.f32 %v3354, %v3357
    %v3359 = vld [vmem:[%s3 + $0x2] sm:$0x1]
    %v3361 = vsel %vm88, %v3359, 0
    %3363 = vmatprep.subr.mxu0 0.0
    %3364 = vmatpush1.msra.mxu0 %v1728
    %3365 = vmatprep.subr.mxu0 0.0
    %3366 = vmatpush1.msra.mxu0 %v1729
    %3367 = vmatprep.subr.mxu0 0.0
    %3368 = vmatpush1.msra.mxu0 0.0
    %3369 = vmatprep.subr.mxu0 0.0
    %3370 = vmatpush1.msra.mxu0 0.0
    %3371 = vmatprep.subr.mxu0 0.0
    %3372 = vmatpush1.msra.mxu0 0.0
    %3373 = vmatprep.subr.mxu0 0.0
    %3374 = vmatpush1.msra.mxu0 0.0
    %3375 = vmatprep.subr.mxu0 0.0
    %3376 = vmatpush1.msra.mxu0 0.0
    %3377 = vmatprep.subr.mxu0 0.0
    %3378 = vmatpush1.msra.mxu0 0.0
    %3379 = vmatprep.subr.mxu0 0.0
    %3380 = vmatpush1.msra.mxu0 0.0
    %3381 = vmatprep.subr.mxu0 0.0
    %3382 = vmatpush1.msra.mxu0 0.0
    %3383 = vmatprep.subr.mxu0 0.0
    %3384 = vmatpush1.msra.mxu0 0.0
    %3385 = vmatprep.subr.mxu0 0.0
    %3386 = vmatpush1.msra.mxu0 0.0
    %3387 = vmatprep.subr.mxu0 0.0
    %3388 = vmatpush1.msra.mxu0 0.0
    %3389 = vmatprep.subr.mxu0 0.0
    %3390 = vmatpush1.msra.mxu0 0.0
    %3391 = vmatprep.subr.mxu0 0.0
    %3392 = vmatpush1.msra.mxu0 0.0
    %3393 = vmatprep.subr.mxu0 0.0
    %3394 = vmatpush1.msra.mxu0 0.0
    %3395 = vmatprep.subr.mxu0 0.0
    %3396 = vmatpush1.msra.mxu0 0.0
    %3397 = vmatprep.subr.mxu0 0.0
    %3398 = vmatpush1.msra.mxu0 0.0
    %3399 = vmatprep.subr.mxu0 0.0
    %3400 = vmatpush1.msra.mxu0 0.0
    %3401 = vmatprep.subr.mxu0 0.0
    %3402 = vmatpush1.msra.mxu0 0.0
    %3403 = vmatprep.subr.mxu0 0.0
    %3404 = vmatpush1.msra.mxu0 0.0
    %3405 = vmatprep.subr.mxu0 0.0
    %3406 = vmatpush1.msra.mxu0 0.0
    %3407 = vmatprep.subr.mxu0 0.0
    %3408 = vmatpush1.msra.mxu0 0.0
    %3409 = vmatprep.subr.mxu0 0.0
    %3410 = vmatpush1.msra.mxu0 0.0
    %3411 = vmatprep.subr.mxu0 0.0
    %3412 = vmatpush1.msra.mxu0 0.0
    %3413 = vmatprep.subr.mxu0 0.0
    %3414 = vmatpush1.msra.mxu0 0.0
    %3415 = vmatprep.subr.mxu0 0.0
    %3416 = vmatpush1.msra.mxu0 0.0
    %3417 = vmatprep.subr.mxu0 0.0
    %3418 = vmatpush1.msra.mxu0 0.0
    %3419 = vmatprep.subr.mxu0 0.0
    %3420 = vmatpush1.msra.mxu0 0.0
    %3421 = vmatprep.subr.mxu0 0.0
    %3422 = vmatpush1.msra.mxu0 0.0
    %3423 = vmatprep.subr.mxu0 0.0
    %3424 = vmatpush1.msra.mxu0 0.0
    %3425 = vmatprep.subr.mxu0 0.0
    %3426 = vmatpush1.msra.mxu0 0.0
    %3427 = vmatprep.mubr.f32.mxu0 0.0
    %3428 = vmatmul.mubr.f32.gmra.mrb[0].mxu0 %v3361
    %v3429 = vpop.f32.mrb[0].mxu0
    %v3430 = vadd.f32 %v1730, %v3429
    %v3431 = vpop.f32.mrb[0].mxu0
    %3432 = vdwg.mxu0
    %vm3433 = vcmp.gt.f32.partialorder %v3430, 20.0
    %v3434 = vmin.f32 %v3430, 20.0
    %v3435 = vmul.f32 %v3434, 1.442695
    %v3436 = vpow.pop %v3435
    %v3437 = vadd.f32 %v3436, 1.0
    %v3438 = vlog2.pop %v3437
    %v3439 = vmul.f32 %v3438, 0.6931472
    %v3440 = vmul.f32 -0.5, %v3436
    %v3441 = vadd.f32 %v3440, 1.0
    %v3442 = vmul.f32 %v3441, %v3436
    %v3443 = vand.u32 2147483647, %v3436
    %vm3444 = vcmp.lt.f32.partialorder %v3443, 0.0004427343
    %v3445 = vsel %vm3444, %v3442, %v3439
    %v3446 = vsel %vm3433, %v3430, %v3445
    %v3447 = vtanh.pop %v3446
    %v3448 = vmul.f32 %v3430, %v3447
    %v3450 = vsel %vm187, %v3448, 0
    %3452 = vmatprep.subr.mxu0 0.0
    %3453 = vmatpush1.msra.mxu0 %v1820
    %3454 = vmatprep.subr.mxu0 0.0
    %3455 = vmatpush1.msra.mxu0 %v1821
    %3456 = vmatprep.subr.mxu0 0.0
    %3457 = vmatpush1.msra.mxu0 %v1822
    %3458 = vmatprep.subr.mxu0 0.0
    %3459 = vmatpush1.msra.mxu0 %v1823
    %3460 = vmatprep.subr.mxu0 0.0
    %3461 = vmatpush1.msra.mxu0 %v1824
    %3462 = vmatprep.subr.mxu0 0.0
    %3463 = vmatpush1.msra.mxu0 %v1825
    %3464 = vmatprep.subr.mxu0 0.0
    %3465 = vmatpush1.msra.mxu0 %v1826
    %3466 = vmatprep.subr.mxu0 0.0
    %3467 = vmatpush1.msra.mxu0 %v1827
    %3468 = vmatprep.subr.mxu0 0.0
    %3469 = vmatpush1.msra.mxu0 0.0
    %3470 = vmatprep.subr.mxu0 0.0
    %3471 = vmatpush1.msra.mxu0 0.0
    %3472 = vmatprep.subr.mxu0 0.0
    %3473 = vmatpush1.msra.mxu0 0.0
    %3474 = vmatprep.subr.mxu0 0.0
    %3475 = vmatpush1.msra.mxu0 0.0
    %3476 = vmatprep.subr.mxu0 0.0
    %3477 = vmatpush1.msra.mxu0 0.0
    %3478 = vmatprep.subr.mxu0 0.0
    %3479 = vmatpush1.msra.mxu0 0.0
    %3480 = vmatprep.subr.mxu0 0.0
    %3481 = vmatpush1.msra.mxu0 0.0
    %3482 = vmatprep.subr.mxu0 0.0
    %3483 = vmatpush1.msra.mxu0 0.0
    %3484 = vmatprep.subr.mxu0 0.0
    %3485 = vmatpush1.msra.mxu0 0.0
    %3486 = vmatprep.subr.mxu0 0.0
    %3487 = vmatpush1.msra.mxu0 0.0
    %3488 = vmatprep.subr.mxu0 0.0
    %3489 = vmatpush1.msra.mxu0 0.0
    %3490 = vmatprep.subr.mxu0 0.0
    %3491 = vmatpush1.msra.mxu0 0.0
    %3492 = vmatprep.subr.mxu0 0.0
    %3493 = vmatpush1.msra.mxu0 0.0
    %3494 = vmatprep.subr.mxu0 0.0
    %3495 = vmatpush1.msra.mxu0 0.0
    %3496 = vmatprep.subr.mxu0 0.0
    %3497 = vmatpush1.msra.mxu0 0.0
    %3498 = vmatprep.subr.mxu0 0.0
    %3499 = vmatpush1.msra.mxu0 0.0
    %3500 = vmatprep.subr.mxu0 0.0
    %3501 = vmatpush1.msra.mxu0 0.0
    %3502 = vmatprep.subr.mxu0 0.0
    %3503 = vmatpush1.msra.mxu0 0.0
    %3504 = vmatprep.subr.mxu0 0.0
    %3505 = vmatpush1.msra.mxu0 0.0
    %3506 = vmatprep.subr.mxu0 0.0
    %3507 = vmatpush1.msra.mxu0 0.0
    %3508 = vmatprep.subr.mxu0 0.0
    %3509 = vmatpush1.msra.mxu0 0.0
    %3510 = vmatprep.subr.mxu0 0.0
    %3511 = vmatpush1.msra.mxu0 0.0
    %3512 = vmatprep.subr.mxu0 0.0
    %3513 = vmatpush1.msra.mxu0 0.0
    %3514 = vmatprep.subr.mxu0 0.0
    %3515 = vmatpush1.msra.mxu0 0.0
    %3516 = vmatprep.mubr.f32.mxu0 0.0
    %3517 = vmatmul.mubr.f32.gmra.mrb[0].mxu0 %v3450
    %v3518 = vpop.f32.mrb[0].mxu0
    %v3519 = vadd.f32 %v1828, %v3518
    %v3520 = vpop.f32.mrb[0].mxu0
    %3521 = vdwg.mxu0
    %v3523 = vsel %vm88, %v3519, 0
    %3525 = vmatprep.subr.mxu0 0.0
    %3526 = vmatpush1.msra.mxu0 %v1906
    %3527 = vmatprep.subr.mxu0 0.0
    %3528 = vmatpush1.msra.mxu0 %v1907
    %3529 = vmatprep.subr.mxu0 0.0
    %3530 = vmatpush1.msra.mxu0 0.0
    %3531 = vmatprep.subr.mxu0 0.0
    %3532 = vmatpush1.msra.mxu0 0.0
    %3533 = vmatprep.subr.mxu0 0.0
    %3534 = vmatpush1.msra.mxu0 0.0
    %3535 = vmatprep.subr.mxu0 0.0
    %3536 = vmatpush1.msra.mxu0 0.0
    %3537 = vmatprep.subr.mxu0 0.0
    %3538 = vmatpush1.msra.mxu0 0.0
    %3539 = vmatprep.subr.mxu0 0.0
    %3540 = vmatpush1.msra.mxu0 0.0
    %3541 = vmatprep.subr.mxu0 0.0
    %3542 = vmatpush1.msra.mxu0 0.0
    %3543 = vmatprep.subr.mxu0 0.0
    %3544 = vmatpush1.msra.mxu0 0.0
    %3545 = vmatprep.subr.mxu0 0.0
    %3546 = vmatpush1.msra.mxu0 0.0
    %3547 = vmatprep.subr.mxu0 0.0
    %3548 = vmatpush1.msra.mxu0 0.0
    %3549 = vmatprep.subr.mxu0 0.0
    %3550 = vmatpush1.msra.mxu0 0.0
    %3551 = vmatprep.subr.mxu0 0.0
    %3552 = vmatpush1.msra.mxu0 0.0
    %3553 = vmatprep.subr.mxu0 0.0
    %3554 = vmatpush1.msra.mxu0 0.0
    %3555 = vmatprep.subr.mxu0 0.0
    %3556 = vmatpush1.msra.mxu0 0.0
    %3557 = vmatprep.subr.mxu0 0.0
    %3558 = vmatpush1.msra.mxu0 0.0
    %3559 = vmatprep.subr.mxu0 0.0
    %3560 = vmatpush1.msra.mxu0 0.0
    %3561 = vmatprep.subr.mxu0 0.0
    %3562 = vmatpush1.msra.mxu0 0.0
    %3563 = vmatprep.subr.mxu0 0.0
    %3564 = vmatpush1.msra.mxu0 0.0
    %3565 = vmatprep.subr.mxu0 0.0
    %3566 = vmatpush1.msra.mxu0 0.0
    %3567 = vmatprep.subr.mxu0 0.0
    %3568 = vmatpush1.msra.mxu0 0.0
    %3569 = vmatprep.subr.mxu0 0.0
    %3570 = vmatpush1.msra.mxu0 0.0
    %3571 = vmatprep.subr.mxu0 0.0
    %3572 = vmatpush1.msra.mxu0 0.0
    %3573 = vmatprep.subr.mxu0 0.0
    %3574 = vmatpush1.msra.mxu0 0.0
    %3575 = vmatprep.subr.mxu0 0.0
    %3576 = vmatpush1.msra.mxu0 0.0
    %3577 = vmatprep.subr.mxu0 0.0
    %3578 = vmatpush1.msra.mxu0 0.0
    %3579 = vmatprep.subr.mxu0 0.0
    %3580 = vmatpush1.msra.mxu0 0.0
    %3581 = vmatprep.subr.mxu0 0.0
    %3582 = vmatpush1.msra.mxu0 0.0
    %3583 = vmatprep.subr.mxu0 0.0
    %3584 = vmatpush1.msra.mxu0 0.0
    %3585 = vmatprep.subr.mxu0 0.0
    %3586 = vmatpush1.msra.mxu0 0.0
    %3587 = vmatprep.subr.mxu0 0.0
    %3588 = vmatpush1.msra.mxu0 0.0
    %3589 = vmatprep.mubr.f32.mxu0 0.0
    %3590 = vmatmul.mubr.f32.gmra.mrb[0].mxu0 %v3523
    %v3591 = vpop.f32.mrb[0].mxu0
    %v3592 = vadd.f32 0.0, %v3591
    %v3593 = vpop.f32.mrb[0].mxu0
    %3594 = vdwg.mxu0
    %v3595 = vlaneseq
    %v3596 = vshrl.u32 %v3595, 7
    %v3597 = vsub.s32 0, %v3596
    %v3598 = vrot.slane %v3592, %v3597
    %v3600 = vsel %vm344, %v3358, 0
    %3602 = vmatprep.subr.mxu0 0.0
    %3603 = vmatpush1.msra.mxu0 %v1902
    %3604 = vmatprep.subr.mxu0 0.0
    %3605 = vmatpush1.msra.mxu0 %v1903
    %3606 = vmatprep.subr.mxu0 0.0
    %3607 = vmatpush1.msra.mxu0 %v1904
    %3608 = vmatprep.subr.mxu0 0.0
    %3609 = vmatpush1.msra.mxu0 %v1905
    %3610 = vmatprep.subr.mxu0 0.0
    %3611 = vmatpush1.msra.mxu0 0.0
    %3612 = vmatprep.subr.mxu0 0.0
    %3613 = vmatpush1.msra.mxu0 0.0
    %3614 = vmatprep.subr.mxu0 0.0
    %3615 = vmatpush1.msra.mxu0 0.0
    %3616 = vmatprep.subr.mxu0 0.0
    %3617 = vmatpush1.msra.mxu0 0.0
    %3618 = vmatprep.subr.mxu0 0.0
    %3619 = vmatpush1.msra.mxu0 0.0
    %3620 = vmatprep.subr.mxu0 0.0
    %3621 = vmatpush1.msra.mxu0 0.0
    %3622 = vmatprep.subr.mxu0 0.0
    %3623 = vmatpush1.msra.mxu0 0.0
    %3624 = vmatprep.subr.mxu0 0.0
    %3625 = vmatpush1.msra.mxu0 0.0
    %3626 = vmatprep.subr.mxu0 0.0
    %3627 = vmatpush1.msra.mxu0 0.0
    %3628 = vmatprep.subr.mxu0 0.0
    %3629 = vmatpush1.msra.mxu0 0.0
    %3630 = vmatprep.subr.mxu0 0.0
    %3631 = vmatpush1.msra.mxu0 0.0
    %3632 = vmatprep.subr.mxu0 0.0
    %3633 = vmatpush1.msra.mxu0 0.0
    %3634 = vmatprep.subr.mxu0 0.0
    %3635 = vmatpush1.msra.mxu0 0.0
    %3636 = vmatprep.subr.mxu0 0.0
    %3637 = vmatpush1.msra.mxu0 0.0
    %3638 = vmatprep.subr.mxu0 0.0
    %3639 = vmatpush1.msra.mxu0 0.0
    %3640 = vmatprep.subr.mxu0 0.0
    %3641 = vmatpush1.msra.mxu0 0.0
    %3642 = vmatprep.subr.mxu0 0.0
    %3643 = vmatpush1.msra.mxu0 0.0
    %3644 = vmatprep.subr.mxu0 0.0
    %3645 = vmatpush1.msra.mxu0 0.0
    %3646 = vmatprep.subr.mxu0 0.0
    %3647 = vmatpush1.msra.mxu0 0.0
    %3648 = vmatprep.subr.mxu0 0.0
    %3649 = vmatpush1.msra.mxu0 0.0
    %3650 = vmatprep.subr.mxu0 0.0
    %3651 = vmatpush1.msra.mxu0 0.0
    %3652 = vmatprep.subr.mxu0 0.0
    %3653 = vmatpush1.msra.mxu0 0.0
    %3654 = vmatprep.subr.mxu0 0.0
    %3655 = vmatpush1.msra.mxu0 0.0
    %3656 = vmatprep.subr.mxu0 0.0
    %3657 = vmatpush1.msra.mxu0 0.0
    %3658 = vmatprep.subr.mxu0 0.0
    %3659 = vmatpush1.msra.mxu0 0.0
    %3660 = vmatprep.subr.mxu0 0.0
    %3661 = vmatpush1.msra.mxu0 0.0
    %3662 = vmatprep.subr.mxu0 0.0
    %3663 = vmatpush1.msra.mxu0 0.0
    %3664 = vmatprep.subr.mxu0 0.0
    %3665 = vmatpush1.msra.mxu0 0.0
    %3666 = vmatprep.mubr.f32.mxu0 0.0
    %3667 = vmatmul.mubr.f32.gmra.mrb[0].mxu0 %v3600
    %v3668 = vpop.f32.mrb[0].mxu0
    %v3669 = vadd.f32 %v3598, %v3668
    %v3670 = vpop.f32.mrb[0].mxu0
    %3671 = vdwg.mxu0
    %v3672 = vadd.f32 %v3669, %v2060
    %v3673 = vmul.f32 %v2079, %v3672
    %v3674 = vadd.f32 %v3673, %v2081
    %v3675 = vmul.f32 %v2083, %v3672
    %v3676 = vadd.f32 %v3675, %v2085
    %v3677 = vmul.f32 %v2087, %v3672
    %v3678 = vadd.f32 %v3677, %v2089
    %v3679 = vlaneseq
    %v3680 = vshrl.u32 %v3679, 7
    %v3681 = vsub.s32 0, %v3680
    %v3682 = vrot.slane %v3674, %v3681
    %3684 = vbcast.lane.b32.xlu0 %v3682, 256
    %v3685 = vpop.permute.xlu0 %3684
    %s3687 = sor.u32 256, 8
    %3688 = vbcast.lane.b32.xlu0 %v3682, %s3687
    %v3689 = vpop.permute.xlu0 %3688
    %s3691 = sor.u32 256, 16
    %3692 = vbcast.lane.b32.xlu0 %v3682, %s3691
    %v3693 = vpop.permute.xlu0 %3692
    %s3695 = sor.u32 256, 24
    %3696 = vbcast.lane.b32.xlu0 %v3682, %s3695
    %v3697 = vpop.permute.xlu0 %3696
    %v3698 = vlaneseq
    %v3699 = vshrl.u32 %v3698, 7
    %v3700 = vsub.s32 1, %v3699
    %v3701 = vrot.slane %v3674, %v3700
    %3703 = vbcast.lane.b32.xlu0 %v3701, 256
    %v3704 = vpop.permute.xlu0 %3703
    %s3706 = sor.u32 256, 8
    %3707 = vbcast.lane.b32.xlu0 %v3701, %s3706
    %v3708 = vpop.permute.xlu0 %3707
    %s3710 = sor.u32 256, 16
    %3711 = vbcast.lane.b32.xlu0 %v3701, %s3710
    %v3712 = vpop.permute.xlu0 %3711
    %s3714 = sor.u32 256, 24
    %3715 = vbcast.lane.b32.xlu0 %v3701, %s3714
    %v3716 = vpop.permute.xlu0 %3715
    %v3719 = vunpack.c.l.s4 1966171168
    %v3720 = vunpack.c.0.s8 %v3719
    %v3721 = vlaneseq
    %v3722 = vshrl.u32 %v3721, 7
    %v3723 = vsub.s32 %v3720, %v3722
    %v3724 = vrot.slane %v3676, %v3723
    %v3725 = vcombine.high %v3724, %v3724
    %v3727 = vunpack.c.l.s4 1966171168
    %v3728 = vunpack.c.0.s8 %v3727
    %v3729 = vlaneseq
    %v3730 = vshrl.u32 %v3729, 7
    %v3731 = vsub.s32 %v3728, %v3730
    %v3732 = vrot.slane %v3724, %v3731
    %v3734 = vunpack.c.l.s4 1966171168
    %v3735 = vunpack.c.0.s8 %v3734
    %v3736 = vlaneseq
    %v3737 = vshrl.u32 %v3736, 7
    %v3738 = vsub.s32 %v3735, %v3737
    %v3739 = vrot.slane %v3725, %v3738
    %v3740 = vlaneseq
    %v3741 = vshrl.u32 %v3740, 7
    %v3742 = vsub.s32 0, %v3741
    %v3743 = vrot.slane %v3732, %v3742
    %v3744 = vlaneseq
    %v3745 = vshrl.u32 %v3744, 7
    %v3746 = vsub.s32 0, %v3745
    %v3747 = vrot.slane %v3739, %v3746
    %v3750 = vmul.f32 %v3685, %v3743
    %v3751 = vmul.f32 %v3689, %v3743
    %v3752 = vmul.f32 %v3693, %v3743
    %v3753 = vmul.f32 %v3697, %v3743
    %v3754 = vmul.f32 %v3704, %v3747
    %v3755 = vmul.f32 %v3708, %v3747
    %v3756 = vmul.f32 %v3712, %v3747
    %v3757 = vmul.f32 %v3716, %v3747
    %v3758 = vsel %vm344, %v3750, -inf
    %3759 = vmax.xlane.f32.xlu0 %v3758
    %v3760 = vpop.xlane.xlu0 %3759
    %v3761 = vsel %vm344, %v3751, -inf
    %3762 = vmax.xlane.f32.xlu0 %v3761
    %v3763 = vpop.xlane.xlu0 %3762
    %v3764 = vsel %vm344, %v3752, -inf
    %3765 = vmax.xlane.f32.xlu0 %v3764
    %v3766 = vpop.xlane.xlu0 %3765
    %v3767 = vsel %vm344, %v3753, -inf
    %3768 = vmax.xlane.f32.xlu0 %v3767
    %v3769 = vpop.xlane.xlu0 %3768
    %v3770 = vsel %vm344, %v3754, -inf
    %3771 = vmax.xlane.f32.xlu0 %v3770
    %v3772 = vpop.xlane.xlu0 %3771
    %v3773 = vsel %vm344, %v3755, -inf
    %3774 = vmax.xlane.f32.xlu0 %v3773
    %v3775 = vpop.xlane.xlu0 %3774
    %v3776 = vsel %vm344, %v3756, -inf
    %3777 = vmax.xlane.f32.xlu0 %v3776
    %v3778 = vpop.xlane.xlu0 %3777
    %v3779 = vsel %vm344, %v3757, -inf
    %3780 = vmax.xlane.f32.xlu0 %v3779
    %v3781 = vpop.xlane.xlu0 %3780
    %v3782 = vsub.f32 %v3750, %v3760
    %v3783 = vsub.f32 %v3751, %v3763
    %v3784 = vsub.f32 %v3752, %v3766
    %v3785 = vsub.f32 %v3753, %v3769
    %v3786 = vsub.f32 %v3754, %v3772
    %v3787 = vsub.f32 %v3755, %v3775
    %v3788 = vsub.f32 %v3756, %v3778
    %v3789 = vsub.f32 %v3757, %v3781
    %v3790 = vmul.f32 %v3782, 1.442695
    %v3791 = vpow.pop %v3790
    %v3792 = vmul.f32 %v3783, 1.442695
    %v3793 = vpow.pop %v3792
    %v3794 = vmul.f32 %v3784, 1.442695
    %v3795 = vpow.pop %v3794
    %v3796 = vmul.f32 %v3785, 1.442695
    %v3797 = vpow.pop %v3796
    %v3798 = vmul.f32 %v3786, 1.442695
    %v3799 = vpow.pop %v3798
    %v3800 = vmul.f32 %v3787, 1.442695
    %v3801 = vpow.pop %v3800
    %v3802 = vmul.f32 %v3788, 1.442695
    %v3803 = vpow.pop %v3802
    %v3804 = vmul.f32 %v3789, 1.442695
    %v3805 = vpow.pop %v3804
    %v3806 = vsel %vm344, %v3791, 0.0
    %3807 = vadd.xlane.f32.xlu0 %v3806
    %v3808 = vpop.xlane.xlu0 %3807
    %v3809 = vsel %vm344, %v3793, 0.0
    %3810 = vadd.xlane.f32.xlu0 %v3809
    %v3811 = vpop.xlane.xlu0 %3810
    %v3812 = vsel %vm344, %v3795, 0.0
    %3813 = vadd.xlane.f32.xlu0 %v3812
    %v3814 = vpop.xlane.xlu0 %3813
    %v3815 = vsel %vm344, %v3797, 0.0
    %3816 = vadd.xlane.f32.xlu0 %v3815
    %v3817 = vpop.xlane.xlu0 %3816
    %v3818 = vsel %vm344, %v3799, 0.0
    %3819 = vadd.xlane.f32.xlu0 %v3818
    %v3820 = vpop.xlane.xlu0 %3819
    %v3821 = vsel %vm344, %v3801, 0.0
    %3822 = vadd.xlane.f32.xlu0 %v3821
    %v3823 = vpop.xlane.xlu0 %3822
    %v3824 = vsel %vm344, %v3803, 0.0
    %3825 = vadd.xlane.f32.xlu0 %v3824
    %v3826 = vpop.xlane.xlu0 %3825
    %v3827 = vsel %vm344, %v3805, 0.0
    %3828 = vadd.xlane.f32.xlu0 %v3827
    %v3829 = vpop.xlane.xlu0 %3828
    %v3830 = vrcp.pop %v3808
    %v3831 = vmul.f32 %v3791, %v3830
    %v3832 = vrcp.pop %v3811
    %v3833 = vmul.f32 %v3793, %v3832
    %v3834 = vrcp.pop %v3814
    %v3835 = vmul.f32 %v3795, %v3834
    %v3836 = vrcp.pop %v3817
    %v3837 = vmul.f32 %v3797, %v3836
    %v3838 = vrcp.pop %v3820
    %v3839 = vmul.f32 %v3799, %v3838
    %v3840 = vrcp.pop %v3823
    %v3841 = vmul.f32 %v3801, %v3840
    %v3842 = vrcp.pop %v3826
    %v3843 = vmul.f32 %v3803, %v3842
    %v3844 = vrcp.pop %v3829
    %v3845 = vmul.f32 %v3805, %v3844
    %v3848 = vunpack.c.l.s4 1966171168
    %v3849 = vunpack.c.0.s8 %v3848
    %v3850 = vlaneseq
    %v3851 = vshrl.u32 %v3850, 7
    %v3852 = vsub.s32 %v3849, %v3851
    %v3853 = vrot.slane %v3678, %v3852
    %v3854 = vcombine.high %v3853, %v3853
    %v3856 = vunpack.c.l.s4 1966171168
    %v3857 = vunpack.c.0.s8 %v3856
    %v3858 = vlaneseq
    %v3859 = vshrl.u32 %v3858, 7
    %v3860 = vsub.s32 %v3857, %v3859
    %v3861 = vrot.slane %v3853, %v3860
    %v3863 = vunpack.c.l.s4 1966171168
    %v3864 = vunpack.c.0.s8 %v3863
    %v3865 = vlaneseq
    %v3866 = vshrl.u32 %v3865, 7
    %v3867 = vsub.s32 %v3864, %v3866
    %v3868 = vrot.slane %v3854, %v3867
    %v3869 = vlaneseq
    %v3870 = vshrl.u32 %v3869, 7
    %v3871 = vsub.s32 0, %v3870
    %v3872 = vrot.slane %v3861, %v3871
    %v3873 = vlaneseq
    %v3874 = vshrl.u32 %v3873, 7
    %v3875 = vsub.s32 0, %v3874
    %v3876 = vrot.slane %v3868, %v3875
    %v3879 = vmul.f32 %v3831, %v3872
    %v3880 = vmul.f32 %v3833, %v3872
    %v3881 = vmul.f32 %v3835, %v3872
    %v3882 = vmul.f32 %v3837, %v3872
    %v3883 = vmul.f32 %v3839, %v3876
    %v3884 = vmul.f32 %v3841, %v3876
    %v3885 = vmul.f32 %v3843, %v3876
    %v3886 = vmul.f32 %v3845, %v3876
    %v3887 = vsel %vm344, %v3879, 0.0
    %3888 = vadd.xlane.f32.xlu0 %v3887
    %v3889 = vpop.xlane.xlu0 %3888
    %v3890 = vsel %vm344, %v3880, 0.0
    %3891 = vadd.xlane.f32.xlu0 %v3890
    %v3892 = vpop.xlane.xlu0 %3891
    %v3893 = vsel %vm344, %v3881, 0.0
    %3894 = vadd.xlane.f32.xlu0 %v3893
    %v3895 = vpop.xlane.xlu0 %3894
    %v3896 = vsel %vm344, %v3882, 0.0
    %3897 = vadd.xlane.f32.xlu0 %v3896
    %v3898 = vpop.xlane.xlu0 %3897
    %v3899 = vsel %vm344, %v3883, 0.0
    %3900 = vadd.xlane.f32.xlu0 %v3899
    %v3901 = vpop.xlane.xlu0 %3900
    %v3902 = vsel %vm344, %v3884, 0.0
    %3903 = vadd.xlane.f32.xlu0 %v3902
    %v3904 = vpop.xlane.xlu0 %3903
    %v3905 = vsel %vm344, %v3885, 0.0
    %3906 = vadd.xlane.f32.xlu0 %v3905
    %v3907 = vpop.xlane.xlu0 %3906
    %v3908 = vsel %vm344, %v3886, 0.0
    %3909 = vadd.xlane.f32.xlu0 %v3908
    %v3910 = vpop.xlane.xlu0 %3909
    %v3911 = vmul.f32 %v2323, %v3889
    %v3912 = vmul.f32 %v2323, %v3892
    %v3913 = vmul.f32 %v2323, %v3895
    %v3914 = vmul.f32 %v2323, %v3898
    %v3915 = vmul.f32 %v2323, %v3901
    %v3916 = vmul.f32 %v2323, %v3904
    %v3917 = vmul.f32 %v2323, %v3907
    %v3918 = vmul.f32 %v2323, %v3910
    %v3919 = vadd.f32 %v3911, %v2332
    %v3920 = vadd.f32 %v3912, %v2332
    %v3921 = vadd.f32 %v3913, %v2332
    %v3922 = vadd.f32 %v3914, %v2332
    %v3923 = vadd.f32 %v3915, %v2332
    %v3924 = vadd.f32 %v3916, %v2332
    %v3925 = vadd.f32 %v3917, %v2332
    %v3926 = vadd.f32 %v3918, %v2332
    %v3927 = vmul.f32 %v3919, 2.0
    %v3928 = vmul.f32 %v3920, 2.0
    %v3929 = vmul.f32 %v3921, 2.0
    %v3930 = vmul.f32 %v3922, 2.0
    %v3931 = vmul.f32 %v3923, 2.0
    %v3932 = vmul.f32 %v3924, 2.0
    %v3933 = vmul.f32 %v3925, 2.0
    %v3934 = vmul.f32 %v3926, 2.0
    %v3943 = vlaneseq
    %v3944 = vshrl.u32 %v3943, 7
    %v3945 = vsub.s32 %v721, %v3944
    %v3946 = vrot.slane %v3927, %v3945
    %v3947 = vlaneseq
    %v3948 = vshrl.u32 %v3947, 7
    %v3949 = vsub.s32 %v726, %v3948
    %v3950 = vrot.slane %v3928, %v3949
    %v3951 = vsel %vm731, %v3950, %v3946
    %v3952 = vlaneseq
    %v3953 = vshrl.u32 %v3952, 7
    %v3954 = vsub.s32 %v733, %v3953
    %v3955 = vrot.slane %v3929, %v3954
    %v3956 = vsel %vm738, %v3955, %v3951
    %v3957 = vlaneseq
    %v3958 = vshrl.u32 %v3957, 7
    %v3959 = vsub.s32 %v740, %v3958
    %v3960 = vrot.slane %v3930, %v3959
    %v3961 = vsel %vm745, %v3960, %v3956
    %v3962 = vlaneseq
    %v3963 = vshrl.u32 %v3962, 7
    %v3964 = vsub.s32 %v721, %v3963
    %v3965 = vrot.slane %v3931, %v3964
    %v3966 = vlaneseq
    %v3967 = vshrl.u32 %v3966, 7
    %v3968 = vsub.s32 %v726, %v3967
    %v3969 = vrot.slane %v3932, %v3968
    %v3970 = vsel %vm731, %v3969, %v3965
    %v3971 = vlaneseq
    %v3972 = vshrl.u32 %v3971, 7
    %v3973 = vsub.s32 %v733, %v3972
    %v3974 = vrot.slane %v3933, %v3973
    %v3975 = vsel %vm738, %v3974, %v3970
    %v3976 = vlaneseq
    %v3977 = vshrl.u32 %v3976, 7
    %v3978 = vsub.s32 %v740, %v3977
    %v3979 = vrot.slane %v3934, %v3978
    %v3980 = vsel %vm745, %v3979, %v3975
    %v3981 = vsel %vm766, %v3980, %v3961
    %v3983 = vadd.f32 %v3672, %v3981
    %v3984 = vsel %vm770, %v3983, 0.0
    %3985 = vadd.xlane.f32.xlu0 %v3984
    %v3986 = vpop.xlane.xlu0 %3985
    %v3987 = vmul.f32 %v3986, %v774
    %v3988 = vsub.f32 %v3983, %v3987
    %v3989 = vmul.f32 %v3988, %v3988
    %v3990 = vsel %vm770, %v3989, 0.0
    %3991 = vadd.xlane.f32.xlu0 %v3990
    %v3992 = vpop.xlane.xlu0 %3991
    %v3993 = vmul.f32 %v3992, %v774
    %v3994 = vadd.f32 %v3993, 1e-05
    %v3995 = vrsqrt.pop %v3994
    %v3996 = vmul.f32 %v3988, %v3995
    %v3997 = vmul.f32 %v3996, %v2415
    %v3998 = vadd.f32 %v3997, %v2422
    %3999 = vrot.lane.b32.xlu0 %v3998, 32
    %v4000 = vpop.permute.xlu0 %3999
    %v4001 = vsel %vm800, %v4000, %v3998
    %4002 = vrot.lane.b32.xlu0 %v4001, 32
    %v4003 = vpop.permute.xlu0 %4002
    %v4004 = vsel %vm800, %v4003, %v3998
    %4006 = vrot.lane.b32.xlu0 %v4004, 97
    %v4007 = vpop.permute.xlu0 %4006
    %v4009 = vsel %vm799, 0.0, %v4007
    %4010 = vrot.lane.b32.xlu0 %v4004, 127
    %v4011 = vpop.permute.xlu0 %4010
    %v4013 = vsel %vm812, 0.0, %v4011
    %v4016 = vunpack.c.l.s4 1966171168
    %v4017 = vunpack.c.0.s8 %v4016
    %v4018 = vlaneseq
    %v4019 = vshrl.u32 %v4018, 7
    %v4020 = vsub.s32 %v4017, %v4019
    %v4021 = vrot.slane %v4009, %v4020
    %v4022 = vcombine.high %v4021, %v4021
    %v4024 = vunpack.c.l.s4 1966171168
    %v4025 = vunpack.c.0.s8 %v4024
    %v4026 = vlaneseq
    %v4027 = vshrl.u32 %v4026, 7
    %v4028 = vsub.s32 %v4025, %v4027
    %v4029 = vrot.slane %v4021, %v4028
    %v4031 = vunpack.c.l.s4 1966171168
    %v4032 = vunpack.c.0.s8 %v4031
    %v4033 = vlaneseq
    %v4034 = vshrl.u32 %v4033, 7
    %v4035 = vsub.s32 %v4032, %v4034
    %v4036 = vrot.slane %v4022, %v4035
    %v4037 = vlaneseq
    %v4038 = vshrl.u32 %v4037, 7
    %v4039 = vsub.s32 0, %v4038
    %v4040 = vrot.slane %v4029, %v4039
    %v4041 = vlaneseq
    %v4042 = vshrl.u32 %v4041, 7
    %v4043 = vsub.s32 0, %v4042
    %v4044 = vrot.slane %v4036, %v4043
    %v4047 = vmul.f32 %v4040, %v2446
    %v4048 = vmul.f32 %v4040, %v2450
    %v4049 = vmul.f32 %v4040, %v2454
    %v4050 = vmul.f32 %v4040, %v2458
    %v4051 = vmul.f32 %v4040, %v2462
    %v4052 = vmul.f32 %v4040, %v2466
    %v4053 = vmul.f32 %v4040, %v2470
    %v4054 = vmul.f32 %v4040, %v2474
    %v4055 = vmul.f32 %v4044, %v2446
    %v4056 = vmul.f32 %v4044, %v2450
    %v4057 = vmul.f32 %v4044, %v2454
    %v4058 = vmul.f32 %v4044, %v2458
    %v4059 = vmul.f32 %v4044, %v2462
    %v4060 = vmul.f32 %v4044, %v2466
    %v4061 = vmul.f32 %v4044, %v2470
    %v4062 = vmul.f32 %v4044, %v2474
    %v4065 = vunpack.c.l.s4 1966171168
    %v4066 = vunpack.c.0.s8 %v4065
    %v4067 = vlaneseq
    %v4068 = vshrl.u32 %v4067, 7
    %v4069 = vsub.s32 %v4066, %v4068
    %v4070 = vrot.slane %v3998, %v4069
    %v4071 = vcombine.high %v4070, %v4070
    %v4073 = vunpack.c.l.s4 1966171168
    %v4074 = vunpack.c.0.s8 %v4073
    %v4075 = vlaneseq
    %v4076 = vshrl.u32 %v4075, 7
    %v4077 = vsub.s32 %v4074, %v4076
    %v4078 = vrot.slane %v4070, %v4077
    %v4080 = vunpack.c.l.s4 1966171168
    %v4081 = vunpack.c.0.s8 %v4080
    %v4082 = vlaneseq
    %v4083 = vshrl.u32 %v4082, 7
    %v4084 = vsub.s32 %v4081, %v4083
    %v4085 = vrot.slane %v4071, %v4084
    %v4086 = vlaneseq
    %v4087 = vshrl.u32 %v4086, 7
    %v4088 = vsub.s32 0, %v4087
    %v4089 = vrot.slane %v4078, %v4088
    %v4090 = vlaneseq
    %v4091 = vshrl.u32 %v4090, 7
    %v4092 = vsub.s32 0, %v4091
    %v4093 = vrot.slane %v4085, %v4092
    %v4096 = vmul.f32 %v4089, %v2481
    %v4097 = vmul.f32 %v4089, %v2485
    %v4098 = vmul.f32 %v4089, %v2489
    %v4099 = vmul.f32 %v4089, %v2493
    %v4100 = vmul.f32 %v4089, %v2497
    %v4101 = vmul.f32 %v4089, %v2501
    %v4102 = vmul.f32 %v4089, %v2505
    %v4103 = vmul.f32 %v4089, %v2509
    %v4104 = vmul.f32 %v4093, %v2481
    %v4105 = vmul.f32 %v4093, %v2485
    %v4106 = vmul.f32 %v4093, %v2489
    %v4107 = vmul.f32 %v4093, %v2493
    %v4108 = vmul.f32 %v4093, %v2497
    %v4109 = vmul.f32 %v4093, %v2501
    %v4110 = vmul.f32 %v4093, %v2505
    %v4111 = vmul.f32 %v4093, %v2509
    %v4112 = vadd.f32 %v4047, %v4096
    %v4113 = vadd.f32 %v4048, %v4097
    %v4114 = vadd.f32 %v4049, %v4098
    %v4115 = vadd.f32 %v4050, %v4099
    %v4116 = vadd.f32 %v4051, %v4100
    %v4117 = vadd.f32 %v4052, %v4101
    %v4118 = vadd.f32 %v4053, %v4102
    %v4119 = vadd.f32 %v4054, %v4103
    %v4120 = vadd.f32 %v4055, %v4104
    %v4121 = vadd.f32 %v4056, %v4105
    %v4122 = vadd.f32 %v4057, %v4106
    %v4123 = vadd.f32 %v4058, %v4107
    %v4124 = vadd.f32 %v4059, %v4108
    %v4125 = vadd.f32 %v4060, %v4109
    %v4126 = vadd.f32 %v4061, %v4110
    %v4127 = vadd.f32 %v4062, %v4111
    %v4130 = vunpack.c.l.s4 1966171168
    %v4131 = vunpack.c.0.s8 %v4130
    %v4132 = vlaneseq
    %v4133 = vshrl.u32 %v4132, 7
    %v4134 = vsub.s32 %v4131, %v4133
    %v4135 = vrot.slane %v4013, %v4134
    %v4136 = vcombine.high %v4135, %v4135
    %v4138 = vunpack.c.l.s4 1966171168
    %v4139 = vunpack.c.0.s8 %v4138
    %v4140 = vlaneseq
    %v4141 = vshrl.u32 %v4140, 7
    %v4142 = vsub.s32 %v4139, %v4141
    %v4143 = vrot.slane %v4135, %v4142
    %v4145 = vunpack.c.l.s4 1966171168
    %v4146 = vunpack.c.0.s8 %v4145
    %v4147 = vlaneseq
    %v4148 = vshrl.u32 %v4147, 7
    %v4149 = vsub.s32 %v4146, %v4148
    %v4150 = vrot.slane %v4136, %v4149
    %v4151 = vlaneseq
    %v4152 = vshrl.u32 %v4151, 7
    %v4153 = vsub.s32 0, %v4152
    %v4154 = vrot.slane %v4143, %v4153
    %v4155 = vlaneseq
    %v4156 = vshrl.u32 %v4155, 7
    %v4157 = vsub.s32 0, %v4156
    %v4158 = vrot.slane %v4150, %v4157
    %v4161 = vmul.f32 %v4154, %v2516
    %v4162 = vmul.f32 %v4154, %v2520
    %v4163 = vmul.f32 %v4154, %v2524
    %v4164 = vmul.f32 %v4154, %v2528
    %v4165 = vmul.f32 %v4154, %v2532
    %v4166 = vmul.f32 %v4154, %v2536
    %v4167 = vmul.f32 %v4154, %v2540
    %v4168 = vmul.f32 %v4154, %v2544
    %v4169 = vmul.f32 %v4158, %v2516
    %v4170 = vmul.f32 %v4158, %v2520
    %v4171 = vmul.f32 %v4158, %v2524
    %v4172 = vmul.f32 %v4158, %v2528
    %v4173 = vmul.f32 %v4158, %v2532
    %v4174 = vmul.f32 %v4158, %v2536
    %v4175 = vmul.f32 %v4158, %v2540
    %v4176 = vmul.f32 %v4158, %v2544
    %v4177 = vadd.f32 %v4112, %v4161
    %v4178 = vadd.f32 %v4113, %v4162
    %v4179 = vadd.f32 %v4114, %v4163
    %v4180 = vadd.f32 %v4115, %v4164
    %v4181 = vadd.f32 %v4116, %v4165
    %v4182 = vadd.f32 %v4117, %v4166
    %v4183 = vadd.f32 %v4118, %v4167
    %v4184 = vadd.f32 %v4119, %v4168
    %v4185 = vadd.f32 %v4120, %v4169
    %v4186 = vadd.f32 %v4121, %v4170
    %v4187 = vadd.f32 %v4122, %v4171
    %v4188 = vadd.f32 %v4123, %v4172
    %v4189 = vadd.f32 %v4124, %v4173
    %v4190 = vadd.f32 %v4125, %v4174
    %v4191 = vadd.f32 %v4126, %v4175
    %v4192 = vadd.f32 %v4127, %v4176
    %v4193 = vadd.f32 %v4177, %v2730
    %v4194 = vadd.f32 %v4178, %v2734
    %v4195 = vadd.f32 %v4179, %v2738
    %v4196 = vadd.f32 %v4180, %v2742
    %v4197 = vadd.f32 %v4181, %v2746
    %v4198 = vadd.f32 %v4182, %v2750
    %v4199 = vadd.f32 %v4183, %v2754
    %v4200 = vadd.f32 %v4184, %v2758
    %v4201 = vadd.f32 %v4185, %v2730
    %v4202 = vadd.f32 %v4186, %v2734
    %v4203 = vadd.f32 %v4187, %v2738
    %v4204 = vadd.f32 %v4188, %v2742
    %v4205 = vadd.f32 %v4189, %v2746
    %v4206 = vadd.f32 %v4190, %v2750
    %v4207 = vadd.f32 %v4191, %v2754
    %v4208 = vadd.f32 %v4192, %v2758
    %v4209 = vmax.f32 %v4193, 0.0
    %v4210 = vmax.f32 %v4194, 0.0
    %v4211 = vmax.f32 %v4195, 0.0
    %v4212 = vmax.f32 %v4196, 0.0
    %v4213 = vmax.f32 %v4197, 0.0
    %v4214 = vmax.f32 %v4198, 0.0
    %v4215 = vmax.f32 %v4199, 0.0
    %v4216 = vmax.f32 %v4200, 0.0
    %v4217 = vmax.f32 %v4201, 0.0
    %v4218 = vmax.f32 %v4202, 0.0
    %v4219 = vmax.f32 %v4203, 0.0
    %v4220 = vmax.f32 %v4204, 0.0
    %v4221 = vmax.f32 %v4205, 0.0
    %v4222 = vmax.f32 %v4206, 0.0
    %v4223 = vmax.f32 %v4207, 0.0
    %v4224 = vmax.f32 %v4208, 0.0
    %4225 = vrot.lane.b32.xlu0 %v4209, 32
    %v4226 = vpop.permute.xlu0 %4225
    %v4227 = vsel %vm800, %v4226, %v4209
    %4228 = vrot.lane.b32.xlu0 %v4210, 32
    %v4229 = vpop.permute.xlu0 %4228
    %v4230 = vsel %vm800, %v4229, %v4210
    %4231 = vrot.lane.b32.xlu0 %v4211, 32
    %v4232 = vpop.permute.xlu0 %4231
    %v4233 = vsel %vm800, %v4232, %v4211
    %4234 = vrot.lane.b32.xlu0 %v4212, 32
    %v4235 = vpop.permute.xlu0 %4234
    %v4236 = vsel %vm800, %v4235, %v4212
    %4237 = vrot.lane.b32.xlu0 %v4213, 32
    %v4238 = vpop.permute.xlu0 %4237
    %v4239 = vsel %vm800, %v4238, %v4213
    %4240 = vrot.lane.b32.xlu0 %v4214, 32
    %v4241 = vpop.permute.xlu0 %4240
    %v4242 = vsel %vm800, %v4241, %v4214
    %4243 = vrot.lane.b32.xlu0 %v4215, 32
    %v4244 = vpop.permute.xlu0 %4243
    %v4245 = vsel %vm800, %v4244, %v4215
    %4246 = vrot.lane.b32.xlu0 %v4216, 32
    %v4247 = vpop.permute.xlu0 %4246
    %v4248 = vsel %vm800, %v4247, %v4216
    %4249 = vrot.lane.b32.xlu0 %v4217, 32
    %v4250 = vpop.permute.xlu0 %4249
    %v4251 = vsel %vm800, %v4250, %v4217
    %4252 = vrot.lane.b32.xlu0 %v4218, 32
    %v4253 = vpop.permute.xlu0 %4252
    %v4254 = vsel %vm800, %v4253, %v4218
    %4255 = vrot.lane.b32.xlu0 %v4219, 32
    %v4256 = vpop.permute.xlu0 %4255
    %v4257 = vsel %vm800, %v4256, %v4219
    %4258 = vrot.lane.b32.xlu0 %v4220, 32
    %v4259 = vpop.permute.xlu0 %4258
    %v4260 = vsel %vm800, %v4259, %v4220
    %4261 = vrot.lane.b32.xlu0 %v4221, 32
    %v4262 = vpop.permute.xlu0 %4261
    %v4263 = vsel %vm800, %v4262, %v4221
    %4264 = vrot.lane.b32.xlu0 %v4222, 32
    %v4265 = vpop.permute.xlu0 %4264
    %v4266 = vsel %vm800, %v4265, %v4222
    %4267 = vrot.lane.b32.xlu0 %v4223, 32
    %v4268 = vpop.permute.xlu0 %4267
    %v4269 = vsel %vm800, %v4268, %v4223
    %4270 = vrot.lane.b32.xlu0 %v4224, 32
    %v4271 = vpop.permute.xlu0 %4270
    %v4272 = vsel %vm800, %v4271, %v4224
    %4273 = vrot.lane.b32.xlu0 %v4227, 32
    %v4274 = vpop.permute.xlu0 %4273
    %4275 = vrot.lane.b32.xlu0 %v4230, 32
    %v4276 = vpop.permute.xlu0 %4275
    %4277 = vrot.lane.b32.xlu0 %v4233, 32
    %v4278 = vpop.permute.xlu0 %4277
    %4279 = vrot.lane.b32.xlu0 %v4236, 32
    %v4280 = vpop.permute.xlu0 %4279
    %4281 = vrot.lane.b32.xlu0 %v4239, 32
    %v4282 = vpop.permute.xlu0 %4281
    %4283 = vrot.lane.b32.xlu0 %v4242, 32
    %v4284 = vpop.permute.xlu0 %4283
    %4285 = vrot.lane.b32.xlu0 %v4245, 32
    %v4286 = vpop.permute.xlu0 %4285
    %4287 = vrot.lane.b32.xlu0 %v4248, 32
    %v4288 = vpop.permute.xlu0 %4287
    %4289 = vrot.lane.b32.xlu0 %v4251, 32
    %v4290 = vpop.permute.xlu0 %4289
    %4291 = vrot.lane.b32.xlu0 %v4254, 32
    %v4292 = vpop.permute.xlu0 %4291
    %4293 = vrot.lane.b32.xlu0 %v4257, 32
    %v4294 = vpop.permute.xlu0 %4293
    %4295 = vrot.lane.b32.xlu0 %v4260, 32
    %v4296 = vpop.permute.xlu0 %4295
    %4297 = vrot.lane.b32.xlu0 %v4263, 32
    %v4298 = vpop.permute.xlu0 %4297
    %4299 = vrot.lane.b32.xlu0 %v4266, 32
    %v4300 = vpop.permute.xlu0 %4299
    %4301 = vrot.lane.b32.xlu0 %v4269, 32
    %v4302 = vpop.permute.xlu0 %4301
    %4303 = vrot.lane.b32.xlu0 %v4272, 32
    %v4304 = vpop.permute.xlu0 %4303
    %v4305 = vsel %vm800, %v4274, %v4209
    %v4306 = vsel %vm800, %v4276, %v4210
    %v4307 = vsel %vm800, %v4278, %v4211
    %v4308 = vsel %vm800, %v4280, %v4212
    %v4309 = vsel %vm800, %v4282, %v4213
    %v4310 = vsel %vm800, %v4284, %v4214
    %v4311 = vsel %vm800, %v4286, %v4215
    %v4312 = vsel %vm800, %v4288, %v4216
    %v4313 = vsel %vm800, %v4290, %v4217
    %v4314 = vsel %vm800, %v4292, %v4218
    %v4315 = vsel %vm800, %v4294, %v4219
    %v4316 = vsel %vm800, %v4296, %v4220
    %v4317 = vsel %vm800, %v4298, %v4221
    %v4318 = vsel %vm800, %v4300, %v4222
    %v4319 = vsel %vm800, %v4302, %v4223
    %v4320 = vsel %vm800, %v4304, %v4224
    %4337 = vrot.lane.b32.xlu0 %v4305, 97
    %v4338 = vpop.permute.xlu0 %4337
    %4339 = vrot.lane.b32.xlu0 %v4306, 97
    %v4340 = vpop.permute.xlu0 %4339
    %4341 = vrot.lane.b32.xlu0 %v4307, 97
    %v4342 = vpop.permute.xlu0 %4341
    %4343 = vrot.lane.b32.xlu0 %v4308, 97
    %v4344 = vpop.permute.xlu0 %4343
    %4345 = vrot.lane.b32.xlu0 %v4309, 97
    %v4346 = vpop.permute.xlu0 %4345
    %4347 = vrot.lane.b32.xlu0 %v4310, 97
    %v4348 = vpop.permute.xlu0 %4347
    %4349 = vrot.lane.b32.xlu0 %v4311, 97
    %v4350 = vpop.permute.xlu0 %4349
    %4351 = vrot.lane.b32.xlu0 %v4312, 97
    %v4352 = vpop.permute.xlu0 %4351
    %4353 = vrot.lane.b32.xlu0 %v4313, 97
    %v4354 = vpop.permute.xlu0 %4353
    %4355 = vrot.lane.b32.xlu0 %v4314, 97
    %v4356 = vpop.permute.xlu0 %4355
    %4357 = vrot.lane.b32.xlu0 %v4315, 97
    %v4358 = vpop.permute.xlu0 %4357
    %4359 = vrot.lane.b32.xlu0 %v4316, 97
    %v4360 = vpop.permute.xlu0 %4359
    %4361 = vrot.lane.b32.xlu0 %v4317, 97
    %v4362 = vpop.permute.xlu0 %4361
    %4363 = vrot.lane.b32.xlu0 %v4318, 97
    %v4364 = vpop.permute.xlu0 %4363
    %4365 = vrot.lane.b32.xlu0 %v4319, 97
    %v4366 = vpop.permute.xlu0 %4365
    %4367 = vrot.lane.b32.xlu0 %v4320, 97
    %v4368 = vpop.permute.xlu0 %4367
    %v4385 = vsel %vm799, 0.0, %v4338
    %v4386 = vsel %vm799, 0.0, %v4340
    %v4387 = vsel %vm799, 0.0, %v4342
    %v4388 = vsel %vm799, 0.0, %v4344
    %v4389 = vsel %vm799, 0.0, %v4346
    %v4390 = vsel %vm799, 0.0, %v4348
    %v4391 = vsel %vm799, 0.0, %v4350
    %v4392 = vsel %vm799, 0.0, %v4352
    %v4393 = vsel %vm799, 0.0, %v4354
    %v4394 = vsel %vm799, 0.0, %v4356
    %v4395 = vsel %vm799, 0.0, %v4358
    %v4396 = vsel %vm799, 0.0, %v4360
    %v4397 = vsel %vm799, 0.0, %v4362
    %v4398 = vsel %vm799, 0.0, %v4364
    %v4399 = vsel %vm799, 0.0, %v4366
    %v4400 = vsel %vm799, 0.0, %v4368
    %4401 = vrot.lane.b32.xlu0 %v4305, 127
    %v4402 = vpop.permute.xlu0 %4401
    %4403 = vrot.lane.b32.xlu0 %v4306, 127
    %v4404 = vpop.permute.xlu0 %4403
    %4405 = vrot.lane.b32.xlu0 %v4307, 127
    %v4406 = vpop.permute.xlu0 %4405
    %4407 = vrot.lane.b32.xlu0 %v4308, 127
    %v4408 = vpop.permute.xlu0 %4407
    %4409 = vrot.lane.b32.xlu0 %v4309, 127
    %v4410 = vpop.permute.xlu0 %4409
    %4411 = vrot.lane.b32.xlu0 %v4310, 127
    %v4412 = vpop.permute.xlu0 %4411
    %4413 = vrot.lane.b32.xlu0 %v4311, 127
    %v4414 = vpop.permute.xlu0 %4413
    %4415 = vrot.lane.b32.xlu0 %v4312, 127
    %v4416 = vpop.permute.xlu0 %4415
    %4417 = vrot.lane.b32.xlu0 %v4313, 127
    %v4418 = vpop.permute.xlu0 %4417
    %4419 = vrot.lane.b32.xlu0 %v4314, 127
    %v4420 = vpop.permute.xlu0 %4419
    %4421 = vrot.lane.b32.xlu0 %v4315, 127
    %v4422 = vpop.permute.xlu0 %4421
    %4423 = vrot.lane.b32.xlu0 %v4316, 127
    %v4424 = vpop.permute.xlu0 %4423
    %4425 = vrot.lane.b32.xlu0 %v4317, 127
    %v4426 = vpop.permute.xlu0 %4425
    %4427 = vrot.lane.b32.xlu0 %v4318, 127
    %v4428 = vpop.permute.xlu0 %4427
    %4429 = vrot.lane.b32.xlu0 %v4319, 127
    %v4430 = vpop.permute.xlu0 %4429
    %4431 = vrot.lane.b32.xlu0 %v4320, 127
    %v4432 = vpop.permute.xlu0 %4431
    %v4449 = vsel %vm812, 0.0, %v4402
    %v4450 = vsel %vm812, 0.0, %v4404
    %v4451 = vsel %vm812, 0.0, %v4406
    %v4452 = vsel %vm812, 0.0, %v4408
    %v4453 = vsel %vm812, 0.0, %v4410
    %v4454 = vsel %vm812, 0.0, %v4412
    %v4455 = vsel %vm812, 0.0, %v4414
    %v4456 = vsel %vm812, 0.0, %v4416
    %v4457 = vsel %vm812, 0.0, %v4418
    %v4458 = vsel %vm812, 0.0, %v4420
    %v4459 = vsel %vm812, 0.0, %v4422
    %v4460 = vsel %vm812, 0.0, %v4424
    %v4461 = vsel %vm812, 0.0, %v4426
    %v4462 = vsel %vm812, 0.0, %v4428
    %v4463 = vsel %vm812, 0.0, %v4430
    %v4464 = vsel %vm812, 0.0, %v4432
    %v4465 = vmul.f32 %v4385, %v3037
    %v4466 = vmul.f32 %v4386, %v3041
    %v4467 = vmul.f32 %v4387, %v3045
    %v4468 = vmul.f32 %v4388, %v3049
    %v4469 = vmul.f32 %v4389, %v3053
    %v4470 = vmul.f32 %v4390, %v3057
    %v4471 = vmul.f32 %v4391, %v3061
    %v4472 = vmul.f32 %v4392, %v3065
    %v4473 = vmul.f32 %v4393, %v3037
    %v4474 = vmul.f32 %v4394, %v3041
    %v4475 = vmul.f32 %v4395, %v3045
    %v4476 = vmul.f32 %v4396, %v3049
    %v4477 = vmul.f32 %v4397, %v3053
    %v4478 = vmul.f32 %v4398, %v3057
    %v4479 = vmul.f32 %v4399, %v3061
    %v4480 = vmul.f32 %v4400, %v3065
    %v4481 = vsel %vm344, %v4465, 0.0
    %v4482 = vsel %vm344, %v4466, 0.0
    %v4483 = vadd.f32 %v4481, %v4482
    %v4484 = vsel %vm344, %v4467, 0.0
    %v4485 = vadd.f32 %v4483, %v4484
    %v4486 = vsel %vm344, %v4468, 0.0
    %v4487 = vadd.f32 %v4485, %v4486
    %v4488 = vsel %vm344, %v4469, 0.0
    %v4489 = vadd.f32 %v4487, %v4488
    %v4490 = vsel %vm344, %v4470, 0.0
    %v4491 = vadd.f32 %v4489, %v4490
    %v4492 = vsel %vm344, %v4471, 0.0
    %v4493 = vadd.f32 %v4491, %v4492
    %v4494 = vsel %vm344, %v4472, 0.0
    %v4495 = vadd.f32 %v4493, %v4494
    %v4496 = vrot.slane %v4495, 4
    %v4497 = vadd.f32 %v4495, %v4496
    %v4498 = vrot.slane %v4497, 2
    %v4499 = vadd.f32 %v4497, %v4498
    %v4500 = vrot.slane %v4499, 1
    %v4501 = vadd.f32 %v4499, %v4500
    %v4502 = vsel %vm344, %v4473, 0.0
    %v4503 = vsel %vm344, %v4474, 0.0
    %v4504 = vadd.f32 %v4502, %v4503
    %v4505 = vsel %vm344, %v4475, 0.0
    %v4506 = vadd.f32 %v4504, %v4505
    %v4507 = vsel %vm344, %v4476, 0.0
    %v4508 = vadd.f32 %v4506, %v4507
    %v4509 = vsel %vm344, %v4477, 0.0
    %v4510 = vadd.f32 %v4508, %v4509
    %v4511 = vsel %vm344, %v4478, 0.0
    %v4512 = vadd.f32 %v4510, %v4511
    %v4513 = vsel %vm344, %v4479, 0.0
    %v4514 = vadd.f32 %v4512, %v4513
    %v4515 = vsel %vm344, %v4480, 0.0
    %v4516 = vadd.f32 %v4514, %v4515
    %v4517 = vrot.slane %v4516, 4
    %v4518 = vadd.f32 %v4516, %v4517
    %v4519 = vrot.slane %v4518, 2
    %v4520 = vadd.f32 %v4518, %v4519
    %v4521 = vrot.slane %v4520, 1
    %v4522 = vadd.f32 %v4520, %v4521
    %v4523 = vmul.f32 %v4209, %v3072
    %v4524 = vmul.f32 %v4210, %v3076
    %v4525 = vmul.f32 %v4211, %v3080
    %v4526 = vmul.f32 %v4212, %v3084
    %v4527 = vmul.f32 %v4213, %v3088
    %v4528 = vmul.f32 %v4214, %v3092
    %v4529 = vmul.f32 %v4215, %v3096
    %v4530 = vmul.f32 %v4216, %v3100
    %v4531 = vmul.f32 %v4217, %v3072
    %v4532 = vmul.f32 %v4218, %v3076
    %v4533 = vmul.f32 %v4219, %v3080
    %v4534 = vmul.f32 %v4220, %v3084
    %v4535 = vmul.f32 %v4221, %v3088
    %v4536 = vmul.f32 %v4222, %v3092
    %v4537 = vmul.f32 %v4223, %v3096
    %v4538 = vmul.f32 %v4224, %v3100
    %v4539 = vsel %vm344, %v4523, 0.0
    %v4540 = vsel %vm344, %v4524, 0.0
    %v4541 = vadd.f32 %v4539, %v4540
    %v4542 = vsel %vm344, %v4525, 0.0
    %v4543 = vadd.f32 %v4541, %v4542
    %v4544 = vsel %vm344, %v4526, 0.0
    %v4545 = vadd.f32 %v4543, %v4544
    %v4546 = vsel %vm344, %v4527, 0.0
    %v4547 = vadd.f32 %v4545, %v4546
    %v4548 = vsel %vm344, %v4528, 0.0
    %v4549 = vadd.f32 %v4547, %v4548
    %v4550 = vsel %vm344, %v4529, 0.0
    %v4551 = vadd.f32 %v4549, %v4550
    %v4552 = vsel %vm344, %v4530, 0.0
    %v4553 = vadd.f32 %v4551, %v4552
    %v4554 = vrot.slane %v4553, 4
    %v4555 = vadd.f32 %v4553, %v4554
    %v4556 = vrot.slane %v4555, 2
    %v4557 = vadd.f32 %v4555, %v4556
    %v4558 = vrot.slane %v4557, 1
    %v4559 = vadd.f32 %v4557, %v4558
    %v4560 = vsel %vm344, %v4531, 0.0
    %v4561 = vsel %vm344, %v4532, 0.0
    %v4562 = vadd.f32 %v4560, %v4561
    %v4563 = vsel %vm344, %v4533, 0.0
    %v4564 = vadd.f32 %v4562, %v4563
    %v4565 = vsel %vm344, %v4534, 0.0
    %v4566 = vadd.f32 %v4564, %v4565
    %v4567 = vsel %vm344, %v4535, 0.0
    %v4568 = vadd.f32 %v4566, %v4567
    %v4569 = vsel %vm344, %v4536, 0.0
    %v4570 = vadd.f32 %v4568, %v4569
    %v4571 = vsel %vm344, %v4537, 0.0
    %v4572 = vadd.f32 %v4570, %v4571
    %v4573 = vsel %vm344, %v4538, 0.0
    %v4574 = vadd.f32 %v4572, %v4573
    %v4575 = vrot.slane %v4574, 4
    %v4576 = vadd.f32 %v4574, %v4575
    %v4577 = vrot.slane %v4576, 2
    %v4578 = vadd.f32 %v4576, %v4577
    %v4579 = vrot.slane %v4578, 1
    %v4580 = vadd.f32 %v4578, %v4579
    %v4581 = vadd.f32 %v4501, %v4559
    %v4582 = vadd.f32 %v4522, %v4580
    %v4583 = vmul.f32 %v4449, %v3107
    %v4584 = vmul.f32 %v4450, %v3111
    %v4585 = vmul.f32 %v4451, %v3115
    %v4586 = vmul.f32 %v4452, %v3119
    %v4587 = vmul.f32 %v4453, %v3123
    %v4588 = vmul.f32 %v4454, %v3127
    %v4589 = vmul.f32 %v4455, %v3131
    %v4590 = vmul.f32 %v4456, %v3135
    %v4591 = vmul.f32 %v4457, %v3107
    %v4592 = vmul.f32 %v4458, %v3111
    %v4593 = vmul.f32 %v4459, %v3115
    %v4594 = vmul.f32 %v4460, %v3119
    %v4595 = vmul.f32 %v4461, %v3123
    %v4596 = vmul.f32 %v4462, %v3127
    %v4597 = vmul.f32 %v4463, %v3131
    %v4598 = vmul.f32 %v4464, %v3135
    %v4599 = vsel %vm344, %v4583, 0.0
    %v4600 = vsel %vm344, %v4584, 0.0
    %v4601 = vadd.f32 %v4599, %v4600
    %v4602 = vsel %vm344, %v4585, 0.0
    %v4603 = vadd.f32 %v4601, %v4602
    %v4604 = vsel %vm344, %v4586, 0.0
    %v4605 = vadd.f32 %v4603, %v4604
    %v4606 = vsel %vm344, %v4587, 0.0
    %v4607 = vadd.f32 %v4605, %v4606
    %v4608 = vsel %vm344, %v4588, 0.0
    %v4609 = vadd.f32 %v4607, %v4608
    %v4610 = vsel %vm344, %v4589, 0.0
    %v4611 = vadd.f32 %v4609, %v4610
    %v4612 = vsel %vm344, %v4590, 0.0
    %v4613 = vadd.f32 %v4611, %v4612
    %v4614 = vrot.slane %v4613, 4
    %v4615 = vadd.f32 %v4613, %v4614
    %v4616 = vrot.slane %v4615, 2
    %v4617 = vadd.f32 %v4615, %v4616
    %v4618 = vrot.slane %v4617, 1
    %v4619 = vadd.f32 %v4617, %v4618
    %v4620 = vsel %vm344, %v4591, 0.0
    %v4621 = vsel %vm344, %v4592, 0.0
    %v4622 = vadd.f32 %v4620, %v4621
    %v4623 = vsel %vm344, %v4593, 0.0
    %v4624 = vadd.f32 %v4622, %v4623
    %v4625 = vsel %vm344, %v4594, 0.0
    %v4626 = vadd.f32 %v4624, %v4625
    %v4627 = vsel %vm344, %v4595, 0.0
    %v4628 = vadd.f32 %v4626, %v4627
    %v4629 = vsel %vm344, %v4596, 0.0
    %v4630 = vadd.f32 %v4628, %v4629
    %v4631 = vsel %vm344, %v4597, 0.0
    %v4632 = vadd.f32 %v4630, %v4631
    %v4633 = vsel %vm344, %v4598, 0.0
    %v4634 = vadd.f32 %v4632, %v4633
    %v4635 = vrot.slane %v4634, 4
    %v4636 = vadd.f32 %v4634, %v4635
    %v4637 = vrot.slane %v4636, 2
    %v4638 = vadd.f32 %v4636, %v4637
    %v4639 = vrot.slane %v4638, 1
    %v4640 = vadd.f32 %v4638, %v4639
    %v4641 = vadd.f32 %v4581, %v4619
    %v4642 = vadd.f32 %v4582, %v4640
    %v4643 = vadd.f32 %v4641, %v3314
    %v4644 = vadd.f32 %v4642, %v3314
    %v4647 = vsel %vm766, %v4644, %v4643
    %v4649 = vadd.f32 %v3998, %v4647
    %v4650 = vsel %vm770, %v4649, 0.0
    %4651 = vadd.xlane.f32.xlu0 %v4650
    %v4652 = vpop.xlane.xlu0 %4651
    %v4653 = vmul.f32 %v4652, %v774
    %v4654 = vsub.f32 %v4649, %v4653
    %v4655 = vmul.f32 %v4654, %v4654
    %v4656 = vsel %vm770, %v4655, 0.0
    %4657 = vadd.xlane.f32.xlu0 %v4656
    %v4658 = vpop.xlane.xlu0 %4657
    %v4659 = vmul.f32 %v4658, %v774
    %v4660 = vadd.f32 %v4659, 1e-05
    %v4661 = vrsqrt.pop %v4660
    %v4662 = vmul.f32 %v4654, %v4661
    %v4663 = vmul.f32 %v4662, %v3339
    %v4664 = vadd.f32 %v4663, %v3346
    %v4665 = vmul.f32 %v3358, 1.0017544
    %v4666 = vmul.f32 %v4664, 0.059261713
    %v4667 = vsub.f32 %v4665, %v4666
    %v4668 = vmul.f32 %v4667, 0.97147435
    %v4669 = vmul.f32 %v3358, 0.028525587
    %v4670 = vadd.f32 %v4668, %v4669
    %s4671 = scalar_lea.vmem %s2, 2
    %v4672 = vld [vmem:[%s4671] sm:$0x3]
    %v4673 = vmul.f32 %v4672, 0.009856586
    %v4674 = vadd.f32 %v4670, %v4673
    %v4675 = vld [vmem:[%s3 + $0x3] sm:$0x1]
    %v4677 = vsel %vm88, %v4675, 0
    %4679 = vmatprep.subr.mxu0 0.0
    %4680 = vmatpush1.msra.mxu0 %v1728
    %4681 = vmatprep.subr.mxu0 0.0
    %4682 = vmatpush1.msra.mxu0 %v1729
    %4683 = vmatprep.subr.mxu0 0.0
    %4684 = vmatpush1.msra.mxu0 0.0
    %4685 = vmatprep.subr.mxu0 0.0
    %4686 = vmatpush1.msra.mxu0 0.0
    %4687 = vmatprep.subr.mxu0 0.0
    %4688 = vmatpush1.msra.mxu0 0.0
    %4689 = vmatprep.subr.mxu0 0.0
    %4690 = vmatpush1.msra.mxu0 0.0
    %4691 = vmatprep.subr.mxu0 0.0
    %4692 = vmatpush1.msra.mxu0 0.0
    %4693 = vmatprep.subr.mxu0 0.0
    %4694 = vmatpush1.msra.mxu0 0.0
    %4695 = vmatprep.subr.mxu0 0.0
    %4696 = vmatpush1.msra.mxu0 0.0
    %4697 = vmatprep.subr.mxu0 0.0
    %4698 = vmatpush1.msra.mxu0 0.0
    %4699 = vmatprep.subr.mxu0 0.0
    %4700 = vmatpush1.msra.mxu0 0.0
    %4701 = vmatprep.subr.mxu0 0.0
    %4702 = vmatpush1.msra.mxu0 0.0
    %4703 = vmatprep.subr.mxu0 0.0
    %4704 = vmatpush1.msra.mxu0 0.0
    %4705 = vmatprep.subr.mxu0 0.0
    %4706 = vmatpush1.msra.mxu0 0.0
    %4707 = vmatprep.subr.mxu0 0.0
    %4708 = vmatpush1.msra.mxu0 0.0
    %4709 = vmatprep.subr.mxu0 0.0
    %4710 = vmatpush1.msra.mxu0 0.0
    %4711 = vmatprep.subr.mxu0 0.0
    %4712 = vmatpush1.msra.mxu0 0.0
    %4713 = vmatprep.subr.mxu0 0.0
    %4714 = vmatpush1.msra.mxu0 0.0
    %4715 = vmatprep.subr.mxu0 0.0
    %4716 = vmatpush1.msra.mxu0 0.0
    %4717 = vmatprep.subr.mxu0 0.0
    %4718 = vmatpush1.msra.mxu0 0.0
    %4719 = vmatprep.subr.mxu0 0.0
    %4720 = vmatpush1.msra.mxu0 0.0
    %4721 = vmatprep.subr.mxu0 0.0
    %4722 = vmatpush1.msra.mxu0 0.0
    %4723 = vmatprep.subr.mxu0 0.0
    %4724 = vmatpush1.msra.mxu0 0.0
    %4725 = vmatprep.subr.mxu0 0.0
    %4726 = vmatpush1.msra.mxu0 0.0
    %4727 = vmatprep.subr.mxu0 0.0
    %4728 = vmatpush1.msra.mxu0 0.0
    %4729 = vmatprep.subr.mxu0 0.0
    %4730 = vmatpush1.msra.mxu0 0.0
    %4731 = vmatprep.subr.mxu0 0.0
    %4732 = vmatpush1.msra.mxu0 0.0
    %4733 = vmatprep.subr.mxu0 0.0
    %4734 = vmatpush1.msra.mxu0 0.0
    %4735 = vmatprep.subr.mxu0 0.0
    %4736 = vmatpush1.msra.mxu0 0.0
    %4737 = vmatprep.subr.mxu0 0.0
    %4738 = vmatpush1.msra.mxu0 0.0
    %4739 = vmatprep.subr.mxu0 0.0
    %4740 = vmatpush1.msra.mxu0 0.0
    %4741 = vmatprep.subr.mxu0 0.0
    %4742 = vmatpush1.msra.mxu0 0.0
    %4743 = vmatprep.mubr.f32.mxu0 0.0
    %4744 = vmatmul.mubr.f32.gmra.mrb[0].mxu0 %v4677
    %v4745 = vpop.f32.mrb[0].mxu0
    %v4746 = vadd.f32 %v1730, %v4745
    %v4747 = vpop.f32.mrb[0].mxu0
    %4748 = vdwg.mxu0
    %vm4749 = vcmp.gt.f32.partialorder %v4746, 20.0
    %v4750 = vmin.f32 %v4746, 20.0
    %v4751 = vmul.f32 %v4750, 1.442695
    %v4752 = vpow.pop %v4751
    %v4753 = vadd.f32 %v4752, 1.0
    %v4754 = vlog2.pop %v4753
    %v4755 = vmul.f32 %v4754, 0.6931472
    %v4756 = vmul.f32 -0.5, %v4752
    %v4757 = vadd.f32 %v4756, 1.0
    %v4758 = vmul.f32 %v4757, %v4752
    %v4759 = vand.u32 2147483647, %v4752
    %vm4760 = vcmp.lt.f32.partialorder %v4759, 0.0004427343
    %v4761 = vsel %vm4760, %v4758, %v4755
    %v4762 = vsel %vm4749, %v4746, %v4761
    %v4763 = vtanh.pop %v4762
    %v4764 = vmul.f32 %v4746, %v4763
    %v4766 = vsel %vm187, %v4764, 0
    %4768 = vmatprep.subr.mxu0 0.0
    %4769 = vmatpush1.msra.mxu0 %v1820
    %4770 = vmatprep.subr.mxu0 0.0
    %4771 = vmatpush1.msra.mxu0 %v1821
    %4772 = vmatprep.subr.mxu0 0.0
    %4773 = vmatpush1.msra.mxu0 %v1822
    %4774 = vmatprep.subr.mxu0 0.0
    %4775 = vmatpush1.msra.mxu0 %v1823
    %4776 = vmatprep.subr.mxu0 0.0
    %4777 = vmatpush1.msra.mxu0 %v1824
    %4778 = vmatprep.subr.mxu0 0.0
    %4779 = vmatpush1.msra.mxu0 %v1825
    %4780 = vmatprep.subr.mxu0 0.0
    %4781 = vmatpush1.msra.mxu0 %v1826
    %4782 = vmatprep.subr.mxu0 0.0
    %4783 = vmatpush1.msra.mxu0 %v1827
    %4784 = vmatprep.subr.mxu0 0.0
    %4785 = vmatpush1.msra.mxu0 0.0
    %4786 = vmatprep.subr.mxu0 0.0
    %4787 = vmatpush1.msra.mxu0 0.0
    %4788 = vmatprep.subr.mxu0 0.0
    %4789 = vmatpush1.msra.mxu0 0.0
    %4790 = vmatprep.subr.mxu0 0.0
    %4791 = vmatpush1.msra.mxu0 0.0
    %4792 = vmatprep.subr.mxu0 0.0
    %4793 = vmatpush1.msra.mxu0 0.0
    %4794 = vmatprep.subr.mxu0 0.0
    %4795 = vmatpush1.msra.mxu0 0.0
    %4796 = vmatprep.subr.mxu0 0.0
    %4797 = vmatpush1.msra.mxu0 0.0
    %4798 = vmatprep.subr.mxu0 0.0
    %4799 = vmatpush1.msra.mxu0 0.0
    %4800 = vmatprep.subr.mxu0 0.0
    %4801 = vmatpush1.msra.mxu0 0.0
    %4802 = vmatprep.subr.mxu0 0.0
    %4803 = vmatpush1.msra.mxu0 0.0
    %4804 = vmatprep.subr.mxu0 0.0
    %4805 = vmatpush1.msra.mxu0 0.0
    %4806 = vmatprep.subr.mxu0 0.0
    %4807 = vmatpush1.msra.mxu0 0.0
    %4808 = vmatprep.subr.mxu0 0.0
    %4809 = vmatpush1.msra.mxu0 0.0
    %4810 = vmatprep.subr.mxu0 0.0
    %4811 = vmatpush1.msra.mxu0 0.0
    %4812 = vmatprep.subr.mxu0 0.0
    %4813 = vmatpush1.msra.mxu0 0.0
    %4814 = vmatprep.subr.mxu0 0.0
    %4815 = vmatpush1.msra.mxu0 0.0
    %4816 = vmatprep.subr.mxu0 0.0
    %4817 = vmatpush1.msra.mxu0 0.0
    %4818 = vmatprep.subr.mxu0 0.0
    %4819 = vmatpush1.msra.mxu0 0.0
    %4820 = vmatprep.subr.mxu0 0.0
    %4821 = vmatpush1.msra.mxu0 0.0
    %4822 = vmatprep.subr.mxu0 0.0
    %4823 = vmatpush1.msra.mxu0 0.0
    %4824 = vmatprep.subr.mxu0 0.0
    %4825 = vmatpush1.msra.mxu0 0.0
    %4826 = vmatprep.subr.mxu0 0.0
    %4827 = vmatpush1.msra.mxu0 0.0
    %4828 = vmatprep.subr.mxu0 0.0
    %4829 = vmatpush1.msra.mxu0 0.0
    %4830 = vmatprep.subr.mxu0 0.0
    %4831 = vmatpush1.msra.mxu0 0.0
    %4832 = vmatprep.mubr.f32.mxu0 0.0
    %4833 = vmatmul.mubr.f32.gmra.mrb[0].mxu0 %v4766
    %v4834 = vpop.f32.mrb[0].mxu0
    %v4835 = vadd.f32 %v1828, %v4834
    %v4836 = vpop.f32.mrb[0].mxu0
    %4837 = vdwg.mxu0
    %v4839 = vsel %vm88, %v4835, 0
    %4841 = vmatprep.subr.mxu0 0.0
    %4842 = vmatpush1.msra.mxu0 %v1906
    %4843 = vmatprep.subr.mxu0 0.0
    %4844 = vmatpush1.msra.mxu0 %v1907
    %4845 = vmatprep.subr.mxu0 0.0
    %4846 = vmatpush1.msra.mxu0 0.0
    %4847 = vmatprep.subr.mxu0 0.0
    %4848 = vmatpush1.msra.mxu0 0.0
    %4849 = vmatprep.subr.mxu0 0.0
    %4850 = vmatpush1.msra.mxu0 0.0
    %4851 = vmatprep.subr.mxu0 0.0
    %4852 = vmatpush1.msra.mxu0 0.0
    %4853 = vmatprep.subr.mxu0 0.0
    %4854 = vmatpush1.msra.mxu0 0.0
    %4855 = vmatprep.subr.mxu0 0.0
    %4856 = vmatpush1.msra.mxu0 0.0
    %4857 = vmatprep.subr.mxu0 0.0
    %4858 = vmatpush1.msra.mxu0 0.0
    %4859 = vmatprep.subr.mxu0 0.0
    %4860 = vmatpush1.msra.mxu0 0.0
    %4861 = vmatprep.subr.mxu0 0.0
    %4862 = vmatpush1.msra.mxu0 0.0
    %4863 = vmatprep.subr.mxu0 0.0
    %4864 = vmatpush1.msra.mxu0 0.0
    %4865 = vmatprep.subr.mxu0 0.0
    %4866 = vmatpush1.msra.mxu0 0.0
    %4867 = vmatprep.subr.mxu0 0.0
    %4868 = vmatpush1.msra.mxu0 0.0
    %4869 = vmatprep.subr.mxu0 0.0
    %4870 = vmatpush1.msra.mxu0 0.0
    %4871 = vmatprep.subr.mxu0 0.0
    %4872 = vmatpush1.msra.mxu0 0.0
    %4873 = vmatprep.subr.mxu0 0.0
    %4874 = vmatpush1.msra.mxu0 0.0
    %4875 = vmatprep.subr.mxu0 0.0
    %4876 = vmatpush1.msra.mxu0 0.0
    %4877 = vmatprep.subr.mxu0 0.0
    %4878 = vmatpush1.msra.mxu0 0.0
    %4879 = vmatprep.subr.mxu0 0.0
    %4880 = vmatpush1.msra.mxu0 0.0
    %4881 = vmatprep.subr.mxu0 0.0
    %4882 = vmatpush1.msra.mxu0 0.0
    %4883 = vmatprep.subr.mxu0 0.0
    %4884 = vmatpush1.msra.mxu0 0.0
    %4885 = vmatprep.subr.mxu0 0.0
    %4886 = vmatpush1.msra.mxu0 0.0
    %4887 = vmatprep.subr.mxu0 0.0
    %4888 = vmatpush1.msra.mxu0 0.0
    %4889 = vmatprep.subr.mxu0 0.0
    %4890 = vmatpush1.msra.mxu0 0.0
    %4891 = vmatprep.subr.mxu0 0.0
    %4892 = vmatpush1.msra.mxu0 0.0
    %4893 = vmatprep.subr.mxu0 0.0
    %4894 = vmatpush1.msra.mxu0 0.0
    %4895 = vmatprep.subr.mxu0 0.0
    %4896 = vmatpush1.msra.mxu0 0.0
    %4897 = vmatprep.subr.mxu0 0.0
    %4898 = vmatpush1.msra.mxu0 0.0
    %4899 = vmatprep.subr.mxu0 0.0
    %4900 = vmatpush1.msra.mxu0 0.0
    %4901 = vmatprep.subr.mxu0 0.0
    %4902 = vmatpush1.msra.mxu0 0.0
    %4903 = vmatprep.subr.mxu0 0.0
    %4904 = vmatpush1.msra.mxu0 0.0
    %4905 = vmatprep.mubr.f32.mxu0 0.0
    %4906 = vmatmul.mubr.f32.gmra.mrb[0].mxu0 %v4839
    %v4907 = vpop.f32.mrb[0].mxu0
    %v4908 = vadd.f32 0.0, %v4907
    %v4909 = vpop.f32.mrb[0].mxu0
    %4910 = vdwg.mxu0
    %v4911 = vlaneseq
    %v4912 = vshrl.u32 %v4911, 7
    %v4913 = vsub.s32 0, %v4912
    %v4914 = vrot.slane %v4908, %v4913
    %v4916 = vsel %vm344, %v4674, 0
    %4918 = vmatprep.subr.mxu0 0.0
    %4919 = vmatpush1.msra.mxu0 %v1902
    %4920 = vmatprep.subr.mxu0 0.0
    %4921 = vmatpush1.msra.mxu0 %v1903
    %4922 = vmatprep.subr.mxu0 0.0
    %4923 = vmatpush1.msra.mxu0 %v1904
    %4924 = vmatprep.subr.mxu0 0.0
    %4925 = vmatpush1.msra.mxu0 %v1905
    %4926 = vmatprep.subr.mxu0 0.0
    %4927 = vmatpush1.msra.mxu0 0.0
    %4928 = vmatprep.subr.mxu0 0.0
    %4929 = vmatpush1.msra.mxu0 0.0
    %4930 = vmatprep.subr.mxu0 0.0
    %4931 = vmatpush1.msra.mxu0 0.0
    %4932 = vmatprep.subr.mxu0 0.0
    %4933 = vmatpush1.msra.mxu0 0.0
    %4934 = vmatprep.subr.mxu0 0.0
    %4935 = vmatpush1.msra.mxu0 0.0
    %4936 = vmatprep.subr.mxu0 0.0
    %4937 = vmatpush1.msra.mxu0 0.0
    %4938 = vmatprep.subr.mxu0 0.0
    %4939 = vmatpush1.msra.mxu0 0.0
    %4940 = vmatprep.subr.mxu0 0.0
    %4941 = vmatpush1.msra.mxu0 0.0
    %4942 = vmatprep.subr.mxu0 0.0
    %4943 = vmatpush1.msra.mxu0 0.0
    %4944 = vmatprep.subr.mxu0 0.0
    %4945 = vmatpush1.msra.mxu0 0.0
    %4946 = vmatprep.subr.mxu0 0.0
    %4947 = vmatpush1.msra.mxu0 0.0
    %4948 = vmatprep.subr.mxu0 0.0
    %4949 = vmatpush1.msra.mxu0 0.0
    %4950 = vmatprep.subr.mxu0 0.0
    %4951 = vmatpush1.msra.mxu0 0.0
    %4952 = vmatprep.subr.mxu0 0.0
    %4953 = vmatpush1.msra.mxu0 0.0
    %4954 = vmatprep.subr.mxu0 0.0
    %4955 = vmatpush1.msra.mxu0 0.0
    %4956 = vmatprep.subr.mxu0 0.0
    %4957 = vmatpush1.msra.mxu0 0.0
    %4958 = vmatprep.subr.mxu0 0.0
    %4959 = vmatpush1.msra.mxu0 0.0
    %4960 = vmatprep.subr.mxu0 0.0
    %4961 = vmatpush1.msra.mxu0 0.0
    %4962 = vmatprep.subr.mxu0 0.0
    %4963 = vmatpush1.msra.mxu0 0.0
    %4964 = vmatprep.subr.mxu0 0.0
    %4965 = vmatpush1.msra.mxu0 0.0
    %4966 = vmatprep.subr.mxu0 0.0
    %4967 = vmatpush1.msra.mxu0 0.0
    %4968 = vmatprep.subr.mxu0 0.0
    %4969 = vmatpush1.msra.mxu0 0.0
    %4970 = vmatprep.subr.mxu0 0.0
    %4971 = vmatpush1.msra.mxu0 0.0
    %4972 = vmatprep.subr.mxu0 0.0
    %4973 = vmatpush1.msra.mxu0 0.0
    %4974 = vmatprep.subr.mxu0 0.0
    %4975 = vmatpush1.msra.mxu0 0.0
    %4976 = vmatprep.subr.mxu0 0.0
    %4977 = vmatpush1.msra.mxu0 0.0
    %4978 = vmatprep.subr.mxu0 0.0
    %4979 = vmatpush1.msra.mxu0 0.0
    %4980 = vmatprep.subr.mxu0 0.0
    %4981 = vmatpush1.msra.mxu0 0.0
    %4982 = vmatprep.mubr.f32.mxu0 0.0
    %4983 = vmatmul.mubr.f32.gmra.mrb[0].mxu0 %v4916
    %v4984 = vpop.f32.mrb[0].mxu0
    %v4985 = vadd.f32 %v4914, %v4984
    %v4986 = vpop.f32.mrb[0].mxu0
    %4987 = vdwg.mxu0
    %v4988 = vadd.f32 %v4985, %v2060
    %v4989 = vmul.f32 %v2079, %v4988
    %v4990 = vadd.f32 %v4989, %v2081
    %v4991 = vmul.f32 %v2083, %v4988
    %v4992 = vadd.f32 %v4991, %v2085
    %v4993 = vmul.f32 %v2087, %v4988
    %v4994 = vadd.f32 %v4993, %v2089
    %v4995 = vlaneseq
    %v4996 = vshrl.u32 %v4995, 7
    %v4997 = vsub.s32 0, %v4996
    %v4998 = vrot.slane %v4990, %v4997
    %5000 = vbcast.lane.b32.xlu0 %v4998, 256
    %v5001 = vpop.permute.xlu0 %5000
    %s5003 = sor.u32 256, 8
    %5004 = vbcast.lane.b32.xlu0 %v4998, %s5003
    %v5005 = vpop.permute.xlu0 %5004
    %s5007 = sor.u32 256, 16
    %5008 = vbcast.lane.b32.xlu0 %v4998, %s5007
    %v5009 = vpop.permute.xlu0 %5008
    %s5011 = sor.u32 256, 24
    %5012 = vbcast.lane.b32.xlu0 %v4998, %s5011
    %v5013 = vpop.permute.xlu0 %5012
    %v5014 = vlaneseq
    %v5015 = vshrl.u32 %v5014, 7
    %v5016 = vsub.s32 1, %v5015
    %v5017 = vrot.slane %v4990, %v5016
    %5019 = vbcast.lane.b32.xlu0 %v5017, 256
    %v5020 = vpop.permute.xlu0 %5019
    %s5022 = sor.u32 256, 8
    %5023 = vbcast.lane.b32.xlu0 %v5017, %s5022
    %v5024 = vpop.permute.xlu0 %5023
    %s5026 = sor.u32 256, 16
    %5027 = vbcast.lane.b32.xlu0 %v5017, %s5026
    %v5028 = vpop.permute.xlu0 %5027
    %s5030 = sor.u32 256, 24
    %5031 = vbcast.lane.b32.xlu0 %v5017, %s5030
    %v5032 = vpop.permute.xlu0 %5031
    %v5035 = vunpack.c.l.s4 1966171168
    %v5036 = vunpack.c.0.s8 %v5035
    %v5037 = vlaneseq
    %v5038 = vshrl.u32 %v5037, 7
    %v5039 = vsub.s32 %v5036, %v5038
    %v5040 = vrot.slane %v4992, %v5039
    %v5041 = vcombine.high %v5040, %v5040
    %v5043 = vunpack.c.l.s4 1966171168
    %v5044 = vunpack.c.0.s8 %v5043
    %v5045 = vlaneseq
    %v5046 = vshrl.u32 %v5045, 7
    %v5047 = vsub.s32 %v5044, %v5046
    %v5048 = vrot.slane %v5040, %v5047
    %v5050 = vunpack.c.l.s4 1966171168
    %v5051 = vunpack.c.0.s8 %v5050
    %v5052 = vlaneseq
    %v5053 = vshrl.u32 %v5052, 7
    %v5054 = vsub.s32 %v5051, %v5053
    %v5055 = vrot.slane %v5041, %v5054
    %v5056 = vlaneseq
    %v5057 = vshrl.u32 %v5056, 7
    %v5058 = vsub.s32 0, %v5057
    %v5059 = vrot.slane %v5048, %v5058
    %v5060 = vlaneseq
    %v5061 = vshrl.u32 %v5060, 7
    %v5062 = vsub.s32 0, %v5061
    %v5063 = vrot.slane %v5055, %v5062
    %v5066 = vmul.f32 %v5001, %v5059
    %v5067 = vmul.f32 %v5005, %v5059
    %v5068 = vmul.f32 %v5009, %v5059
    %v5069 = vmul.f32 %v5013, %v5059
    %v5070 = vmul.f32 %v5020, %v5063
    %v5071 = vmul.f32 %v5024, %v5063
    %v5072 = vmul.f32 %v5028, %v5063
    %v5073 = vmul.f32 %v5032, %v5063
    %v5074 = vsel %vm344, %v5066, -inf
    %5075 = vmax.xlane.f32.xlu0 %v5074
    %v5076 = vpop.xlane.xlu0 %5075
    %v5077 = vsel %vm344, %v5067, -inf
    %5078 = vmax.xlane.f32.xlu0 %v5077
    %v5079 = vpop.xlane.xlu0 %5078
    %v5080 = vsel %vm344, %v5068, -inf
    %5081 = vmax.xlane.f32.xlu0 %v5080
    %v5082 = vpop.xlane.xlu0 %5081
    %v5083 = vsel %vm344, %v5069, -inf
    %5084 = vmax.xlane.f32.xlu0 %v5083
    %v5085 = vpop.xlane.xlu0 %5084
    %v5086 = vsel %vm344, %v5070, -inf
    %5087 = vmax.xlane.f32.xlu0 %v5086
    %v5088 = vpop.xlane.xlu0 %5087
    %v5089 = vsel %vm344, %v5071, -inf
    %5090 = vmax.xlane.f32.xlu0 %v5089
    %v5091 = vpop.xlane.xlu0 %5090
    %v5092 = vsel %vm344, %v5072, -inf
    %5093 = vmax.xlane.f32.xlu0 %v5092
    %v5094 = vpop.xlane.xlu0 %5093
    %v5095 = vsel %vm344, %v5073, -inf
    %5096 = vmax.xlane.f32.xlu0 %v5095
    %v5097 = vpop.xlane.xlu0 %5096
    %v5098 = vsub.f32 %v5066, %v5076
    %v5099 = vsub.f32 %v5067, %v5079
    %v5100 = vsub.f32 %v5068, %v5082
    %v5101 = vsub.f32 %v5069, %v5085
    %v5102 = vsub.f32 %v5070, %v5088
    %v5103 = vsub.f32 %v5071, %v5091
    %v5104 = vsub.f32 %v5072, %v5094
    %v5105 = vsub.f32 %v5073, %v5097
    %v5106 = vmul.f32 %v5098, 1.442695
    %v5107 = vpow.pop %v5106
    %v5108 = vmul.f32 %v5099, 1.442695
    %v5109 = vpow.pop %v5108
    %v5110 = vmul.f32 %v5100, 1.442695
    %v5111 = vpow.pop %v5110
    %v5112 = vmul.f32 %v5101, 1.442695
    %v5113 = vpow.pop %v5112
    %v5114 = vmul.f32 %v5102, 1.442695
    %v5115 = vpow.pop %v5114
    %v5116 = vmul.f32 %v5103, 1.442695
    %v5117 = vpow.pop %v5116
    %v5118 = vmul.f32 %v5104, 1.442695
    %v5119 = vpow.pop %v5118
    %v5120 = vmul.f32 %v5105, 1.442695
    %v5121 = vpow.pop %v5120
    %v5122 = vsel %vm344, %v5107, 0.0
    %5123 = vadd.xlane.f32.xlu0 %v5122
    %v5124 = vpop.xlane.xlu0 %5123
    %v5125 = vsel %vm344, %v5109, 0.0
    %5126 = vadd.xlane.f32.xlu0 %v5125
    %v5127 = vpop.xlane.xlu0 %5126
    %v5128 = vsel %vm344, %v5111, 0.0
    %5129 = vadd.xlane.f32.xlu0 %v5128
    %v5130 = vpop.xlane.xlu0 %5129
    %v5131 = vsel %vm344, %v5113, 0.0
    %5132 = vadd.xlane.f32.xlu0 %v5131
    %v5133 = vpop.xlane.xlu0 %5132
    %v5134 = vsel %vm344, %v5115, 0.0
    %5135 = vadd.xlane.f32.xlu0 %v5134
    %v5136 = vpop.xlane.xlu0 %5135
    %v5137 = vsel %vm344, %v5117, 0.0
    %5138 = vadd.xlane.f32.xlu0 %v5137
    %v5139 = vpop.xlane.xlu0 %5138
    %v5140 = vsel %vm344, %v5119, 0.0
    %5141 = vadd.xlane.f32.xlu0 %v5140
    %v5142 = vpop.xlane.xlu0 %5141
    %v5143 = vsel %vm344, %v5121, 0.0
    %5144 = vadd.xlane.f32.xlu0 %v5143
    %v5145 = vpop.xlane.xlu0 %5144
    %v5146 = vrcp.pop %v5124
    %v5147 = vmul.f32 %v5107, %v5146
    %v5148 = vrcp.pop %v5127
    %v5149 = vmul.f32 %v5109, %v5148
    %v5150 = vrcp.pop %v5130
    %v5151 = vmul.f32 %v5111, %v5150
    %v5152 = vrcp.pop %v5133
    %v5153 = vmul.f32 %v5113, %v5152
    %v5154 = vrcp.pop %v5136
    %v5155 = vmul.f32 %v5115, %v5154
    %v5156 = vrcp.pop %v5139
    %v5157 = vmul.f32 %v5117, %v5156
    %v5158 = vrcp.pop %v5142
    %v5159 = vmul.f32 %v5119, %v5158
    %v5160 = vrcp.pop %v5145
    %v5161 = vmul.f32 %v5121, %v5160
    %v5164 = vunpack.c.l.s4 1966171168
    %v5165 = vunpack.c.0.s8 %v5164
    %v5166 = vlaneseq
    %v5167 = vshrl.u32 %v5166, 7
    %v5168 = vsub.s32 %v5165, %v5167
    %v5169 = vrot.slane %v4994, %v5168
    %v5170 = vcombine.high %v5169, %v5169
    %v5172 = vunpack.c.l.s4 1966171168
    %v5173 = vunpack.c.0.s8 %v5172
    %v5174 = vlaneseq
    %v5175 = vshrl.u32 %v5174, 7
    %v5176 = vsub.s32 %v5173, %v5175
    %v5177 = vrot.slane %v5169, %v5176
    %v5179 = vunpack.c.l.s4 1966171168
    %v5180 = vunpack.c.0.s8 %v5179
    %v5181 = vlaneseq
    %v5182 = vshrl.u32 %v5181, 7
    %v5183 = vsub.s32 %v5180, %v5182
    %v5184 = vrot.slane %v5170, %v5183
    %v5185 = vlaneseq
    %v5186 = vshrl.u32 %v5185, 7
    %v5187 = vsub.s32 0, %v5186
    %v5188 = vrot.slane %v5177, %v5187
    %v5189 = vlaneseq
    %v5190 = vshrl.u32 %v5189, 7
    %v5191 = vsub.s32 0, %v5190
    %v5192 = vrot.slane %v5184, %v5191
    %v5195 = vmul.f32 %v5147, %v5188
    %v5196 = vmul.f32 %v5149, %v5188
    %v5197 = vmul.f32 %v5151, %v5188
    %v5198 = vmul.f32 %v5153, %v5188
    %v5199 = vmul.f32 %v5155, %v5192
    %v5200 = vmul.f32 %v5157, %v5192
    %v5201 = vmul.f32 %v5159, %v5192
    %v5202 = vmul.f32 %v5161, %v5192
    %v5203 = vsel %vm344, %v5195, 0.0
    %5204 = vadd.xlane.f32.xlu0 %v5203
    %v5205 = vpop.xlane.xlu0 %5204
    %v5206 = vsel %vm344, %v5196, 0.0
    %5207 = vadd.xlane.f32.xlu0 %v5206
    %v5208 = vpop.xlane.xlu0 %5207
    %v5209 = vsel %vm344, %v5197, 0.0
    %5210 = vadd.xlane.f32.xlu0 %v5209
    %v5211 = vpop.xlane.xlu0 %5210
    %v5212 = vsel %vm344, %v5198, 0.0
    %5213 = vadd.xlane.f32.xlu0 %v5212
    %v5214 = vpop.xlane.xlu0 %5213
    %v5215 = vsel %vm344, %v5199, 0.0
    %5216 = vadd.xlane.f32.xlu0 %v5215
    %v5217 = vpop.xlane.xlu0 %5216
    %v5218 = vsel %vm344, %v5200, 0.0
    %5219 = vadd.xlane.f32.xlu0 %v5218
    %v5220 = vpop.xlane.xlu0 %5219
    %v5221 = vsel %vm344, %v5201, 0.0
    %5222 = vadd.xlane.f32.xlu0 %v5221
    %v5223 = vpop.xlane.xlu0 %5222
    %v5224 = vsel %vm344, %v5202, 0.0
    %5225 = vadd.xlane.f32.xlu0 %v5224
    %v5226 = vpop.xlane.xlu0 %5225
    %v5227 = vmul.f32 %v2323, %v5205
    %v5228 = vmul.f32 %v2323, %v5208
    %v5229 = vmul.f32 %v2323, %v5211
    %v5230 = vmul.f32 %v2323, %v5214
    %v5231 = vmul.f32 %v2323, %v5217
    %v5232 = vmul.f32 %v2323, %v5220
    %v5233 = vmul.f32 %v2323, %v5223
    %v5234 = vmul.f32 %v2323, %v5226
    %v5235 = vadd.f32 %v5227, %v2332
    %v5236 = vadd.f32 %v5228, %v2332
    %v5237 = vadd.f32 %v5229, %v2332
    %v5238 = vadd.f32 %v5230, %v2332
    %v5239 = vadd.f32 %v5231, %v2332
    %v5240 = vadd.f32 %v5232, %v2332
    %v5241 = vadd.f32 %v5233, %v2332
    %v5242 = vadd.f32 %v5234, %v2332
    %v5243 = vmul.f32 %v5235, 2.0
    %v5244 = vmul.f32 %v5236, 2.0
    %v5245 = vmul.f32 %v5237, 2.0
    %v5246 = vmul.f32 %v5238, 2.0
    %v5247 = vmul.f32 %v5239, 2.0
    %v5248 = vmul.f32 %v5240, 2.0
    %v5249 = vmul.f32 %v5241, 2.0
    %v5250 = vmul.f32 %v5242, 2.0
    %v5259 = vlaneseq
    %v5260 = vshrl.u32 %v5259, 7
    %v5261 = vsub.s32 %v721, %v5260
    %v5262 = vrot.slane %v5243, %v5261
    %v5263 = vlaneseq
    %v5264 = vshrl.u32 %v5263, 7
    %v5265 = vsub.s32 %v726, %v5264
    %v5266 = vrot.slane %v5244, %v5265
    %v5267 = vsel %vm731, %v5266, %v5262
    %v5268 = vlaneseq
    %v5269 = vshrl.u32 %v5268, 7
    %v5270 = vsub.s32 %v733, %v5269
    %v5271 = vrot.slane %v5245, %v5270
    %v5272 = vsel %vm738, %v5271, %v5267
    %v5273 = vlaneseq
    %v5274 = vshrl.u32 %v5273, 7
    %v5275 = vsub.s32 %v740, %v5274
    %v5276 = vrot.slane %v5246, %v5275
    %v5277 = vsel %vm745, %v5276, %v5272
    %v5278 = vlaneseq
    %v5279 = vshrl.u32 %v5278, 7
    %v5280 = vsub.s32 %v721, %v5279
    %v5281 = vrot.slane %v5247, %v5280
    %v5282 = vlaneseq
    %v5283 = vshrl.u32 %v5282, 7
    %v5284 = vsub.s32 %v726, %v5283
    %v5285 = vrot.slane %v5248, %v5284
    %v5286 = vsel %vm731, %v5285, %v5281
    %v5287 = vlaneseq
    %v5288 = vshrl.u32 %v5287, 7
    %v5289 = vsub.s32 %v733, %v5288
    %v5290 = vrot.slane %v5249, %v5289
    %v5291 = vsel %vm738, %v5290, %v5286
    %v5292 = vlaneseq
    %v5293 = vshrl.u32 %v5292, 7
    %v5294 = vsub.s32 %v740, %v5293
    %v5295 = vrot.slane %v5250, %v5294
    %v5296 = vsel %vm745, %v5295, %v5291
    %v5297 = vsel %vm766, %v5296, %v5277
    %v5299 = vadd.f32 %v4988, %v5297
    %v5300 = vsel %vm770, %v5299, 0.0
    %5301 = vadd.xlane.f32.xlu0 %v5300
    %v5302 = vpop.xlane.xlu0 %5301
    %v5303 = vmul.f32 %v5302, %v774
    %v5304 = vsub.f32 %v5299, %v5303
    %v5305 = vmul.f32 %v5304, %v5304
    %v5306 = vsel %vm770, %v5305, 0.0
    %5307 = vadd.xlane.f32.xlu0 %v5306
    %v5308 = vpop.xlane.xlu0 %5307
    %v5309 = vmul.f32 %v5308, %v774
    %v5310 = vadd.f32 %v5309, 1e-05
    %v5311 = vrsqrt.pop %v5310
    %v5312 = vmul.f32 %v5304, %v5311
    %v5313 = vmul.f32 %v5312, %v2415
    %v5314 = vadd.f32 %v5313, %v2422
    %5315 = vrot.lane.b32.xlu0 %v5314, 32
    %v5316 = vpop.permute.xlu0 %5315
    %v5317 = vsel %vm800, %v5316, %v5314
    %5318 = vrot.lane.b32.xlu0 %v5317, 32
    %v5319 = vpop.permute.xlu0 %5318
    %v5320 = vsel %vm800, %v5319, %v5314
    %5322 = vrot.lane.b32.xlu0 %v5320, 97
    %v5323 = vpop.permute.xlu0 %5322
    %v5325 = vsel %vm799, 0.0, %v5323
    %5326 = vrot.lane.b32.xlu0 %v5320, 127
    %v5327 = vpop.permute.xlu0 %5326
    %v5329 = vsel %vm812, 0.0, %v5327
    %v5332 = vunpack.c.l.s4 1966171168
    %v5333 = vunpack.c.0.s8 %v5332
    %v5334 = vlaneseq
    %v5335 = vshrl.u32 %v5334, 7
    %v5336 = vsub.s32 %v5333, %v5335
    %v5337 = vrot.slane %v5325, %v5336
    %v5338 = vcombine.high %v5337, %v5337
    %v5340 = vunpack.c.l.s4 1966171168
    %v5341 = vunpack.c.0.s8 %v5340
    %v5342 = vlaneseq
    %v5343 = vshrl.u32 %v5342, 7
    %v5344 = vsub.s32 %v5341, %v5343
    %v5345 = vrot.slane %v5337, %v5344
    %v5347 = vunpack.c.l.s4 1966171168
    %v5348 = vunpack.c.0.s8 %v5347
    %v5349 = vlaneseq
    %v5350 = vshrl.u32 %v5349, 7
    %v5351 = vsub.s32 %v5348, %v5350
    %v5352 = vrot.slane %v5338, %v5351
    %v5353 = vlaneseq
    %v5354 = vshrl.u32 %v5353, 7
    %v5355 = vsub.s32 0, %v5354
    %v5356 = vrot.slane %v5345, %v5355
    %v5357 = vlaneseq
    %v5358 = vshrl.u32 %v5357, 7
    %v5359 = vsub.s32 0, %v5358
    %v5360 = vrot.slane %v5352, %v5359
    %v5363 = vmul.f32 %v5356, %v2446
    %v5364 = vmul.f32 %v5356, %v2450
    %v5365 = vmul.f32 %v5356, %v2454
    %v5366 = vmul.f32 %v5356, %v2458
    %v5367 = vmul.f32 %v5356, %v2462
    %v5368 = vmul.f32 %v5356, %v2466
    %v5369 = vmul.f32 %v5356, %v2470
    %v5370 = vmul.f32 %v5356, %v2474
    %v5371 = vmul.f32 %v5360, %v2446
    %v5372 = vmul.f32 %v5360, %v2450
    %v5373 = vmul.f32 %v5360, %v2454
    %v5374 = vmul.f32 %v5360, %v2458
    %v5375 = vmul.f32 %v5360, %v2462
    %v5376 = vmul.f32 %v5360, %v2466
    %v5377 = vmul.f32 %v5360, %v2470
    %v5378 = vmul.f32 %v5360, %v2474
    %v5381 = vunpack.c.l.s4 1966171168
    %v5382 = vunpack.c.0.s8 %v5381
    %v5383 = vlaneseq
    %v5384 = vshrl.u32 %v5383, 7
    %v5385 = vsub.s32 %v5382, %v5384
    %v5386 = vrot.slane %v5314, %v5385
    %v5387 = vcombine.high %v5386, %v5386
    %v5389 = vunpack.c.l.s4 1966171168
    %v5390 = vunpack.c.0.s8 %v5389
    %v5391 = vlaneseq
    %v5392 = vshrl.u32 %v5391, 7
    %v5393 = vsub.s32 %v5390, %v5392
    %v5394 = vrot.slane %v5386, %v5393
    %v5396 = vunpack.c.l.s4 1966171168
    %v5397 = vunpack.c.0.s8 %v5396
    %v5398 = vlaneseq
    %v5399 = vshrl.u32 %v5398, 7
    %v5400 = vsub.s32 %v5397, %v5399
    %v5401 = vrot.slane %v5387, %v5400
    %v5402 = vlaneseq
    %v5403 = vshrl.u32 %v5402, 7
    %v5404 = vsub.s32 0, %v5403
    %v5405 = vrot.slane %v5394, %v5404
    %v5406 = vlaneseq
    %v5407 = vshrl.u32 %v5406, 7
    %v5408 = vsub.s32 0, %v5407
    %v5409 = vrot.slane %v5401, %v5408
    %v5412 = vmul.f32 %v5405, %v2481
    %v5413 = vmul.f32 %v5405, %v2485
    %v5414 = vmul.f32 %v5405, %v2489
    %v5415 = vmul.f32 %v5405, %v2493
    %v5416 = vmul.f32 %v5405, %v2497
    %v5417 = vmul.f32 %v5405, %v2501
    %v5418 = vmul.f32 %v5405, %v2505
    %v5419 = vmul.f32 %v5405, %v2509
    %v5420 = vmul.f32 %v5409, %v2481
    %v5421 = vmul.f32 %v5409, %v2485
    %v5422 = vmul.f32 %v5409, %v2489
    %v5423 = vmul.f32 %v5409, %v2493
    %v5424 = vmul.f32 %v5409, %v2497
    %v5425 = vmul.f32 %v5409, %v2501
    %v5426 = vmul.f32 %v5409, %v2505
    %v5427 = vmul.f32 %v5409, %v2509
    %v5428 = vadd.f32 %v5363, %v5412
    %v5429 = vadd.f32 %v5364, %v5413
    %v5430 = vadd.f32 %v5365, %v5414
    %v5431 = vadd.f32 %v5366, %v5415
    %v5432 = vadd.f32 %v5367, %v5416
    %v5433 = vadd.f32 %v5368, %v5417
    %v5434 = vadd.f32 %v5369, %v5418
    %v5435 = vadd.f32 %v5370, %v5419
    %v5436 = vadd.f32 %v5371, %v5420
    %v5437 = vadd.f32 %v5372, %v5421
    %v5438 = vadd.f32 %v5373, %v5422
    %v5439 = vadd.f32 %v5374, %v5423
    %v5440 = vadd.f32 %v5375, %v5424
    %v5441 = vadd.f32 %v5376, %v5425
    %v5442 = vadd.f32 %v5377, %v5426
    %v5443 = vadd.f32 %v5378, %v5427
    %v5446 = vunpack.c.l.s4 1966171168
    %v5447 = vunpack.c.0.s8 %v5446
    %v5448 = vlaneseq
    %v5449 = vshrl.u32 %v5448, 7
    %v5450 = vsub.s32 %v5447, %v5449
    %v5451 = vrot.slane %v5329, %v5450
    %v5452 = vcombine.high %v5451, %v5451
    %v5454 = vunpack.c.l.s4 1966171168
    %v5455 = vunpack.c.0.s8 %v5454
    %v5456 = vlaneseq
    %v5457 = vshrl.u32 %v5456, 7
    %v5458 = vsub.s32 %v5455, %v5457
    %v5459 = vrot.slane %v5451, %v5458
    %v5461 = vunpack.c.l.s4 1966171168
    %v5462 = vunpack.c.0.s8 %v5461
    %v5463 = vlaneseq
    %v5464 = vshrl.u32 %v5463, 7
    %v5465 = vsub.s32 %v5462, %v5464
    %v5466 = vrot.slane %v5452, %v5465
    %v5467 = vlaneseq
    %v5468 = vshrl.u32 %v5467, 7
    %v5469 = vsub.s32 0, %v5468
    %v5470 = vrot.slane %v5459, %v5469
    %v5471 = vlaneseq
    %v5472 = vshrl.u32 %v5471, 7
    %v5473 = vsub.s32 0, %v5472
    %v5474 = vrot.slane %v5466, %v5473
    %v5477 = vmul.f32 %v5470, %v2516
    %v5478 = vmul.f32 %v5470, %v2520
    %v5479 = vmul.f32 %v5470, %v2524
    %v5480 = vmul.f32 %v5470, %v2528
    %v5481 = vmul.f32 %v5470, %v2532
    %v5482 = vmul.f32 %v5470, %v2536
    %v5483 = vmul.f32 %v5470, %v2540
    %v5484 = vmul.f32 %v5470, %v2544
    %v5485 = vmul.f32 %v5474, %v2516
    %v5486 = vmul.f32 %v5474, %v2520
    %v5487 = vmul.f32 %v5474, %v2524
    %v5488 = vmul.f32 %v5474, %v2528
    %v5489 = vmul.f32 %v5474, %v2532
    %v5490 = vmul.f32 %v5474, %v2536
    %v5491 = vmul.f32 %v5474, %v2540
    %v5492 = vmul.f32 %v5474, %v2544
    %v5493 = vadd.f32 %v5428, %v5477
    %v5494 = vadd.f32 %v5429, %v5478
    %v5495 = vadd.f32 %v5430, %v5479
    %v5496 = vadd.f32 %v5431, %v5480
    %v5497 = vadd.f32 %v5432, %v5481
    %v5498 = vadd.f32 %v5433, %v5482
    %v5499 = vadd.f32 %v5434, %v5483
    %v5500 = vadd.f32 %v5435, %v5484
    %v5501 = vadd.f32 %v5436, %v5485
    %v5502 = vadd.f32 %v5437, %v5486
    %v5503 = vadd.f32 %v5438, %v5487
    %v5504 = vadd.f32 %v5439, %v5488
    %v5505 = vadd.f32 %v5440, %v5489
    %v5506 = vadd.f32 %v5441, %v5490
    %v5507 = vadd.f32 %v5442, %v5491
    %v5508 = vadd.f32 %v5443, %v5492
    %v5509 = vadd.f32 %v5493, %v2730
    %v5510 = vadd.f32 %v5494, %v2734
    %v5511 = vadd.f32 %v5495, %v2738
    %v5512 = vadd.f32 %v5496, %v2742
    %v5513 = vadd.f32 %v5497, %v2746
    %v5514 = vadd.f32 %v5498, %v2750
    %v5515 = vadd.f32 %v5499, %v2754
    %v5516 = vadd.f32 %v5500, %v2758
    %v5517 = vadd.f32 %v5501, %v2730
    %v5518 = vadd.f32 %v5502, %v2734
    %v5519 = vadd.f32 %v5503, %v2738
    %v5520 = vadd.f32 %v5504, %v2742
    %v5521 = vadd.f32 %v5505, %v2746
    %v5522 = vadd.f32 %v5506, %v2750
    %v5523 = vadd.f32 %v5507, %v2754
    %v5524 = vadd.f32 %v5508, %v2758
    %v5525 = vmax.f32 %v5509, 0.0
    %v5526 = vmax.f32 %v5510, 0.0
    %v5527 = vmax.f32 %v5511, 0.0
    %v5528 = vmax.f32 %v5512, 0.0
    %v5529 = vmax.f32 %v5513, 0.0
    %v5530 = vmax.f32 %v5514, 0.0
    %v5531 = vmax.f32 %v5515, 0.0
    %v5532 = vmax.f32 %v5516, 0.0
    %v5533 = vmax.f32 %v5517, 0.0
    %v5534 = vmax.f32 %v5518, 0.0
    %v5535 = vmax.f32 %v5519, 0.0
    %v5536 = vmax.f32 %v5520, 0.0
    %v5537 = vmax.f32 %v5521, 0.0
    %v5538 = vmax.f32 %v5522, 0.0
    %v5539 = vmax.f32 %v5523, 0.0
    %v5540 = vmax.f32 %v5524, 0.0
    %5541 = vrot.lane.b32.xlu0 %v5525, 32
    %v5542 = vpop.permute.xlu0 %5541
    %v5543 = vsel %vm800, %v5542, %v5525
    %5544 = vrot.lane.b32.xlu0 %v5526, 32
    %v5545 = vpop.permute.xlu0 %5544
    %v5546 = vsel %vm800, %v5545, %v5526
    %5547 = vrot.lane.b32.xlu0 %v5527, 32
    %v5548 = vpop.permute.xlu0 %5547
    %v5549 = vsel %vm800, %v5548, %v5527
    %5550 = vrot.lane.b32.xlu0 %v5528, 32
    %v5551 = vpop.permute.xlu0 %5550
    %v5552 = vsel %vm800, %v5551, %v5528
    %5553 = vrot.lane.b32.xlu0 %v5529, 32
    %v5554 = vpop.permute.xlu0 %5553
    %v5555 = vsel %vm800, %v5554, %v5529
    %5556 = vrot.lane.b32.xlu0 %v5530, 32
    %v5557 = vpop.permute.xlu0 %5556
    %v5558 = vsel %vm800, %v5557, %v5530
    %5559 = vrot.lane.b32.xlu0 %v5531, 32
    %v5560 = vpop.permute.xlu0 %5559
    %v5561 = vsel %vm800, %v5560, %v5531
    %5562 = vrot.lane.b32.xlu0 %v5532, 32
    %v5563 = vpop.permute.xlu0 %5562
    %v5564 = vsel %vm800, %v5563, %v5532
    %5565 = vrot.lane.b32.xlu0 %v5533, 32
    %v5566 = vpop.permute.xlu0 %5565
    %v5567 = vsel %vm800, %v5566, %v5533
    %5568 = vrot.lane.b32.xlu0 %v5534, 32
    %v5569 = vpop.permute.xlu0 %5568
    %v5570 = vsel %vm800, %v5569, %v5534
    %5571 = vrot.lane.b32.xlu0 %v5535, 32
    %v5572 = vpop.permute.xlu0 %5571
    %v5573 = vsel %vm800, %v5572, %v5535
    %5574 = vrot.lane.b32.xlu0 %v5536, 32
    %v5575 = vpop.permute.xlu0 %5574
    %v5576 = vsel %vm800, %v5575, %v5536
    %5577 = vrot.lane.b32.xlu0 %v5537, 32
    %v5578 = vpop.permute.xlu0 %5577
    %v5579 = vsel %vm800, %v5578, %v5537
    %5580 = vrot.lane.b32.xlu0 %v5538, 32
    %v5581 = vpop.permute.xlu0 %5580
    %v5582 = vsel %vm800, %v5581, %v5538
    %5583 = vrot.lane.b32.xlu0 %v5539, 32
    %v5584 = vpop.permute.xlu0 %5583
    %v5585 = vsel %vm800, %v5584, %v5539
    %5586 = vrot.lane.b32.xlu0 %v5540, 32
    %v5587 = vpop.permute.xlu0 %5586
    %v5588 = vsel %vm800, %v5587, %v5540
    %5589 = vrot.lane.b32.xlu0 %v5543, 32
    %v5590 = vpop.permute.xlu0 %5589
    %5591 = vrot.lane.b32.xlu0 %v5546, 32
    %v5592 = vpop.permute.xlu0 %5591
    %5593 = vrot.lane.b32.xlu0 %v5549, 32
    %v5594 = vpop.permute.xlu0 %5593
    %5595 = vrot.lane.b32.xlu0 %v5552, 32
    %v5596 = vpop.permute.xlu0 %5595
    %5597 = vrot.lane.b32.xlu0 %v5555, 32
    %v5598 = vpop.permute.xlu0 %5597
    %5599 = vrot.lane.b32.xlu0 %v5558, 32
    %v5600 = vpop.permute.xlu0 %5599
    %5601 = vrot.lane.b32.xlu0 %v5561, 32
    %v5602 = vpop.permute.xlu0 %5601
    %5603 = vrot.lane.b32.xlu0 %v5564, 32
    %v5604 = vpop.permute.xlu0 %5603
    %5605 = vrot.lane.b32.xlu0 %v5567, 32
    %v5606 = vpop.permute.xlu0 %5605
    %5607 = vrot.lane.b32.xlu0 %v5570, 32
    %v5608 = vpop.permute.xlu0 %5607
    %5609 = vrot.lane.b32.xlu0 %v5573, 32
    %v5610 = vpop.permute.xlu0 %5609
    %5611 = vrot.lane.b32.xlu0 %v5576, 32
    %v5612 = vpop.permute.xlu0 %5611
    %5613 = vrot.lane.b32.xlu0 %v5579, 32
    %v5614 = vpop.permute.xlu0 %5613
    %5615 = vrot.lane.b32.xlu0 %v5582, 32
    %v5616 = vpop.permute.xlu0 %5615
    %5617 = vrot.lane.b32.xlu0 %v5585, 32
    %v5618 = vpop.permute.xlu0 %5617
    %5619 = vrot.lane.b32.xlu0 %v5588, 32
    %v5620 = vpop.permute.xlu0 %5619
    %v5621 = vsel %vm800, %v5590, %v5525
    %v5622 = vsel %vm800, %v5592, %v5526
    %v5623 = vsel %vm800, %v5594, %v5527
    %v5624 = vsel %vm800, %v5596, %v5528
    %v5625 = vsel %vm800, %v5598, %v5529
    %v5626 = vsel %vm800, %v5600, %v5530
    %v5627 = vsel %vm800, %v5602, %v5531
    %v5628 = vsel %vm800, %v5604, %v5532
    %v5629 = vsel %vm800, %v5606, %v5533
    %v5630 = vsel %vm800, %v5608, %v5534
    %v5631 = vsel %vm800, %v5610, %v5535
    %v5632 = vsel %vm800, %v5612, %v5536
    %v5633 = vsel %vm800, %v5614, %v5537
    %v5634 = vsel %vm800, %v5616, %v5538
    %v5635 = vsel %vm800, %v5618, %v5539
    %v5636 = vsel %vm800, %v5620, %v5540
    %5653 = vrot.lane.b32.xlu0 %v5621, 97
    %v5654 = vpop.permute.xlu0 %5653
    %5655 = vrot.lane.b32.xlu0 %v5622, 97
    %v5656 = vpop.permute.xlu0 %5655
    %5657 = vrot.lane.b32.xlu0 %v5623, 97
    %v5658 = vpop.permute.xlu0 %5657
    %5659 = vrot.lane.b32.xlu0 %v5624, 97
    %v5660 = vpop.permute.xlu0 %5659
    %5661 = vrot.lane.b32.xlu0 %v5625, 97
    %v5662 = vpop.permute.xlu0 %5661
    %5663 = vrot.lane.b32.xlu0 %v5626, 97
    %v5664 = vpop.permute.xlu0 %5663
    %5665 = vrot.lane.b32.xlu0 %v5627, 97
    %v5666 = vpop.permute.xlu0 %5665
    %5667 = vrot.lane.b32.xlu0 %v5628, 97
    %v5668 = vpop.permute.xlu0 %5667
    %5669 = vrot.lane.b32.xlu0 %v5629, 97
    %v5670 = vpop.permute.xlu0 %5669
    %5671 = vrot.lane.b32.xlu0 %v5630, 97
    %v5672 = vpop.permute.xlu0 %5671
    %5673 = vrot.lane.b32.xlu0 %v5631, 97
    %v5674 = vpop.permute.xlu0 %5673
    %5675 = vrot.lane.b32.xlu0 %v5632, 97
    %v5676 = vpop.permute.xlu0 %5675
    %5677 = vrot.lane.b32.xlu0 %v5633, 97
    %v5678 = vpop.permute.xlu0 %5677
    %5679 = vrot.lane.b32.xlu0 %v5634, 97
    %v5680 = vpop.permute.xlu0 %5679
    %5681 = vrot.lane.b32.xlu0 %v5635, 97
    %v5682 = vpop.permute.xlu0 %5681
    %5683 = vrot.lane.b32.xlu0 %v5636, 97
    %v5684 = vpop.permute.xlu0 %5683
    %v5701 = vsel %vm799, 0.0, %v5654
    %v5702 = vsel %vm799, 0.0, %v5656
    %v5703 = vsel %vm799, 0.0, %v5658
    %v5704 = vsel %vm799, 0.0, %v5660
    %v5705 = vsel %vm799, 0.0, %v5662
    %v5706 = vsel %vm799, 0.0, %v5664
    %v5707 = vsel %vm799, 0.0, %v5666
    %v5708 = vsel %vm799, 0.0, %v5668
    %v5709 = vsel %vm799, 0.0, %v5670
    %v5710 = vsel %vm799, 0.0, %v5672
    %v5711 = vsel %vm799, 0.0, %v5674
    %v5712 = vsel %vm799, 0.0, %v5676
    %v5713 = vsel %vm799, 0.0, %v5678
    %v5714 = vsel %vm799, 0.0, %v5680
    %v5715 = vsel %vm799, 0.0, %v5682
    %v5716 = vsel %vm799, 0.0, %v5684
    %5717 = vrot.lane.b32.xlu0 %v5621, 127
    %v5718 = vpop.permute.xlu0 %5717
    %5719 = vrot.lane.b32.xlu0 %v5622, 127
    %v5720 = vpop.permute.xlu0 %5719
    %5721 = vrot.lane.b32.xlu0 %v5623, 127
    %v5722 = vpop.permute.xlu0 %5721
    %5723 = vrot.lane.b32.xlu0 %v5624, 127
    %v5724 = vpop.permute.xlu0 %5723
    %5725 = vrot.lane.b32.xlu0 %v5625, 127
    %v5726 = vpop.permute.xlu0 %5725
    %5727 = vrot.lane.b32.xlu0 %v5626, 127
    %v5728 = vpop.permute.xlu0 %5727
    %5729 = vrot.lane.b32.xlu0 %v5627, 127
    %v5730 = vpop.permute.xlu0 %5729
    %5731 = vrot.lane.b32.xlu0 %v5628, 127
    %v5732 = vpop.permute.xlu0 %5731
    %5733 = vrot.lane.b32.xlu0 %v5629, 127
    %v5734 = vpop.permute.xlu0 %5733
    %5735 = vrot.lane.b32.xlu0 %v5630, 127
    %v5736 = vpop.permute.xlu0 %5735
    %5737 = vrot.lane.b32.xlu0 %v5631, 127
    %v5738 = vpop.permute.xlu0 %5737
    %5739 = vrot.lane.b32.xlu0 %v5632, 127
    %v5740 = vpop.permute.xlu0 %5739
    %5741 = vrot.lane.b32.xlu0 %v5633, 127
    %v5742 = vpop.permute.xlu0 %5741
    %5743 = vrot.lane.b32.xlu0 %v5634, 127
    %v5744 = vpop.permute.xlu0 %5743
    %5745 = vrot.lane.b32.xlu0 %v5635, 127
    %v5746 = vpop.permute.xlu0 %5745
    %5747 = vrot.lane.b32.xlu0 %v5636, 127
    %v5748 = vpop.permute.xlu0 %5747
    %v5765 = vsel %vm812, 0.0, %v5718
    %v5766 = vsel %vm812, 0.0, %v5720
    %v5767 = vsel %vm812, 0.0, %v5722
    %v5768 = vsel %vm812, 0.0, %v5724
    %v5769 = vsel %vm812, 0.0, %v5726
    %v5770 = vsel %vm812, 0.0, %v5728
    %v5771 = vsel %vm812, 0.0, %v5730
    %v5772 = vsel %vm812, 0.0, %v5732
    %v5773 = vsel %vm812, 0.0, %v5734
    %v5774 = vsel %vm812, 0.0, %v5736
    %v5775 = vsel %vm812, 0.0, %v5738
    %v5776 = vsel %vm812, 0.0, %v5740
    %v5777 = vsel %vm812, 0.0, %v5742
    %v5778 = vsel %vm812, 0.0, %v5744
    %v5779 = vsel %vm812, 0.0, %v5746
    %v5780 = vsel %vm812, 0.0, %v5748
    %v5781 = vmul.f32 %v5701, %v3037
    %v5782 = vmul.f32 %v5702, %v3041
    %v5783 = vmul.f32 %v5703, %v3045
    %v5784 = vmul.f32 %v5704, %v3049
    %v5785 = vmul.f32 %v5705, %v3053
    %v5786 = vmul.f32 %v5706, %v3057
    %v5787 = vmul.f32 %v5707, %v3061
    %v5788 = vmul.f32 %v5708, %v3065
    %v5789 = vmul.f32 %v5709, %v3037
    %v5790 = vmul.f32 %v5710, %v3041
    %v5791 = vmul.f32 %v5711, %v3045
    %v5792 = vmul.f32 %v5712, %v3049
    %v5793 = vmul.f32 %v5713, %v3053
    %v5794 = vmul.f32 %v5714, %v3057
    %v5795 = vmul.f32 %v5715, %v3061
    %v5796 = vmul.f32 %v5716, %v3065
    %v5797 = vsel %vm344, %v5781, 0.0
    %v5798 = vsel %vm344, %v5782, 0.0
    %v5799 = vadd.f32 %v5797, %v5798
    %v5800 = vsel %vm344, %v5783, 0.0
    %v5801 = vadd.f32 %v5799, %v5800
    %v5802 = vsel %vm344, %v5784, 0.0
    %v5803 = vadd.f32 %v5801, %v5802
    %v5804 = vsel %vm344, %v5785, 0.0
    %v5805 = vadd.f32 %v5803, %v5804
    %v5806 = vsel %vm344, %v5786, 0.0
    %v5807 = vadd.f32 %v5805, %v5806
    %v5808 = vsel %vm344, %v5787, 0.0
    %v5809 = vadd.f32 %v5807, %v5808
    %v5810 = vsel %vm344, %v5788, 0.0
    %v5811 = vadd.f32 %v5809, %v5810
    %v5812 = vrot.slane %v5811, 4
    %v5813 = vadd.f32 %v5811, %v5812
    %v5814 = vrot.slane %v5813, 2
    %v5815 = vadd.f32 %v5813, %v5814
    %v5816 = vrot.slane %v5815, 1
    %v5817 = vadd.f32 %v5815, %v5816
    %v5818 = vsel %vm344, %v5789, 0.0
    %v5819 = vsel %vm344, %v5790, 0.0
    %v5820 = vadd.f32 %v5818, %v5819
    %v5821 = vsel %vm344, %v5791, 0.0
    %v5822 = vadd.f32 %v5820, %v5821
    %v5823 = vsel %vm344, %v5792, 0.0
    %v5824 = vadd.f32 %v5822, %v5823
    %v5825 = vsel %vm344, %v5793, 0.0
    %v5826 = vadd.f32 %v5824, %v5825
    %v5827 = vsel %vm344, %v5794, 0.0
    %v5828 = vadd.f32 %v5826, %v5827
    %v5829 = vsel %vm344, %v5795, 0.0
    %v5830 = vadd.f32 %v5828, %v5829
    %v5831 = vsel %vm344, %v5796, 0.0
    %v5832 = vadd.f32 %v5830, %v5831
    %v5833 = vrot.slane %v5832, 4
    %v5834 = vadd.f32 %v5832, %v5833
    %v5835 = vrot.slane %v5834, 2
    %v5836 = vadd.f32 %v5834, %v5835
    %v5837 = vrot.slane %v5836, 1
    %v5838 = vadd.f32 %v5836, %v5837
    %v5839 = vmul.f32 %v5525, %v3072
    %v5840 = vmul.f32 %v5526, %v3076
    %v5841 = vmul.f32 %v5527, %v3080
    %v5842 = vmul.f32 %v5528, %v3084
    %v5843 = vmul.f32 %v5529, %v3088
    %v5844 = vmul.f32 %v5530, %v3092
    %v5845 = vmul.f32 %v5531, %v3096
    %v5846 = vmul.f32 %v5532, %v3100
    %v5847 = vmul.f32 %v5533, %v3072
    %v5848 = vmul.f32 %v5534, %v3076
    %v5849 = vmul.f32 %v5535, %v3080
    %v5850 = vmul.f32 %v5536, %v3084
    %v5851 = vmul.f32 %v5537, %v3088
    %v5852 = vmul.f32 %v5538, %v3092
    %v5853 = vmul.f32 %v5539, %v3096
    %v5854 = vmul.f32 %v5540, %v3100
    %v5855 = vsel %vm344, %v5839, 0.0
    %v5856 = vsel %vm344, %v5840, 0.0
    %v5857 = vadd.f32 %v5855, %v5856
    %v5858 = vsel %vm344, %v5841, 0.0
    %v5859 = vadd.f32 %v5857, %v5858
    %v5860 = vsel %vm344, %v5842, 0.0
    %v5861 = vadd.f32 %v5859, %v5860
    %v5862 = vsel %vm344, %v5843, 0.0
    %v5863 = vadd.f32 %v5861, %v5862
    %v5864 = vsel %vm344, %v5844, 0.0
    %v5865 = vadd.f32 %v5863, %v5864
    %v5866 = vsel %vm344, %v5845, 0.0
    %v5867 = vadd.f32 %v5865, %v5866
    %v5868 = vsel %vm344, %v5846, 0.0
    %v5869 = vadd.f32 %v5867, %v5868
    %v5870 = vrot.slane %v5869, 4
    %v5871 = vadd.f32 %v5869, %v5870
    %v5872 = vrot.slane %v5871, 2
    %v5873 = vadd.f32 %v5871, %v5872
    %v5874 = vrot.slane %v5873, 1
    %v5875 = vadd.f32 %v5873, %v5874
    %v5876 = vsel %vm344, %v5847, 0.0
    %v5877 = vsel %vm344, %v5848, 0.0
    %v5878 = vadd.f32 %v5876, %v5877
    %v5879 = vsel %vm344, %v5849, 0.0
    %v5880 = vadd.f32 %v5878, %v5879
    %v5881 = vsel %vm344, %v5850, 0.0
    %v5882 = vadd.f32 %v5880, %v5881
    %v5883 = vsel %vm344, %v5851, 0.0
    %v5884 = vadd.f32 %v5882, %v5883
    %v5885 = vsel %vm344, %v5852, 0.0
    %v5886 = vadd.f32 %v5884, %v5885
    %v5887 = vsel %vm344, %v5853, 0.0
    %v5888 = vadd.f32 %v5886, %v5887
    %v5889 = vsel %vm344, %v5854, 0.0
    %v5890 = vadd.f32 %v5888, %v5889
    %v5891 = vrot.slane %v5890, 4
    %v5892 = vadd.f32 %v5890, %v5891
    %v5893 = vrot.slane %v5892, 2
    %v5894 = vadd.f32 %v5892, %v5893
    %v5895 = vrot.slane %v5894, 1
    %v5896 = vadd.f32 %v5894, %v5895
    %v5897 = vadd.f32 %v5817, %v5875
    %v5898 = vadd.f32 %v5838, %v5896
    %v5899 = vmul.f32 %v5765, %v3107
    %v5900 = vmul.f32 %v5766, %v3111
    %v5901 = vmul.f32 %v5767, %v3115
    %v5902 = vmul.f32 %v5768, %v3119
    %v5903 = vmul.f32 %v5769, %v3123
    %v5904 = vmul.f32 %v5770, %v3127
    %v5905 = vmul.f32 %v5771, %v3131
    %v5906 = vmul.f32 %v5772, %v3135
    %v5907 = vmul.f32 %v5773, %v3107
    %v5908 = vmul.f32 %v5774, %v3111
    %v5909 = vmul.f32 %v5775, %v3115
    %v5910 = vmul.f32 %v5776, %v3119
    %v5911 = vmul.f32 %v5777, %v3123
    %v5912 = vmul.f32 %v5778, %v3127
    %v5913 = vmul.f32 %v5779, %v3131
    %v5914 = vmul.f32 %v5780, %v3135
    %v5915 = vsel %vm344, %v5899, 0.0
    %v5916 = vsel %vm344, %v5900, 0.0
    %v5917 = vadd.f32 %v5915, %v5916
    %v5918 = vsel %vm344, %v5901, 0.0
    %v5919 = vadd.f32 %v5917, %v5918
    %v5920 = vsel %vm344, %v5902, 0.0
    %v5921 = vadd.f32 %v5919, %v5920
    %v5922 = vsel %vm344, %v5903, 0.0
    %v5923 = vadd.f32 %v5921, %v5922
    %v5924 = vsel %vm344, %v5904, 0.0
    %v5925 = vadd.f32 %v5923, %v5924
    %v5926 = vsel %vm344, %v5905, 0.0
    %v5927 = vadd.f32 %v5925, %v5926
    %v5928 = vsel %vm344, %v5906, 0.0
    %v5929 = vadd.f32 %v5927, %v5928
    %v5930 = vrot.slane %v5929, 4
    %v5931 = vadd.f32 %v5929, %v5930
    %v5932 = vrot.slane %v5931, 2
    %v5933 = vadd.f32 %v5931, %v5932
    %v5934 = vrot.slane %v5933, 1
    %v5935 = vadd.f32 %v5933, %v5934
    %v5936 = vsel %vm344, %v5907, 0.0
    %v5937 = vsel %vm344, %v5908, 0.0
    %v5938 = vadd.f32 %v5936, %v5937
    %v5939 = vsel %vm344, %v5909, 0.0
    %v5940 = vadd.f32 %v5938, %v5939
    %v5941 = vsel %vm344, %v5910, 0.0
    %v5942 = vadd.f32 %v5940, %v5941
    %v5943 = vsel %vm344, %v5911, 0.0
    %v5944 = vadd.f32 %v5942, %v5943
    %v5945 = vsel %vm344, %v5912, 0.0
    %v5946 = vadd.f32 %v5944, %v5945
    %v5947 = vsel %vm344, %v5913, 0.0
    %v5948 = vadd.f32 %v5946, %v5947
    %v5949 = vsel %vm344, %v5914, 0.0
    %v5950 = vadd.f32 %v5948, %v5949
    %v5951 = vrot.slane %v5950, 4
    %v5952 = vadd.f32 %v5950, %v5951
    %v5953 = vrot.slane %v5952, 2
    %v5954 = vadd.f32 %v5952, %v5953
    %v5955 = vrot.slane %v5954, 1
    %v5956 = vadd.f32 %v5954, %v5955
    %v5957 = vadd.f32 %v5897, %v5935
    %v5958 = vadd.f32 %v5898, %v5956
    %v5959 = vadd.f32 %v5957, %v3314
    %v5960 = vadd.f32 %v5958, %v3314
    %v5963 = vsel %vm766, %v5960, %v5959
    %v5965 = vadd.f32 %v5314, %v5963
    %v5966 = vsel %vm770, %v5965, 0.0
    %5967 = vadd.xlane.f32.xlu0 %v5966
    %v5968 = vpop.xlane.xlu0 %5967
    %v5969 = vmul.f32 %v5968, %v774
    %v5970 = vsub.f32 %v5965, %v5969
    %v5971 = vmul.f32 %v5970, %v5970
    %v5972 = vsel %vm770, %v5971, 0.0
    %5973 = vadd.xlane.f32.xlu0 %v5972
    %v5974 = vpop.xlane.xlu0 %5973
    %v5975 = vmul.f32 %v5974, %v774
    %v5976 = vadd.f32 %v5975, 1e-05
    %v5977 = vrsqrt.pop %v5976
    %v5978 = vmul.f32 %v5970, %v5977
    %v5979 = vmul.f32 %v5978, %v3339
    %v5980 = vadd.f32 %v5979, %v3346
    %v5981 = vmul.f32 %v4674, 1.00005
    %v5982 = vmul.f32 %v5980, 0.0100005
    %v5983 = vsub.f32 %v5981, %v5982
    %v5984 = vmul.f32 %v4674, 0.0
    %v5985 = vadd.f32 %v5983, %v5984
    %5986 = vst.msk [vmem:[#allocation6] sm:$0x3] %vm770, %v5985
    // Predicated region
    $region82: #{diff_style_forward.5} parent=1 // pred_check
      _
    $region83: #{diff_style_forward.5} parent=1 // pred_check_branch
      %5988 = sbr.rel (0) target = $region85
    $region84: #{diff_style_forward.5} parent=1 // pred_region
      %s5990 = ssub.s32 32, 32
      %5991 = vsyncadd [#allocation3], %s5990
      %s5993 = sshll.u32 [#allocation5], 4
      %s5994 = int_to_ptr.vmem [resolvable:$true] %s5993
      %5996 = dma.vmem_to_hbm [thread:$0]  %s5994, 32, %s19, [#allocation3]
    $region85: #{diff_style_forward.5} parent=1 // pred_fallthru
      _
    // Predicated region
    $region86: #{diff_style_forward.5} parent=1 // pred_check
      _
    $region87: #{diff_style_forward.5} parent=1 // pred_check_branch
      %5998 = sbr.rel (0) target = $region89
    $region88: #{diff_style_forward.5} parent=1 // pred_region
      %s6000 = ssub.s32 32, 32
      %6001 = vsyncadd [#allocation7], %s6000
      %s6003 = sshll.u32 [#allocation6], 4
      %s6004 = int_to_ptr.vmem [resolvable:$true] %s6003
      %6006 = dma.vmem_to_hbm [thread:$0]  %s6004, 32, %s20, [#allocation7]
    $region89: #{diff_style_forward.5} parent=1 // pred_fallthru
      _
    // Predicated region
    $region90: #{diff_style_forward.5} parent=1 // pred_check
      _
    $region91: #{diff_style_forward.5} parent=1 // pred_check_branch
      %6008 = sbr.rel (0) target = $region93
    $region92: #{diff_style_forward.5} parent=1 // pred_region
      %6009 = dma.done [#allocation3], 32
    $region93: #{diff_style_forward.5} parent=1 // pred_fallthru
      _
    // Predicated region
    $region94: #{diff_style_forward.5} parent=1 // pred_check
      _
    $region95: #{diff_style_forward.5} parent=1 // pred_check_branch
      %6011 = sbr.rel (0) target = $region97
    $region96: #{diff_style_forward.5} parent=1 // pred_region
      %6012 = dma.done [#allocation7], 32
    $region97: #{diff_style_forward.5} parent=1 // pred_fallthru
      _
    %6013 = vsyncpa [#allocation3], 1
    %6014 = vsyncpa [#allocation7], 1
    %6015 = vsyncpa [#allocation4], 1

</llo_original>
